<compile_context>
chip_gen: v5e
topology: v5e:2x2
jax: 0.10.0
libtpu: 0.0.40
codegen_flags: <defaults>
</compile_context>

<pallas_src>
import math

import jax
import jax.numpy as jnp
from jax import lax
from jax.experimental import pallas as pl
from jax.experimental.pallas import tpu as pltpu


def _gelu_exact(x):
    # PyTorch nn.GELU() default = exact erf form.
    return 0.5 * x * (1.0 + lax.erf(x * (1.0 / math.sqrt(2.0))))


def _decoder_kernel(z_ref, w1_ref, b1_ref, w2_ref, b2_ref, w3_ref, b3_ref, o_ref):
    prec = lax.Precision.HIGHEST
    # latent_fc
    h = jnp.dot(z_ref[...], w1_ref[...],
                preferred_element_type=jnp.float32, precision=prec)
    h = h + b1_ref[...]
    # feature_reconstructor: GELU -> Linear(512, 512) -> GELU
    h = _gelu_exact(h)
    h = jnp.dot(h, w2_ref[...],
                preferred_element_type=jnp.float32, precision=prec)
    h = h + b2_ref[...]
    h = _gelu_exact(h)
    # common_fc
    out = jnp.dot(h, w3_ref[...],
                  preferred_element_type=jnp.float32, precision=prec)
    out = out + b3_ref[...]
    o_ref[...] = out.astype(o_ref.dtype)


def mhd_common_decoder(z, w1, b1, w2, b2, w3, b3, *, batch_tile=256):
    """z: (B, latent_dim) -> (B, common_dim)."""
    B, L = z.shape
    H1 = w1.shape[1]          # 512
    H2 = w2.shape[1]          # 512
    C = w3.shape[1]           # common_dim

    # Biases kept 2D (1, N) so every ref is >= 2D; broadcast-add in kernel.
    b1 = b1.reshape(1, H1)
    b2 = b2.reshape(1, H2)
    b3 = b3.reshape(1, C)

    # Batch tiling: a single block for small B (one grid step, no pipeline
    # overhead); `batch_tile` rows (multiple of 8 sublanes) for large B.
    # Weights map to the same block every grid step, so they are DMA'd from
    # HBM exactly once per call and kept in VMEM.
    tb = B if B <= batch_tile else batch_tile
    grid = (pl.cdiv(B, tb),)

    flops = 2 * B * (L * H1 + H1 * H2 + H2 * C)
    transcendentals = B * (H1 + H2)                      # two exact-erf GELUs
    bytes_accessed = 4 * (B * L + L * H1 + H1 + H1 * H2 + H2 + H2 * C + C + B * C)

    return pl.pallas_call(
        _decoder_kernel,
        out_shape=jax.ShapeDtypeStruct((B, C), z.dtype),
        grid_spec=pltpu.PrefetchScalarGridSpec(
            num_scalar_prefetch=0,
            grid=grid,
            in_specs=[
                pl.BlockSpec((tb, L), lambda i: (i, 0)),    # z: tiled over batch
                pl.BlockSpec((L, H1), lambda i: (0, 0)),    # W1: VMEM-resident
                pl.BlockSpec((1, H1), lambda i: (0, 0)),    # b1
                pl.BlockSpec((H1, H2), lambda i: (0, 0)),   # W2: VMEM-resident
                pl.BlockSpec((1, H2), lambda i: (0, 0)),    # b2
                pl.BlockSpec((H2, C), lambda i: (0, 0)),    # W3: VMEM-resident
                pl.BlockSpec((1, C), lambda i: (0, 0)),     # b3
            ],
            out_specs=pl.BlockSpec((tb, C), lambda i: (i, 0)),
        ),
        compiler_params=pltpu.CompilerParams(
            dimension_semantics=("parallel",),
            vmem_limit_bytes=8 * 1024 * 1024,
        ),
        cost_estimate=pl.CostEstimate(
            flops=flops,
            transcendentals=transcendentals,
            bytes_accessed=bytes_accessed,
        ),
    )(z, w1, b1, w2, b2, w3, b3)
    # TODO(synk): if this decoder runs every step, pin the ~1.3 MB of weights
    # in VMEM across calls (cross-call prefetch / P10) to drop the per-call
    # weight DMA entirely.


def _init_linear(key, fan_in, fan_out):
    # Deterministic init mimicking PyTorch's default U(-1/sqrt(fan_in), 1/sqrt(fan_in)).
    kw, kb = jax.random.split(key)
    bound = 1.0 / math.sqrt(fan_in)
    w = jax.random.uniform(kw, (fan_in, fan_out), jnp.float32, -bound, bound)
    b = jax.random.uniform(kb, (fan_out,), jnp.float32, -bound, bound)
    return w, b


def _reference(z, w1, b1, w2, b2, w3, b3):
    prec = lax.Precision.HIGHEST
    h = jnp.dot(z, w1, precision=prec) + b1
    h = _gelu_exact(h)
    h = jnp.dot(h, w2, precision=prec) + b2
    h = _gelu_exact(h)
    return jnp.dot(h, w3, precision=prec) + b3


if __name__ == "__main__":
    # Small shapes consistent with the module.
    B = 8
    latent_dimension = 32
    common_dim = 64

    key = jax.random.PRNGKey(0)
    kz, k1, k2, k3 = jax.random.split(key, 4)

    z = jax.random.normal(kz, (B, latent_dimension), jnp.float32)
    w1, b1 = _init_linear(k1, latent_dimension, 512)   # latent_fc
    w2, b2 = _init_linear(k2, 512, 512)                # feature_reconstructor Linear
    w3, b3 = _init_linear(k3, 512, common_dim)         # common_fc

    out = mhd_common_decoder(z, w1, b1, w2, b2, w3, b3)
    out = jax.block_until_ready(out)

    ref = _reference(z, w1, b1, w2, b2, w3, b3)
    assert out.shape == (B, common_dim), out.shape
    assert jnp.allclose(out, ref, atol=1e-5, rtol=1e-5), float(jnp.max(jnp.abs(out - ref)))

    print("KERNEL_OK")
</pallas_src>

<mosaic_0001>
module attributes {stable_mosaic.version = 11 : i64} {
  func.func @_decoder_kernel(%arg0: i32, %arg1: memref<8x32xf32, #tpu.memory_space<vmem>>, %arg2: memref<32x512xf32, #tpu.memory_space<vmem>>, %arg3: memref<1x512xf32, #tpu.memory_space<vmem>>, %arg4: memref<512x512xf32, #tpu.memory_space<vmem>>, %arg5: memref<1x512xf32, #tpu.memory_space<vmem>>, %arg6: memref<512x64xf32, #tpu.memory_space<vmem>>, %arg7: memref<1x64xf32, #tpu.memory_space<vmem>>, %arg8: memref<8x64xf32, #tpu.memory_space<vmem>>) attributes {dimension_semantics = [#tpu.dimension_semantics<parallel>], iteration_bounds = array<i64: 1>, scalar_prefetch = 0 : i64, scratch_operands = 0 : i64, tpu.core_type = #tpu.core_type<tc>, window_params = [{transform_indices = @transform_0, window_bounds = array<i64: 8, 32>}, {pipeline_mode = #tpu.pipeline_mode<synchronous>, transform_indices = @transform_1, window_bounds = array<i64: 32, 512>}, {pipeline_mode = #tpu.pipeline_mode<synchronous>, transform_indices = @transform_2, window_bounds = array<i64: 1, 512>}, {pipeline_mode = #tpu.pipeline_mode<synchronous>, transform_indices = @transform_3, window_bounds = array<i64: 512, 512>}, {pipeline_mode = #tpu.pipeline_mode<synchronous>, transform_indices = @transform_4, window_bounds = array<i64: 1, 512>}, {pipeline_mode = #tpu.pipeline_mode<synchronous>, transform_indices = @transform_5, window_bounds = array<i64: 512, 64>}, {pipeline_mode = #tpu.pipeline_mode<synchronous>, transform_indices = @transform_6, window_bounds = array<i64: 1, 64>}, {transform_indices = @transform_7, window_bounds = array<i64: 8, 64>}]} {
    %c0 = arith.constant 0 : index
    %c0_0 = arith.constant 0 : index
    %0 = vector.load %arg1[%c0, %c0_0] : memref<8x32xf32, #tpu.memory_space<vmem>>, vector<8x32xf32>
    %c0_1 = arith.constant 0 : index
    %c0_2 = arith.constant 0 : index
    %1 = vector.load %arg2[%c0_1, %c0_2] : memref<32x512xf32, #tpu.memory_space<vmem>>, vector<32x512xf32>
    %cst = arith.constant dense<0.000000e+00> : vector<8x512xf32>
    %2 = tpu.matmul %0, %1, %cst {dimension_numbers = #tpu.dot_dimension_numbers<[1], [0], [0], [1], [0, 0, 1, 1], [], []>, precision = #tpu.contract_precision<fp32>} : vector<8x32xf32>, vector<32x512xf32>, vector<8x512xf32> -> vector<8x512xf32>
    %c0_3 = arith.constant 0 : index
    %c0_4 = arith.constant 0 : index
    %3 = vector.load %arg3[%c0_3, %c0_4] : memref<1x512xf32, #tpu.memory_space<vmem>>, vector<1x512xf32>
    %4 = vector.broadcast %3 : vector<1x512xf32> to vector<8x512xf32>
    %5 = arith.addf %2, %4 : vector<8x512xf32>
    %cst_5 = arith.constant 5.000000e-01 : f32
    %6 = vector.broadcast %cst_5 : f32 to vector<8x512xf32>
    %7 = arith.mulf %6, %5 : vector<8x512xf32>
    %cst_6 = arith.constant 0.707106769 : f32
    %8 = vector.broadcast %cst_6 : f32 to vector<8x512xf32>
    %9 = arith.mulf %5, %8 : vector<8x512xf32>
    %10 = math.erf %9 : vector<8x512xf32>
    %cst_7 = arith.constant 1.000000e+00 : f32
    %11 = vector.broadcast %cst_7 : f32 to vector<8x512xf32>
    %12 = arith.addf %11, %10 : vector<8x512xf32>
    %13 = arith.mulf %7, %12 : vector<8x512xf32>
    %c0_8 = arith.constant 0 : index
    %c0_9 = arith.constant 0 : index
    %14 = vector.load %arg4[%c0_8, %c0_9] : memref<512x512xf32, #tpu.memory_space<vmem>>, vector<512x512xf32>
    %cst_10 = arith.constant dense<0.000000e+00> : vector<8x512xf32>
    %15 = tpu.matmul %13, %14, %cst_10 {dimension_numbers = #tpu.dot_dimension_numbers<[1], [0], [0], [1], [0, 0, 1, 1], [], []>, precision = #tpu.contract_precision<fp32>} : vector<8x512xf32>, vector<512x512xf32>, vector<8x512xf32> -> vector<8x512xf32>
    %c0_11 = arith.constant 0 : index
    %c0_12 = arith.constant 0 : index
    %16 = vector.load %arg5[%c0_11, %c0_12] : memref<1x512xf32, #tpu.memory_space<vmem>>, vector<1x512xf32>
    %17 = vector.broadcast %16 : vector<1x512xf32> to vector<8x512xf32>
    %18 = arith.addf %15, %17 : vector<8x512xf32>
    %cst_13 = arith.constant 5.000000e-01 : f32
    %19 = vector.broadcast %cst_13 : f32 to vector<8x512xf32>
    %20 = arith.mulf %19, %18 : vector<8x512xf32>
    %cst_14 = arith.constant 0.707106769 : f32
    %21 = vector.broadcast %cst_14 : f32 to vector<8x512xf32>
    %22 = arith.mulf %18, %21 : vector<8x512xf32>
    %23 = math.erf %22 : vector<8x512xf32>
    %cst_15 = arith.constant 1.000000e+00 : f32
    %24 = vector.broadcast %cst_15 : f32 to vector<8x512xf32>
    %25 = arith.addf %24, %23 : vector<8x512xf32>
    %26 = arith.mulf %20, %25 : vector<8x512xf32>
    %c0_16 = arith.constant 0 : index
    %c0_17 = arith.constant 0 : index
    %27 = vector.load %arg6[%c0_16, %c0_17] : memref<512x64xf32, #tpu.memory_space<vmem>>, vector<512x64xf32>
    %cst_18 = arith.constant dense<0.000000e+00> : vector<8x64xf32>
    %28 = tpu.matmul %26, %27, %cst_18 {dimension_numbers = #tpu.dot_dimension_numbers<[1], [0], [0], [1], [0, 0, 1, 1], [], []>, precision = #tpu.contract_precision<fp32>} : vector<8x512xf32>, vector<512x64xf32>, vector<8x64xf32> -> vector<8x64xf32>
    %c0_19 = arith.constant 0 : index
    %c0_20 = arith.constant 0 : index
    %29 = vector.load %arg7[%c0_19, %c0_20] : memref<1x64xf32, #tpu.memory_space<vmem>>, vector<1x64xf32>
    %30 = vector.broadcast %29 : vector<1x64xf32> to vector<8x64xf32>
    %31 = arith.addf %28, %30 : vector<8x64xf32>
    %c0_21 = arith.constant 0 : index
    %c0_22 = arith.constant 0 : index
    %32 = vector.load %arg8[%c0_21, %c0_22] : memref<8x64xf32, #tpu.memory_space<vmem>>, vector<8x64xf32>
    tpu.vector_store %arg8[%c0_21, %c0_22], %31 {strides = array<i32>} : memref<8x64xf32, #tpu.memory_space<vmem>>, vector<8x64xf32>,
    return
  }
  func.func @transform_0(%arg0: i32) -> (i32, i32) {
    %c0_i32 = arith.constant 0 : i32
    %c0_i32_0 = arith.constant 0 : i32
    return %arg0, %c0_i32 : i32, i32
  }
  func.func @transform_1(%arg0: i32) -> (i32, i32) {
    %c0_i32 = arith.constant 0 : i32
    %c0_i32_0 = arith.constant 0 : i32
    %c0_i32_1 = arith.constant 0 : i32
    return %c0_i32, %c0_i32_0 : i32, i32
  }
  func.func @transform_2(%arg0: i32) -> (i32, i32) {
    %c0_i32 = arith.constant 0 : i32
    %c0_i32_0 = arith.constant 0 : i32
    %c0_i32_1 = arith.constant 0 : i32
    return %c0_i32, %c0_i32_0 : i32, i32
  }
  func.func @transform_3(%arg0: i32) -> (i32, i32) {
    %c0_i32 = arith.constant 0 : i32
    %c0_i32_0 = arith.constant 0 : i32
    %c0_i32_1 = arith.constant 0 : i32
    return %c0_i32, %c0_i32_0 : i32, i32
  }
  func.func @transform_4(%arg0: i32) -> (i32, i32) {
    %c0_i32 = arith.constant 0 : i32
    %c0_i32_0 = arith.constant 0 : i32
    %c0_i32_1 = arith.constant 0 : i32
    return %c0_i32, %c0_i32_0 : i32, i32
  }
  func.func @transform_5(%arg0: i32) -> (i32, i32) {
    %c0_i32 = arith.constant 0 : i32
    %c0_i32_0 = arith.constant 0 : i32
    %c0_i32_1 = arith.constant 0 : i32
    return %c0_i32, %c0_i32_0 : i32, i32
  }
  func.func @transform_6(%arg0: i32) -> (i32, i32) {
    %c0_i32 = arith.constant 0 : i32
    %c0_i32_0 = arith.constant 0 : i32
    %c0_i32_1 = arith.constant 0 : i32
    return %c0_i32, %c0_i32_0 : i32, i32
  }
  func.func @transform_7(%arg0: i32) -> (i32, i32) {
    %c0_i32 = arith.constant 0 : i32
    %c0_i32_0 = arith.constant 0 : i32
    return %arg0, %c0_i32 : i32, i32
  }
}

</mosaic_0001>

<llo_original>
// kernel: tpu_custom_call.1
$region0: #{tpu_custom_call.1}
  #allocation0 [shape = 'u32[]', space=smem, size = 0x4, offset = 0x4, fixed_abs, tag = 'smem constant byte address 0x4 - core index']
  #allocation1 [shape = 'u32[72,128]{1,0:T(1,128)}', space=vmem, size = 0x9000, scoped, tag = 'internal scratch']
  %s0 = inlined_call_operand.vmem [shape: f32[8,32], index: 0, kind: input, shape index: {}]
  %s1 = inlined_call_operand.vmem [shape: f32[32,512], index: 1, kind: input, shape index: {}]
  %s2 = inlined_call_operand.vmem [shape: f32[1,512], index: 2, kind: input, shape index: {}]
  %s3 = inlined_call_operand.hbm [shape: f32[512,512], index: 3, kind: input, shape index: {}]
  %s4 = inlined_call_operand.vmem [shape: f32[1,512], index: 4, kind: input, shape index: {}]
  %s5 = inlined_call_operand.vmem [shape: f32[512,64], index: 5, kind: input, shape index: {}]
  %s6 = inlined_call_operand.vmem [shape: f32[1,64], index: 6, kind: input, shape index: {}]
  %s7 = inlined_call_operand.hbm [shape: f32[8,64], index: 7, kind: output, shape index: {}]
  %s8 = sld [smem:[#allocation0]]
  $region42: #{tpu_custom_call.1} parent=0
    _
  %s10 = ssub.s32 1, %s8
  %s11 = scalar_select 0, %s10, %s8
  $region1: #{tpu_custom_call.1} parent=0
    #allocation2 [shape = 'u8[1048576]{0}', space=vmem, size = 0x100000, scoped, tag = 'input window, operand 3, single buffered']
    #allocation3 [shape = 's32[1]{0}', space=sflag, size = 0x4, scoped, tag = 'scoped memory for tpu_custom_call.1']
    #allocation4 [shape = 's32[1]{0}', space=sflag, size = 0x4, scoped, tag = 'scoped memory for tpu_custom_call.1']
    #allocation5 [shape = 'u8[4096]{0}', space=vmem, size = 0x1000, scoped, tag = 'output window, operand 0, single buffered']
    %12 = vsyncpa [#allocation3], 0
    %13 = vsyncpa [#allocation4], 0
    // Predicated region
    $region2: #{tpu_custom_call.1} parent=1 // pred_check
      _
    $region3: #{tpu_custom_call.1} parent=1 // pred_check_branch
      %15 = sbr.rel (0) target = $region5
    $region4: #{tpu_custom_call.1} parent=1 // pred_region
      _
    $region5: #{tpu_custom_call.1} parent=1 // pred_fallthru
      _
    // Predicated region
    $region6: #{tpu_custom_call.1} parent=1 // pred_check
      _
    $region7: #{tpu_custom_call.1} parent=1 // pred_check_branch
      %17 = sbr.rel (0) target = $region9
    $region8: #{tpu_custom_call.1} parent=1 // pred_region
      _
    $region9: #{tpu_custom_call.1} parent=1 // pred_fallthru
      _
    // Predicated region
    $region10: #{tpu_custom_call.1} parent=1 // pred_check
      _
    $region11: #{tpu_custom_call.1} parent=1 // pred_check_branch
      %19 = sbr.rel (0) target = $region13
    $region12: #{tpu_custom_call.1} parent=1 // pred_region
      _
    $region13: #{tpu_custom_call.1} parent=1 // pred_fallthru
      _
    // Predicated region
    $region14: #{tpu_custom_call.1} parent=1 // pred_check
      _
    $region15: #{tpu_custom_call.1} parent=1 // pred_check_branch
      %21 = sbr.rel (0) target = $region17
    $region16: #{tpu_custom_call.1} parent=1 // pred_region
      %23 = vsyncadd [#allocation3], 0
      %s24 = sshll.u32 %s3, 4
      %s25 = int_to_ptr.hbm [resolvable:$true] %s24
      %s26 = sshll.u32 [#allocation2], 4
      %s27 = int_to_ptr.vmem [resolvable:$true] %s26
      %32 = dma.hbm_to_vmem [thread:$0]  %s25, 32768, %s27, [#allocation3], 512, 512, 32
    $region17: #{tpu_custom_call.1} parent=1 // pred_fallthru
      _
    // Predicated region
    $region18: #{tpu_custom_call.1} parent=1 // pred_check
      _
    $region19: #{tpu_custom_call.1} parent=1 // pred_check_branch
      %34 = sbr.rel (0) target = $region21
    $region20: #{tpu_custom_call.1} parent=1 // pred_region
      _
    $region21: #{tpu_custom_call.1} parent=1 // pred_fallthru
      _
    // Predicated region
    $region22: #{tpu_custom_call.1} parent=1 // pred_check
      _
    $region23: #{tpu_custom_call.1} parent=1 // pred_check_branch
      %36 = sbr.rel (0) target = $region25
    $region24: #{tpu_custom_call.1} parent=1 // pred_region
      _
    $region25: #{tpu_custom_call.1} parent=1 // pred_fallthru
      _
    // Predicated region
    $region26: #{tpu_custom_call.1} parent=1 // pred_check
      _
    $region27: #{tpu_custom_call.1} parent=1 // pred_check_branch
      %38 = sbr.rel (0) target = $region29
    $region28: #{tpu_custom_call.1} parent=1 // pred_region
      _
    $region29: #{tpu_custom_call.1} parent=1 // pred_fallthru
      _
    // Predicated region
    $region30: #{tpu_custom_call.1} parent=1 // pred_check
      _
    $region31: #{tpu_custom_call.1} parent=1 // pred_check_branch
      %40 = sbr.rel (0) target = $region33
    $region32: #{tpu_custom_call.1} parent=1 // pred_region
      %42 = dma.done [#allocation3], 32768
    $region33: #{tpu_custom_call.1} parent=1 // pred_fallthru
      _
    %v43 = vld [vmem:[%s0] sm:$0xff]
    %v44 = vld [vmem:[%s1] sm:$0xff]
    %v45 = vld [vmem:[%s1 + $0x8] sm:$0xff]
    %v46 = vld [vmem:[%s1 + $0x10] sm:$0xff]
    %v47 = vld [vmem:[%s1 + $0x18] sm:$0xff]
    %v48 = vld [vmem:[%s1 + $0x20] sm:$0xff]
    %v49 = vld [vmem:[%s1 + $0x28] sm:$0xff]
    %v50 = vld [vmem:[%s1 + $0x30] sm:$0xff]
    %v51 = vld [vmem:[%s1 + $0x38] sm:$0xff]
    %v52 = vld [vmem:[%s1 + $0x40] sm:$0xff]
    %v53 = vld [vmem:[%s1 + $0x48] sm:$0xff]
    %v54 = vld [vmem:[%s1 + $0x50] sm:$0xff]
    %v55 = vld [vmem:[%s1 + $0x58] sm:$0xff]
    %v56 = vld [vmem:[%s1 + $0x60] sm:$0xff]
    %v57 = vld [vmem:[%s1 + $0x68] sm:$0xff]
    %v58 = vld [vmem:[%s1 + $0x70] sm:$0xff]
    %v59 = vld [vmem:[%s1 + $0x78] sm:$0xff]
    %v60 = vld [vmem:[%s2] sm:$0xf]
    %v62 = vperm.slane %v60, 0
    %v63 = vperm.slane %v60, 1
    %v64 = vperm.slane %v60, 2
    %v65 = vperm.slane %v60, 3
    %vm70 = vcmask 261120
    %v72 = vsel %vm70, %v43, 0
    %74 = vmatpush.msra.mxu0 0.0
    %75 = vmatpush.msra.mxu0 0.0
    %76 = vmatpush.msra.mxu0 0.0
    %77 = vmatpush.msra.mxu0 0.0
    %78 = vmatpush.msra.mxu0 0.0
    %79 = vmatpush.msra.mxu0 0.0
    %80 = vmatpush.msra.mxu0 0.0
    %81 = vmatpush.msra.mxu0 0.0
    %82 = vmatpush.msra.mxu0 0.0
    %83 = vmatpush.msra.mxu0 0.0
    %84 = vmatpush.msra.mxu0 0.0
    %85 = vmatpush.msra.mxu0 0.0
    %v86 = vand.u32 %v56, 4294901760
    %87 = vmatpush.msra.mxu0 %v86
    %v88 = vand.u32 %v52, 4294901760
    %89 = vmatpush.msra.mxu0 %v88
    %v90 = vand.u32 %v48, 4294901760
    %91 = vmatpush.msra.mxu0 %v90
    %v92 = vand.u32 %v44, 4294901760
    %93 = vmatpush.msra.mxu0 %v92
    %v94 = vand.u32 %v72, 4294901760
    %v95 = vsub.f32 %v72, %v94
    %v96 = vand.u32 %v95, 4294901760
    %v97 = vsub.f32 %v95, %v96
    %v98 = vand.u32 %v97, 4294901760
    %99 = vmatmul.f32.gmra.mxu0 %v98
    %v100 = vpop.f32.mrf.mxu0
    %v101 = vadd.f32 %v62, %v100
    %102 = vdwg.mxu0
    %103 = vmatpush.msra.mxu0 0.0
    %104 = vmatpush.msra.mxu0 0.0
    %105 = vmatpush.msra.mxu0 0.0
    %106 = vmatpush.msra.mxu0 0.0
    %107 = vmatpush.msra.mxu0 0.0
    %108 = vmatpush.msra.mxu0 0.0
    %109 = vmatpush.msra.mxu0 0.0
    %110 = vmatpush.msra.mxu0 0.0
    %111 = vmatpush.msra.mxu0 0.0
    %112 = vmatpush.msra.mxu0 0.0
    %113 = vmatpush.msra.mxu0 0.0
    %114 = vmatpush.msra.mxu0 0.0
    %v115 = vand.u32 %v56, 4294901760
    %v116 = vsub.f32 %v56, %v115
    %v117 = vand.u32 %v116, 4294901760
    %v118 = vsub.f32 %v116, %v117
    %v119 = vand.u32 %v118, 4294901760
    %120 = vmatpush.msra.mxu0 %v119
    %v121 = vand.u32 %v52, 4294901760
    %v122 = vsub.f32 %v52, %v121
    %v123 = vand.u32 %v122, 4294901760
    %v124 = vsub.f32 %v122, %v123
    %v125 = vand.u32 %v124, 4294901760
    %126 = vmatpush.msra.mxu0 %v125
    %v127 = vand.u32 %v48, 4294901760
    %v128 = vsub.f32 %v48, %v127
    %v129 = vand.u32 %v128, 4294901760
    %v130 = vsub.f32 %v128, %v129
    %v131 = vand.u32 %v130, 4294901760
    %132 = vmatpush.msra.mxu0 %v131
    %v133 = vand.u32 %v44, 4294901760
    %v134 = vsub.f32 %v44, %v133
    %v135 = vand.u32 %v134, 4294901760
    %v136 = vsub.f32 %v134, %v135
    %v137 = vand.u32 %v136, 4294901760
    %138 = vmatpush.msra.mxu0 %v137
    %v139 = vand.u32 %v72, 4294901760
    %140 = vmatmul.f32.gmra.mxu0 %v139
    %v141 = vpop.f32.mrf.mxu0
    %v142 = vadd.f32 %v101, %v141
    %143 = vdwg.mxu0
    %144 = vmatpush.msra.mxu0 0.0
    %145 = vmatpush.msra.mxu0 0.0
    %146 = vmatpush.msra.mxu0 0.0
    %147 = vmatpush.msra.mxu0 0.0
    %148 = vmatpush.msra.mxu0 0.0
    %149 = vmatpush.msra.mxu0 0.0
    %150 = vmatpush.msra.mxu0 0.0
    %151 = vmatpush.msra.mxu0 0.0
    %152 = vmatpush.msra.mxu0 0.0
    %153 = vmatpush.msra.mxu0 0.0
    %154 = vmatpush.msra.mxu0 0.0
    %155 = vmatpush.msra.mxu0 0.0
    %v156 = vand.u32 %v56, 4294901760
    %v157 = vsub.f32 %v56, %v156
    %158 = vmatpush.msra.mxu0 %v157
    %v159 = vand.u32 %v52, 4294901760
    %v160 = vsub.f32 %v52, %v159
    %161 = vmatpush.msra.mxu0 %v160
    %v162 = vand.u32 %v48, 4294901760
    %v163 = vsub.f32 %v48, %v162
    %164 = vmatpush.msra.mxu0 %v163
    %v165 = vand.u32 %v44, 4294901760
    %v166 = vsub.f32 %v44, %v165
    %167 = vmatpush.msra.mxu0 %v166
    %v168 = vand.u32 %v72, 4294901760
    %v169 = vsub.f32 %v72, %v168
    %170 = vmatmul.f32.gmra.mxu0 %v169
    %v171 = vpop.f32.mrf.mxu0
    %v172 = vadd.f32 %v142, %v171
    %173 = vdwg.mxu0
    %174 = vmatpush.msra.mxu0 0.0
    %175 = vmatpush.msra.mxu0 0.0
    %176 = vmatpush.msra.mxu0 0.0
    %177 = vmatpush.msra.mxu0 0.0
    %178 = vmatpush.msra.mxu0 0.0
    %179 = vmatpush.msra.mxu0 0.0
    %180 = vmatpush.msra.mxu0 0.0
    %181 = vmatpush.msra.mxu0 0.0
    %182 = vmatpush.msra.mxu0 0.0
    %183 = vmatpush.msra.mxu0 0.0
    %184 = vmatpush.msra.mxu0 0.0
    %185 = vmatpush.msra.mxu0 0.0
    %v186 = vand.u32 %v56, 4294901760
    %187 = vmatpush.msra.mxu0 %v186
    %v188 = vand.u32 %v52, 4294901760
    %189 = vmatpush.msra.mxu0 %v188
    %v190 = vand.u32 %v48, 4294901760
    %191 = vmatpush.msra.mxu0 %v190
    %v192 = vand.u32 %v44, 4294901760
    %193 = vmatpush.msra.mxu0 %v192
    %v194 = vand.u32 %v72, 4294901760
    %v195 = vsub.f32 %v72, %v194
    %v196 = vand.u32 %v195, 4294901760
    %197 = vmatmul.f32.gmra.mxu0 %v196
    %v198 = vpop.f32.mrf.mxu0
    %v199 = vadd.f32 %v172, %v198
    %200 = vdwg.mxu0
    %201 = vmatpush.msra.mxu0 0.0
    %202 = vmatpush.msra.mxu0 0.0
    %203 = vmatpush.msra.mxu0 0.0
    %204 = vmatpush.msra.mxu0 0.0
    %205 = vmatpush.msra.mxu0 0.0
    %206 = vmatpush.msra.mxu0 0.0
    %207 = vmatpush.msra.mxu0 0.0
    %208 = vmatpush.msra.mxu0 0.0
    %209 = vmatpush.msra.mxu0 0.0
    %210 = vmatpush.msra.mxu0 0.0
    %211 = vmatpush.msra.mxu0 0.0
    %212 = vmatpush.msra.mxu0 0.0
    %v213 = vand.u32 %v56, 4294901760
    %v214 = vsub.f32 %v56, %v213
    %v215 = vand.u32 %v214, 4294901760
    %216 = vmatpush.msra.mxu0 %v215
    %v217 = vand.u32 %v52, 4294901760
    %v218 = vsub.f32 %v52, %v217
    %v219 = vand.u32 %v218, 4294901760
    %220 = vmatpush.msra.mxu0 %v219
    %v221 = vand.u32 %v48, 4294901760
    %v222 = vsub.f32 %v48, %v221
    %v223 = vand.u32 %v222, 4294901760
    %224 = vmatpush.msra.mxu0 %v223
    %v225 = vand.u32 %v44, 4294901760
    %v226 = vsub.f32 %v44, %v225
    %v227 = vand.u32 %v226, 4294901760
    %228 = vmatpush.msra.mxu0 %v227
    %v229 = vand.u32 %v72, 4294901760
    %230 = vmatmul.f32.gmra.mxu0 %v229
    %v231 = vpop.f32.mrf.mxu0
    %v232 = vadd.f32 %v199, %v231
    %233 = vdwg.mxu0
    %234 = vmatpush.msra.mxu0 0.0
    %235 = vmatpush.msra.mxu0 0.0
    %236 = vmatpush.msra.mxu0 0.0
    %237 = vmatpush.msra.mxu0 0.0
    %238 = vmatpush.msra.mxu0 0.0
    %239 = vmatpush.msra.mxu0 0.0
    %240 = vmatpush.msra.mxu0 0.0
    %241 = vmatpush.msra.mxu0 0.0
    %242 = vmatpush.msra.mxu0 0.0
    %243 = vmatpush.msra.mxu0 0.0
    %244 = vmatpush.msra.mxu0 0.0
    %245 = vmatpush.msra.mxu0 0.0
    %v246 = vand.u32 %v56, 4294901760
    %247 = vmatpush.msra.mxu0 %v246
    %v248 = vand.u32 %v52, 4294901760
    %249 = vmatpush.msra.mxu0 %v248
    %v250 = vand.u32 %v48, 4294901760
    %251 = vmatpush.msra.mxu0 %v250
    %v252 = vand.u32 %v44, 4294901760
    %253 = vmatpush.msra.mxu0 %v252
    %v254 = vand.u32 %v72, 4294901760
    %255 = vmatmul.f32.gmra.mxu0 %v254
    %v256 = vpop.f32.mrf.mxu0
    %v257 = vadd.f32 %v232, %v256
    %258 = vdwg.mxu0
    %259 = vmatpush.msra.mxu0 0.0
    %260 = vmatpush.msra.mxu0 0.0
    %261 = vmatpush.msra.mxu0 0.0
    %262 = vmatpush.msra.mxu0 0.0
    %263 = vmatpush.msra.mxu0 0.0
    %264 = vmatpush.msra.mxu0 0.0
    %265 = vmatpush.msra.mxu0 0.0
    %266 = vmatpush.msra.mxu0 0.0
    %267 = vmatpush.msra.mxu0 0.0
    %268 = vmatpush.msra.mxu0 0.0
    %269 = vmatpush.msra.mxu0 0.0
    %270 = vmatpush.msra.mxu0 0.0
    %v271 = vand.u32 %v57, 4294901760
    %272 = vmatpush.msra.mxu0 %v271
    %v273 = vand.u32 %v53, 4294901760
    %274 = vmatpush.msra.mxu0 %v273
    %v275 = vand.u32 %v49, 4294901760
    %276 = vmatpush.msra.mxu0 %v275
    %v277 = vand.u32 %v45, 4294901760
    %278 = vmatpush.msra.mxu0 %v277
    %v279 = vand.u32 %v72, 4294901760
    %v280 = vsub.f32 %v72, %v279
    %v281 = vand.u32 %v280, 4294901760
    %v282 = vsub.f32 %v280, %v281
    %v283 = vand.u32 %v282, 4294901760
    %284 = vmatmul.f32.gmra.mxu0 %v283
    %v285 = vpop.f32.mrf.mxu0
    %v286 = vadd.f32 %v63, %v285
    %287 = vdwg.mxu0
    %288 = vmatpush.msra.mxu0 0.0
    %289 = vmatpush.msra.mxu0 0.0
    %290 = vmatpush.msra.mxu0 0.0
    %291 = vmatpush.msra.mxu0 0.0
    %292 = vmatpush.msra.mxu0 0.0
    %293 = vmatpush.msra.mxu0 0.0
    %294 = vmatpush.msra.mxu0 0.0
    %295 = vmatpush.msra.mxu0 0.0
    %296 = vmatpush.msra.mxu0 0.0
    %297 = vmatpush.msra.mxu0 0.0
    %298 = vmatpush.msra.mxu0 0.0
    %299 = vmatpush.msra.mxu0 0.0
    %v300 = vand.u32 %v57, 4294901760
    %v301 = vsub.f32 %v57, %v300
    %v302 = vand.u32 %v301, 4294901760
    %v303 = vsub.f32 %v301, %v302
    %v304 = vand.u32 %v303, 4294901760
    %305 = vmatpush.msra.mxu0 %v304
    %v306 = vand.u32 %v53, 4294901760
    %v307 = vsub.f32 %v53, %v306
    %v308 = vand.u32 %v307, 4294901760
    %v309 = vsub.f32 %v307, %v308
    %v310 = vand.u32 %v309, 4294901760
    %311 = vmatpush.msra.mxu0 %v310
    %v312 = vand.u32 %v49, 4294901760
    %v313 = vsub.f32 %v49, %v312
    %v314 = vand.u32 %v313, 4294901760
    %v315 = vsub.f32 %v313, %v314
    %v316 = vand.u32 %v315, 4294901760
    %317 = vmatpush.msra.mxu0 %v316
    %v318 = vand.u32 %v45, 4294901760
    %v319 = vsub.f32 %v45, %v318
    %v320 = vand.u32 %v319, 4294901760
    %v321 = vsub.f32 %v319, %v320
    %v322 = vand.u32 %v321, 4294901760
    %323 = vmatpush.msra.mxu0 %v322
    %v324 = vand.u32 %v72, 4294901760
    %325 = vmatmul.f32.gmra.mxu0 %v324
    %v326 = vpop.f32.mrf.mxu0
    %v327 = vadd.f32 %v286, %v326
    %328 = vdwg.mxu0
    %329 = vmatpush.msra.mxu0 0.0
    %330 = vmatpush.msra.mxu0 0.0
    %331 = vmatpush.msra.mxu0 0.0
    %332 = vmatpush.msra.mxu0 0.0
    %333 = vmatpush.msra.mxu0 0.0
    %334 = vmatpush.msra.mxu0 0.0
    %335 = vmatpush.msra.mxu0 0.0
    %336 = vmatpush.msra.mxu0 0.0
    %337 = vmatpush.msra.mxu0 0.0
    %338 = vmatpush.msra.mxu0 0.0
    %339 = vmatpush.msra.mxu0 0.0
    %340 = vmatpush.msra.mxu0 0.0
    %v341 = vand.u32 %v57, 4294901760
    %v342 = vsub.f32 %v57, %v341
    %343 = vmatpush.msra.mxu0 %v342
    %v344 = vand.u32 %v53, 4294901760
    %v345 = vsub.f32 %v53, %v344
    %346 = vmatpush.msra.mxu0 %v345
    %v347 = vand.u32 %v49, 4294901760
    %v348 = vsub.f32 %v49, %v347
    %349 = vmatpush.msra.mxu0 %v348
    %v350 = vand.u32 %v45, 4294901760
    %v351 = vsub.f32 %v45, %v350
    %352 = vmatpush.msra.mxu0 %v351
    %v353 = vand.u32 %v72, 4294901760
    %v354 = vsub.f32 %v72, %v353
    %355 = vmatmul.f32.gmra.mxu0 %v354
    %v356 = vpop.f32.mrf.mxu0
    %v357 = vadd.f32 %v327, %v356
    %358 = vdwg.mxu0
    %359 = vmatpush.msra.mxu0 0.0
    %360 = vmatpush.msra.mxu0 0.0
    %361 = vmatpush.msra.mxu0 0.0
    %362 = vmatpush.msra.mxu0 0.0
    %363 = vmatpush.msra.mxu0 0.0
    %364 = vmatpush.msra.mxu0 0.0
    %365 = vmatpush.msra.mxu0 0.0
    %366 = vmatpush.msra.mxu0 0.0
    %367 = vmatpush.msra.mxu0 0.0
    %368 = vmatpush.msra.mxu0 0.0
    %369 = vmatpush.msra.mxu0 0.0
    %370 = vmatpush.msra.mxu0 0.0
    %v371 = vand.u32 %v57, 4294901760
    %372 = vmatpush.msra.mxu0 %v371
    %v373 = vand.u32 %v53, 4294901760
    %374 = vmatpush.msra.mxu0 %v373
    %v375 = vand.u32 %v49, 4294901760
    %376 = vmatpush.msra.mxu0 %v375
    %v377 = vand.u32 %v45, 4294901760
    %378 = vmatpush.msra.mxu0 %v377
    %v379 = vand.u32 %v72, 4294901760
    %v380 = vsub.f32 %v72, %v379
    %v381 = vand.u32 %v380, 4294901760
    %382 = vmatmul.f32.gmra.mxu0 %v381
    %v383 = vpop.f32.mrf.mxu0
    %v384 = vadd.f32 %v357, %v383
    %385 = vdwg.mxu0
    %386 = vmatpush.msra.mxu0 0.0
    %387 = vmatpush.msra.mxu0 0.0
    %388 = vmatpush.msra.mxu0 0.0
    %389 = vmatpush.msra.mxu0 0.0
    %390 = vmatpush.msra.mxu0 0.0
    %391 = vmatpush.msra.mxu0 0.0
    %392 = vmatpush.msra.mxu0 0.0
    %393 = vmatpush.msra.mxu0 0.0
    %394 = vmatpush.msra.mxu0 0.0
    %395 = vmatpush.msra.mxu0 0.0
    %396 = vmatpush.msra.mxu0 0.0
    %397 = vmatpush.msra.mxu0 0.0
    %v398 = vand.u32 %v57, 4294901760
    %v399 = vsub.f32 %v57, %v398
    %v400 = vand.u32 %v399, 4294901760
    %401 = vmatpush.msra.mxu0 %v400
    %v402 = vand.u32 %v53, 4294901760
    %v403 = vsub.f32 %v53, %v402
    %v404 = vand.u32 %v403, 4294901760
    %405 = vmatpush.msra.mxu0 %v404
    %v406 = vand.u32 %v49, 4294901760
    %v407 = vsub.f32 %v49, %v406
    %v408 = vand.u32 %v407, 4294901760
    %409 = vmatpush.msra.mxu0 %v408
    %v410 = vand.u32 %v45, 4294901760
    %v411 = vsub.f32 %v45, %v410
    %v412 = vand.u32 %v411, 4294901760
    %413 = vmatpush.msra.mxu0 %v412
    %v414 = vand.u32 %v72, 4294901760
    %415 = vmatmul.f32.gmra.mxu0 %v414
    %v416 = vpop.f32.mrf.mxu0
    %v417 = vadd.f32 %v384, %v416
    %418 = vdwg.mxu0
    %419 = vmatpush.msra.mxu0 0.0
    %420 = vmatpush.msra.mxu0 0.0
    %421 = vmatpush.msra.mxu0 0.0
    %422 = vmatpush.msra.mxu0 0.0
    %423 = vmatpush.msra.mxu0 0.0
    %424 = vmatpush.msra.mxu0 0.0
    %425 = vmatpush.msra.mxu0 0.0
    %426 = vmatpush.msra.mxu0 0.0
    %427 = vmatpush.msra.mxu0 0.0
    %428 = vmatpush.msra.mxu0 0.0
    %429 = vmatpush.msra.mxu0 0.0
    %430 = vmatpush.msra.mxu0 0.0
    %v431 = vand.u32 %v57, 4294901760
    %432 = vmatpush.msra.mxu0 %v431
    %v433 = vand.u32 %v53, 4294901760
    %434 = vmatpush.msra.mxu0 %v433
    %v435 = vand.u32 %v49, 4294901760
    %436 = vmatpush.msra.mxu0 %v435
    %v437 = vand.u32 %v45, 4294901760
    %438 = vmatpush.msra.mxu0 %v437
    %v439 = vand.u32 %v72, 4294901760
    %440 = vmatmul.f32.gmra.mxu0 %v439
    %v441 = vpop.f32.mrf.mxu0
    %v442 = vadd.f32 %v417, %v441
    %443 = vdwg.mxu0
    %444 = vmatpush.msra.mxu0 0.0
    %445 = vmatpush.msra.mxu0 0.0
    %446 = vmatpush.msra.mxu0 0.0
    %447 = vmatpush.msra.mxu0 0.0
    %448 = vmatpush.msra.mxu0 0.0
    %449 = vmatpush.msra.mxu0 0.0
    %450 = vmatpush.msra.mxu0 0.0
    %451 = vmatpush.msra.mxu0 0.0
    %452 = vmatpush.msra.mxu0 0.0
    %453 = vmatpush.msra.mxu0 0.0
    %454 = vmatpush.msra.mxu0 0.0
    %455 = vmatpush.msra.mxu0 0.0
    %v456 = vand.u32 %v58, 4294901760
    %457 = vmatpush.msra.mxu0 %v456
    %v458 = vand.u32 %v54, 4294901760
    %459 = vmatpush.msra.mxu0 %v458
    %v460 = vand.u32 %v50, 4294901760
    %461 = vmatpush.msra.mxu0 %v460
    %v462 = vand.u32 %v46, 4294901760
    %463 = vmatpush.msra.mxu0 %v462
    %v464 = vand.u32 %v72, 4294901760
    %v465 = vsub.f32 %v72, %v464
    %v466 = vand.u32 %v465, 4294901760
    %v467 = vsub.f32 %v465, %v466
    %v468 = vand.u32 %v467, 4294901760
    %469 = vmatmul.f32.gmra.mxu0 %v468
    %v470 = vpop.f32.mrf.mxu0
    %v471 = vadd.f32 %v64, %v470
    %472 = vdwg.mxu0
    %473 = vmatpush.msra.mxu0 0.0
    %474 = vmatpush.msra.mxu0 0.0
    %475 = vmatpush.msra.mxu0 0.0
    %476 = vmatpush.msra.mxu0 0.0
    %477 = vmatpush.msra.mxu0 0.0
    %478 = vmatpush.msra.mxu0 0.0
    %479 = vmatpush.msra.mxu0 0.0
    %480 = vmatpush.msra.mxu0 0.0
    %481 = vmatpush.msra.mxu0 0.0
    %482 = vmatpush.msra.mxu0 0.0
    %483 = vmatpush.msra.mxu0 0.0
    %484 = vmatpush.msra.mxu0 0.0
    %v485 = vand.u32 %v58, 4294901760
    %v486 = vsub.f32 %v58, %v485
    %v487 = vand.u32 %v486, 4294901760
    %v488 = vsub.f32 %v486, %v487
    %v489 = vand.u32 %v488, 4294901760
    %490 = vmatpush.msra.mxu0 %v489
    %v491 = vand.u32 %v54, 4294901760
    %v492 = vsub.f32 %v54, %v491
    %v493 = vand.u32 %v492, 4294901760
    %v494 = vsub.f32 %v492, %v493
    %v495 = vand.u32 %v494, 4294901760
    %496 = vmatpush.msra.mxu0 %v495
    %v497 = vand.u32 %v50, 4294901760
    %v498 = vsub.f32 %v50, %v497
    %v499 = vand.u32 %v498, 4294901760
    %v500 = vsub.f32 %v498, %v499
    %v501 = vand.u32 %v500, 4294901760
    %502 = vmatpush.msra.mxu0 %v501
    %v503 = vand.u32 %v46, 4294901760
    %v504 = vsub.f32 %v46, %v503
    %v505 = vand.u32 %v504, 4294901760
    %v506 = vsub.f32 %v504, %v505
    %v507 = vand.u32 %v506, 4294901760
    %508 = vmatpush.msra.mxu0 %v507
    %v509 = vand.u32 %v72, 4294901760
    %510 = vmatmul.f32.gmra.mxu0 %v509
    %v511 = vpop.f32.mrf.mxu0
    %v512 = vadd.f32 %v471, %v511
    %513 = vdwg.mxu0
    %514 = vmatpush.msra.mxu0 0.0
    %515 = vmatpush.msra.mxu0 0.0
    %516 = vmatpush.msra.mxu0 0.0
    %517 = vmatpush.msra.mxu0 0.0
    %518 = vmatpush.msra.mxu0 0.0
    %519 = vmatpush.msra.mxu0 0.0
    %520 = vmatpush.msra.mxu0 0.0
    %521 = vmatpush.msra.mxu0 0.0
    %522 = vmatpush.msra.mxu0 0.0
    %523 = vmatpush.msra.mxu0 0.0
    %524 = vmatpush.msra.mxu0 0.0
    %525 = vmatpush.msra.mxu0 0.0
    %v526 = vand.u32 %v58, 4294901760
    %v527 = vsub.f32 %v58, %v526
    %528 = vmatpush.msra.mxu0 %v527
    %v529 = vand.u32 %v54, 4294901760
    %v530 = vsub.f32 %v54, %v529
    %531 = vmatpush.msra.mxu0 %v530
    %v532 = vand.u32 %v50, 4294901760
    %v533 = vsub.f32 %v50, %v532
    %534 = vmatpush.msra.mxu0 %v533
    %v535 = vand.u32 %v46, 4294901760
    %v536 = vsub.f32 %v46, %v535
    %537 = vmatpush.msra.mxu0 %v536
    %v538 = vand.u32 %v72, 4294901760
    %v539 = vsub.f32 %v72, %v538
    %540 = vmatmul.f32.gmra.mxu0 %v539
    %v541 = vpop.f32.mrf.mxu0
    %v542 = vadd.f32 %v512, %v541
    %543 = vdwg.mxu0
    %544 = vmatpush.msra.mxu0 0.0
    %545 = vmatpush.msra.mxu0 0.0
    %546 = vmatpush.msra.mxu0 0.0
    %547 = vmatpush.msra.mxu0 0.0
    %548 = vmatpush.msra.mxu0 0.0
    %549 = vmatpush.msra.mxu0 0.0
    %550 = vmatpush.msra.mxu0 0.0
    %551 = vmatpush.msra.mxu0 0.0
    %552 = vmatpush.msra.mxu0 0.0
    %553 = vmatpush.msra.mxu0 0.0
    %554 = vmatpush.msra.mxu0 0.0
    %555 = vmatpush.msra.mxu0 0.0
    %v556 = vand.u32 %v58, 4294901760
    %557 = vmatpush.msra.mxu0 %v556
    %v558 = vand.u32 %v54, 4294901760
    %559 = vmatpush.msra.mxu0 %v558
    %v560 = vand.u32 %v50, 4294901760
    %561 = vmatpush.msra.mxu0 %v560
    %v562 = vand.u32 %v46, 4294901760
    %563 = vmatpush.msra.mxu0 %v562
    %v564 = vand.u32 %v72, 4294901760
    %v565 = vsub.f32 %v72, %v564
    %v566 = vand.u32 %v565, 4294901760
    %567 = vmatmul.f32.gmra.mxu0 %v566
    %v568 = vpop.f32.mrf.mxu0
    %v569 = vadd.f32 %v542, %v568
    %570 = vdwg.mxu0
    %571 = vmatpush.msra.mxu0 0.0
    %572 = vmatpush.msra.mxu0 0.0
    %573 = vmatpush.msra.mxu0 0.0
    %574 = vmatpush.msra.mxu0 0.0
    %575 = vmatpush.msra.mxu0 0.0
    %576 = vmatpush.msra.mxu0 0.0
    %577 = vmatpush.msra.mxu0 0.0
    %578 = vmatpush.msra.mxu0 0.0
    %579 = vmatpush.msra.mxu0 0.0
    %580 = vmatpush.msra.mxu0 0.0
    %581 = vmatpush.msra.mxu0 0.0
    %582 = vmatpush.msra.mxu0 0.0
    %v583 = vand.u32 %v58, 4294901760
    %v584 = vsub.f32 %v58, %v583
    %v585 = vand.u32 %v584, 4294901760
    %586 = vmatpush.msra.mxu0 %v585
    %v587 = vand.u32 %v54, 4294901760
    %v588 = vsub.f32 %v54, %v587
    %v589 = vand.u32 %v588, 4294901760
    %590 = vmatpush.msra.mxu0 %v589
    %v591 = vand.u32 %v50, 4294901760
    %v592 = vsub.f32 %v50, %v591
    %v593 = vand.u32 %v592, 4294901760
    %594 = vmatpush.msra.mxu0 %v593
    %v595 = vand.u32 %v46, 4294901760
    %v596 = vsub.f32 %v46, %v595
    %v597 = vand.u32 %v596, 4294901760
    %598 = vmatpush.msra.mxu0 %v597
    %v599 = vand.u32 %v72, 4294901760
    %600 = vmatmul.f32.gmra.mxu0 %v599
    %v601 = vpop.f32.mrf.mxu0
    %v602 = vadd.f32 %v569, %v601
    %603 = vdwg.mxu0
    %604 = vmatpush.msra.mxu0 0.0
    %605 = vmatpush.msra.mxu0 0.0
    %606 = vmatpush.msra.mxu0 0.0
    %607 = vmatpush.msra.mxu0 0.0
    %608 = vmatpush.msra.mxu0 0.0
    %609 = vmatpush.msra.mxu0 0.0
    %610 = vmatpush.msra.mxu0 0.0
    %611 = vmatpush.msra.mxu0 0.0
    %612 = vmatpush.msra.mxu0 0.0
    %613 = vmatpush.msra.mxu0 0.0
    %614 = vmatpush.msra.mxu0 0.0
    %615 = vmatpush.msra.mxu0 0.0
    %v616 = vand.u32 %v58, 4294901760
    %617 = vmatpush.msra.mxu0 %v616
    %v618 = vand.u32 %v54, 4294901760
    %619 = vmatpush.msra.mxu0 %v618
    %v620 = vand.u32 %v50, 4294901760
    %621 = vmatpush.msra.mxu0 %v620
    %v622 = vand.u32 %v46, 4294901760
    %623 = vmatpush.msra.mxu0 %v622
    %v624 = vand.u32 %v72, 4294901760
    %625 = vmatmul.f32.gmra.mxu0 %v624
    %v626 = vpop.f32.mrf.mxu0
    %v627 = vadd.f32 %v602, %v626
    %628 = vdwg.mxu0
    %629 = vmatpush.msra.mxu0 0.0
    %630 = vmatpush.msra.mxu0 0.0
    %631 = vmatpush.msra.mxu0 0.0
    %632 = vmatpush.msra.mxu0 0.0
    %633 = vmatpush.msra.mxu0 0.0
    %634 = vmatpush.msra.mxu0 0.0
    %635 = vmatpush.msra.mxu0 0.0
    %636 = vmatpush.msra.mxu0 0.0
    %637 = vmatpush.msra.mxu0 0.0
    %638 = vmatpush.msra.mxu0 0.0
    %639 = vmatpush.msra.mxu0 0.0
    %640 = vmatpush.msra.mxu0 0.0
    %v641 = vand.u32 %v59, 4294901760
    %642 = vmatpush.msra.mxu0 %v641
    %v643 = vand.u32 %v55, 4294901760
    %644 = vmatpush.msra.mxu0 %v643
    %v645 = vand.u32 %v51, 4294901760
    %646 = vmatpush.msra.mxu0 %v645
    %v647 = vand.u32 %v47, 4294901760
    %648 = vmatpush.msra.mxu0 %v647
    %v649 = vand.u32 %v72, 4294901760
    %v650 = vsub.f32 %v72, %v649
    %v651 = vand.u32 %v650, 4294901760
    %v652 = vsub.f32 %v650, %v651
    %v653 = vand.u32 %v652, 4294901760
    %654 = vmatmul.f32.gmra.mxu0 %v653
    %v655 = vpop.f32.mrf.mxu0
    %v656 = vadd.f32 %v65, %v655
    %657 = vdwg.mxu0
    %658 = vmatpush.msra.mxu0 0.0
    %659 = vmatpush.msra.mxu0 0.0
    %660 = vmatpush.msra.mxu0 0.0
    %661 = vmatpush.msra.mxu0 0.0
    %662 = vmatpush.msra.mxu0 0.0
    %663 = vmatpush.msra.mxu0 0.0
    %664 = vmatpush.msra.mxu0 0.0
    %665 = vmatpush.msra.mxu0 0.0
    %666 = vmatpush.msra.mxu0 0.0
    %667 = vmatpush.msra.mxu0 0.0
    %668 = vmatpush.msra.mxu0 0.0
    %669 = vmatpush.msra.mxu0 0.0
    %v670 = vand.u32 %v59, 4294901760
    %v671 = vsub.f32 %v59, %v670
    %v672 = vand.u32 %v671, 4294901760
    %v673 = vsub.f32 %v671, %v672
    %v674 = vand.u32 %v673, 4294901760
    %675 = vmatpush.msra.mxu0 %v674
    %v676 = vand.u32 %v55, 4294901760
    %v677 = vsub.f32 %v55, %v676
    %v678 = vand.u32 %v677, 4294901760
    %v679 = vsub.f32 %v677, %v678
    %v680 = vand.u32 %v679, 4294901760
    %681 = vmatpush.msra.mxu0 %v680
    %v682 = vand.u32 %v51, 4294901760
    %v683 = vsub.f32 %v51, %v682
    %v684 = vand.u32 %v683, 4294901760
    %v685 = vsub.f32 %v683, %v684
    %v686 = vand.u32 %v685, 4294901760
    %687 = vmatpush.msra.mxu0 %v686
    %v688 = vand.u32 %v47, 4294901760
    %v689 = vsub.f32 %v47, %v688
    %v690 = vand.u32 %v689, 4294901760
    %v691 = vsub.f32 %v689, %v690
    %v692 = vand.u32 %v691, 4294901760
    %693 = vmatpush.msra.mxu0 %v692
    %v694 = vand.u32 %v72, 4294901760
    %695 = vmatmul.f32.gmra.mxu0 %v694
    %v696 = vpop.f32.mrf.mxu0
    %v697 = vadd.f32 %v656, %v696
    %698 = vdwg.mxu0
    %699 = vmatpush.msra.mxu0 0.0
    %700 = vmatpush.msra.mxu0 0.0
    %701 = vmatpush.msra.mxu0 0.0
    %702 = vmatpush.msra.mxu0 0.0
    %703 = vmatpush.msra.mxu0 0.0
    %704 = vmatpush.msra.mxu0 0.0
    %705 = vmatpush.msra.mxu0 0.0
    %706 = vmatpush.msra.mxu0 0.0
    %707 = vmatpush.msra.mxu0 0.0
    %708 = vmatpush.msra.mxu0 0.0
    %709 = vmatpush.msra.mxu0 0.0
    %710 = vmatpush.msra.mxu0 0.0
    %v711 = vand.u32 %v59, 4294901760
    %v712 = vsub.f32 %v59, %v711
    %713 = vmatpush.msra.mxu0 %v712
    %v714 = vand.u32 %v55, 4294901760
    %v715 = vsub.f32 %v55, %v714
    %716 = vmatpush.msra.mxu0 %v715
    %v717 = vand.u32 %v51, 4294901760
    %v718 = vsub.f32 %v51, %v717
    %719 = vmatpush.msra.mxu0 %v718
    %v720 = vand.u32 %v47, 4294901760
    %v721 = vsub.f32 %v47, %v720
    %722 = vmatpush.msra.mxu0 %v721
    %v723 = vand.u32 %v72, 4294901760
    %v724 = vsub.f32 %v72, %v723
    %725 = vmatmul.f32.gmra.mxu0 %v724
    %v726 = vpop.f32.mrf.mxu0
    %v727 = vadd.f32 %v697, %v726
    %728 = vdwg.mxu0
    %729 = vmatpush.msra.mxu0 0.0
    %730 = vmatpush.msra.mxu0 0.0
    %731 = vmatpush.msra.mxu0 0.0
    %732 = vmatpush.msra.mxu0 0.0
    %733 = vmatpush.msra.mxu0 0.0
    %734 = vmatpush.msra.mxu0 0.0
    %735 = vmatpush.msra.mxu0 0.0
    %736 = vmatpush.msra.mxu0 0.0
    %737 = vmatpush.msra.mxu0 0.0
    %738 = vmatpush.msra.mxu0 0.0
    %739 = vmatpush.msra.mxu0 0.0
    %740 = vmatpush.msra.mxu0 0.0
    %v741 = vand.u32 %v59, 4294901760
    %742 = vmatpush.msra.mxu0 %v741
    %v743 = vand.u32 %v55, 4294901760
    %744 = vmatpush.msra.mxu0 %v743
    %v745 = vand.u32 %v51, 4294901760
    %746 = vmatpush.msra.mxu0 %v745
    %v747 = vand.u32 %v47, 4294901760
    %748 = vmatpush.msra.mxu0 %v747
    %v749 = vand.u32 %v72, 4294901760
    %v750 = vsub.f32 %v72, %v749
    %v751 = vand.u32 %v750, 4294901760
    %752 = vmatmul.f32.gmra.mxu0 %v751
    %v753 = vpop.f32.mrf.mxu0
    %v754 = vadd.f32 %v727, %v753
    %755 = vdwg.mxu0
    %756 = vmatpush.msra.mxu0 0.0
    %757 = vmatpush.msra.mxu0 0.0
    %758 = vmatpush.msra.mxu0 0.0
    %759 = vmatpush.msra.mxu0 0.0
    %760 = vmatpush.msra.mxu0 0.0
    %761 = vmatpush.msra.mxu0 0.0
    %762 = vmatpush.msra.mxu0 0.0
    %763 = vmatpush.msra.mxu0 0.0
    %764 = vmatpush.msra.mxu0 0.0
    %765 = vmatpush.msra.mxu0 0.0
    %766 = vmatpush.msra.mxu0 0.0
    %767 = vmatpush.msra.mxu0 0.0
    %v768 = vand.u32 %v59, 4294901760
    %v769 = vsub.f32 %v59, %v768
    %v770 = vand.u32 %v769, 4294901760
    %771 = vmatpush.msra.mxu0 %v770
    %v772 = vand.u32 %v55, 4294901760
    %v773 = vsub.f32 %v55, %v772
    %v774 = vand.u32 %v773, 4294901760
    %775 = vmatpush.msra.mxu0 %v774
    %v776 = vand.u32 %v51, 4294901760
    %v777 = vsub.f32 %v51, %v776
    %v778 = vand.u32 %v777, 4294901760
    %779 = vmatpush.msra.mxu0 %v778
    %v780 = vand.u32 %v47, 4294901760
    %v781 = vsub.f32 %v47, %v780
    %v782 = vand.u32 %v781, 4294901760
    %783 = vmatpush.msra.mxu0 %v782
    %v784 = vand.u32 %v72, 4294901760
    %785 = vmatmul.f32.gmra.mxu0 %v784
    %v786 = vpop.f32.mrf.mxu0
    %v787 = vadd.f32 %v754, %v786
    %788 = vdwg.mxu0
    %789 = vmatpush.msra.mxu0 0.0
    %790 = vmatpush.msra.mxu0 0.0
    %791 = vmatpush.msra.mxu0 0.0
    %792 = vmatpush.msra.mxu0 0.0
    %793 = vmatpush.msra.mxu0 0.0
    %794 = vmatpush.msra.mxu0 0.0
    %795 = vmatpush.msra.mxu0 0.0
    %796 = vmatpush.msra.mxu0 0.0
    %797 = vmatpush.msra.mxu0 0.0
    %798 = vmatpush.msra.mxu0 0.0
    %799 = vmatpush.msra.mxu0 0.0
    %800 = vmatpush.msra.mxu0 0.0
    %v801 = vand.u32 %v59, 4294901760
    %802 = vmatpush.msra.mxu0 %v801
    %v803 = vand.u32 %v55, 4294901760
    %804 = vmatpush.msra.mxu0 %v803
    %v805 = vand.u32 %v51, 4294901760
    %806 = vmatpush.msra.mxu0 %v805
    %v807 = vand.u32 %v47, 4294901760
    %808 = vmatpush.msra.mxu0 %v807
    %v809 = vand.u32 %v72, 4294901760
    %810 = vmatmul.f32.gmra.mxu0 %v809
    %v811 = vpop.f32.mrf.mxu0
    %v812 = vadd.f32 %v787, %v811
    %813 = vdwg.mxu0
    %v814 = vmul.f32 %v257, 0.5
    %v815 = vmul.f32 %v442, 0.5
    %v816 = vmul.f32 %v627, 0.5
    %v817 = vmul.f32 %v812, 0.5
    %v818 = vmul.f32 %v257, 0.70710677
    %v819 = vmul.f32 %v442, 0.70710677
    %v820 = vmul.f32 %v627, 0.70710677
    %v821 = vmul.f32 %v812, 0.70710677
    %v822 = vmul.f32 %v818, %v818
    %v823 = vmin.f32 16.0, %v822
    %v824 = vmul.f32 %v823, 2.1237322e-06
    %v825 = vadd.f32 %v824, 0.00028619796
    %v826 = vmul.f32 %v823, %v825
    %v827 = vadd.f32 %v826, 0.0036580483
    %v828 = vmul.f32 %v823, %v827
    %v829 = vadd.f32 %v828, 0.05243302
    %v830 = vmul.f32 %v823, %v829
    %v831 = vadd.f32 %v830, 0.18741608
    %v832 = vmul.f32 %v823, %v831
    %v833 = vadd.f32 %v832, 1.1283791
    %v834 = vmul.f32 %v818, %v833
    %v835 = vmul.f32 %v823, 3.8918573e-05
    %v836 = vadd.f32 %v835, 0.001143296
    %v837 = vmul.f32 %v823, %v836
    %v838 = vadd.f32 %v837, 0.014752088
    %v839 = vmul.f32 %v823, %v838
    %v840 = vadd.f32 %v839, 0.112945676
    %v841 = vmul.f32 %v823, %v840
    %v842 = vadd.f32 %v841, 0.4994258
    %v843 = vmul.f32 %v823, %v842
    %v844 = vadd.f32 %v843, 1.0
    %v845 = vrcp.pop %v844
    %v846 = vmul.f32 %v844, %v845
    %v847 = vsub.f32 1.0, %v846
    %v848 = vmul.f32 %v845, %v847
    %v849 = vadd.f32 %v845, %v848
    %vm850 = vweird.f32 %v844
    %vm851 = vweird.f32 %v845
    %vm852 = vmor %vm850, %vm851
    %v853 = vsel %vm852, %v845, %v849
    %v854 = vand.u32 2147483647, %v844
    %vm855 = vcmp.eq.f32.partialorder %v854, 8.507059e+37
    %v856 = vand.u32 %v844, 2147483648
    %v857 = vor.u32 1.1754944e-38, %v856
    %v858 = vsel %vm855, %v857, %v853
    %v859 = vmul.f32 %v834, %v858
    %v860 = vmin.f32 %v859, 1.0
    %v861 = vmax.f32 %v860, -1.0
    %v862 = vmul.f32 %v819, %v819
    %v863 = vmin.f32 16.0, %v862
    %v864 = vmul.f32 %v863, 2.1237322e-06
    %v865 = vadd.f32 %v864, 0.00028619796
    %v866 = vmul.f32 %v863, %v865
    %v867 = vadd.f32 %v866, 0.0036580483
    %v868 = vmul.f32 %v863, %v867
    %v869 = vadd.f32 %v868, 0.05243302
    %v870 = vmul.f32 %v863, %v869
    %v871 = vadd.f32 %v870, 0.18741608
    %v872 = vmul.f32 %v863, %v871
    %v873 = vadd.f32 %v872, 1.1283791
    %v874 = vmul.f32 %v819, %v873
    %v875 = vmul.f32 %v863, 3.8918573e-05
    %v876 = vadd.f32 %v875, 0.001143296
    %v877 = vmul.f32 %v863, %v876
    %v878 = vadd.f32 %v877, 0.014752088
    %v879 = vmul.f32 %v863, %v878
    %v880 = vadd.f32 %v879, 0.112945676
    %v881 = vmul.f32 %v863, %v880
    %v882 = vadd.f32 %v881, 0.4994258
    %v883 = vmul.f32 %v863, %v882
    %v884 = vadd.f32 %v883, 1.0
    %v885 = vrcp.pop %v884
    %v886 = vmul.f32 %v884, %v885
    %v887 = vsub.f32 1.0, %v886
    %v888 = vmul.f32 %v885, %v887
    %v889 = vadd.f32 %v885, %v888
    %vm890 = vweird.f32 %v884
    %vm891 = vweird.f32 %v885
    %vm892 = vmor %vm890, %vm891
    %v893 = vsel %vm892, %v885, %v889
    %v894 = vand.u32 2147483647, %v884
    %vm895 = vcmp.eq.f32.partialorder %v894, 8.507059e+37
    %v896 = vand.u32 %v884, 2147483648
    %v897 = vor.u32 1.1754944e-38, %v896
    %v898 = vsel %vm895, %v897, %v893
    %v899 = vmul.f32 %v874, %v898
    %v900 = vmin.f32 %v899, 1.0
    %v901 = vmax.f32 %v900, -1.0
    %v902 = vmul.f32 %v820, %v820
    %v903 = vmin.f32 16.0, %v902
    %v904 = vmul.f32 %v903, 2.1237322e-06
    %v905 = vadd.f32 %v904, 0.00028619796
    %v906 = vmul.f32 %v903, %v905
    %v907 = vadd.f32 %v906, 0.0036580483
    %v908 = vmul.f32 %v903, %v907
    %v909 = vadd.f32 %v908, 0.05243302
    %v910 = vmul.f32 %v903, %v909
    %v911 = vadd.f32 %v910, 0.18741608
    %v912 = vmul.f32 %v903, %v911
    %v913 = vadd.f32 %v912, 1.1283791
    %v914 = vmul.f32 %v820, %v913
    %v915 = vmul.f32 %v903, 3.8918573e-05
    %v916 = vadd.f32 %v915, 0.001143296
    %v917 = vmul.f32 %v903, %v916
    %v918 = vadd.f32 %v917, 0.014752088
    %v919 = vmul.f32 %v903, %v918
    %v920 = vadd.f32 %v919, 0.112945676
    %v921 = vmul.f32 %v903, %v920
    %v922 = vadd.f32 %v921, 0.4994258
    %v923 = vmul.f32 %v903, %v922
    %v924 = vadd.f32 %v923, 1.0
    %v925 = vrcp.pop %v924
    %v926 = vmul.f32 %v924, %v925
    %v927 = vsub.f32 1.0, %v926
    %v928 = vmul.f32 %v925, %v927
    %v929 = vadd.f32 %v925, %v928
    %vm930 = vweird.f32 %v924
    %vm931 = vweird.f32 %v925
    %vm932 = vmor %vm930, %vm931
    %v933 = vsel %vm932, %v925, %v929
    %v934 = vand.u32 2147483647, %v924
    %vm935 = vcmp.eq.f32.partialorder %v934, 8.507059e+37
    %v936 = vand.u32 %v924, 2147483648
    %v937 = vor.u32 1.1754944e-38, %v936
    %v938 = vsel %vm935, %v937, %v933
    %v939 = vmul.f32 %v914, %v938
    %v940 = vmin.f32 %v939, 1.0
    %v941 = vmax.f32 %v940, -1.0
    %v942 = vmul.f32 %v821, %v821
    %v943 = vmin.f32 16.0, %v942
    %v944 = vmul.f32 %v943, 2.1237322e-06
    %v945 = vadd.f32 %v944, 0.00028619796
    %v946 = vmul.f32 %v943, %v945
    %v947 = vadd.f32 %v946, 0.0036580483
    %v948 = vmul.f32 %v943, %v947
    %v949 = vadd.f32 %v948, 0.05243302
    %v950 = vmul.f32 %v943, %v949
    %v951 = vadd.f32 %v950, 0.18741608
    %v952 = vmul.f32 %v943, %v951
    %v953 = vadd.f32 %v952, 1.1283791
    %v954 = vmul.f32 %v821, %v953
    %v955 = vmul.f32 %v943, 3.8918573e-05
    %v956 = vadd.f32 %v955, 0.001143296
    %v957 = vmul.f32 %v943, %v956
    %v958 = vadd.f32 %v957, 0.014752088
    %v959 = vmul.f32 %v943, %v958
    %v960 = vadd.f32 %v959, 0.112945676
    %v961 = vmul.f32 %v943, %v960
    %v962 = vadd.f32 %v961, 0.4994258
    %v963 = vmul.f32 %v943, %v962
    %v964 = vadd.f32 %v963, 1.0
    %v965 = vrcp.pop %v964
    %v966 = vmul.f32 %v964, %v965
    %v967 = vsub.f32 1.0, %v966
    %v968 = vmul.f32 %v965, %v967
    %v969 = vadd.f32 %v965, %v968
    %vm970 = vweird.f32 %v964
    %vm971 = vweird.f32 %v965
    %vm972 = vmor %vm970, %vm971
    %v973 = vsel %vm972, %v965, %v969
    %v974 = vand.u32 2147483647, %v964
    %vm975 = vcmp.eq.f32.partialorder %v974, 8.507059e+37
    %v976 = vand.u32 %v964, 2147483648
    %v977 = vor.u32 1.1754944e-38, %v976
    %v978 = vsel %vm975, %v977, %v973
    %v979 = vmul.f32 %v954, %v978
    %v980 = vmin.f32 %v979, 1.0
    %v981 = vmax.f32 %v980, -1.0
    %v982 = vadd.f32 %v861, 1.0
    %v983 = vadd.f32 %v901, 1.0
    %v984 = vadd.f32 %v941, 1.0
    %v985 = vadd.f32 %v981, 1.0
    %v986 = vmul.f32 %v814, %v982
    %v987 = vmul.f32 %v815, %v983
    %v988 = vmul.f32 %v816, %v984
    %v989 = vmul.f32 %v817, %v985
    %v990 = vld [vmem:[#allocation2] sm:$0xff]
    %v991 = vld [vmem:[#allocation2 + $0x8] sm:$0xff]
    %v992 = vld [vmem:[#allocation2 + $0x10] sm:$0xff]
    %v993 = vld [vmem:[#allocation2 + $0x18] sm:$0xff]
    %v994 = vld [vmem:[#allocation2 + $0x20] sm:$0xff]
    %v995 = vld [vmem:[#allocation2 + $0x28] sm:$0xff]
    %v996 = vld [vmem:[#allocation2 + $0x30] sm:$0xff]
    %v997 = vld [vmem:[#allocation2 + $0x38] sm:$0xff]
    %v998 = vld [vmem:[#allocation2 + $0x40] sm:$0xff]
    %v999 = vld [vmem:[#allocation2 + $0x48] sm:$0xff]
    %v1000 = vld [vmem:[#allocation2 + $0x50] sm:$0xff]
    %v1001 = vld [vmem:[#allocation2 + $0x58] sm:$0xff]
    %v1002 = vld [vmem:[#allocation2 + $0x60] sm:$0xff]
    %v1003 = vld [vmem:[#allocation2 + $0x68] sm:$0xff]
    %v1004 = vld [vmem:[#allocation2 + $0x70] sm:$0xff]
    %v1005 = vld [vmem:[#allocation2 + $0x78] sm:$0xff]
    %v1006 = vld [vmem:[#allocation2 + $0x80] sm:$0xff]
    %v1007 = vld [vmem:[#allocation2 + $0x88] sm:$0xff]
    %v1008 = vld [vmem:[#allocation2 + $0x90] sm:$0xff]
    %v1009 = vld [vmem:[#allocation2 + $0x98] sm:$0xff]
    %v1010 = vld [vmem:[#allocation2 + $0xa0] sm:$0xff]
    %v1011 = vld [vmem:[#allocation2 + $0xa8] sm:$0xff]
    %v1012 = vld [vmem:[#allocation2 + $0xb0] sm:$0xff]
    %v1013 = vld [vmem:[#allocation2 + $0xb8] sm:$0xff]
    %v1014 = vld [vmem:[#allocation2 + $0xc0] sm:$0xff]
    %v1015 = vld [vmem:[#allocation2 + $0xc8] sm:$0xff]
    %v1016 = vld [vmem:[#allocation2 + $0xd0] sm:$0xff]
    %v1017 = vld [vmem:[#allocation2 + $0xd8] sm:$0xff]
    %v1018 = vld [vmem:[#allocation2 + $0xe0] sm:$0xff]
    %v1019 = vld [vmem:[#allocation2 + $0xe8] sm:$0xff]
    %v1020 = vld [vmem:[#allocation2 + $0xf0] sm:$0xff]
    %v1021 = vld [vmem:[#allocation2 + $0xf8] sm:$0xff]
    %v1022 = vld [vmem:[#allocation2 + $0x100] sm:$0xff]
    %v1023 = vld [vmem:[#allocation2 + $0x108] sm:$0xff]
    %v1024 = vld [vmem:[#allocation2 + $0x110] sm:$0xff]
    %v1025 = vld [vmem:[#allocation2 + $0x118] sm:$0xff]
    %v1026 = vld [vmem:[#allocation2 + $0x120] sm:$0xff]
    %v1027 = vld [vmem:[#allocation2 + $0x128] sm:$0xff]
    %v1028 = vld [vmem:[#allocation2 + $0x130] sm:$0xff]
    %v1029 = vld [vmem:[#allocation2 + $0x138] sm:$0xff]
    %v1030 = vld [vmem:[#allocation2 + $0x140] sm:$0xff]
    %v1031 = vld [vmem:[#allocation2 + $0x148] sm:$0xff]
    %v1032 = vld [vmem:[#allocation2 + $0x150] sm:$0xff]
    %v1033 = vld [vmem:[#allocation2 + $0x158] sm:$0xff]
    %v1034 = vld [vmem:[#allocation2 + $0x160] sm:$0xff]
    %v1035 = vld [vmem:[#allocation2 + $0x168] sm:$0xff]
    %v1036 = vld [vmem:[#allocation2 + $0x170] sm:$0xff]
    %v1037 = vld [vmem:[#allocation2 + $0x178] sm:$0xff]
    %v1038 = vld [vmem:[#allocation2 + $0x180] sm:$0xff]
    %v1039 = vld [vmem:[#allocation2 + $0x188] sm:$0xff]
    %v1040 = vld [vmem:[#allocation2 + $0x190] sm:$0xff]
    %v1041 = vld [vmem:[#allocation2 + $0x198] sm:$0xff]
    %v1042 = vld [vmem:[#allocation2 + $0x1a0] sm:$0xff]
    %v1043 = vld [vmem:[#allocation2 + $0x1a8] sm:$0xff]
    %v1044 = vld [vmem:[#allocation2 + $0x1b0] sm:$0xff]
    %v1045 = vld [vmem:[#allocation2 + $0x1b8] sm:$0xff]
    %v1046 = vld [vmem:[#allocation2 + $0x1c0] sm:$0xff]
    %v1047 = vld [vmem:[#allocation2 + $0x1c8] sm:$0xff]
    %v1048 = vld [vmem:[#allocation2 + $0x1d0] sm:$0xff]
    %v1049 = vld [vmem:[#allocation2 + $0x1d8] sm:$0xff]
    %v1050 = vld [vmem:[#allocation2 + $0x1e0] sm:$0xff]
    %v1051 = vld [vmem:[#allocation2 + $0x1e8] sm:$0xff]
    %v1052 = vld [vmem:[#allocation2 + $0x1f0] sm:$0xff]
    %v1053 = vld [vmem:[#allocation2 + $0x1f8] sm:$0xff]
    %v1054 = vld [vmem:[#allocation2 + $0x200] sm:$0xff]
    %v1055 = vld [vmem:[#allocation2 + $0x208] sm:$0xff]
    %v1056 = vld [vmem:[#allocation2 + $0x210] sm:$0xff]
    %v1057 = vld [vmem:[#allocation2 + $0x218] sm:$0xff]
    %v1058 = vld [vmem:[#allocation2 + $0x220] sm:$0xff]
    %v1059 = vld [vmem:[#allocation2 + $0x228] sm:$0xff]
    %v1060 = vld [vmem:[#allocation2 + $0x230] sm:$0xff]
    %v1061 = vld [vmem:[#allocation2 + $0x238] sm:$0xff]
    %v1062 = vld [vmem:[#allocation2 + $0x240] sm:$0xff]
    %v1063 = vld [vmem:[#allocation2 + $0x248] sm:$0xff]
    %v1064 = vld [vmem:[#allocation2 + $0x250] sm:$0xff]
    %v1065 = vld [vmem:[#allocation2 + $0x258] sm:$0xff]
    %v1066 = vld [vmem:[#allocation2 + $0x260] sm:$0xff]
    %v1067 = vld [vmem:[#allocation2 + $0x268] sm:$0xff]
    %v1068 = vld [vmem:[#allocation2 + $0x270] sm:$0xff]
    %v1069 = vld [vmem:[#allocation2 + $0x278] sm:$0xff]
    %v1070 = vld [vmem:[#allocation2 + $0x280] sm:$0xff]
    %v1071 = vld [vmem:[#allocation2 + $0x288] sm:$0xff]
    %v1072 = vld [vmem:[#allocation2 + $0x290] sm:$0xff]
    %v1073 = vld [vmem:[#allocation2 + $0x298] sm:$0xff]
    %v1074 = vld [vmem:[#allocation2 + $0x2a0] sm:$0xff]
    %v1075 = vld [vmem:[#allocation2 + $0x2a8] sm:$0xff]
    %v1076 = vld [vmem:[#allocation2 + $0x2b0] sm:$0xff]
    %v1077 = vld [vmem:[#allocation2 + $0x2b8] sm:$0xff]
    %v1078 = vld [vmem:[#allocation2 + $0x2c0] sm:$0xff]
    %v1079 = vld [vmem:[#allocation2 + $0x2c8] sm:$0xff]
    %v1080 = vld [vmem:[#allocation2 + $0x2d0] sm:$0xff]
    %v1081 = vld [vmem:[#allocation2 + $0x2d8] sm:$0xff]
    %v1082 = vld [vmem:[#allocation2 + $0x2e0] sm:$0xff]
    %v1083 = vld [vmem:[#allocation2 + $0x2e8] sm:$0xff]
    %v1084 = vld [vmem:[#allocation2 + $0x2f0] sm:$0xff]
    %v1085 = vld [vmem:[#allocation2 + $0x2f8] sm:$0xff]
    %v1086 = vld [vmem:[#allocation2 + $0x300] sm:$0xff]
    %v1087 = vld [vmem:[#allocation2 + $0x308] sm:$0xff]
    %v1088 = vld [vmem:[#allocation2 + $0x310] sm:$0xff]
    %v1089 = vld [vmem:[#allocation2 + $0x318] sm:$0xff]
    %v1090 = vld [vmem:[#allocation2 + $0x320] sm:$0xff]
    %v1091 = vld [vmem:[#allocation2 + $0x328] sm:$0xff]
    %v1092 = vld [vmem:[#allocation2 + $0x330] sm:$0xff]
    %v1093 = vld [vmem:[#allocation2 + $0x338] sm:$0xff]
    %v1094 = vld [vmem:[#allocation2 + $0x340] sm:$0xff]
    %v1095 = vld [vmem:[#allocation2 + $0x348] sm:$0xff]
    %v1096 = vld [vmem:[#allocation2 + $0x350] sm:$0xff]
    %v1097 = vld [vmem:[#allocation2 + $0x358] sm:$0xff]
    %v1098 = vld [vmem:[#allocation2 + $0x360] sm:$0xff]
    %v1099 = vld [vmem:[#allocation2 + $0x368] sm:$0xff]
    %v1100 = vld [vmem:[#allocation2 + $0x370] sm:$0xff]
    %v1101 = vld [vmem:[#allocation2 + $0x378] sm:$0xff]
    %v1102 = vld [vmem:[#allocation2 + $0x380] sm:$0xff]
    %v1103 = vld [vmem:[#allocation2 + $0x388] sm:$0xff]
    %v1104 = vld [vmem:[#allocation2 + $0x390] sm:$0xff]
    %v1105 = vld [vmem:[#allocation2 + $0x398] sm:$0xff]
    %v1106 = vld [vmem:[#allocation2 + $0x3a0] sm:$0xff]
    %v1107 = vld [vmem:[#allocation2 + $0x3a8] sm:$0xff]
    %v1108 = vld [vmem:[#allocation2 + $0x3b0] sm:$0xff]
    %v1109 = vld [vmem:[#allocation2 + $0x3b8] sm:$0xff]
    %v1110 = vld [vmem:[#allocation2 + $0x3c0] sm:$0xff]
    %v1111 = vld [vmem:[#allocation2 + $0x3c8] sm:$0xff]
    %v1112 = vld [vmem:[#allocation2 + $0x3d0] sm:$0xff]
    %v1113 = vld [vmem:[#allocation2 + $0x3d8] sm:$0xff]
    %v1114 = vld [vmem:[#allocation2 + $0x3e0] sm:$0xff]
    %v1115 = vld [vmem:[#allocation2 + $0x3e8] sm:$0xff]
    %v1116 = vld [vmem:[#allocation2 + $0x3f0] sm:$0xff]
    %v1117 = vld [vmem:[#allocation2 + $0x3f8] sm:$0xff]
    %v1118 = vld [vmem:[#allocation2 + $0x400] sm:$0xff]
    %v1119 = vld [vmem:[#allocation2 + $0x408] sm:$0xff]
    %v1120 = vld [vmem:[#allocation2 + $0x410] sm:$0xff]
    %v1121 = vld [vmem:[#allocation2 + $0x418] sm:$0xff]
    %v1122 = vld [vmem:[#allocation2 + $0x420] sm:$0xff]
    %v1123 = vld [vmem:[#allocation2 + $0x428] sm:$0xff]
    %v1124 = vld [vmem:[#allocation2 + $0x430] sm:$0xff]
    %v1125 = vld [vmem:[#allocation2 + $0x438] sm:$0xff]
    %v1126 = vld [vmem:[#allocation2 + $0x440] sm:$0xff]
    %v1127 = vld [vmem:[#allocation2 + $0x448] sm:$0xff]
    %v1128 = vld [vmem:[#allocation2 + $0x450] sm:$0xff]
    %v1129 = vld [vmem:[#allocation2 + $0x458] sm:$0xff]
    %v1130 = vld [vmem:[#allocation2 + $0x460] sm:$0xff]
    %v1131 = vld [vmem:[#allocation2 + $0x468] sm:$0xff]
    %v1132 = vld [vmem:[#allocation2 + $0x470] sm:$0xff]
    %v1133 = vld [vmem:[#allocation2 + $0x478] sm:$0xff]
    %v1134 = vld [vmem:[#allocation2 + $0x480] sm:$0xff]
    %v1135 = vld [vmem:[#allocation2 + $0x488] sm:$0xff]
    %v1136 = vld [vmem:[#allocation2 + $0x490] sm:$0xff]
    %v1137 = vld [vmem:[#allocation2 + $0x498] sm:$0xff]
    %v1138 = vld [vmem:[#allocation2 + $0x4a0] sm:$0xff]
    %v1139 = vld [vmem:[#allocation2 + $0x4a8] sm:$0xff]
    %v1140 = vld [vmem:[#allocation2 + $0x4b0] sm:$0xff]
    %v1141 = vld [vmem:[#allocation2 + $0x4b8] sm:$0xff]
    %v1142 = vld [vmem:[#allocation2 + $0x4c0] sm:$0xff]
    %v1143 = vld [vmem:[#allocation2 + $0x4c8] sm:$0xff]
    %v1144 = vld [vmem:[#allocation2 + $0x4d0] sm:$0xff]
    %v1145 = vld [vmem:[#allocation2 + $0x4d8] sm:$0xff]
    %v1146 = vld [vmem:[#allocation2 + $0x4e0] sm:$0xff]
    %v1147 = vld [vmem:[#allocation2 + $0x4e8] sm:$0xff]
    %v1148 = vld [vmem:[#allocation2 + $0x4f0] sm:$0xff]
    %v1149 = vld [vmem:[#allocation2 + $0x4f8] sm:$0xff]
    %v1150 = vld [vmem:[#allocation2 + $0x500] sm:$0xff]
    %v1151 = vld [vmem:[#allocation2 + $0x508] sm:$0xff]
    %v1152 = vld [vmem:[#allocation2 + $0x510] sm:$0xff]
    %v1153 = vld [vmem:[#allocation2 + $0x518] sm:$0xff]
    %v1154 = vld [vmem:[#allocation2 + $0x520] sm:$0xff]
    %v1155 = vld [vmem:[#allocation2 + $0x528] sm:$0xff]
    %v1156 = vld [vmem:[#allocation2 + $0x530] sm:$0xff]
    %v1157 = vld [vmem:[#allocation2 + $0x538] sm:$0xff]
    %v1158 = vld [vmem:[#allocation2 + $0x540] sm:$0xff]
    %v1159 = vld [vmem:[#allocation2 + $0x548] sm:$0xff]
    %v1160 = vld [vmem:[#allocation2 + $0x550] sm:$0xff]
    %v1161 = vld [vmem:[#allocation2 + $0x558] sm:$0xff]
    %v1162 = vld [vmem:[#allocation2 + $0x560] sm:$0xff]
    %v1163 = vld [vmem:[#allocation2 + $0x568] sm:$0xff]
    %v1164 = vld [vmem:[#allocation2 + $0x570] sm:$0xff]
    %v1165 = vld [vmem:[#allocation2 + $0x578] sm:$0xff]
    %v1166 = vld [vmem:[#allocation2 + $0x580] sm:$0xff]
    %v1167 = vld [vmem:[#allocation2 + $0x588] sm:$0xff]
    %v1168 = vld [vmem:[#allocation2 + $0x590] sm:$0xff]
    %v1169 = vld [vmem:[#allocation2 + $0x598] sm:$0xff]
    %v1170 = vld [vmem:[#allocation2 + $0x5a0] sm:$0xff]
    %v1171 = vld [vmem:[#allocation2 + $0x5a8] sm:$0xff]
    %v1172 = vld [vmem:[#allocation2 + $0x5b0] sm:$0xff]
    %v1173 = vld [vmem:[#allocation2 + $0x5b8] sm:$0xff]
    %v1174 = vld [vmem:[#allocation2 + $0x5c0] sm:$0xff]
    %v1175 = vld [vmem:[#allocation2 + $0x5c8] sm:$0xff]
    %v1176 = vld [vmem:[#allocation2 + $0x5d0] sm:$0xff]
    %v1177 = vld [vmem:[#allocation2 + $0x5d8] sm:$0xff]
    %v1178 = vld [vmem:[#allocation2 + $0x5e0] sm:$0xff]
    %v1179 = vld [vmem:[#allocation2 + $0x5e8] sm:$0xff]
    %v1180 = vld [vmem:[#allocation2 + $0x5f0] sm:$0xff]
    %v1181 = vld [vmem:[#allocation2 + $0x5f8] sm:$0xff]
    %v1182 = vld [vmem:[#allocation2 + $0x600] sm:$0xff]
    %v1183 = vld [vmem:[#allocation2 + $0x608] sm:$0xff]
    %v1184 = vld [vmem:[#allocation2 + $0x610] sm:$0xff]
    %v1185 = vld [vmem:[#allocation2 + $0x618] sm:$0xff]
    %v1186 = vld [vmem:[#allocation2 + $0x620] sm:$0xff]
    %v1187 = vld [vmem:[#allocation2 + $0x628] sm:$0xff]
    %v1188 = vld [vmem:[#allocation2 + $0x630] sm:$0xff]
    %v1189 = vld [vmem:[#allocation2 + $0x638] sm:$0xff]
    %v1190 = vld [vmem:[#allocation2 + $0x640] sm:$0xff]
    %v1191 = vld [vmem:[#allocation2 + $0x648] sm:$0xff]
    %v1192 = vld [vmem:[#allocation2 + $0x650] sm:$0xff]
    %v1193 = vld [vmem:[#allocation2 + $0x658] sm:$0xff]
    %v1194 = vld [vmem:[#allocation2 + $0x660] sm:$0xff]
    %v1195 = vld [vmem:[#allocation2 + $0x668] sm:$0xff]
    %v1196 = vld [vmem:[#allocation2 + $0x670] sm:$0xff]
    %v1197 = vld [vmem:[#allocation2 + $0x678] sm:$0xff]
    %v1198 = vld [vmem:[#allocation2 + $0x680] sm:$0xff]
    %v1199 = vld [vmem:[#allocation2 + $0x688] sm:$0xff]
    %v1200 = vld [vmem:[#allocation2 + $0x690] sm:$0xff]
    %v1201 = vld [vmem:[#allocation2 + $0x698] sm:$0xff]
    %v1202 = vld [vmem:[#allocation2 + $0x6a0] sm:$0xff]
    %v1203 = vld [vmem:[#allocation2 + $0x6a8] sm:$0xff]
    %v1204 = vld [vmem:[#allocation2 + $0x6b0] sm:$0xff]
    %v1205 = vld [vmem:[#allocation2 + $0x6b8] sm:$0xff]
    %v1206 = vld [vmem:[#allocation2 + $0x6c0] sm:$0xff]
    %v1207 = vld [vmem:[#allocation2 + $0x6c8] sm:$0xff]
    %v1208 = vld [vmem:[#allocation2 + $0x6d0] sm:$0xff]
    %v1209 = vld [vmem:[#allocation2 + $0x6d8] sm:$0xff]
    %v1210 = vld [vmem:[#allocation2 + $0x6e0] sm:$0xff]
    %v1211 = vld [vmem:[#allocation2 + $0x6e8] sm:$0xff]
    %v1212 = vld [vmem:[#allocation2 + $0x6f0] sm:$0xff]
    %v1213 = vld [vmem:[#allocation2 + $0x6f8] sm:$0xff]
    %v1214 = vld [vmem:[#allocation2 + $0x700] sm:$0xff]
    %v1215 = vld [vmem:[#allocation2 + $0x708] sm:$0xff]
    %v1216 = vld [vmem:[#allocation2 + $0x710] sm:$0xff]
    %v1217 = vld [vmem:[#allocation2 + $0x718] sm:$0xff]
    %v1218 = vld [vmem:[#allocation2 + $0x720] sm:$0xff]
    %v1219 = vld [vmem:[#allocation2 + $0x728] sm:$0xff]
    %v1220 = vld [vmem:[#allocation2 + $0x730] sm:$0xff]
    %v1221 = vld [vmem:[#allocation2 + $0x738] sm:$0xff]
    %v1222 = vld [vmem:[#allocation2 + $0x740] sm:$0xff]
    %v1223 = vld [vmem:[#allocation2 + $0x748] sm:$0xff]
    %v1224 = vld [vmem:[#allocation2 + $0x750] sm:$0xff]
    %v1225 = vld [vmem:[#allocation2 + $0x758] sm:$0xff]
    %v1226 = vld [vmem:[#allocation2 + $0x760] sm:$0xff]
    %v1227 = vld [vmem:[#allocation2 + $0x768] sm:$0xff]
    %v1228 = vld [vmem:[#allocation2 + $0x770] sm:$0xff]
    %v1229 = vld [vmem:[#allocation2 + $0x778] sm:$0xff]
    %v1230 = vld [vmem:[#allocation2 + $0x780] sm:$0xff]
    %v1231 = vld [vmem:[#allocation2 + $0x788] sm:$0xff]
    %v1232 = vld [vmem:[#allocation2 + $0x790] sm:$0xff]
    %v1233 = vld [vmem:[#allocation2 + $0x798] sm:$0xff]
    %v1234 = vld [vmem:[#allocation2 + $0x7a0] sm:$0xff]
    %v1235 = vld [vmem:[#allocation2 + $0x7a8] sm:$0xff]
    %v1236 = vld [vmem:[#allocation2 + $0x7b0] sm:$0xff]
    %v1237 = vld [vmem:[#allocation2 + $0x7b8] sm:$0xff]
    %v1238 = vld [vmem:[#allocation2 + $0x7c0] sm:$0xff]
    %v1239 = vld [vmem:[#allocation2 + $0x7c8] sm:$0xff]
    %v1240 = vld [vmem:[#allocation2 + $0x7d0] sm:$0xff]
    %v1241 = vld [vmem:[#allocation2 + $0x7d8] sm:$0xff]
    %v1242 = vld [vmem:[#allocation2 + $0x7e0] sm:$0xff]
    %v1243 = vld [vmem:[#allocation2 + $0x7e8] sm:$0xff]
    %v1244 = vld [vmem:[#allocation2 + $0x7f0] sm:$0xff]
    %v1245 = vld [vmem:[#allocation2 + $0x7f8] sm:$0xff]
    %v1246 = vld [vmem:[%s4] sm:$0xf]
    %v1248 = vperm.slane %v1246, 0
    %v1249 = vperm.slane %v1246, 1
    %v1250 = vperm.slane %v1246, 2
    %v1251 = vperm.slane %v1246, 3
    %v1256 = vand.u32 %v1050, 4294901760
    %1257 = vmatpush.msra.mxu0 %v1256
    %v1258 = vand.u32 %v1046, 4294901760
    %1259 = vmatpush.msra.mxu0 %v1258
    %v1260 = vand.u32 %v1042, 4294901760
    %1261 = vmatpush.msra.mxu0 %v1260
    %v1262 = vand.u32 %v1038, 4294901760
    %1263 = vmatpush.msra.mxu0 %v1262
    %v1264 = vand.u32 %v1034, 4294901760
    %1265 = vmatpush.msra.mxu0 %v1264
    %v1266 = vand.u32 %v1030, 4294901760
    %1267 = vmatpush.msra.mxu0 %v1266
    %v1268 = vand.u32 %v1026, 4294901760
    %1269 = vmatpush.msra.mxu0 %v1268
    %v1270 = vand.u32 %v1022, 4294901760
    %1271 = vmatpush.msra.mxu0 %v1270
    %v1272 = vand.u32 %v1018, 4294901760
    %1273 = vmatpush.msra.mxu0 %v1272
    %v1274 = vand.u32 %v1014, 4294901760
    %1275 = vmatpush.msra.mxu0 %v1274
    %v1276 = vand.u32 %v1010, 4294901760
    %1277 = vmatpush.msra.mxu0 %v1276
    %v1278 = vand.u32 %v1006, 4294901760
    %1279 = vmatpush.msra.mxu0 %v1278
    %v1280 = vand.u32 %v1002, 4294901760
    %1281 = vmatpush.msra.mxu0 %v1280
    %v1282 = vand.u32 %v998, 4294901760
    %1283 = vmatpush.msra.mxu0 %v1282
    %v1284 = vand.u32 %v994, 4294901760
    %1285 = vmatpush.msra.mxu0 %v1284
    %v1286 = vand.u32 %v990, 4294901760
    %1287 = vmatpush.msra.mxu0 %v1286
    %v1288 = vand.u32 %v986, 4294901760
    %v1289 = vsub.f32 %v986, %v1288
    %v1290 = vand.u32 %v1289, 4294901760
    %v1291 = vsub.f32 %v1289, %v1290
    %v1292 = vand.u32 %v1291, 4294901760
    %1293 = vmatmul.f32.gmra.mxu0 %v1292
    %v1294 = vpop.f32.mrf.mxu0
    %v1295 = vadd.f32 %v1248, %v1294
    %1296 = vdwg.mxu0
    %v1297 = vand.u32 %v1050, 4294901760
    %v1298 = vsub.f32 %v1050, %v1297
    %v1299 = vand.u32 %v1298, 4294901760
    %v1300 = vsub.f32 %v1298, %v1299
    %v1301 = vand.u32 %v1300, 4294901760
    %1302 = vmatpush.msra.mxu0 %v1301
    %v1303 = vand.u32 %v1046, 4294901760
    %v1304 = vsub.f32 %v1046, %v1303
    %v1305 = vand.u32 %v1304, 4294901760
    %v1306 = vsub.f32 %v1304, %v1305
    %v1307 = vand.u32 %v1306, 4294901760
    %1308 = vmatpush.msra.mxu0 %v1307
    %v1309 = vand.u32 %v1042, 4294901760
    %v1310 = vsub.f32 %v1042, %v1309
    %v1311 = vand.u32 %v1310, 4294901760
    %v1312 = vsub.f32 %v1310, %v1311
    %v1313 = vand.u32 %v1312, 4294901760
    %1314 = vmatpush.msra.mxu0 %v1313
    %v1315 = vand.u32 %v1038, 4294901760
    %v1316 = vsub.f32 %v1038, %v1315
    %v1317 = vand.u32 %v1316, 4294901760
    %v1318 = vsub.f32 %v1316, %v1317
    %v1319 = vand.u32 %v1318, 4294901760
    %1320 = vmatpush.msra.mxu0 %v1319
    %v1321 = vand.u32 %v1034, 4294901760
    %v1322 = vsub.f32 %v1034, %v1321
    %v1323 = vand.u32 %v1322, 4294901760
    %v1324 = vsub.f32 %v1322, %v1323
    %v1325 = vand.u32 %v1324, 4294901760
    %1326 = vmatpush.msra.mxu0 %v1325
    %v1327 = vand.u32 %v1030, 4294901760
    %v1328 = vsub.f32 %v1030, %v1327
    %v1329 = vand.u32 %v1328, 4294901760
    %v1330 = vsub.f32 %v1328, %v1329
    %v1331 = vand.u32 %v1330, 4294901760
    %1332 = vmatpush.msra.mxu0 %v1331
    %v1333 = vand.u32 %v1026, 4294901760
    %v1334 = vsub.f32 %v1026, %v1333
    %v1335 = vand.u32 %v1334, 4294901760
    %v1336 = vsub.f32 %v1334, %v1335
    %v1337 = vand.u32 %v1336, 4294901760
    %1338 = vmatpush.msra.mxu0 %v1337
    %v1339 = vand.u32 %v1022, 4294901760
    %v1340 = vsub.f32 %v1022, %v1339
    %v1341 = vand.u32 %v1340, 4294901760
    %v1342 = vsub.f32 %v1340, %v1341
    %v1343 = vand.u32 %v1342, 4294901760
    %1344 = vmatpush.msra.mxu0 %v1343
    %v1345 = vand.u32 %v1018, 4294901760
    %v1346 = vsub.f32 %v1018, %v1345
    %v1347 = vand.u32 %v1346, 4294901760
    %v1348 = vsub.f32 %v1346, %v1347
    %v1349 = vand.u32 %v1348, 4294901760
    %1350 = vmatpush.msra.mxu0 %v1349
    %v1351 = vand.u32 %v1014, 4294901760
    %v1352 = vsub.f32 %v1014, %v1351
    %v1353 = vand.u32 %v1352, 4294901760
    %v1354 = vsub.f32 %v1352, %v1353
    %v1355 = vand.u32 %v1354, 4294901760
    %1356 = vmatpush.msra.mxu0 %v1355
    %v1357 = vand.u32 %v1010, 4294901760
    %v1358 = vsub.f32 %v1010, %v1357
    %v1359 = vand.u32 %v1358, 4294901760
    %v1360 = vsub.f32 %v1358, %v1359
    %v1361 = vand.u32 %v1360, 4294901760
    %1362 = vmatpush.msra.mxu0 %v1361
    %v1363 = vand.u32 %v1006, 4294901760
    %v1364 = vsub.f32 %v1006, %v1363
    %v1365 = vand.u32 %v1364, 4294901760
    %v1366 = vsub.f32 %v1364, %v1365
    %v1367 = vand.u32 %v1366, 4294901760
    %1368 = vmatpush.msra.mxu0 %v1367
    %v1369 = vand.u32 %v1002, 4294901760
    %v1370 = vsub.f32 %v1002, %v1369
    %v1371 = vand.u32 %v1370, 4294901760
    %v1372 = vsub.f32 %v1370, %v1371
    %v1373 = vand.u32 %v1372, 4294901760
    %1374 = vmatpush.msra.mxu0 %v1373
    %v1375 = vand.u32 %v998, 4294901760
    %v1376 = vsub.f32 %v998, %v1375
    %v1377 = vand.u32 %v1376, 4294901760
    %v1378 = vsub.f32 %v1376, %v1377
    %v1379 = vand.u32 %v1378, 4294901760
    %1380 = vmatpush.msra.mxu0 %v1379
    %v1381 = vand.u32 %v994, 4294901760
    %v1382 = vsub.f32 %v994, %v1381
    %v1383 = vand.u32 %v1382, 4294901760
    %v1384 = vsub.f32 %v1382, %v1383
    %v1385 = vand.u32 %v1384, 4294901760
    %1386 = vmatpush.msra.mxu0 %v1385
    %v1387 = vand.u32 %v990, 4294901760
    %v1388 = vsub.f32 %v990, %v1387
    %v1389 = vand.u32 %v1388, 4294901760
    %v1390 = vsub.f32 %v1388, %v1389
    %v1391 = vand.u32 %v1390, 4294901760
    %1392 = vmatpush.msra.mxu0 %v1391
    %v1393 = vand.u32 %v986, 4294901760
    %1394 = vmatmul.f32.gmra.mxu0 %v1393
    %v1395 = vpop.f32.mrf.mxu0
    %v1396 = vadd.f32 %v1295, %v1395
    %1397 = vdwg.mxu0
    %v1398 = vand.u32 %v1050, 4294901760
    %v1399 = vsub.f32 %v1050, %v1398
    %1400 = vmatpush.msra.mxu0 %v1399
    %v1401 = vand.u32 %v1046, 4294901760
    %v1402 = vsub.f32 %v1046, %v1401
    %1403 = vmatpush.msra.mxu0 %v1402
    %v1404 = vand.u32 %v1042, 4294901760
    %v1405 = vsub.f32 %v1042, %v1404
    %1406 = vmatpush.msra.mxu0 %v1405
    %v1407 = vand.u32 %v1038, 4294901760
    %v1408 = vsub.f32 %v1038, %v1407
    %1409 = vmatpush.msra.mxu0 %v1408
    %v1410 = vand.u32 %v1034, 4294901760
    %v1411 = vsub.f32 %v1034, %v1410
    %1412 = vmatpush.msra.mxu0 %v1411
    %v1413 = vand.u32 %v1030, 4294901760
    %v1414 = vsub.f32 %v1030, %v1413
    %1415 = vmatpush.msra.mxu0 %v1414
    %v1416 = vand.u32 %v1026, 4294901760
    %v1417 = vsub.f32 %v1026, %v1416
    %1418 = vmatpush.msra.mxu0 %v1417
    %v1419 = vand.u32 %v1022, 4294901760
    %v1420 = vsub.f32 %v1022, %v1419
    %1421 = vmatpush.msra.mxu0 %v1420
    %v1422 = vand.u32 %v1018, 4294901760
    %v1423 = vsub.f32 %v1018, %v1422
    %1424 = vmatpush.msra.mxu0 %v1423
    %v1425 = vand.u32 %v1014, 4294901760
    %v1426 = vsub.f32 %v1014, %v1425
    %1427 = vmatpush.msra.mxu0 %v1426
    %v1428 = vand.u32 %v1010, 4294901760
    %v1429 = vsub.f32 %v1010, %v1428
    %1430 = vmatpush.msra.mxu0 %v1429
    %v1431 = vand.u32 %v1006, 4294901760
    %v1432 = vsub.f32 %v1006, %v1431
    %1433 = vmatpush.msra.mxu0 %v1432
    %v1434 = vand.u32 %v1002, 4294901760
    %v1435 = vsub.f32 %v1002, %v1434
    %1436 = vmatpush.msra.mxu0 %v1435
    %v1437 = vand.u32 %v998, 4294901760
    %v1438 = vsub.f32 %v998, %v1437
    %1439 = vmatpush.msra.mxu0 %v1438
    %v1440 = vand.u32 %v994, 4294901760
    %v1441 = vsub.f32 %v994, %v1440
    %1442 = vmatpush.msra.mxu0 %v1441
    %v1443 = vand.u32 %v990, 4294901760
    %v1444 = vsub.f32 %v990, %v1443
    %1445 = vmatpush.msra.mxu0 %v1444
    %v1446 = vand.u32 %v986, 4294901760
    %v1447 = vsub.f32 %v986, %v1446
    %1448 = vmatmul.f32.gmra.mxu0 %v1447
    %v1449 = vpop.f32.mrf.mxu0
    %v1450 = vadd.f32 %v1396, %v1449
    %1451 = vdwg.mxu0
    %v1452 = vand.u32 %v1050, 4294901760
    %1453 = vmatpush.msra.mxu0 %v1452
    %v1454 = vand.u32 %v1046, 4294901760
    %1455 = vmatpush.msra.mxu0 %v1454
    %v1456 = vand.u32 %v1042, 4294901760
    %1457 = vmatpush.msra.mxu0 %v1456
    %v1458 = vand.u32 %v1038, 4294901760
    %1459 = vmatpush.msra.mxu0 %v1458
    %v1460 = vand.u32 %v1034, 4294901760
    %1461 = vmatpush.msra.mxu0 %v1460
    %v1462 = vand.u32 %v1030, 4294901760
    %1463 = vmatpush.msra.mxu0 %v1462
    %v1464 = vand.u32 %v1026, 4294901760
    %1465 = vmatpush.msra.mxu0 %v1464
    %v1466 = vand.u32 %v1022, 4294901760
    %1467 = vmatpush.msra.mxu0 %v1466
    %v1468 = vand.u32 %v1018, 4294901760
    %1469 = vmatpush.msra.mxu0 %v1468
    %v1470 = vand.u32 %v1014, 4294901760
    %1471 = vmatpush.msra.mxu0 %v1470
    %v1472 = vand.u32 %v1010, 4294901760
    %1473 = vmatpush.msra.mxu0 %v1472
    %v1474 = vand.u32 %v1006, 4294901760
    %1475 = vmatpush.msra.mxu0 %v1474
    %v1476 = vand.u32 %v1002, 4294901760
    %1477 = vmatpush.msra.mxu0 %v1476
    %v1478 = vand.u32 %v998, 4294901760
    %1479 = vmatpush.msra.mxu0 %v1478
    %v1480 = vand.u32 %v994, 4294901760
    %1481 = vmatpush.msra.mxu0 %v1480
    %v1482 = vand.u32 %v990, 4294901760
    %1483 = vmatpush.msra.mxu0 %v1482
    %v1484 = vand.u32 %v986, 4294901760
    %v1485 = vsub.f32 %v986, %v1484
    %v1486 = vand.u32 %v1485, 4294901760
    %1487 = vmatmul.f32.gmra.mxu0 %v1486
    %v1488 = vpop.f32.mrf.mxu0
    %v1489 = vadd.f32 %v1450, %v1488
    %1490 = vdwg.mxu0
    %v1491 = vand.u32 %v1050, 4294901760
    %v1492 = vsub.f32 %v1050, %v1491
    %v1493 = vand.u32 %v1492, 4294901760
    %1494 = vmatpush.msra.mxu0 %v1493
    %v1495 = vand.u32 %v1046, 4294901760
    %v1496 = vsub.f32 %v1046, %v1495
    %v1497 = vand.u32 %v1496, 4294901760
    %1498 = vmatpush.msra.mxu0 %v1497
    %v1499 = vand.u32 %v1042, 4294901760
    %v1500 = vsub.f32 %v1042, %v1499
    %v1501 = vand.u32 %v1500, 4294901760
    %1502 = vmatpush.msra.mxu0 %v1501
    %v1503 = vand.u32 %v1038, 4294901760
    %v1504 = vsub.f32 %v1038, %v1503
    %v1505 = vand.u32 %v1504, 4294901760
    %1506 = vmatpush.msra.mxu0 %v1505
    %v1507 = vand.u32 %v1034, 4294901760
    %v1508 = vsub.f32 %v1034, %v1507
    %v1509 = vand.u32 %v1508, 4294901760
    %1510 = vmatpush.msra.mxu0 %v1509
    %v1511 = vand.u32 %v1030, 4294901760
    %v1512 = vsub.f32 %v1030, %v1511
    %v1513 = vand.u32 %v1512, 4294901760
    %1514 = vmatpush.msra.mxu0 %v1513
    %v1515 = vand.u32 %v1026, 4294901760
    %v1516 = vsub.f32 %v1026, %v1515
    %v1517 = vand.u32 %v1516, 4294901760
    %1518 = vmatpush.msra.mxu0 %v1517
    %v1519 = vand.u32 %v1022, 4294901760
    %v1520 = vsub.f32 %v1022, %v1519
    %v1521 = vand.u32 %v1520, 4294901760
    %1522 = vmatpush.msra.mxu0 %v1521
    %v1523 = vand.u32 %v1018, 4294901760
    %v1524 = vsub.f32 %v1018, %v1523
    %v1525 = vand.u32 %v1524, 4294901760
    %1526 = vmatpush.msra.mxu0 %v1525
    %v1527 = vand.u32 %v1014, 4294901760
    %v1528 = vsub.f32 %v1014, %v1527
    %v1529 = vand.u32 %v1528, 4294901760
    %1530 = vmatpush.msra.mxu0 %v1529
    %v1531 = vand.u32 %v1010, 4294901760
    %v1532 = vsub.f32 %v1010, %v1531
    %v1533 = vand.u32 %v1532, 4294901760
    %1534 = vmatpush.msra.mxu0 %v1533
    %v1535 = vand.u32 %v1006, 4294901760
    %v1536 = vsub.f32 %v1006, %v1535
    %v1537 = vand.u32 %v1536, 4294901760
    %1538 = vmatpush.msra.mxu0 %v1537
    %v1539 = vand.u32 %v1002, 4294901760
    %v1540 = vsub.f32 %v1002, %v1539
    %v1541 = vand.u32 %v1540, 4294901760
    %1542 = vmatpush.msra.mxu0 %v1541
    %v1543 = vand.u32 %v998, 4294901760
    %v1544 = vsub.f32 %v998, %v1543
    %v1545 = vand.u32 %v1544, 4294901760
    %1546 = vmatpush.msra.mxu0 %v1545
    %v1547 = vand.u32 %v994, 4294901760
    %v1548 = vsub.f32 %v994, %v1547
    %v1549 = vand.u32 %v1548, 4294901760
    %1550 = vmatpush.msra.mxu0 %v1549
    %v1551 = vand.u32 %v990, 4294901760
    %v1552 = vsub.f32 %v990, %v1551
    %v1553 = vand.u32 %v1552, 4294901760
    %1554 = vmatpush.msra.mxu0 %v1553
    %v1555 = vand.u32 %v986, 4294901760
    %1556 = vmatmul.f32.gmra.mxu0 %v1555
    %v1557 = vpop.f32.mrf.mxu0
    %v1558 = vadd.f32 %v1489, %v1557
    %1559 = vdwg.mxu0
    %v1560 = vand.u32 %v1050, 4294901760
    %1561 = vmatpush.msra.mxu0 %v1560
    %v1562 = vand.u32 %v1046, 4294901760
    %1563 = vmatpush.msra.mxu0 %v1562
    %v1564 = vand.u32 %v1042, 4294901760
    %1565 = vmatpush.msra.mxu0 %v1564
    %v1566 = vand.u32 %v1038, 4294901760
    %1567 = vmatpush.msra.mxu0 %v1566
    %v1568 = vand.u32 %v1034, 4294901760
    %1569 = vmatpush.msra.mxu0 %v1568
    %v1570 = vand.u32 %v1030, 4294901760
    %1571 = vmatpush.msra.mxu0 %v1570
    %v1572 = vand.u32 %v1026, 4294901760
    %1573 = vmatpush.msra.mxu0 %v1572
    %v1574 = vand.u32 %v1022, 4294901760
    %1575 = vmatpush.msra.mxu0 %v1574
    %v1576 = vand.u32 %v1018, 4294901760
    %1577 = vmatpush.msra.mxu0 %v1576
    %v1578 = vand.u32 %v1014, 4294901760
    %1579 = vmatpush.msra.mxu0 %v1578
    %v1580 = vand.u32 %v1010, 4294901760
    %1581 = vmatpush.msra.mxu0 %v1580
    %v1582 = vand.u32 %v1006, 4294901760
    %1583 = vmatpush.msra.mxu0 %v1582
    %v1584 = vand.u32 %v1002, 4294901760
    %1585 = vmatpush.msra.mxu0 %v1584
    %v1586 = vand.u32 %v998, 4294901760
    %1587 = vmatpush.msra.mxu0 %v1586
    %v1588 = vand.u32 %v994, 4294901760
    %1589 = vmatpush.msra.mxu0 %v1588
    %v1590 = vand.u32 %v990, 4294901760
    %1591 = vmatpush.msra.mxu0 %v1590
    %v1592 = vand.u32 %v986, 4294901760
    %1593 = vmatmul.f32.gmra.mxu0 %v1592
    %v1594 = vpop.f32.mrf.mxu0
    %v1595 = vadd.f32 %v1558, %v1594
    %1596 = vdwg.mxu0
    %v1597 = vand.u32 %v1114, 4294901760
    %1598 = vmatpush.msra.mxu0 %v1597
    %v1599 = vand.u32 %v1110, 4294901760
    %1600 = vmatpush.msra.mxu0 %v1599
    %v1601 = vand.u32 %v1106, 4294901760
    %1602 = vmatpush.msra.mxu0 %v1601
    %v1603 = vand.u32 %v1102, 4294901760
    %1604 = vmatpush.msra.mxu0 %v1603
    %v1605 = vand.u32 %v1098, 4294901760
    %1606 = vmatpush.msra.mxu0 %v1605
    %v1607 = vand.u32 %v1094, 4294901760
    %1608 = vmatpush.msra.mxu0 %v1607
    %v1609 = vand.u32 %v1090, 4294901760
    %1610 = vmatpush.msra.mxu0 %v1609
    %v1611 = vand.u32 %v1086, 4294901760
    %1612 = vmatpush.msra.mxu0 %v1611
    %v1613 = vand.u32 %v1082, 4294901760
    %1614 = vmatpush.msra.mxu0 %v1613
    %v1615 = vand.u32 %v1078, 4294901760
    %1616 = vmatpush.msra.mxu0 %v1615
    %v1617 = vand.u32 %v1074, 4294901760
    %1618 = vmatpush.msra.mxu0 %v1617
    %v1619 = vand.u32 %v1070, 4294901760
    %1620 = vmatpush.msra.mxu0 %v1619
    %v1621 = vand.u32 %v1066, 4294901760
    %1622 = vmatpush.msra.mxu0 %v1621
    %v1623 = vand.u32 %v1062, 4294901760
    %1624 = vmatpush.msra.mxu0 %v1623
    %v1625 = vand.u32 %v1058, 4294901760
    %1626 = vmatpush.msra.mxu0 %v1625
    %v1627 = vand.u32 %v1054, 4294901760
    %1628 = vmatpush.msra.mxu0 %v1627
    %v1629 = vand.u32 %v987, 4294901760
    %v1630 = vsub.f32 %v987, %v1629
    %v1631 = vand.u32 %v1630, 4294901760
    %v1632 = vsub.f32 %v1630, %v1631
    %v1633 = vand.u32 %v1632, 4294901760
    %1634 = vmatmul.f32.gmra.mxu0 %v1633
    %v1635 = vpop.f32.mrf.mxu0
    %v1636 = vadd.f32 %v1595, %v1635
    %1637 = vdwg.mxu0
    %v1638 = vand.u32 %v1114, 4294901760
    %v1639 = vsub.f32 %v1114, %v1638
    %v1640 = vand.u32 %v1639, 4294901760
    %v1641 = vsub.f32 %v1639, %v1640
    %v1642 = vand.u32 %v1641, 4294901760
    %1643 = vmatpush.msra.mxu0 %v1642
    %v1644 = vand.u32 %v1110, 4294901760
    %v1645 = vsub.f32 %v1110, %v1644
    %v1646 = vand.u32 %v1645, 4294901760
    %v1647 = vsub.f32 %v1645, %v1646
    %v1648 = vand.u32 %v1647, 4294901760
    %1649 = vmatpush.msra.mxu0 %v1648
    %v1650 = vand.u32 %v1106, 4294901760
    %v1651 = vsub.f32 %v1106, %v1650
    %v1652 = vand.u32 %v1651, 4294901760
    %v1653 = vsub.f32 %v1651, %v1652
    %v1654 = vand.u32 %v1653, 4294901760
    %1655 = vmatpush.msra.mxu0 %v1654
    %v1656 = vand.u32 %v1102, 4294901760
    %v1657 = vsub.f32 %v1102, %v1656
    %v1658 = vand.u32 %v1657, 4294901760
    %v1659 = vsub.f32 %v1657, %v1658
    %v1660 = vand.u32 %v1659, 4294901760
    %1661 = vmatpush.msra.mxu0 %v1660
    %v1662 = vand.u32 %v1098, 4294901760
    %v1663 = vsub.f32 %v1098, %v1662
    %v1664 = vand.u32 %v1663, 4294901760
    %v1665 = vsub.f32 %v1663, %v1664
    %v1666 = vand.u32 %v1665, 4294901760
    %1667 = vmatpush.msra.mxu0 %v1666
    %v1668 = vand.u32 %v1094, 4294901760
    %v1669 = vsub.f32 %v1094, %v1668
    %v1670 = vand.u32 %v1669, 4294901760
    %v1671 = vsub.f32 %v1669, %v1670
    %v1672 = vand.u32 %v1671, 4294901760
    %1673 = vmatpush.msra.mxu0 %v1672
    %v1674 = vand.u32 %v1090, 4294901760
    %v1675 = vsub.f32 %v1090, %v1674
    %v1676 = vand.u32 %v1675, 4294901760
    %v1677 = vsub.f32 %v1675, %v1676
    %v1678 = vand.u32 %v1677, 4294901760
    %1679 = vmatpush.msra.mxu0 %v1678
    %v1680 = vand.u32 %v1086, 4294901760
    %v1681 = vsub.f32 %v1086, %v1680
    %v1682 = vand.u32 %v1681, 4294901760
    %v1683 = vsub.f32 %v1681, %v1682
    %v1684 = vand.u32 %v1683, 4294901760
    %1685 = vmatpush.msra.mxu0 %v1684
    %v1686 = vand.u32 %v1082, 4294901760
    %v1687 = vsub.f32 %v1082, %v1686
    %v1688 = vand.u32 %v1687, 4294901760
    %v1689 = vsub.f32 %v1687, %v1688
    %v1690 = vand.u32 %v1689, 4294901760
    %1691 = vmatpush.msra.mxu0 %v1690
    %v1692 = vand.u32 %v1078, 4294901760
    %v1693 = vsub.f32 %v1078, %v1692
    %v1694 = vand.u32 %v1693, 4294901760
    %v1695 = vsub.f32 %v1693, %v1694
    %v1696 = vand.u32 %v1695, 4294901760
    %1697 = vmatpush.msra.mxu0 %v1696
    %v1698 = vand.u32 %v1074, 4294901760
    %v1699 = vsub.f32 %v1074, %v1698
    %v1700 = vand.u32 %v1699, 4294901760
    %v1701 = vsub.f32 %v1699, %v1700
    %v1702 = vand.u32 %v1701, 4294901760
    %1703 = vmatpush.msra.mxu0 %v1702
    %v1704 = vand.u32 %v1070, 4294901760
    %v1705 = vsub.f32 %v1070, %v1704
    %v1706 = vand.u32 %v1705, 4294901760
    %v1707 = vsub.f32 %v1705, %v1706
    %v1708 = vand.u32 %v1707, 4294901760
    %1709 = vmatpush.msra.mxu0 %v1708
    %v1710 = vand.u32 %v1066, 4294901760
    %v1711 = vsub.f32 %v1066, %v1710
    %v1712 = vand.u32 %v1711, 4294901760
    %v1713 = vsub.f32 %v1711, %v1712
    %v1714 = vand.u32 %v1713, 4294901760
    %1715 = vmatpush.msra.mxu0 %v1714
    %v1716 = vand.u32 %v1062, 4294901760
    %v1717 = vsub.f32 %v1062, %v1716
    %v1718 = vand.u32 %v1717, 4294901760
    %v1719 = vsub.f32 %v1717, %v1718
    %v1720 = vand.u32 %v1719, 4294901760
    %1721 = vmatpush.msra.mxu0 %v1720
    %v1722 = vand.u32 %v1058, 4294901760
    %v1723 = vsub.f32 %v1058, %v1722
    %v1724 = vand.u32 %v1723, 4294901760
    %v1725 = vsub.f32 %v1723, %v1724
    %v1726 = vand.u32 %v1725, 4294901760
    %1727 = vmatpush.msra.mxu0 %v1726
    %v1728 = vand.u32 %v1054, 4294901760
    %v1729 = vsub.f32 %v1054, %v1728
    %v1730 = vand.u32 %v1729, 4294901760
    %v1731 = vsub.f32 %v1729, %v1730
    %v1732 = vand.u32 %v1731, 4294901760
    %1733 = vmatpush.msra.mxu0 %v1732
    %v1734 = vand.u32 %v987, 4294901760
    %1735 = vmatmul.f32.gmra.mxu0 %v1734
    %v1736 = vpop.f32.mrf.mxu0
    %v1737 = vadd.f32 %v1636, %v1736
    %1738 = vdwg.mxu0
    %v1739 = vand.u32 %v1114, 4294901760
    %v1740 = vsub.f32 %v1114, %v1739
    %1741 = vmatpush.msra.mxu0 %v1740
    %v1742 = vand.u32 %v1110, 4294901760
    %v1743 = vsub.f32 %v1110, %v1742
    %1744 = vmatpush.msra.mxu0 %v1743
    %v1745 = vand.u32 %v1106, 4294901760
    %v1746 = vsub.f32 %v1106, %v1745
    %1747 = vmatpush.msra.mxu0 %v1746
    %v1748 = vand.u32 %v1102, 4294901760
    %v1749 = vsub.f32 %v1102, %v1748
    %1750 = vmatpush.msra.mxu0 %v1749
    %v1751 = vand.u32 %v1098, 4294901760
    %v1752 = vsub.f32 %v1098, %v1751
    %1753 = vmatpush.msra.mxu0 %v1752
    %v1754 = vand.u32 %v1094, 4294901760
    %v1755 = vsub.f32 %v1094, %v1754
    %1756 = vmatpush.msra.mxu0 %v1755
    %v1757 = vand.u32 %v1090, 4294901760
    %v1758 = vsub.f32 %v1090, %v1757
    %1759 = vmatpush.msra.mxu0 %v1758
    %v1760 = vand.u32 %v1086, 4294901760
    %v1761 = vsub.f32 %v1086, %v1760
    %1762 = vmatpush.msra.mxu0 %v1761
    %v1763 = vand.u32 %v1082, 4294901760
    %v1764 = vsub.f32 %v1082, %v1763
    %1765 = vmatpush.msra.mxu0 %v1764
    %v1766 = vand.u32 %v1078, 4294901760
    %v1767 = vsub.f32 %v1078, %v1766
    %1768 = vmatpush.msra.mxu0 %v1767
    %v1769 = vand.u32 %v1074, 4294901760
    %v1770 = vsub.f32 %v1074, %v1769
    %1771 = vmatpush.msra.mxu0 %v1770
    %v1772 = vand.u32 %v1070, 4294901760
    %v1773 = vsub.f32 %v1070, %v1772
    %1774 = vmatpush.msra.mxu0 %v1773
    %v1775 = vand.u32 %v1066, 4294901760
    %v1776 = vsub.f32 %v1066, %v1775
    %1777 = vmatpush.msra.mxu0 %v1776
    %v1778 = vand.u32 %v1062, 4294901760
    %v1779 = vsub.f32 %v1062, %v1778
    %1780 = vmatpush.msra.mxu0 %v1779
    %v1781 = vand.u32 %v1058, 4294901760
    %v1782 = vsub.f32 %v1058, %v1781
    %1783 = vmatpush.msra.mxu0 %v1782
    %v1784 = vand.u32 %v1054, 4294901760
    %v1785 = vsub.f32 %v1054, %v1784
    %1786 = vmatpush.msra.mxu0 %v1785
    %v1787 = vand.u32 %v987, 4294901760
    %v1788 = vsub.f32 %v987, %v1787
    %1789 = vmatmul.f32.gmra.mxu0 %v1788
    %v1790 = vpop.f32.mrf.mxu0
    %v1791 = vadd.f32 %v1737, %v1790
    %1792 = vdwg.mxu0
    %v1793 = vand.u32 %v1114, 4294901760
    %1794 = vmatpush.msra.mxu0 %v1793
    %v1795 = vand.u32 %v1110, 4294901760
    %1796 = vmatpush.msra.mxu0 %v1795
    %v1797 = vand.u32 %v1106, 4294901760
    %1798 = vmatpush.msra.mxu0 %v1797
    %v1799 = vand.u32 %v1102, 4294901760
    %1800 = vmatpush.msra.mxu0 %v1799
    %v1801 = vand.u32 %v1098, 4294901760
    %1802 = vmatpush.msra.mxu0 %v1801
    %v1803 = vand.u32 %v1094, 4294901760
    %1804 = vmatpush.msra.mxu0 %v1803
    %v1805 = vand.u32 %v1090, 4294901760
    %1806 = vmatpush.msra.mxu0 %v1805
    %v1807 = vand.u32 %v1086, 4294901760
    %1808 = vmatpush.msra.mxu0 %v1807
    %v1809 = vand.u32 %v1082, 4294901760
    %1810 = vmatpush.msra.mxu0 %v1809
    %v1811 = vand.u32 %v1078, 4294901760
    %1812 = vmatpush.msra.mxu0 %v1811
    %v1813 = vand.u32 %v1074, 4294901760
    %1814 = vmatpush.msra.mxu0 %v1813
    %v1815 = vand.u32 %v1070, 4294901760
    %1816 = vmatpush.msra.mxu0 %v1815
    %v1817 = vand.u32 %v1066, 4294901760
    %1818 = vmatpush.msra.mxu0 %v1817
    %v1819 = vand.u32 %v1062, 4294901760
    %1820 = vmatpush.msra.mxu0 %v1819
    %v1821 = vand.u32 %v1058, 4294901760
    %1822 = vmatpush.msra.mxu0 %v1821
    %v1823 = vand.u32 %v1054, 4294901760
    %1824 = vmatpush.msra.mxu0 %v1823
    %v1825 = vand.u32 %v987, 4294901760
    %v1826 = vsub.f32 %v987, %v1825
    %v1827 = vand.u32 %v1826, 4294901760
    %1828 = vmatmul.f32.gmra.mxu0 %v1827
    %v1829 = vpop.f32.mrf.mxu0
    %v1830 = vadd.f32 %v1791, %v1829
    %1831 = vdwg.mxu0
    %v1832 = vand.u32 %v1114, 4294901760
    %v1833 = vsub.f32 %v1114, %v1832
    %v1834 = vand.u32 %v1833, 4294901760
    %1835 = vmatpush.msra.mxu0 %v1834
    %v1836 = vand.u32 %v1110, 4294901760
    %v1837 = vsub.f32 %v1110, %v1836
    %v1838 = vand.u32 %v1837, 4294901760
    %1839 = vmatpush.msra.mxu0 %v1838
    %v1840 = vand.u32 %v1106, 4294901760
    %v1841 = vsub.f32 %v1106, %v1840
    %v1842 = vand.u32 %v1841, 4294901760
    %1843 = vmatpush.msra.mxu0 %v1842
    %v1844 = vand.u32 %v1102, 4294901760
    %v1845 = vsub.f32 %v1102, %v1844
    %v1846 = vand.u32 %v1845, 4294901760
    %1847 = vmatpush.msra.mxu0 %v1846
    %v1848 = vand.u32 %v1098, 4294901760
    %v1849 = vsub.f32 %v1098, %v1848
    %v1850 = vand.u32 %v1849, 4294901760
    %1851 = vmatpush.msra.mxu0 %v1850
    %v1852 = vand.u32 %v1094, 4294901760
    %v1853 = vsub.f32 %v1094, %v1852
    %v1854 = vand.u32 %v1853, 4294901760
    %1855 = vmatpush.msra.mxu0 %v1854
    %v1856 = vand.u32 %v1090, 4294901760
    %v1857 = vsub.f32 %v1090, %v1856
    %v1858 = vand.u32 %v1857, 4294901760
    %1859 = vmatpush.msra.mxu0 %v1858
    %v1860 = vand.u32 %v1086, 4294901760
    %v1861 = vsub.f32 %v1086, %v1860
    %v1862 = vand.u32 %v1861, 4294901760
    %1863 = vmatpush.msra.mxu0 %v1862
    %v1864 = vand.u32 %v1082, 4294901760
    %v1865 = vsub.f32 %v1082, %v1864
    %v1866 = vand.u32 %v1865, 4294901760
    %1867 = vmatpush.msra.mxu0 %v1866
    %v1868 = vand.u32 %v1078, 4294901760
    %v1869 = vsub.f32 %v1078, %v1868
    %v1870 = vand.u32 %v1869, 4294901760
    %1871 = vmatpush.msra.mxu0 %v1870
    %v1872 = vand.u32 %v1074, 4294901760
    %v1873 = vsub.f32 %v1074, %v1872
    %v1874 = vand.u32 %v1873, 4294901760
    %1875 = vmatpush.msra.mxu0 %v1874
    %v1876 = vand.u32 %v1070, 4294901760
    %v1877 = vsub.f32 %v1070, %v1876
    %v1878 = vand.u32 %v1877, 4294901760
    %1879 = vmatpush.msra.mxu0 %v1878
    %v1880 = vand.u32 %v1066, 4294901760
    %v1881 = vsub.f32 %v1066, %v1880
    %v1882 = vand.u32 %v1881, 4294901760
    %1883 = vmatpush.msra.mxu0 %v1882
    %v1884 = vand.u32 %v1062, 4294901760
    %v1885 = vsub.f32 %v1062, %v1884
    %v1886 = vand.u32 %v1885, 4294901760
    %1887 = vmatpush.msra.mxu0 %v1886
    %v1888 = vand.u32 %v1058, 4294901760
    %v1889 = vsub.f32 %v1058, %v1888
    %v1890 = vand.u32 %v1889, 4294901760
    %1891 = vmatpush.msra.mxu0 %v1890
    %v1892 = vand.u32 %v1054, 4294901760
    %v1893 = vsub.f32 %v1054, %v1892
    %v1894 = vand.u32 %v1893, 4294901760
    %1895 = vmatpush.msra.mxu0 %v1894
    %v1896 = vand.u32 %v987, 4294901760
    %1897 = vmatmul.f32.gmra.mxu0 %v1896
    %v1898 = vpop.f32.mrf.mxu0
    %v1899 = vadd.f32 %v1830, %v1898
    %1900 = vdwg.mxu0
    %v1901 = vand.u32 %v1114, 4294901760
    %1902 = vmatpush.msra.mxu0 %v1901
    %v1903 = vand.u32 %v1110, 4294901760
    %1904 = vmatpush.msra.mxu0 %v1903
    %v1905 = vand.u32 %v1106, 4294901760
    %1906 = vmatpush.msra.mxu0 %v1905
    %v1907 = vand.u32 %v1102, 4294901760
    %1908 = vmatpush.msra.mxu0 %v1907
    %v1909 = vand.u32 %v1098, 4294901760
    %1910 = vmatpush.msra.mxu0 %v1909
    %v1911 = vand.u32 %v1094, 4294901760
    %1912 = vmatpush.msra.mxu0 %v1911
    %v1913 = vand.u32 %v1090, 4294901760
    %1914 = vmatpush.msra.mxu0 %v1913
    %v1915 = vand.u32 %v1086, 4294901760
    %1916 = vmatpush.msra.mxu0 %v1915
    %v1917 = vand.u32 %v1082, 4294901760
    %1918 = vmatpush.msra.mxu0 %v1917
    %v1919 = vand.u32 %v1078, 4294901760
    %1920 = vmatpush.msra.mxu0 %v1919
    %v1921 = vand.u32 %v1074, 4294901760
    %1922 = vmatpush.msra.mxu0 %v1921
    %v1923 = vand.u32 %v1070, 4294901760
    %1924 = vmatpush.msra.mxu0 %v1923
    %v1925 = vand.u32 %v1066, 4294901760
    %1926 = vmatpush.msra.mxu0 %v1925
    %v1927 = vand.u32 %v1062, 4294901760
    %1928 = vmatpush.msra.mxu0 %v1927
    %v1929 = vand.u32 %v1058, 4294901760
    %1930 = vmatpush.msra.mxu0 %v1929
    %v1931 = vand.u32 %v1054, 4294901760
    %1932 = vmatpush.msra.mxu0 %v1931
    %v1933 = vand.u32 %v987, 4294901760
    %1934 = vmatmul.f32.gmra.mxu0 %v1933
    %v1935 = vpop.f32.mrf.mxu0
    %v1936 = vadd.f32 %v1899, %v1935
    %1937 = vdwg.mxu0
    %v1938 = vand.u32 %v1178, 4294901760
    %1939 = vmatpush.msra.mxu0 %v1938
    %v1940 = vand.u32 %v1174, 4294901760
    %1941 = vmatpush.msra.mxu0 %v1940
    %v1942 = vand.u32 %v1170, 4294901760
    %1943 = vmatpush.msra.mxu0 %v1942
    %v1944 = vand.u32 %v1166, 4294901760
    %1945 = vmatpush.msra.mxu0 %v1944
    %v1946 = vand.u32 %v1162, 4294901760
    %1947 = vmatpush.msra.mxu0 %v1946
    %v1948 = vand.u32 %v1158, 4294901760
    %1949 = vmatpush.msra.mxu0 %v1948
    %v1950 = vand.u32 %v1154, 4294901760
    %1951 = vmatpush.msra.mxu0 %v1950
    %v1952 = vand.u32 %v1150, 4294901760
    %1953 = vmatpush.msra.mxu0 %v1952
    %v1954 = vand.u32 %v1146, 4294901760
    %1955 = vmatpush.msra.mxu0 %v1954
    %v1956 = vand.u32 %v1142, 4294901760
    %1957 = vmatpush.msra.mxu0 %v1956
    %v1958 = vand.u32 %v1138, 4294901760
    %1959 = vmatpush.msra.mxu0 %v1958
    %v1960 = vand.u32 %v1134, 4294901760
    %1961 = vmatpush.msra.mxu0 %v1960
    %v1962 = vand.u32 %v1130, 4294901760
    %1963 = vmatpush.msra.mxu0 %v1962
    %v1964 = vand.u32 %v1126, 4294901760
    %1965 = vmatpush.msra.mxu0 %v1964
    %v1966 = vand.u32 %v1122, 4294901760
    %1967 = vmatpush.msra.mxu0 %v1966
    %v1968 = vand.u32 %v1118, 4294901760
    %1969 = vmatpush.msra.mxu0 %v1968
    %v1970 = vand.u32 %v988, 4294901760
    %v1971 = vsub.f32 %v988, %v1970
    %v1972 = vand.u32 %v1971, 4294901760
    %v1973 = vsub.f32 %v1971, %v1972
    %v1974 = vand.u32 %v1973, 4294901760
    %1975 = vmatmul.f32.gmra.mxu0 %v1974
    %v1976 = vpop.f32.mrf.mxu0
    %v1977 = vadd.f32 %v1936, %v1976
    %1978 = vdwg.mxu0
    %v1979 = vand.u32 %v1178, 4294901760
    %v1980 = vsub.f32 %v1178, %v1979
    %v1981 = vand.u32 %v1980, 4294901760
    %v1982 = vsub.f32 %v1980, %v1981
    %v1983 = vand.u32 %v1982, 4294901760
    %1984 = vmatpush.msra.mxu0 %v1983
    %v1985 = vand.u32 %v1174, 4294901760
    %v1986 = vsub.f32 %v1174, %v1985
    %v1987 = vand.u32 %v1986, 4294901760
    %v1988 = vsub.f32 %v1986, %v1987
    %v1989 = vand.u32 %v1988, 4294901760
    %1990 = vmatpush.msra.mxu0 %v1989
    %v1991 = vand.u32 %v1170, 4294901760
    %v1992 = vsub.f32 %v1170, %v1991
    %v1993 = vand.u32 %v1992, 4294901760
    %v1994 = vsub.f32 %v1992, %v1993
    %v1995 = vand.u32 %v1994, 4294901760
    %1996 = vmatpush.msra.mxu0 %v1995
    %v1997 = vand.u32 %v1166, 4294901760
    %v1998 = vsub.f32 %v1166, %v1997
    %v1999 = vand.u32 %v1998, 4294901760
    %v2000 = vsub.f32 %v1998, %v1999
    %v2001 = vand.u32 %v2000, 4294901760
    %2002 = vmatpush.msra.mxu0 %v2001
    %v2003 = vand.u32 %v1162, 4294901760
    %v2004 = vsub.f32 %v1162, %v2003
    %v2005 = vand.u32 %v2004, 4294901760
    %v2006 = vsub.f32 %v2004, %v2005
    %v2007 = vand.u32 %v2006, 4294901760
    %2008 = vmatpush.msra.mxu0 %v2007
    %v2009 = vand.u32 %v1158, 4294901760
    %v2010 = vsub.f32 %v1158, %v2009
    %v2011 = vand.u32 %v2010, 4294901760
    %v2012 = vsub.f32 %v2010, %v2011
    %v2013 = vand.u32 %v2012, 4294901760
    %2014 = vmatpush.msra.mxu0 %v2013
    %v2015 = vand.u32 %v1154, 4294901760
    %v2016 = vsub.f32 %v1154, %v2015
    %v2017 = vand.u32 %v2016, 4294901760
    %v2018 = vsub.f32 %v2016, %v2017
    %v2019 = vand.u32 %v2018, 4294901760
    %2020 = vmatpush.msra.mxu0 %v2019
    %v2021 = vand.u32 %v1150, 4294901760
    %v2022 = vsub.f32 %v1150, %v2021
    %v2023 = vand.u32 %v2022, 4294901760
    %v2024 = vsub.f32 %v2022, %v2023
    %v2025 = vand.u32 %v2024, 4294901760
    %2026 = vmatpush.msra.mxu0 %v2025
    %v2027 = vand.u32 %v1146, 4294901760
    %v2028 = vsub.f32 %v1146, %v2027
    %v2029 = vand.u32 %v2028, 4294901760
    %v2030 = vsub.f32 %v2028, %v2029
    %v2031 = vand.u32 %v2030, 4294901760
    %2032 = vmatpush.msra.mxu0 %v2031
    %v2033 = vand.u32 %v1142, 4294901760
    %v2034 = vsub.f32 %v1142, %v2033
    %v2035 = vand.u32 %v2034, 4294901760
    %v2036 = vsub.f32 %v2034, %v2035
    %v2037 = vand.u32 %v2036, 4294901760
    %2038 = vmatpush.msra.mxu0 %v2037
    %v2039 = vand.u32 %v1138, 4294901760
    %v2040 = vsub.f32 %v1138, %v2039
    %v2041 = vand.u32 %v2040, 4294901760
    %v2042 = vsub.f32 %v2040, %v2041
    %v2043 = vand.u32 %v2042, 4294901760
    %2044 = vmatpush.msra.mxu0 %v2043
    %v2045 = vand.u32 %v1134, 4294901760
    %v2046 = vsub.f32 %v1134, %v2045
    %v2047 = vand.u32 %v2046, 4294901760
    %v2048 = vsub.f32 %v2046, %v2047
    %v2049 = vand.u32 %v2048, 4294901760
    %2050 = vmatpush.msra.mxu0 %v2049
    %v2051 = vand.u32 %v1130, 4294901760
    %v2052 = vsub.f32 %v1130, %v2051
    %v2053 = vand.u32 %v2052, 4294901760
    %v2054 = vsub.f32 %v2052, %v2053
    %v2055 = vand.u32 %v2054, 4294901760
    %2056 = vmatpush.msra.mxu0 %v2055
    %v2057 = vand.u32 %v1126, 4294901760
    %v2058 = vsub.f32 %v1126, %v2057
    %v2059 = vand.u32 %v2058, 4294901760
    %v2060 = vsub.f32 %v2058, %v2059
    %v2061 = vand.u32 %v2060, 4294901760
    %2062 = vmatpush.msra.mxu0 %v2061
    %v2063 = vand.u32 %v1122, 4294901760
    %v2064 = vsub.f32 %v1122, %v2063
    %v2065 = vand.u32 %v2064, 4294901760
    %v2066 = vsub.f32 %v2064, %v2065
    %v2067 = vand.u32 %v2066, 4294901760
    %2068 = vmatpush.msra.mxu0 %v2067
    %v2069 = vand.u32 %v1118, 4294901760
    %v2070 = vsub.f32 %v1118, %v2069
    %v2071 = vand.u32 %v2070, 4294901760
    %v2072 = vsub.f32 %v2070, %v2071
    %v2073 = vand.u32 %v2072, 4294901760
    %2074 = vmatpush.msra.mxu0 %v2073
    %v2075 = vand.u32 %v988, 4294901760
    %2076 = vmatmul.f32.gmra.mxu0 %v2075
    %v2077 = vpop.f32.mrf.mxu0
    %v2078 = vadd.f32 %v1977, %v2077
    %2079 = vdwg.mxu0
    %v2080 = vand.u32 %v1178, 4294901760
    %v2081 = vsub.f32 %v1178, %v2080
    %2082 = vmatpush.msra.mxu0 %v2081
    %v2083 = vand.u32 %v1174, 4294901760
    %v2084 = vsub.f32 %v1174, %v2083
    %2085 = vmatpush.msra.mxu0 %v2084
    %v2086 = vand.u32 %v1170, 4294901760
    %v2087 = vsub.f32 %v1170, %v2086
    %2088 = vmatpush.msra.mxu0 %v2087
    %v2089 = vand.u32 %v1166, 4294901760
    %v2090 = vsub.f32 %v1166, %v2089
    %2091 = vmatpush.msra.mxu0 %v2090
    %v2092 = vand.u32 %v1162, 4294901760
    %v2093 = vsub.f32 %v1162, %v2092
    %2094 = vmatpush.msra.mxu0 %v2093
    %v2095 = vand.u32 %v1158, 4294901760
    %v2096 = vsub.f32 %v1158, %v2095
    %2097 = vmatpush.msra.mxu0 %v2096
    %v2098 = vand.u32 %v1154, 4294901760
    %v2099 = vsub.f32 %v1154, %v2098
    %2100 = vmatpush.msra.mxu0 %v2099
    %v2101 = vand.u32 %v1150, 4294901760
    %v2102 = vsub.f32 %v1150, %v2101
    %2103 = vmatpush.msra.mxu0 %v2102
    %v2104 = vand.u32 %v1146, 4294901760
    %v2105 = vsub.f32 %v1146, %v2104
    %2106 = vmatpush.msra.mxu0 %v2105
    %v2107 = vand.u32 %v1142, 4294901760
    %v2108 = vsub.f32 %v1142, %v2107
    %2109 = vmatpush.msra.mxu0 %v2108
    %v2110 = vand.u32 %v1138, 4294901760
    %v2111 = vsub.f32 %v1138, %v2110
    %2112 = vmatpush.msra.mxu0 %v2111
    %v2113 = vand.u32 %v1134, 4294901760
    %v2114 = vsub.f32 %v1134, %v2113
    %2115 = vmatpush.msra.mxu0 %v2114
    %v2116 = vand.u32 %v1130, 4294901760
    %v2117 = vsub.f32 %v1130, %v2116
    %2118 = vmatpush.msra.mxu0 %v2117
    %v2119 = vand.u32 %v1126, 4294901760
    %v2120 = vsub.f32 %v1126, %v2119
    %2121 = vmatpush.msra.mxu0 %v2120
    %v2122 = vand.u32 %v1122, 4294901760
    %v2123 = vsub.f32 %v1122, %v2122
    %2124 = vmatpush.msra.mxu0 %v2123
    %v2125 = vand.u32 %v1118, 4294901760
    %v2126 = vsub.f32 %v1118, %v2125
    %2127 = vmatpush.msra.mxu0 %v2126
    %v2128 = vand.u32 %v988, 4294901760
    %v2129 = vsub.f32 %v988, %v2128
    %2130 = vmatmul.f32.gmra.mxu0 %v2129
    %v2131 = vpop.f32.mrf.mxu0
    %v2132 = vadd.f32 %v2078, %v2131
    %2133 = vdwg.mxu0
    %v2134 = vand.u32 %v1178, 4294901760
    %2135 = vmatpush.msra.mxu0 %v2134
    %v2136 = vand.u32 %v1174, 4294901760
    %2137 = vmatpush.msra.mxu0 %v2136
    %v2138 = vand.u32 %v1170, 4294901760
    %2139 = vmatpush.msra.mxu0 %v2138
    %v2140 = vand.u32 %v1166, 4294901760
    %2141 = vmatpush.msra.mxu0 %v2140
    %v2142 = vand.u32 %v1162, 4294901760
    %2143 = vmatpush.msra.mxu0 %v2142
    %v2144 = vand.u32 %v1158, 4294901760
    %2145 = vmatpush.msra.mxu0 %v2144
    %v2146 = vand.u32 %v1154, 4294901760
    %2147 = vmatpush.msra.mxu0 %v2146
    %v2148 = vand.u32 %v1150, 4294901760
    %2149 = vmatpush.msra.mxu0 %v2148
    %v2150 = vand.u32 %v1146, 4294901760
    %2151 = vmatpush.msra.mxu0 %v2150
    %v2152 = vand.u32 %v1142, 4294901760
    %2153 = vmatpush.msra.mxu0 %v2152
    %v2154 = vand.u32 %v1138, 4294901760
    %2155 = vmatpush.msra.mxu0 %v2154
    %v2156 = vand.u32 %v1134, 4294901760
    %2157 = vmatpush.msra.mxu0 %v2156
    %v2158 = vand.u32 %v1130, 4294901760
    %2159 = vmatpush.msra.mxu0 %v2158
    %v2160 = vand.u32 %v1126, 4294901760
    %2161 = vmatpush.msra.mxu0 %v2160
    %v2162 = vand.u32 %v1122, 4294901760
    %2163 = vmatpush.msra.mxu0 %v2162
    %v2164 = vand.u32 %v1118, 4294901760
    %2165 = vmatpush.msra.mxu0 %v2164
    %v2166 = vand.u32 %v988, 4294901760
    %v2167 = vsub.f32 %v988, %v2166
    %v2168 = vand.u32 %v2167, 4294901760
    %2169 = vmatmul.f32.gmra.mxu0 %v2168
    %v2170 = vpop.f32.mrf.mxu0
    %v2171 = vadd.f32 %v2132, %v2170
    %2172 = vdwg.mxu0
    %v2173 = vand.u32 %v1178, 4294901760
    %v2174 = vsub.f32 %v1178, %v2173
    %v2175 = vand.u32 %v2174, 4294901760
    %2176 = vmatpush.msra.mxu0 %v2175
    %v2177 = vand.u32 %v1174, 4294901760
    %v2178 = vsub.f32 %v1174, %v2177
    %v2179 = vand.u32 %v2178, 4294901760
    %2180 = vmatpush.msra.mxu0 %v2179
    %v2181 = vand.u32 %v1170, 4294901760
    %v2182 = vsub.f32 %v1170, %v2181
    %v2183 = vand.u32 %v2182, 4294901760
    %2184 = vmatpush.msra.mxu0 %v2183
    %v2185 = vand.u32 %v1166, 4294901760
    %v2186 = vsub.f32 %v1166, %v2185
    %v2187 = vand.u32 %v2186, 4294901760
    %2188 = vmatpush.msra.mxu0 %v2187
    %v2189 = vand.u32 %v1162, 4294901760
    %v2190 = vsub.f32 %v1162, %v2189
    %v2191 = vand.u32 %v2190, 4294901760
    %2192 = vmatpush.msra.mxu0 %v2191
    %v2193 = vand.u32 %v1158, 4294901760
    %v2194 = vsub.f32 %v1158, %v2193
    %v2195 = vand.u32 %v2194, 4294901760
    %2196 = vmatpush.msra.mxu0 %v2195
    %v2197 = vand.u32 %v1154, 4294901760
    %v2198 = vsub.f32 %v1154, %v2197
    %v2199 = vand.u32 %v2198, 4294901760
    %2200 = vmatpush.msra.mxu0 %v2199
    %v2201 = vand.u32 %v1150, 4294901760
    %v2202 = vsub.f32 %v1150, %v2201
    %v2203 = vand.u32 %v2202, 4294901760
    %2204 = vmatpush.msra.mxu0 %v2203
    %v2205 = vand.u32 %v1146, 4294901760
    %v2206 = vsub.f32 %v1146, %v2205
    %v2207 = vand.u32 %v2206, 4294901760
    %2208 = vmatpush.msra.mxu0 %v2207
    %v2209 = vand.u32 %v1142, 4294901760
    %v2210 = vsub.f32 %v1142, %v2209
    %v2211 = vand.u32 %v2210, 4294901760
    %2212 = vmatpush.msra.mxu0 %v2211
    %v2213 = vand.u32 %v1138, 4294901760
    %v2214 = vsub.f32 %v1138, %v2213
    %v2215 = vand.u32 %v2214, 4294901760
    %2216 = vmatpush.msra.mxu0 %v2215
    %v2217 = vand.u32 %v1134, 4294901760
    %v2218 = vsub.f32 %v1134, %v2217
    %v2219 = vand.u32 %v2218, 4294901760
    %2220 = vmatpush.msra.mxu0 %v2219
    %v2221 = vand.u32 %v1130, 4294901760
    %v2222 = vsub.f32 %v1130, %v2221
    %v2223 = vand.u32 %v2222, 4294901760
    %2224 = vmatpush.msra.mxu0 %v2223
    %v2225 = vand.u32 %v1126, 4294901760
    %v2226 = vsub.f32 %v1126, %v2225
    %v2227 = vand.u32 %v2226, 4294901760
    %2228 = vmatpush.msra.mxu0 %v2227
    %v2229 = vand.u32 %v1122, 4294901760
    %v2230 = vsub.f32 %v1122, %v2229
    %v2231 = vand.u32 %v2230, 4294901760
    %2232 = vmatpush.msra.mxu0 %v2231
    %v2233 = vand.u32 %v1118, 4294901760
    %v2234 = vsub.f32 %v1118, %v2233
    %v2235 = vand.u32 %v2234, 4294901760
    %2236 = vmatpush.msra.mxu0 %v2235
    %v2237 = vand.u32 %v988, 4294901760
    %2238 = vmatmul.f32.gmra.mxu0 %v2237
    %v2239 = vpop.f32.mrf.mxu0
    %v2240 = vadd.f32 %v2171, %v2239
    %2241 = vdwg.mxu0
    %v2242 = vand.u32 %v1178, 4294901760
    %2243 = vmatpush.msra.mxu0 %v2242
    %v2244 = vand.u32 %v1174, 4294901760
    %2245 = vmatpush.msra.mxu0 %v2244
    %v2246 = vand.u32 %v1170, 4294901760
    %2247 = vmatpush.msra.mxu0 %v2246
    %v2248 = vand.u32 %v1166, 4294901760
    %2249 = vmatpush.msra.mxu0 %v2248
    %v2250 = vand.u32 %v1162, 4294901760
    %2251 = vmatpush.msra.mxu0 %v2250
    %v2252 = vand.u32 %v1158, 4294901760
    %2253 = vmatpush.msra.mxu0 %v2252
    %v2254 = vand.u32 %v1154, 4294901760
    %2255 = vmatpush.msra.mxu0 %v2254
    %v2256 = vand.u32 %v1150, 4294901760
    %2257 = vmatpush.msra.mxu0 %v2256
    %v2258 = vand.u32 %v1146, 4294901760
    %2259 = vmatpush.msra.mxu0 %v2258
    %v2260 = vand.u32 %v1142, 4294901760
    %2261 = vmatpush.msra.mxu0 %v2260
    %v2262 = vand.u32 %v1138, 4294901760
    %2263 = vmatpush.msra.mxu0 %v2262
    %v2264 = vand.u32 %v1134, 4294901760
    %2265 = vmatpush.msra.mxu0 %v2264
    %v2266 = vand.u32 %v1130, 4294901760
    %2267 = vmatpush.msra.mxu0 %v2266
    %v2268 = vand.u32 %v1126, 4294901760
    %2269 = vmatpush.msra.mxu0 %v2268
    %v2270 = vand.u32 %v1122, 4294901760
    %2271 = vmatpush.msra.mxu0 %v2270
    %v2272 = vand.u32 %v1118, 4294901760
    %2273 = vmatpush.msra.mxu0 %v2272
    %v2274 = vand.u32 %v988, 4294901760
    %2275 = vmatmul.f32.gmra.mxu0 %v2274
    %v2276 = vpop.f32.mrf.mxu0
    %v2277 = vadd.f32 %v2240, %v2276
    %2278 = vdwg.mxu0
    %v2279 = vand.u32 %v1242, 4294901760
    %2280 = vmatpush.msra.mxu0 %v2279
    %v2281 = vand.u32 %v1238, 4294901760
    %2282 = vmatpush.msra.mxu0 %v2281
    %v2283 = vand.u32 %v1234, 4294901760
    %2284 = vmatpush.msra.mxu0 %v2283
    %v2285 = vand.u32 %v1230, 4294901760
    %2286 = vmatpush.msra.mxu0 %v2285
    %v2287 = vand.u32 %v1226, 4294901760
    %2288 = vmatpush.msra.mxu0 %v2287
    %v2289 = vand.u32 %v1222, 4294901760
    %2290 = vmatpush.msra.mxu0 %v2289
    %v2291 = vand.u32 %v1218, 4294901760
    %2292 = vmatpush.msra.mxu0 %v2291
    %v2293 = vand.u32 %v1214, 4294901760
    %2294 = vmatpush.msra.mxu0 %v2293
    %v2295 = vand.u32 %v1210, 4294901760
    %2296 = vmatpush.msra.mxu0 %v2295
    %v2297 = vand.u32 %v1206, 4294901760
    %2298 = vmatpush.msra.mxu0 %v2297
    %v2299 = vand.u32 %v1202, 4294901760
    %2300 = vmatpush.msra.mxu0 %v2299
    %v2301 = vand.u32 %v1198, 4294901760
    %2302 = vmatpush.msra.mxu0 %v2301
    %v2303 = vand.u32 %v1194, 4294901760
    %2304 = vmatpush.msra.mxu0 %v2303
    %v2305 = vand.u32 %v1190, 4294901760
    %2306 = vmatpush.msra.mxu0 %v2305
    %v2307 = vand.u32 %v1186, 4294901760
    %2308 = vmatpush.msra.mxu0 %v2307
    %v2309 = vand.u32 %v1182, 4294901760
    %2310 = vmatpush.msra.mxu0 %v2309
    %v2311 = vand.u32 %v989, 4294901760
    %v2312 = vsub.f32 %v989, %v2311
    %v2313 = vand.u32 %v2312, 4294901760
    %v2314 = vsub.f32 %v2312, %v2313
    %v2315 = vand.u32 %v2314, 4294901760
    %2316 = vmatmul.f32.gmra.mxu0 %v2315
    %v2317 = vpop.f32.mrf.mxu0
    %v2318 = vadd.f32 %v2277, %v2317
    %2319 = vdwg.mxu0
    %v2320 = vand.u32 %v1242, 4294901760
    %v2321 = vsub.f32 %v1242, %v2320
    %v2322 = vand.u32 %v2321, 4294901760
    %v2323 = vsub.f32 %v2321, %v2322
    %v2324 = vand.u32 %v2323, 4294901760
    %2325 = vmatpush.msra.mxu0 %v2324
    %v2326 = vand.u32 %v1238, 4294901760
    %v2327 = vsub.f32 %v1238, %v2326
    %v2328 = vand.u32 %v2327, 4294901760
    %v2329 = vsub.f32 %v2327, %v2328
    %v2330 = vand.u32 %v2329, 4294901760
    %2331 = vmatpush.msra.mxu0 %v2330
    %v2332 = vand.u32 %v1234, 4294901760
    %v2333 = vsub.f32 %v1234, %v2332
    %v2334 = vand.u32 %v2333, 4294901760
    %v2335 = vsub.f32 %v2333, %v2334
    %v2336 = vand.u32 %v2335, 4294901760
    %2337 = vmatpush.msra.mxu0 %v2336
    %v2338 = vand.u32 %v1230, 4294901760
    %v2339 = vsub.f32 %v1230, %v2338
    %v2340 = vand.u32 %v2339, 4294901760
    %v2341 = vsub.f32 %v2339, %v2340
    %v2342 = vand.u32 %v2341, 4294901760
    %2343 = vmatpush.msra.mxu0 %v2342
    %v2344 = vand.u32 %v1226, 4294901760
    %v2345 = vsub.f32 %v1226, %v2344
    %v2346 = vand.u32 %v2345, 4294901760
    %v2347 = vsub.f32 %v2345, %v2346
    %v2348 = vand.u32 %v2347, 4294901760
    %2349 = vmatpush.msra.mxu0 %v2348
    %v2350 = vand.u32 %v1222, 4294901760
    %v2351 = vsub.f32 %v1222, %v2350
    %v2352 = vand.u32 %v2351, 4294901760
    %v2353 = vsub.f32 %v2351, %v2352
    %v2354 = vand.u32 %v2353, 4294901760
    %2355 = vmatpush.msra.mxu0 %v2354
    %v2356 = vand.u32 %v1218, 4294901760
    %v2357 = vsub.f32 %v1218, %v2356
    %v2358 = vand.u32 %v2357, 4294901760
    %v2359 = vsub.f32 %v2357, %v2358
    %v2360 = vand.u32 %v2359, 4294901760
    %2361 = vmatpush.msra.mxu0 %v2360
    %v2362 = vand.u32 %v1214, 4294901760
    %v2363 = vsub.f32 %v1214, %v2362
    %v2364 = vand.u32 %v2363, 4294901760
    %v2365 = vsub.f32 %v2363, %v2364
    %v2366 = vand.u32 %v2365, 4294901760
    %2367 = vmatpush.msra.mxu0 %v2366
    %v2368 = vand.u32 %v1210, 4294901760
    %v2369 = vsub.f32 %v1210, %v2368
    %v2370 = vand.u32 %v2369, 4294901760
    %v2371 = vsub.f32 %v2369, %v2370
    %v2372 = vand.u32 %v2371, 4294901760
    %2373 = vmatpush.msra.mxu0 %v2372
    %v2374 = vand.u32 %v1206, 4294901760
    %v2375 = vsub.f32 %v1206, %v2374
    %v2376 = vand.u32 %v2375, 4294901760
    %v2377 = vsub.f32 %v2375, %v2376
    %v2378 = vand.u32 %v2377, 4294901760
    %2379 = vmatpush.msra.mxu0 %v2378
    %v2380 = vand.u32 %v1202, 4294901760
    %v2381 = vsub.f32 %v1202, %v2380
    %v2382 = vand.u32 %v2381, 4294901760
    %v2383 = vsub.f32 %v2381, %v2382
    %v2384 = vand.u32 %v2383, 4294901760
    %2385 = vmatpush.msra.mxu0 %v2384
    %v2386 = vand.u32 %v1198, 4294901760
    %v2387 = vsub.f32 %v1198, %v2386
    %v2388 = vand.u32 %v2387, 4294901760
    %v2389 = vsub.f32 %v2387, %v2388
    %v2390 = vand.u32 %v2389, 4294901760
    %2391 = vmatpush.msra.mxu0 %v2390
    %v2392 = vand.u32 %v1194, 4294901760
    %v2393 = vsub.f32 %v1194, %v2392
    %v2394 = vand.u32 %v2393, 4294901760
    %v2395 = vsub.f32 %v2393, %v2394
    %v2396 = vand.u32 %v2395, 4294901760
    %2397 = vmatpush.msra.mxu0 %v2396
    %v2398 = vand.u32 %v1190, 4294901760
    %v2399 = vsub.f32 %v1190, %v2398
    %v2400 = vand.u32 %v2399, 4294901760
    %v2401 = vsub.f32 %v2399, %v2400
    %v2402 = vand.u32 %v2401, 4294901760
    %2403 = vmatpush.msra.mxu0 %v2402
    %v2404 = vand.u32 %v1186, 4294901760
    %v2405 = vsub.f32 %v1186, %v2404
    %v2406 = vand.u32 %v2405, 4294901760
    %v2407 = vsub.f32 %v2405, %v2406
    %v2408 = vand.u32 %v2407, 4294901760
    %2409 = vmatpush.msra.mxu0 %v2408
    %v2410 = vand.u32 %v1182, 4294901760
    %v2411 = vsub.f32 %v1182, %v2410
    %v2412 = vand.u32 %v2411, 4294901760
    %v2413 = vsub.f32 %v2411, %v2412
    %v2414 = vand.u32 %v2413, 4294901760
    %2415 = vmatpush.msra.mxu0 %v2414
    %v2416 = vand.u32 %v989, 4294901760
    %2417 = vmatmul.f32.gmra.mxu0 %v2416
    %v2418 = vpop.f32.mrf.mxu0
    %v2419 = vadd.f32 %v2318, %v2418
    %2420 = vdwg.mxu0
    %v2421 = vand.u32 %v1242, 4294901760
    %v2422 = vsub.f32 %v1242, %v2421
    %2423 = vmatpush.msra.mxu0 %v2422
    %v2424 = vand.u32 %v1238, 4294901760
    %v2425 = vsub.f32 %v1238, %v2424
    %2426 = vmatpush.msra.mxu0 %v2425
    %v2427 = vand.u32 %v1234, 4294901760
    %v2428 = vsub.f32 %v1234, %v2427
    %2429 = vmatpush.msra.mxu0 %v2428
    %v2430 = vand.u32 %v1230, 4294901760
    %v2431 = vsub.f32 %v1230, %v2430
    %2432 = vmatpush.msra.mxu0 %v2431
    %v2433 = vand.u32 %v1226, 4294901760
    %v2434 = vsub.f32 %v1226, %v2433
    %2435 = vmatpush.msra.mxu0 %v2434
    %v2436 = vand.u32 %v1222, 4294901760
    %v2437 = vsub.f32 %v1222, %v2436
    %2438 = vmatpush.msra.mxu0 %v2437
    %v2439 = vand.u32 %v1218, 4294901760
    %v2440 = vsub.f32 %v1218, %v2439
    %2441 = vmatpush.msra.mxu0 %v2440
    %v2442 = vand.u32 %v1214, 4294901760
    %v2443 = vsub.f32 %v1214, %v2442
    %2444 = vmatpush.msra.mxu0 %v2443
    %v2445 = vand.u32 %v1210, 4294901760
    %v2446 = vsub.f32 %v1210, %v2445
    %2447 = vmatpush.msra.mxu0 %v2446
    %v2448 = vand.u32 %v1206, 4294901760
    %v2449 = vsub.f32 %v1206, %v2448
    %2450 = vmatpush.msra.mxu0 %v2449
    %v2451 = vand.u32 %v1202, 4294901760
    %v2452 = vsub.f32 %v1202, %v2451
    %2453 = vmatpush.msra.mxu0 %v2452
    %v2454 = vand.u32 %v1198, 4294901760
    %v2455 = vsub.f32 %v1198, %v2454
    %2456 = vmatpush.msra.mxu0 %v2455
    %v2457 = vand.u32 %v1194, 4294901760
    %v2458 = vsub.f32 %v1194, %v2457
    %2459 = vmatpush.msra.mxu0 %v2458
    %v2460 = vand.u32 %v1190, 4294901760
    %v2461 = vsub.f32 %v1190, %v2460
    %2462 = vmatpush.msra.mxu0 %v2461
    %v2463 = vand.u32 %v1186, 4294901760
    %v2464 = vsub.f32 %v1186, %v2463
    %2465 = vmatpush.msra.mxu0 %v2464
    %v2466 = vand.u32 %v1182, 4294901760
    %v2467 = vsub.f32 %v1182, %v2466
    %2468 = vmatpush.msra.mxu0 %v2467
    %v2469 = vand.u32 %v989, 4294901760
    %v2470 = vsub.f32 %v989, %v2469
    %2471 = vmatmul.f32.gmra.mxu0 %v2470
    %v2472 = vpop.f32.mrf.mxu0
    %v2473 = vadd.f32 %v2419, %v2472
    %2474 = vdwg.mxu0
    %v2475 = vand.u32 %v1242, 4294901760
    %2476 = vmatpush.msra.mxu0 %v2475
    %v2477 = vand.u32 %v1238, 4294901760
    %2478 = vmatpush.msra.mxu0 %v2477
    %v2479 = vand.u32 %v1234, 4294901760
    %2480 = vmatpush.msra.mxu0 %v2479
    %v2481 = vand.u32 %v1230, 4294901760
    %2482 = vmatpush.msra.mxu0 %v2481
    %v2483 = vand.u32 %v1226, 4294901760
    %2484 = vmatpush.msra.mxu0 %v2483
    %v2485 = vand.u32 %v1222, 4294901760
    %2486 = vmatpush.msra.mxu0 %v2485
    %v2487 = vand.u32 %v1218, 4294901760
    %2488 = vmatpush.msra.mxu0 %v2487
    %v2489 = vand.u32 %v1214, 4294901760
    %2490 = vmatpush.msra.mxu0 %v2489
    %v2491 = vand.u32 %v1210, 4294901760
    %2492 = vmatpush.msra.mxu0 %v2491
    %v2493 = vand.u32 %v1206, 4294901760
    %2494 = vmatpush.msra.mxu0 %v2493
    %v2495 = vand.u32 %v1202, 4294901760
    %2496 = vmatpush.msra.mxu0 %v2495
    %v2497 = vand.u32 %v1198, 4294901760
    %2498 = vmatpush.msra.mxu0 %v2497
    %v2499 = vand.u32 %v1194, 4294901760
    %2500 = vmatpush.msra.mxu0 %v2499
    %v2501 = vand.u32 %v1190, 4294901760
    %2502 = vmatpush.msra.mxu0 %v2501
    %v2503 = vand.u32 %v1186, 4294901760
    %2504 = vmatpush.msra.mxu0 %v2503
    %v2505 = vand.u32 %v1182, 4294901760
    %2506 = vmatpush.msra.mxu0 %v2505
    %v2507 = vand.u32 %v989, 4294901760
    %v2508 = vsub.f32 %v989, %v2507
    %v2509 = vand.u32 %v2508, 4294901760
    %2510 = vmatmul.f32.gmra.mxu0 %v2509
    %v2511 = vpop.f32.mrf.mxu0
    %v2512 = vadd.f32 %v2473, %v2511
    %2513 = vdwg.mxu0
    %v2514 = vand.u32 %v1242, 4294901760
    %v2515 = vsub.f32 %v1242, %v2514
    %v2516 = vand.u32 %v2515, 4294901760
    %2517 = vmatpush.msra.mxu0 %v2516
    %v2518 = vand.u32 %v1238, 4294901760
    %v2519 = vsub.f32 %v1238, %v2518
    %v2520 = vand.u32 %v2519, 4294901760
    %2521 = vmatpush.msra.mxu0 %v2520
    %v2522 = vand.u32 %v1234, 4294901760
    %v2523 = vsub.f32 %v1234, %v2522
    %v2524 = vand.u32 %v2523, 4294901760
    %2525 = vmatpush.msra.mxu0 %v2524
    %v2526 = vand.u32 %v1230, 4294901760
    %v2527 = vsub.f32 %v1230, %v2526
    %v2528 = vand.u32 %v2527, 4294901760
    %2529 = vmatpush.msra.mxu0 %v2528
    %v2530 = vand.u32 %v1226, 4294901760
    %v2531 = vsub.f32 %v1226, %v2530
    %v2532 = vand.u32 %v2531, 4294901760
    %2533 = vmatpush.msra.mxu0 %v2532
    %v2534 = vand.u32 %v1222, 4294901760
    %v2535 = vsub.f32 %v1222, %v2534
    %v2536 = vand.u32 %v2535, 4294901760
    %2537 = vmatpush.msra.mxu0 %v2536
    %v2538 = vand.u32 %v1218, 4294901760
    %v2539 = vsub.f32 %v1218, %v2538
    %v2540 = vand.u32 %v2539, 4294901760
    %2541 = vmatpush.msra.mxu0 %v2540
    %v2542 = vand.u32 %v1214, 4294901760
    %v2543 = vsub.f32 %v1214, %v2542
    %v2544 = vand.u32 %v2543, 4294901760
    %2545 = vmatpush.msra.mxu0 %v2544
    %v2546 = vand.u32 %v1210, 4294901760
    %v2547 = vsub.f32 %v1210, %v2546
    %v2548 = vand.u32 %v2547, 4294901760
    %2549 = vmatpush.msra.mxu0 %v2548
    %v2550 = vand.u32 %v1206, 4294901760
    %v2551 = vsub.f32 %v1206, %v2550
    %v2552 = vand.u32 %v2551, 4294901760
    %2553 = vmatpush.msra.mxu0 %v2552
    %v2554 = vand.u32 %v1202, 4294901760
    %v2555 = vsub.f32 %v1202, %v2554
    %v2556 = vand.u32 %v2555, 4294901760
    %2557 = vmatpush.msra.mxu0 %v2556
    %v2558 = vand.u32 %v1198, 4294901760
    %v2559 = vsub.f32 %v1198, %v2558
    %v2560 = vand.u32 %v2559, 4294901760
    %2561 = vmatpush.msra.mxu0 %v2560
    %v2562 = vand.u32 %v1194, 4294901760
    %v2563 = vsub.f32 %v1194, %v2562
    %v2564 = vand.u32 %v2563, 4294901760
    %2565 = vmatpush.msra.mxu0 %v2564
    %v2566 = vand.u32 %v1190, 4294901760
    %v2567 = vsub.f32 %v1190, %v2566
    %v2568 = vand.u32 %v2567, 4294901760
    %2569 = vmatpush.msra.mxu0 %v2568
    %v2570 = vand.u32 %v1186, 4294901760
    %v2571 = vsub.f32 %v1186, %v2570
    %v2572 = vand.u32 %v2571, 4294901760
    %2573 = vmatpush.msra.mxu0 %v2572
    %v2574 = vand.u32 %v1182, 4294901760
    %v2575 = vsub.f32 %v1182, %v2574
    %v2576 = vand.u32 %v2575, 4294901760
    %2577 = vmatpush.msra.mxu0 %v2576
    %v2578 = vand.u32 %v989, 4294901760
    %2579 = vmatmul.f32.gmra.mxu0 %v2578
    %v2580 = vpop.f32.mrf.mxu0
    %v2581 = vadd.f32 %v2512, %v2580
    %2582 = vdwg.mxu0
    %v2583 = vand.u32 %v1242, 4294901760
    %2584 = vmatpush.msra.mxu0 %v2583
    %v2585 = vand.u32 %v1238, 4294901760
    %2586 = vmatpush.msra.mxu0 %v2585
    %v2587 = vand.u32 %v1234, 4294901760
    %2588 = vmatpush.msra.mxu0 %v2587
    %v2589 = vand.u32 %v1230, 4294901760
    %2590 = vmatpush.msra.mxu0 %v2589
    %v2591 = vand.u32 %v1226, 4294901760
    %2592 = vmatpush.msra.mxu0 %v2591
    %v2593 = vand.u32 %v1222, 4294901760
    %2594 = vmatpush.msra.mxu0 %v2593
    %v2595 = vand.u32 %v1218, 4294901760
    %2596 = vmatpush.msra.mxu0 %v2595
    %v2597 = vand.u32 %v1214, 4294901760
    %2598 = vmatpush.msra.mxu0 %v2597
    %v2599 = vand.u32 %v1210, 4294901760
    %2600 = vmatpush.msra.mxu0 %v2599
    %v2601 = vand.u32 %v1206, 4294901760
    %2602 = vmatpush.msra.mxu0 %v2601
    %v2603 = vand.u32 %v1202, 4294901760
    %2604 = vmatpush.msra.mxu0 %v2603
    %v2605 = vand.u32 %v1198, 4294901760
    %2606 = vmatpush.msra.mxu0 %v2605
    %v2607 = vand.u32 %v1194, 4294901760
    %2608 = vmatpush.msra.mxu0 %v2607
    %v2609 = vand.u32 %v1190, 4294901760
    %2610 = vmatpush.msra.mxu0 %v2609
    %v2611 = vand.u32 %v1186, 4294901760
    %2612 = vmatpush.msra.mxu0 %v2611
    %v2613 = vand.u32 %v1182, 4294901760
    %2614 = vmatpush.msra.mxu0 %v2613
    %v2615 = vand.u32 %v989, 4294901760
    %2616 = vmatmul.f32.gmra.mxu0 %v2615
    %v2617 = vpop.f32.mrf.mxu0
    %v2618 = vadd.f32 %v2581, %v2617
    %2619 = vdwg.mxu0
    %v2620 = vand.u32 %v1051, 4294901760
    %2621 = vmatpush.msra.mxu0 %v2620
    %v2622 = vand.u32 %v1047, 4294901760
    %2623 = vmatpush.msra.mxu0 %v2622
    %v2624 = vand.u32 %v1043, 4294901760
    %2625 = vmatpush.msra.mxu0 %v2624
    %v2626 = vand.u32 %v1039, 4294901760
    %2627 = vmatpush.msra.mxu0 %v2626
    %v2628 = vand.u32 %v1035, 4294901760
    %2629 = vmatpush.msra.mxu0 %v2628
    %v2630 = vand.u32 %v1031, 4294901760
    %2631 = vmatpush.msra.mxu0 %v2630
    %v2632 = vand.u32 %v1027, 4294901760
    %2633 = vmatpush.msra.mxu0 %v2632
    %v2634 = vand.u32 %v1023, 4294901760
    %2635 = vmatpush.msra.mxu0 %v2634
    %v2636 = vand.u32 %v1019, 4294901760
    %2637 = vmatpush.msra.mxu0 %v2636
    %v2638 = vand.u32 %v1015, 4294901760
    %2639 = vmatpush.msra.mxu0 %v2638
    %v2640 = vand.u32 %v1011, 4294901760
    %2641 = vmatpush.msra.mxu0 %v2640
    %v2642 = vand.u32 %v1007, 4294901760
    %2643 = vmatpush.msra.mxu0 %v2642
    %v2644 = vand.u32 %v1003, 4294901760
    %2645 = vmatpush.msra.mxu0 %v2644
    %v2646 = vand.u32 %v999, 4294901760
    %2647 = vmatpush.msra.mxu0 %v2646
    %v2648 = vand.u32 %v995, 4294901760
    %2649 = vmatpush.msra.mxu0 %v2648
    %v2650 = vand.u32 %v991, 4294901760
    %2651 = vmatpush.msra.mxu0 %v2650
    %v2652 = vand.u32 %v986, 4294901760
    %v2653 = vsub.f32 %v986, %v2652
    %v2654 = vand.u32 %v2653, 4294901760
    %v2655 = vsub.f32 %v2653, %v2654
    %v2656 = vand.u32 %v2655, 4294901760
    %2657 = vmatmul.f32.gmra.mxu0 %v2656
    %v2658 = vpop.f32.mrf.mxu0
    %v2659 = vadd.f32 %v1249, %v2658
    %2660 = vdwg.mxu0
    %v2661 = vand.u32 %v1051, 4294901760
    %v2662 = vsub.f32 %v1051, %v2661
    %v2663 = vand.u32 %v2662, 4294901760
    %v2664 = vsub.f32 %v2662, %v2663
    %v2665 = vand.u32 %v2664, 4294901760
    %2666 = vmatpush.msra.mxu0 %v2665
    %v2667 = vand.u32 %v1047, 4294901760
    %v2668 = vsub.f32 %v1047, %v2667
    %v2669 = vand.u32 %v2668, 4294901760
    %v2670 = vsub.f32 %v2668, %v2669
    %v2671 = vand.u32 %v2670, 4294901760
    %2672 = vmatpush.msra.mxu0 %v2671
    %v2673 = vand.u32 %v1043, 4294901760
    %v2674 = vsub.f32 %v1043, %v2673
    %v2675 = vand.u32 %v2674, 4294901760
    %v2676 = vsub.f32 %v2674, %v2675
    %v2677 = vand.u32 %v2676, 4294901760
    %2678 = vmatpush.msra.mxu0 %v2677
    %v2679 = vand.u32 %v1039, 4294901760
    %v2680 = vsub.f32 %v1039, %v2679
    %v2681 = vand.u32 %v2680, 4294901760
    %v2682 = vsub.f32 %v2680, %v2681
    %v2683 = vand.u32 %v2682, 4294901760
    %2684 = vmatpush.msra.mxu0 %v2683
    %v2685 = vand.u32 %v1035, 4294901760
    %v2686 = vsub.f32 %v1035, %v2685
    %v2687 = vand.u32 %v2686, 4294901760
    %v2688 = vsub.f32 %v2686, %v2687
    %v2689 = vand.u32 %v2688, 4294901760
    %2690 = vmatpush.msra.mxu0 %v2689
    %v2691 = vand.u32 %v1031, 4294901760
    %v2692 = vsub.f32 %v1031, %v2691
    %v2693 = vand.u32 %v2692, 4294901760
    %v2694 = vsub.f32 %v2692, %v2693
    %v2695 = vand.u32 %v2694, 4294901760
    %2696 = vmatpush.msra.mxu0 %v2695
    %v2697 = vand.u32 %v1027, 4294901760
    %v2698 = vsub.f32 %v1027, %v2697
    %v2699 = vand.u32 %v2698, 4294901760
    %v2700 = vsub.f32 %v2698, %v2699
    %v2701 = vand.u32 %v2700, 4294901760
    %2702 = vmatpush.msra.mxu0 %v2701
    %v2703 = vand.u32 %v1023, 4294901760
    %v2704 = vsub.f32 %v1023, %v2703
    %v2705 = vand.u32 %v2704, 4294901760
    %v2706 = vsub.f32 %v2704, %v2705
    %v2707 = vand.u32 %v2706, 4294901760
    %2708 = vmatpush.msra.mxu0 %v2707
    %v2709 = vand.u32 %v1019, 4294901760
    %v2710 = vsub.f32 %v1019, %v2709
    %v2711 = vand.u32 %v2710, 4294901760
    %v2712 = vsub.f32 %v2710, %v2711
    %v2713 = vand.u32 %v2712, 4294901760
    %2714 = vmatpush.msra.mxu0 %v2713
    %v2715 = vand.u32 %v1015, 4294901760
    %v2716 = vsub.f32 %v1015, %v2715
    %v2717 = vand.u32 %v2716, 4294901760
    %v2718 = vsub.f32 %v2716, %v2717
    %v2719 = vand.u32 %v2718, 4294901760
    %2720 = vmatpush.msra.mxu0 %v2719
    %v2721 = vand.u32 %v1011, 4294901760
    %v2722 = vsub.f32 %v1011, %v2721
    %v2723 = vand.u32 %v2722, 4294901760
    %v2724 = vsub.f32 %v2722, %v2723
    %v2725 = vand.u32 %v2724, 4294901760
    %2726 = vmatpush.msra.mxu0 %v2725
    %v2727 = vand.u32 %v1007, 4294901760
    %v2728 = vsub.f32 %v1007, %v2727
    %v2729 = vand.u32 %v2728, 4294901760
    %v2730 = vsub.f32 %v2728, %v2729
    %v2731 = vand.u32 %v2730, 4294901760
    %2732 = vmatpush.msra.mxu0 %v2731
    %v2733 = vand.u32 %v1003, 4294901760
    %v2734 = vsub.f32 %v1003, %v2733
    %v2735 = vand.u32 %v2734, 4294901760
    %v2736 = vsub.f32 %v2734, %v2735
    %v2737 = vand.u32 %v2736, 4294901760
    %2738 = vmatpush.msra.mxu0 %v2737
    %v2739 = vand.u32 %v999, 4294901760
    %v2740 = vsub.f32 %v999, %v2739
    %v2741 = vand.u32 %v2740, 4294901760
    %v2742 = vsub.f32 %v2740, %v2741
    %v2743 = vand.u32 %v2742, 4294901760
    %2744 = vmatpush.msra.mxu0 %v2743
    %v2745 = vand.u32 %v995, 4294901760
    %v2746 = vsub.f32 %v995, %v2745
    %v2747 = vand.u32 %v2746, 4294901760
    %v2748 = vsub.f32 %v2746, %v2747
    %v2749 = vand.u32 %v2748, 4294901760
    %2750 = vmatpush.msra.mxu0 %v2749
    %v2751 = vand.u32 %v991, 4294901760
    %v2752 = vsub.f32 %v991, %v2751
    %v2753 = vand.u32 %v2752, 4294901760
    %v2754 = vsub.f32 %v2752, %v2753
    %v2755 = vand.u32 %v2754, 4294901760
    %2756 = vmatpush.msra.mxu0 %v2755
    %v2757 = vand.u32 %v986, 4294901760
    %2758 = vmatmul.f32.gmra.mxu0 %v2757
    %v2759 = vpop.f32.mrf.mxu0
    %v2760 = vadd.f32 %v2659, %v2759
    %2761 = vdwg.mxu0
    %v2762 = vand.u32 %v1051, 4294901760
    %v2763 = vsub.f32 %v1051, %v2762
    %2764 = vmatpush.msra.mxu0 %v2763
    %v2765 = vand.u32 %v1047, 4294901760
    %v2766 = vsub.f32 %v1047, %v2765
    %2767 = vmatpush.msra.mxu0 %v2766
    %v2768 = vand.u32 %v1043, 4294901760
    %v2769 = vsub.f32 %v1043, %v2768
    %2770 = vmatpush.msra.mxu0 %v2769
    %v2771 = vand.u32 %v1039, 4294901760
    %v2772 = vsub.f32 %v1039, %v2771
    %2773 = vmatpush.msra.mxu0 %v2772
    %v2774 = vand.u32 %v1035, 4294901760
    %v2775 = vsub.f32 %v1035, %v2774
    %2776 = vmatpush.msra.mxu0 %v2775
    %v2777 = vand.u32 %v1031, 4294901760
    %v2778 = vsub.f32 %v1031, %v2777
    %2779 = vmatpush.msra.mxu0 %v2778
    %v2780 = vand.u32 %v1027, 4294901760
    %v2781 = vsub.f32 %v1027, %v2780
    %2782 = vmatpush.msra.mxu0 %v2781
    %v2783 = vand.u32 %v1023, 4294901760
    %v2784 = vsub.f32 %v1023, %v2783
    %2785 = vmatpush.msra.mxu0 %v2784
    %v2786 = vand.u32 %v1019, 4294901760
    %v2787 = vsub.f32 %v1019, %v2786
    %2788 = vmatpush.msra.mxu0 %v2787
    %v2789 = vand.u32 %v1015, 4294901760
    %v2790 = vsub.f32 %v1015, %v2789
    %2791 = vmatpush.msra.mxu0 %v2790
    %v2792 = vand.u32 %v1011, 4294901760
    %v2793 = vsub.f32 %v1011, %v2792
    %2794 = vmatpush.msra.mxu0 %v2793
    %v2795 = vand.u32 %v1007, 4294901760
    %v2796 = vsub.f32 %v1007, %v2795
    %2797 = vmatpush.msra.mxu0 %v2796
    %v2798 = vand.u32 %v1003, 4294901760
    %v2799 = vsub.f32 %v1003, %v2798
    %2800 = vmatpush.msra.mxu0 %v2799
    %v2801 = vand.u32 %v999, 4294901760
    %v2802 = vsub.f32 %v999, %v2801
    %2803 = vmatpush.msra.mxu0 %v2802
    %v2804 = vand.u32 %v995, 4294901760
    %v2805 = vsub.f32 %v995, %v2804
    %2806 = vmatpush.msra.mxu0 %v2805
    %v2807 = vand.u32 %v991, 4294901760
    %v2808 = vsub.f32 %v991, %v2807
    %2809 = vmatpush.msra.mxu0 %v2808
    %v2810 = vand.u32 %v986, 4294901760
    %v2811 = vsub.f32 %v986, %v2810
    %2812 = vmatmul.f32.gmra.mxu0 %v2811
    %v2813 = vpop.f32.mrf.mxu0
    %v2814 = vadd.f32 %v2760, %v2813
    %2815 = vdwg.mxu0
    %v2816 = vand.u32 %v1051, 4294901760
    %2817 = vmatpush.msra.mxu0 %v2816
    %v2818 = vand.u32 %v1047, 4294901760
    %2819 = vmatpush.msra.mxu0 %v2818
    %v2820 = vand.u32 %v1043, 4294901760
    %2821 = vmatpush.msra.mxu0 %v2820
    %v2822 = vand.u32 %v1039, 4294901760
    %2823 = vmatpush.msra.mxu0 %v2822
    %v2824 = vand.u32 %v1035, 4294901760
    %2825 = vmatpush.msra.mxu0 %v2824
    %v2826 = vand.u32 %v1031, 4294901760
    %2827 = vmatpush.msra.mxu0 %v2826
    %v2828 = vand.u32 %v1027, 4294901760
    %2829 = vmatpush.msra.mxu0 %v2828
    %v2830 = vand.u32 %v1023, 4294901760
    %2831 = vmatpush.msra.mxu0 %v2830
    %v2832 = vand.u32 %v1019, 4294901760
    %2833 = vmatpush.msra.mxu0 %v2832
    %v2834 = vand.u32 %v1015, 4294901760
    %2835 = vmatpush.msra.mxu0 %v2834
    %v2836 = vand.u32 %v1011, 4294901760
    %2837 = vmatpush.msra.mxu0 %v2836
    %v2838 = vand.u32 %v1007, 4294901760
    %2839 = vmatpush.msra.mxu0 %v2838
    %v2840 = vand.u32 %v1003, 4294901760
    %2841 = vmatpush.msra.mxu0 %v2840
    %v2842 = vand.u32 %v999, 4294901760
    %2843 = vmatpush.msra.mxu0 %v2842
    %v2844 = vand.u32 %v995, 4294901760
    %2845 = vmatpush.msra.mxu0 %v2844
    %v2846 = vand.u32 %v991, 4294901760
    %2847 = vmatpush.msra.mxu0 %v2846
    %v2848 = vand.u32 %v986, 4294901760
    %v2849 = vsub.f32 %v986, %v2848
    %v2850 = vand.u32 %v2849, 4294901760
    %2851 = vmatmul.f32.gmra.mxu0 %v2850
    %v2852 = vpop.f32.mrf.mxu0
    %v2853 = vadd.f32 %v2814, %v2852
    %2854 = vdwg.mxu0
    %v2855 = vand.u32 %v1051, 4294901760
    %v2856 = vsub.f32 %v1051, %v2855
    %v2857 = vand.u32 %v2856, 4294901760
    %2858 = vmatpush.msra.mxu0 %v2857
    %v2859 = vand.u32 %v1047, 4294901760
    %v2860 = vsub.f32 %v1047, %v2859
    %v2861 = vand.u32 %v2860, 4294901760
    %2862 = vmatpush.msra.mxu0 %v2861
    %v2863 = vand.u32 %v1043, 4294901760
    %v2864 = vsub.f32 %v1043, %v2863
    %v2865 = vand.u32 %v2864, 4294901760
    %2866 = vmatpush.msra.mxu0 %v2865
    %v2867 = vand.u32 %v1039, 4294901760
    %v2868 = vsub.f32 %v1039, %v2867
    %v2869 = vand.u32 %v2868, 4294901760
    %2870 = vmatpush.msra.mxu0 %v2869
    %v2871 = vand.u32 %v1035, 4294901760
    %v2872 = vsub.f32 %v1035, %v2871
    %v2873 = vand.u32 %v2872, 4294901760
    %2874 = vmatpush.msra.mxu0 %v2873
    %v2875 = vand.u32 %v1031, 4294901760
    %v2876 = vsub.f32 %v1031, %v2875
    %v2877 = vand.u32 %v2876, 4294901760
    %2878 = vmatpush.msra.mxu0 %v2877
    %v2879 = vand.u32 %v1027, 4294901760
    %v2880 = vsub.f32 %v1027, %v2879
    %v2881 = vand.u32 %v2880, 4294901760
    %2882 = vmatpush.msra.mxu0 %v2881
    %v2883 = vand.u32 %v1023, 4294901760
    %v2884 = vsub.f32 %v1023, %v2883
    %v2885 = vand.u32 %v2884, 4294901760
    %2886 = vmatpush.msra.mxu0 %v2885
    %v2887 = vand.u32 %v1019, 4294901760
    %v2888 = vsub.f32 %v1019, %v2887
    %v2889 = vand.u32 %v2888, 4294901760
    %2890 = vmatpush.msra.mxu0 %v2889
    %v2891 = vand.u32 %v1015, 4294901760
    %v2892 = vsub.f32 %v1015, %v2891
    %v2893 = vand.u32 %v2892, 4294901760
    %2894 = vmatpush.msra.mxu0 %v2893
    %v2895 = vand.u32 %v1011, 4294901760
    %v2896 = vsub.f32 %v1011, %v2895
    %v2897 = vand.u32 %v2896, 4294901760
    %2898 = vmatpush.msra.mxu0 %v2897
    %v2899 = vand.u32 %v1007, 4294901760
    %v2900 = vsub.f32 %v1007, %v2899
    %v2901 = vand.u32 %v2900, 4294901760
    %2902 = vmatpush.msra.mxu0 %v2901
    %v2903 = vand.u32 %v1003, 4294901760
    %v2904 = vsub.f32 %v1003, %v2903
    %v2905 = vand.u32 %v2904, 4294901760
    %2906 = vmatpush.msra.mxu0 %v2905
    %v2907 = vand.u32 %v999, 4294901760
    %v2908 = vsub.f32 %v999, %v2907
    %v2909 = vand.u32 %v2908, 4294901760
    %2910 = vmatpush.msra.mxu0 %v2909
    %v2911 = vand.u32 %v995, 4294901760
    %v2912 = vsub.f32 %v995, %v2911
    %v2913 = vand.u32 %v2912, 4294901760
    %2914 = vmatpush.msra.mxu0 %v2913
    %v2915 = vand.u32 %v991, 4294901760
    %v2916 = vsub.f32 %v991, %v2915
    %v2917 = vand.u32 %v2916, 4294901760
    %2918 = vmatpush.msra.mxu0 %v2917
    %v2919 = vand.u32 %v986, 4294901760
    %2920 = vmatmul.f32.gmra.mxu0 %v2919
    %v2921 = vpop.f32.mrf.mxu0
    %v2922 = vadd.f32 %v2853, %v2921
    %2923 = vdwg.mxu0
    %v2924 = vand.u32 %v1051, 4294901760
    %2925 = vmatpush.msra.mxu0 %v2924
    %v2926 = vand.u32 %v1047, 4294901760
    %2927 = vmatpush.msra.mxu0 %v2926
    %v2928 = vand.u32 %v1043, 4294901760
    %2929 = vmatpush.msra.mxu0 %v2928
    %v2930 = vand.u32 %v1039, 4294901760
    %2931 = vmatpush.msra.mxu0 %v2930
    %v2932 = vand.u32 %v1035, 4294901760
    %2933 = vmatpush.msra.mxu0 %v2932
    %v2934 = vand.u32 %v1031, 4294901760
    %2935 = vmatpush.msra.mxu0 %v2934
    %v2936 = vand.u32 %v1027, 4294901760
    %2937 = vmatpush.msra.mxu0 %v2936
    %v2938 = vand.u32 %v1023, 4294901760
    %2939 = vmatpush.msra.mxu0 %v2938
    %v2940 = vand.u32 %v1019, 4294901760
    %2941 = vmatpush.msra.mxu0 %v2940
    %v2942 = vand.u32 %v1015, 4294901760
    %2943 = vmatpush.msra.mxu0 %v2942
    %v2944 = vand.u32 %v1011, 4294901760
    %2945 = vmatpush.msra.mxu0 %v2944
    %v2946 = vand.u32 %v1007, 4294901760
    %2947 = vmatpush.msra.mxu0 %v2946
    %v2948 = vand.u32 %v1003, 4294901760
    %2949 = vmatpush.msra.mxu0 %v2948
    %v2950 = vand.u32 %v999, 4294901760
    %2951 = vmatpush.msra.mxu0 %v2950
    %v2952 = vand.u32 %v995, 4294901760
    %2953 = vmatpush.msra.mxu0 %v2952
    %v2954 = vand.u32 %v991, 4294901760
    %2955 = vmatpush.msra.mxu0 %v2954
    %v2956 = vand.u32 %v986, 4294901760
    %2957 = vmatmul.f32.gmra.mxu0 %v2956
    %v2958 = vpop.f32.mrf.mxu0
    %v2959 = vadd.f32 %v2922, %v2958
    %2960 = vdwg.mxu0
    %v2961 = vand.u32 %v1115, 4294901760
    %2962 = vmatpush.msra.mxu0 %v2961
    %v2963 = vand.u32 %v1111, 4294901760
    %2964 = vmatpush.msra.mxu0 %v2963
    %v2965 = vand.u32 %v1107, 4294901760
    %2966 = vmatpush.msra.mxu0 %v2965
    %v2967 = vand.u32 %v1103, 4294901760
    %2968 = vmatpush.msra.mxu0 %v2967
    %v2969 = vand.u32 %v1099, 4294901760
    %2970 = vmatpush.msra.mxu0 %v2969
    %v2971 = vand.u32 %v1095, 4294901760
    %2972 = vmatpush.msra.mxu0 %v2971
    %v2973 = vand.u32 %v1091, 4294901760
    %2974 = vmatpush.msra.mxu0 %v2973
    %v2975 = vand.u32 %v1087, 4294901760
    %2976 = vmatpush.msra.mxu0 %v2975
    %v2977 = vand.u32 %v1083, 4294901760
    %2978 = vmatpush.msra.mxu0 %v2977
    %v2979 = vand.u32 %v1079, 4294901760
    %2980 = vmatpush.msra.mxu0 %v2979
    %v2981 = vand.u32 %v1075, 4294901760
    %2982 = vmatpush.msra.mxu0 %v2981
    %v2983 = vand.u32 %v1071, 4294901760
    %2984 = vmatpush.msra.mxu0 %v2983
    %v2985 = vand.u32 %v1067, 4294901760
    %2986 = vmatpush.msra.mxu0 %v2985
    %v2987 = vand.u32 %v1063, 4294901760
    %2988 = vmatpush.msra.mxu0 %v2987
    %v2989 = vand.u32 %v1059, 4294901760
    %2990 = vmatpush.msra.mxu0 %v2989
    %v2991 = vand.u32 %v1055, 4294901760
    %2992 = vmatpush.msra.mxu0 %v2991
    %v2993 = vand.u32 %v987, 4294901760
    %v2994 = vsub.f32 %v987, %v2993
    %v2995 = vand.u32 %v2994, 4294901760
    %v2996 = vsub.f32 %v2994, %v2995
    %v2997 = vand.u32 %v2996, 4294901760
    %2998 = vmatmul.f32.gmra.mxu0 %v2997
    %v2999 = vpop.f32.mrf.mxu0
    %v3000 = vadd.f32 %v2959, %v2999
    %3001 = vdwg.mxu0
    %v3002 = vand.u32 %v1115, 4294901760
    %v3003 = vsub.f32 %v1115, %v3002
    %v3004 = vand.u32 %v3003, 4294901760
    %v3005 = vsub.f32 %v3003, %v3004
    %v3006 = vand.u32 %v3005, 4294901760
    %3007 = vmatpush.msra.mxu0 %v3006
    %v3008 = vand.u32 %v1111, 4294901760
    %v3009 = vsub.f32 %v1111, %v3008
    %v3010 = vand.u32 %v3009, 4294901760
    %v3011 = vsub.f32 %v3009, %v3010
    %v3012 = vand.u32 %v3011, 4294901760
    %3013 = vmatpush.msra.mxu0 %v3012
    %v3014 = vand.u32 %v1107, 4294901760
    %v3015 = vsub.f32 %v1107, %v3014
    %v3016 = vand.u32 %v3015, 4294901760
    %v3017 = vsub.f32 %v3015, %v3016
    %v3018 = vand.u32 %v3017, 4294901760
    %3019 = vmatpush.msra.mxu0 %v3018
    %v3020 = vand.u32 %v1103, 4294901760
    %v3021 = vsub.f32 %v1103, %v3020
    %v3022 = vand.u32 %v3021, 4294901760
    %v3023 = vsub.f32 %v3021, %v3022
    %v3024 = vand.u32 %v3023, 4294901760
    %3025 = vmatpush.msra.mxu0 %v3024
    %v3026 = vand.u32 %v1099, 4294901760
    %v3027 = vsub.f32 %v1099, %v3026
    %v3028 = vand.u32 %v3027, 4294901760
    %v3029 = vsub.f32 %v3027, %v3028
    %v3030 = vand.u32 %v3029, 4294901760
    %3031 = vmatpush.msra.mxu0 %v3030
    %v3032 = vand.u32 %v1095, 4294901760
    %v3033 = vsub.f32 %v1095, %v3032
    %v3034 = vand.u32 %v3033, 4294901760
    %v3035 = vsub.f32 %v3033, %v3034
    %v3036 = vand.u32 %v3035, 4294901760
    %3037 = vmatpush.msra.mxu0 %v3036
    %v3038 = vand.u32 %v1091, 4294901760
    %v3039 = vsub.f32 %v1091, %v3038
    %v3040 = vand.u32 %v3039, 4294901760
    %v3041 = vsub.f32 %v3039, %v3040
    %v3042 = vand.u32 %v3041, 4294901760
    %3043 = vmatpush.msra.mxu0 %v3042
    %v3044 = vand.u32 %v1087, 4294901760
    %v3045 = vsub.f32 %v1087, %v3044
    %v3046 = vand.u32 %v3045, 4294901760
    %v3047 = vsub.f32 %v3045, %v3046
    %v3048 = vand.u32 %v3047, 4294901760
    %3049 = vmatpush.msra.mxu0 %v3048
    %v3050 = vand.u32 %v1083, 4294901760
    %v3051 = vsub.f32 %v1083, %v3050
    %v3052 = vand.u32 %v3051, 4294901760
    %v3053 = vsub.f32 %v3051, %v3052
    %v3054 = vand.u32 %v3053, 4294901760
    %3055 = vmatpush.msra.mxu0 %v3054
    %v3056 = vand.u32 %v1079, 4294901760
    %v3057 = vsub.f32 %v1079, %v3056
    %v3058 = vand.u32 %v3057, 4294901760
    %v3059 = vsub.f32 %v3057, %v3058
    %v3060 = vand.u32 %v3059, 4294901760
    %3061 = vmatpush.msra.mxu0 %v3060
    %v3062 = vand.u32 %v1075, 4294901760
    %v3063 = vsub.f32 %v1075, %v3062
    %v3064 = vand.u32 %v3063, 4294901760
    %v3065 = vsub.f32 %v3063, %v3064
    %v3066 = vand.u32 %v3065, 4294901760
    %3067 = vmatpush.msra.mxu0 %v3066
    %v3068 = vand.u32 %v1071, 4294901760
    %v3069 = vsub.f32 %v1071, %v3068
    %v3070 = vand.u32 %v3069, 4294901760
    %v3071 = vsub.f32 %v3069, %v3070
    %v3072 = vand.u32 %v3071, 4294901760
    %3073 = vmatpush.msra.mxu0 %v3072
    %v3074 = vand.u32 %v1067, 4294901760
    %v3075 = vsub.f32 %v1067, %v3074
    %v3076 = vand.u32 %v3075, 4294901760
    %v3077 = vsub.f32 %v3075, %v3076
    %v3078 = vand.u32 %v3077, 4294901760
    %3079 = vmatpush.msra.mxu0 %v3078
    %v3080 = vand.u32 %v1063, 4294901760
    %v3081 = vsub.f32 %v1063, %v3080
    %v3082 = vand.u32 %v3081, 4294901760
    %v3083 = vsub.f32 %v3081, %v3082
    %v3084 = vand.u32 %v3083, 4294901760
    %3085 = vmatpush.msra.mxu0 %v3084
    %v3086 = vand.u32 %v1059, 4294901760
    %v3087 = vsub.f32 %v1059, %v3086
    %v3088 = vand.u32 %v3087, 4294901760
    %v3089 = vsub.f32 %v3087, %v3088
    %v3090 = vand.u32 %v3089, 4294901760
    %3091 = vmatpush.msra.mxu0 %v3090
    %v3092 = vand.u32 %v1055, 4294901760
    %v3093 = vsub.f32 %v1055, %v3092
    %v3094 = vand.u32 %v3093, 4294901760
    %v3095 = vsub.f32 %v3093, %v3094
    %v3096 = vand.u32 %v3095, 4294901760
    %3097 = vmatpush.msra.mxu0 %v3096
    %v3098 = vand.u32 %v987, 4294901760
    %3099 = vmatmul.f32.gmra.mxu0 %v3098
    %v3100 = vpop.f32.mrf.mxu0
    %v3101 = vadd.f32 %v3000, %v3100
    %3102 = vdwg.mxu0
    %v3103 = vand.u32 %v1115, 4294901760
    %v3104 = vsub.f32 %v1115, %v3103
    %3105 = vmatpush.msra.mxu0 %v3104
    %v3106 = vand.u32 %v1111, 4294901760
    %v3107 = vsub.f32 %v1111, %v3106
    %3108 = vmatpush.msra.mxu0 %v3107
    %v3109 = vand.u32 %v1107, 4294901760
    %v3110 = vsub.f32 %v1107, %v3109
    %3111 = vmatpush.msra.mxu0 %v3110
    %v3112 = vand.u32 %v1103, 4294901760
    %v3113 = vsub.f32 %v1103, %v3112
    %3114 = vmatpush.msra.mxu0 %v3113
    %v3115 = vand.u32 %v1099, 4294901760
    %v3116 = vsub.f32 %v1099, %v3115
    %3117 = vmatpush.msra.mxu0 %v3116
    %v3118 = vand.u32 %v1095, 4294901760
    %v3119 = vsub.f32 %v1095, %v3118
    %3120 = vmatpush.msra.mxu0 %v3119
    %v3121 = vand.u32 %v1091, 4294901760
    %v3122 = vsub.f32 %v1091, %v3121
    %3123 = vmatpush.msra.mxu0 %v3122
    %v3124 = vand.u32 %v1087, 4294901760
    %v3125 = vsub.f32 %v1087, %v3124
    %3126 = vmatpush.msra.mxu0 %v3125
    %v3127 = vand.u32 %v1083, 4294901760
    %v3128 = vsub.f32 %v1083, %v3127
    %3129 = vmatpush.msra.mxu0 %v3128
    %v3130 = vand.u32 %v1079, 4294901760
    %v3131 = vsub.f32 %v1079, %v3130
    %3132 = vmatpush.msra.mxu0 %v3131
    %v3133 = vand.u32 %v1075, 4294901760
    %v3134 = vsub.f32 %v1075, %v3133
    %3135 = vmatpush.msra.mxu0 %v3134
    %v3136 = vand.u32 %v1071, 4294901760
    %v3137 = vsub.f32 %v1071, %v3136
    %3138 = vmatpush.msra.mxu0 %v3137
    %v3139 = vand.u32 %v1067, 4294901760
    %v3140 = vsub.f32 %v1067, %v3139
    %3141 = vmatpush.msra.mxu0 %v3140
    %v3142 = vand.u32 %v1063, 4294901760
    %v3143 = vsub.f32 %v1063, %v3142
    %3144 = vmatpush.msra.mxu0 %v3143
    %v3145 = vand.u32 %v1059, 4294901760
    %v3146 = vsub.f32 %v1059, %v3145
    %3147 = vmatpush.msra.mxu0 %v3146
    %v3148 = vand.u32 %v1055, 4294901760
    %v3149 = vsub.f32 %v1055, %v3148
    %3150 = vmatpush.msra.mxu0 %v3149
    %v3151 = vand.u32 %v987, 4294901760
    %v3152 = vsub.f32 %v987, %v3151
    %3153 = vmatmul.f32.gmra.mxu0 %v3152
    %v3154 = vpop.f32.mrf.mxu0
    %v3155 = vadd.f32 %v3101, %v3154
    %3156 = vdwg.mxu0
    %v3157 = vand.u32 %v1115, 4294901760
    %3158 = vmatpush.msra.mxu0 %v3157
    %v3159 = vand.u32 %v1111, 4294901760
    %3160 = vmatpush.msra.mxu0 %v3159
    %v3161 = vand.u32 %v1107, 4294901760
    %3162 = vmatpush.msra.mxu0 %v3161
    %v3163 = vand.u32 %v1103, 4294901760
    %3164 = vmatpush.msra.mxu0 %v3163
    %v3165 = vand.u32 %v1099, 4294901760
    %3166 = vmatpush.msra.mxu0 %v3165
    %v3167 = vand.u32 %v1095, 4294901760
    %3168 = vmatpush.msra.mxu0 %v3167
    %v3169 = vand.u32 %v1091, 4294901760
    %3170 = vmatpush.msra.mxu0 %v3169
    %v3171 = vand.u32 %v1087, 4294901760
    %3172 = vmatpush.msra.mxu0 %v3171
    %v3173 = vand.u32 %v1083, 4294901760
    %3174 = vmatpush.msra.mxu0 %v3173
    %v3175 = vand.u32 %v1079, 4294901760
    %3176 = vmatpush.msra.mxu0 %v3175
    %v3177 = vand.u32 %v1075, 4294901760
    %3178 = vmatpush.msra.mxu0 %v3177
    %v3179 = vand.u32 %v1071, 4294901760
    %3180 = vmatpush.msra.mxu0 %v3179
    %v3181 = vand.u32 %v1067, 4294901760
    %3182 = vmatpush.msra.mxu0 %v3181
    %v3183 = vand.u32 %v1063, 4294901760
    %3184 = vmatpush.msra.mxu0 %v3183
    %v3185 = vand.u32 %v1059, 4294901760
    %3186 = vmatpush.msra.mxu0 %v3185
    %v3187 = vand.u32 %v1055, 4294901760
    %3188 = vmatpush.msra.mxu0 %v3187
    %v3189 = vand.u32 %v987, 4294901760
    %v3190 = vsub.f32 %v987, %v3189
    %v3191 = vand.u32 %v3190, 4294901760
    %3192 = vmatmul.f32.gmra.mxu0 %v3191
    %v3193 = vpop.f32.mrf.mxu0
    %v3194 = vadd.f32 %v3155, %v3193
    %3195 = vdwg.mxu0
    %v3196 = vand.u32 %v1115, 4294901760
    %v3197 = vsub.f32 %v1115, %v3196
    %v3198 = vand.u32 %v3197, 4294901760
    %3199 = vmatpush.msra.mxu0 %v3198
    %v3200 = vand.u32 %v1111, 4294901760
    %v3201 = vsub.f32 %v1111, %v3200
    %v3202 = vand.u32 %v3201, 4294901760
    %3203 = vmatpush.msra.mxu0 %v3202
    %v3204 = vand.u32 %v1107, 4294901760
    %v3205 = vsub.f32 %v1107, %v3204
    %v3206 = vand.u32 %v3205, 4294901760
    %3207 = vmatpush.msra.mxu0 %v3206
    %v3208 = vand.u32 %v1103, 4294901760
    %v3209 = vsub.f32 %v1103, %v3208
    %v3210 = vand.u32 %v3209, 4294901760
    %3211 = vmatpush.msra.mxu0 %v3210
    %v3212 = vand.u32 %v1099, 4294901760
    %v3213 = vsub.f32 %v1099, %v3212
    %v3214 = vand.u32 %v3213, 4294901760
    %3215 = vmatpush.msra.mxu0 %v3214
    %v3216 = vand.u32 %v1095, 4294901760
    %v3217 = vsub.f32 %v1095, %v3216
    %v3218 = vand.u32 %v3217, 4294901760
    %3219 = vmatpush.msra.mxu0 %v3218
    %v3220 = vand.u32 %v1091, 4294901760
    %v3221 = vsub.f32 %v1091, %v3220
    %v3222 = vand.u32 %v3221, 4294901760
    %3223 = vmatpush.msra.mxu0 %v3222
    %v3224 = vand.u32 %v1087, 4294901760
    %v3225 = vsub.f32 %v1087, %v3224
    %v3226 = vand.u32 %v3225, 4294901760
    %3227 = vmatpush.msra.mxu0 %v3226
    %v3228 = vand.u32 %v1083, 4294901760
    %v3229 = vsub.f32 %v1083, %v3228
    %v3230 = vand.u32 %v3229, 4294901760
    %3231 = vmatpush.msra.mxu0 %v3230
    %v3232 = vand.u32 %v1079, 4294901760
    %v3233 = vsub.f32 %v1079, %v3232
    %v3234 = vand.u32 %v3233, 4294901760
    %3235 = vmatpush.msra.mxu0 %v3234
    %v3236 = vand.u32 %v1075, 4294901760
    %v3237 = vsub.f32 %v1075, %v3236
    %v3238 = vand.u32 %v3237, 4294901760
    %3239 = vmatpush.msra.mxu0 %v3238
    %v3240 = vand.u32 %v1071, 4294901760
    %v3241 = vsub.f32 %v1071, %v3240
    %v3242 = vand.u32 %v3241, 4294901760
    %3243 = vmatpush.msra.mxu0 %v3242
    %v3244 = vand.u32 %v1067, 4294901760
    %v3245 = vsub.f32 %v1067, %v3244
    %v3246 = vand.u32 %v3245, 4294901760
    %3247 = vmatpush.msra.mxu0 %v3246
    %v3248 = vand.u32 %v1063, 4294901760
    %v3249 = vsub.f32 %v1063, %v3248
    %v3250 = vand.u32 %v3249, 4294901760
    %3251 = vmatpush.msra.mxu0 %v3250
    %v3252 = vand.u32 %v1059, 4294901760
    %v3253 = vsub.f32 %v1059, %v3252
    %v3254 = vand.u32 %v3253, 4294901760
    %3255 = vmatpush.msra.mxu0 %v3254
    %v3256 = vand.u32 %v1055, 4294901760
    %v3257 = vsub.f32 %v1055, %v3256
    %v3258 = vand.u32 %v3257, 4294901760
    %3259 = vmatpush.msra.mxu0 %v3258
    %v3260 = vand.u32 %v987, 4294901760
    %3261 = vmatmul.f32.gmra.mxu0 %v3260
    %v3262 = vpop.f32.mrf.mxu0
    %v3263 = vadd.f32 %v3194, %v3262
    %3264 = vdwg.mxu0
    %v3265 = vand.u32 %v1115, 4294901760
    %3266 = vmatpush.msra.mxu0 %v3265
    %v3267 = vand.u32 %v1111, 4294901760
    %3268 = vmatpush.msra.mxu0 %v3267
    %v3269 = vand.u32 %v1107, 4294901760
    %3270 = vmatpush.msra.mxu0 %v3269
    %v3271 = vand.u32 %v1103, 4294901760
    %3272 = vmatpush.msra.mxu0 %v3271
    %v3273 = vand.u32 %v1099, 4294901760
    %3274 = vmatpush.msra.mxu0 %v3273
    %v3275 = vand.u32 %v1095, 4294901760
    %3276 = vmatpush.msra.mxu0 %v3275
    %v3277 = vand.u32 %v1091, 4294901760
    %3278 = vmatpush.msra.mxu0 %v3277
    %v3279 = vand.u32 %v1087, 4294901760
    %3280 = vmatpush.msra.mxu0 %v3279
    %v3281 = vand.u32 %v1083, 4294901760
    %3282 = vmatpush.msra.mxu0 %v3281
    %v3283 = vand.u32 %v1079, 4294901760
    %3284 = vmatpush.msra.mxu0 %v3283
    %v3285 = vand.u32 %v1075, 4294901760
    %3286 = vmatpush.msra.mxu0 %v3285
    %v3287 = vand.u32 %v1071, 4294901760
    %3288 = vmatpush.msra.mxu0 %v3287
    %v3289 = vand.u32 %v1067, 4294901760
    %3290 = vmatpush.msra.mxu0 %v3289
    %v3291 = vand.u32 %v1063, 4294901760
    %3292 = vmatpush.msra.mxu0 %v3291
    %v3293 = vand.u32 %v1059, 4294901760
    %3294 = vmatpush.msra.mxu0 %v3293
    %v3295 = vand.u32 %v1055, 4294901760
    %3296 = vmatpush.msra.mxu0 %v3295
    %v3297 = vand.u32 %v987, 4294901760
    %3298 = vmatmul.f32.gmra.mxu0 %v3297
    %v3299 = vpop.f32.mrf.mxu0
    %v3300 = vadd.f32 %v3263, %v3299
    %3301 = vdwg.mxu0
    %v3302 = vand.u32 %v1179, 4294901760
    %3303 = vmatpush.msra.mxu0 %v3302
    %v3304 = vand.u32 %v1175, 4294901760
    %3305 = vmatpush.msra.mxu0 %v3304
    %v3306 = vand.u32 %v1171, 4294901760
    %3307 = vmatpush.msra.mxu0 %v3306
    %v3308 = vand.u32 %v1167, 4294901760
    %3309 = vmatpush.msra.mxu0 %v3308
    %v3310 = vand.u32 %v1163, 4294901760
    %3311 = vmatpush.msra.mxu0 %v3310
    %v3312 = vand.u32 %v1159, 4294901760
    %3313 = vmatpush.msra.mxu0 %v3312
    %v3314 = vand.u32 %v1155, 4294901760
    %3315 = vmatpush.msra.mxu0 %v3314
    %v3316 = vand.u32 %v1151, 4294901760
    %3317 = vmatpush.msra.mxu0 %v3316
    %v3318 = vand.u32 %v1147, 4294901760
    %3319 = vmatpush.msra.mxu0 %v3318
    %v3320 = vand.u32 %v1143, 4294901760
    %3321 = vmatpush.msra.mxu0 %v3320
    %v3322 = vand.u32 %v1139, 4294901760
    %3323 = vmatpush.msra.mxu0 %v3322
    %v3324 = vand.u32 %v1135, 4294901760
    %3325 = vmatpush.msra.mxu0 %v3324
    %v3326 = vand.u32 %v1131, 4294901760
    %3327 = vmatpush.msra.mxu0 %v3326
    %v3328 = vand.u32 %v1127, 4294901760
    %3329 = vmatpush.msra.mxu0 %v3328
    %v3330 = vand.u32 %v1123, 4294901760
    %3331 = vmatpush.msra.mxu0 %v3330
    %v3332 = vand.u32 %v1119, 4294901760
    %3333 = vmatpush.msra.mxu0 %v3332
    %v3334 = vand.u32 %v988, 4294901760
    %v3335 = vsub.f32 %v988, %v3334
    %v3336 = vand.u32 %v3335, 4294901760
    %v3337 = vsub.f32 %v3335, %v3336
    %v3338 = vand.u32 %v3337, 4294901760
    %3339 = vmatmul.f32.gmra.mxu0 %v3338
    %v3340 = vpop.f32.mrf.mxu0
    %v3341 = vadd.f32 %v3300, %v3340
    %3342 = vdwg.mxu0
    %v3343 = vand.u32 %v1179, 4294901760
    %v3344 = vsub.f32 %v1179, %v3343
    %v3345 = vand.u32 %v3344, 4294901760
    %v3346 = vsub.f32 %v3344, %v3345
    %v3347 = vand.u32 %v3346, 4294901760
    %3348 = vmatpush.msra.mxu0 %v3347
    %v3349 = vand.u32 %v1175, 4294901760
    %v3350 = vsub.f32 %v1175, %v3349
    %v3351 = vand.u32 %v3350, 4294901760
    %v3352 = vsub.f32 %v3350, %v3351
    %v3353 = vand.u32 %v3352, 4294901760
    %3354 = vmatpush.msra.mxu0 %v3353
    %v3355 = vand.u32 %v1171, 4294901760
    %v3356 = vsub.f32 %v1171, %v3355
    %v3357 = vand.u32 %v3356, 4294901760
    %v3358 = vsub.f32 %v3356, %v3357
    %v3359 = vand.u32 %v3358, 4294901760
    %3360 = vmatpush.msra.mxu0 %v3359
    %v3361 = vand.u32 %v1167, 4294901760
    %v3362 = vsub.f32 %v1167, %v3361
    %v3363 = vand.u32 %v3362, 4294901760
    %v3364 = vsub.f32 %v3362, %v3363
    %v3365 = vand.u32 %v3364, 4294901760
    %3366 = vmatpush.msra.mxu0 %v3365
    %v3367 = vand.u32 %v1163, 4294901760
    %v3368 = vsub.f32 %v1163, %v3367
    %v3369 = vand.u32 %v3368, 4294901760
    %v3370 = vsub.f32 %v3368, %v3369
    %v3371 = vand.u32 %v3370, 4294901760
    %3372 = vmatpush.msra.mxu0 %v3371
    %v3373 = vand.u32 %v1159, 4294901760
    %v3374 = vsub.f32 %v1159, %v3373
    %v3375 = vand.u32 %v3374, 4294901760
    %v3376 = vsub.f32 %v3374, %v3375
    %v3377 = vand.u32 %v3376, 4294901760
    %3378 = vmatpush.msra.mxu0 %v3377
    %v3379 = vand.u32 %v1155, 4294901760
    %v3380 = vsub.f32 %v1155, %v3379
    %v3381 = vand.u32 %v3380, 4294901760
    %v3382 = vsub.f32 %v3380, %v3381
    %v3383 = vand.u32 %v3382, 4294901760
    %3384 = vmatpush.msra.mxu0 %v3383
    %v3385 = vand.u32 %v1151, 4294901760
    %v3386 = vsub.f32 %v1151, %v3385
    %v3387 = vand.u32 %v3386, 4294901760
    %v3388 = vsub.f32 %v3386, %v3387
    %v3389 = vand.u32 %v3388, 4294901760
    %3390 = vmatpush.msra.mxu0 %v3389
    %v3391 = vand.u32 %v1147, 4294901760
    %v3392 = vsub.f32 %v1147, %v3391
    %v3393 = vand.u32 %v3392, 4294901760
    %v3394 = vsub.f32 %v3392, %v3393
    %v3395 = vand.u32 %v3394, 4294901760
    %3396 = vmatpush.msra.mxu0 %v3395
    %v3397 = vand.u32 %v1143, 4294901760
    %v3398 = vsub.f32 %v1143, %v3397
    %v3399 = vand.u32 %v3398, 4294901760
    %v3400 = vsub.f32 %v3398, %v3399
    %v3401 = vand.u32 %v3400, 4294901760
    %3402 = vmatpush.msra.mxu0 %v3401
    %v3403 = vand.u32 %v1139, 4294901760
    %v3404 = vsub.f32 %v1139, %v3403
    %v3405 = vand.u32 %v3404, 4294901760
    %v3406 = vsub.f32 %v3404, %v3405
    %v3407 = vand.u32 %v3406, 4294901760
    %3408 = vmatpush.msra.mxu0 %v3407
    %v3409 = vand.u32 %v1135, 4294901760
    %v3410 = vsub.f32 %v1135, %v3409
    %v3411 = vand.u32 %v3410, 4294901760
    %v3412 = vsub.f32 %v3410, %v3411
    %v3413 = vand.u32 %v3412, 4294901760
    %3414 = vmatpush.msra.mxu0 %v3413
    %v3415 = vand.u32 %v1131, 4294901760
    %v3416 = vsub.f32 %v1131, %v3415
    %v3417 = vand.u32 %v3416, 4294901760
    %v3418 = vsub.f32 %v3416, %v3417
    %v3419 = vand.u32 %v3418, 4294901760
    %3420 = vmatpush.msra.mxu0 %v3419
    %v3421 = vand.u32 %v1127, 4294901760
    %v3422 = vsub.f32 %v1127, %v3421
    %v3423 = vand.u32 %v3422, 4294901760
    %v3424 = vsub.f32 %v3422, %v3423
    %v3425 = vand.u32 %v3424, 4294901760
    %3426 = vmatpush.msra.mxu0 %v3425
    %v3427 = vand.u32 %v1123, 4294901760
    %v3428 = vsub.f32 %v1123, %v3427
    %v3429 = vand.u32 %v3428, 4294901760
    %v3430 = vsub.f32 %v3428, %v3429
    %v3431 = vand.u32 %v3430, 4294901760
    %3432 = vmatpush.msra.mxu0 %v3431
    %v3433 = vand.u32 %v1119, 4294901760
    %v3434 = vsub.f32 %v1119, %v3433
    %v3435 = vand.u32 %v3434, 4294901760
    %v3436 = vsub.f32 %v3434, %v3435
    %v3437 = vand.u32 %v3436, 4294901760
    %3438 = vmatpush.msra.mxu0 %v3437
    %v3439 = vand.u32 %v988, 4294901760
    %3440 = vmatmul.f32.gmra.mxu0 %v3439
    %v3441 = vpop.f32.mrf.mxu0
    %v3442 = vadd.f32 %v3341, %v3441
    %3443 = vdwg.mxu0
    %v3444 = vand.u32 %v1179, 4294901760
    %v3445 = vsub.f32 %v1179, %v3444
    %3446 = vmatpush.msra.mxu0 %v3445
    %v3447 = vand.u32 %v1175, 4294901760
    %v3448 = vsub.f32 %v1175, %v3447
    %3449 = vmatpush.msra.mxu0 %v3448
    %v3450 = vand.u32 %v1171, 4294901760
    %v3451 = vsub.f32 %v1171, %v3450
    %3452 = vmatpush.msra.mxu0 %v3451
    %v3453 = vand.u32 %v1167, 4294901760
    %v3454 = vsub.f32 %v1167, %v3453
    %3455 = vmatpush.msra.mxu0 %v3454
    %v3456 = vand.u32 %v1163, 4294901760
    %v3457 = vsub.f32 %v1163, %v3456
    %3458 = vmatpush.msra.mxu0 %v3457
    %v3459 = vand.u32 %v1159, 4294901760
    %v3460 = vsub.f32 %v1159, %v3459
    %3461 = vmatpush.msra.mxu0 %v3460
    %v3462 = vand.u32 %v1155, 4294901760
    %v3463 = vsub.f32 %v1155, %v3462
    %3464 = vmatpush.msra.mxu0 %v3463
    %v3465 = vand.u32 %v1151, 4294901760
    %v3466 = vsub.f32 %v1151, %v3465
    %3467 = vmatpush.msra.mxu0 %v3466
    %v3468 = vand.u32 %v1147, 4294901760
    %v3469 = vsub.f32 %v1147, %v3468
    %3470 = vmatpush.msra.mxu0 %v3469
    %v3471 = vand.u32 %v1143, 4294901760
    %v3472 = vsub.f32 %v1143, %v3471
    %3473 = vmatpush.msra.mxu0 %v3472
    %v3474 = vand.u32 %v1139, 4294901760
    %v3475 = vsub.f32 %v1139, %v3474
    %3476 = vmatpush.msra.mxu0 %v3475
    %v3477 = vand.u32 %v1135, 4294901760
    %v3478 = vsub.f32 %v1135, %v3477
    %3479 = vmatpush.msra.mxu0 %v3478
    %v3480 = vand.u32 %v1131, 4294901760
    %v3481 = vsub.f32 %v1131, %v3480
    %3482 = vmatpush.msra.mxu0 %v3481
    %v3483 = vand.u32 %v1127, 4294901760
    %v3484 = vsub.f32 %v1127, %v3483
    %3485 = vmatpush.msra.mxu0 %v3484
    %v3486 = vand.u32 %v1123, 4294901760
    %v3487 = vsub.f32 %v1123, %v3486
    %3488 = vmatpush.msra.mxu0 %v3487
    %v3489 = vand.u32 %v1119, 4294901760
    %v3490 = vsub.f32 %v1119, %v3489
    %3491 = vmatpush.msra.mxu0 %v3490
    %v3492 = vand.u32 %v988, 4294901760
    %v3493 = vsub.f32 %v988, %v3492
    %3494 = vmatmul.f32.gmra.mxu0 %v3493
    %v3495 = vpop.f32.mrf.mxu0
    %v3496 = vadd.f32 %v3442, %v3495
    %3497 = vdwg.mxu0
    %v3498 = vand.u32 %v1179, 4294901760
    %3499 = vmatpush.msra.mxu0 %v3498
    %v3500 = vand.u32 %v1175, 4294901760
    %3501 = vmatpush.msra.mxu0 %v3500
    %v3502 = vand.u32 %v1171, 4294901760
    %3503 = vmatpush.msra.mxu0 %v3502
    %v3504 = vand.u32 %v1167, 4294901760
    %3505 = vmatpush.msra.mxu0 %v3504
    %v3506 = vand.u32 %v1163, 4294901760
    %3507 = vmatpush.msra.mxu0 %v3506
    %v3508 = vand.u32 %v1159, 4294901760
    %3509 = vmatpush.msra.mxu0 %v3508
    %v3510 = vand.u32 %v1155, 4294901760
    %3511 = vmatpush.msra.mxu0 %v3510
    %v3512 = vand.u32 %v1151, 4294901760
    %3513 = vmatpush.msra.mxu0 %v3512
    %v3514 = vand.u32 %v1147, 4294901760
    %3515 = vmatpush.msra.mxu0 %v3514
    %v3516 = vand.u32 %v1143, 4294901760
    %3517 = vmatpush.msra.mxu0 %v3516
    %v3518 = vand.u32 %v1139, 4294901760
    %3519 = vmatpush.msra.mxu0 %v3518
    %v3520 = vand.u32 %v1135, 4294901760
    %3521 = vmatpush.msra.mxu0 %v3520
    %v3522 = vand.u32 %v1131, 4294901760
    %3523 = vmatpush.msra.mxu0 %v3522
    %v3524 = vand.u32 %v1127, 4294901760
    %3525 = vmatpush.msra.mxu0 %v3524
    %v3526 = vand.u32 %v1123, 4294901760
    %3527 = vmatpush.msra.mxu0 %v3526
    %v3528 = vand.u32 %v1119, 4294901760
    %3529 = vmatpush.msra.mxu0 %v3528
    %v3530 = vand.u32 %v988, 4294901760
    %v3531 = vsub.f32 %v988, %v3530
    %v3532 = vand.u32 %v3531, 4294901760
    %3533 = vmatmul.f32.gmra.mxu0 %v3532
    %v3534 = vpop.f32.mrf.mxu0
    %v3535 = vadd.f32 %v3496, %v3534
    %3536 = vdwg.mxu0
    %v3537 = vand.u32 %v1179, 4294901760
    %v3538 = vsub.f32 %v1179, %v3537
    %v3539 = vand.u32 %v3538, 4294901760
    %3540 = vmatpush.msra.mxu0 %v3539
    %v3541 = vand.u32 %v1175, 4294901760
    %v3542 = vsub.f32 %v1175, %v3541
    %v3543 = vand.u32 %v3542, 4294901760
    %3544 = vmatpush.msra.mxu0 %v3543
    %v3545 = vand.u32 %v1171, 4294901760
    %v3546 = vsub.f32 %v1171, %v3545
    %v3547 = vand.u32 %v3546, 4294901760
    %3548 = vmatpush.msra.mxu0 %v3547
    %v3549 = vand.u32 %v1167, 4294901760
    %v3550 = vsub.f32 %v1167, %v3549
    %v3551 = vand.u32 %v3550, 4294901760
    %3552 = vmatpush.msra.mxu0 %v3551
    %v3553 = vand.u32 %v1163, 4294901760
    %v3554 = vsub.f32 %v1163, %v3553
    %v3555 = vand.u32 %v3554, 4294901760
    %3556 = vmatpush.msra.mxu0 %v3555
    %v3557 = vand.u32 %v1159, 4294901760
    %v3558 = vsub.f32 %v1159, %v3557
    %v3559 = vand.u32 %v3558, 4294901760
    %3560 = vmatpush.msra.mxu0 %v3559
    %v3561 = vand.u32 %v1155, 4294901760
    %v3562 = vsub.f32 %v1155, %v3561
    %v3563 = vand.u32 %v3562, 4294901760
    %3564 = vmatpush.msra.mxu0 %v3563
    %v3565 = vand.u32 %v1151, 4294901760
    %v3566 = vsub.f32 %v1151, %v3565
    %v3567 = vand.u32 %v3566, 4294901760
    %3568 = vmatpush.msra.mxu0 %v3567
    %v3569 = vand.u32 %v1147, 4294901760
    %v3570 = vsub.f32 %v1147, %v3569
    %v3571 = vand.u32 %v3570, 4294901760
    %3572 = vmatpush.msra.mxu0 %v3571
    %v3573 = vand.u32 %v1143, 4294901760
    %v3574 = vsub.f32 %v1143, %v3573
    %v3575 = vand.u32 %v3574, 4294901760
    %3576 = vmatpush.msra.mxu0 %v3575
    %v3577 = vand.u32 %v1139, 4294901760
    %v3578 = vsub.f32 %v1139, %v3577
    %v3579 = vand.u32 %v3578, 4294901760
    %3580 = vmatpush.msra.mxu0 %v3579
    %v3581 = vand.u32 %v1135, 4294901760
    %v3582 = vsub.f32 %v1135, %v3581
    %v3583 = vand.u32 %v3582, 4294901760
    %3584 = vmatpush.msra.mxu0 %v3583
    %v3585 = vand.u32 %v1131, 4294901760
    %v3586 = vsub.f32 %v1131, %v3585
    %v3587 = vand.u32 %v3586, 4294901760
    %3588 = vmatpush.msra.mxu0 %v3587
    %v3589 = vand.u32 %v1127, 4294901760
    %v3590 = vsub.f32 %v1127, %v3589
    %v3591 = vand.u32 %v3590, 4294901760
    %3592 = vmatpush.msra.mxu0 %v3591
    %v3593 = vand.u32 %v1123, 4294901760
    %v3594 = vsub.f32 %v1123, %v3593
    %v3595 = vand.u32 %v3594, 4294901760
    %3596 = vmatpush.msra.mxu0 %v3595
    %v3597 = vand.u32 %v1119, 4294901760
    %v3598 = vsub.f32 %v1119, %v3597
    %v3599 = vand.u32 %v3598, 4294901760
    %3600 = vmatpush.msra.mxu0 %v3599
    %v3601 = vand.u32 %v988, 4294901760
    %3602 = vmatmul.f32.gmra.mxu0 %v3601
    %v3603 = vpop.f32.mrf.mxu0
    %v3604 = vadd.f32 %v3535, %v3603
    %3605 = vdwg.mxu0
    %v3606 = vand.u32 %v1179, 4294901760
    %3607 = vmatpush.msra.mxu0 %v3606
    %v3608 = vand.u32 %v1175, 4294901760
    %3609 = vmatpush.msra.mxu0 %v3608
    %v3610 = vand.u32 %v1171, 4294901760
    %3611 = vmatpush.msra.mxu0 %v3610
    %v3612 = vand.u32 %v1167, 4294901760
    %3613 = vmatpush.msra.mxu0 %v3612
    %v3614 = vand.u32 %v1163, 4294901760
    %3615 = vmatpush.msra.mxu0 %v3614
    %v3616 = vand.u32 %v1159, 4294901760
    %3617 = vmatpush.msra.mxu0 %v3616
    %v3618 = vand.u32 %v1155, 4294901760
    %3619 = vmatpush.msra.mxu0 %v3618
    %v3620 = vand.u32 %v1151, 4294901760
    %3621 = vmatpush.msra.mxu0 %v3620
    %v3622 = vand.u32 %v1147, 4294901760
    %3623 = vmatpush.msra.mxu0 %v3622
    %v3624 = vand.u32 %v1143, 4294901760
    %3625 = vmatpush.msra.mxu0 %v3624
    %v3626 = vand.u32 %v1139, 4294901760
    %3627 = vmatpush.msra.mxu0 %v3626
    %v3628 = vand.u32 %v1135, 4294901760
    %3629 = vmatpush.msra.mxu0 %v3628
    %v3630 = vand.u32 %v1131, 4294901760
    %3631 = vmatpush.msra.mxu0 %v3630
    %v3632 = vand.u32 %v1127, 4294901760
    %3633 = vmatpush.msra.mxu0 %v3632
    %v3634 = vand.u32 %v1123, 4294901760
    %3635 = vmatpush.msra.mxu0 %v3634
    %v3636 = vand.u32 %v1119, 4294901760
    %3637 = vmatpush.msra.mxu0 %v3636
    %v3638 = vand.u32 %v988, 4294901760
    %3639 = vmatmul.f32.gmra.mxu0 %v3638
    %v3640 = vpop.f32.mrf.mxu0
    %v3641 = vadd.f32 %v3604, %v3640
    %3642 = vdwg.mxu0
    %v3643 = vand.u32 %v1243, 4294901760
    %3644 = vmatpush.msra.mxu0 %v3643
    %v3645 = vand.u32 %v1239, 4294901760
    %3646 = vmatpush.msra.mxu0 %v3645
    %v3647 = vand.u32 %v1235, 4294901760
    %3648 = vmatpush.msra.mxu0 %v3647
    %v3649 = vand.u32 %v1231, 4294901760
    %3650 = vmatpush.msra.mxu0 %v3649
    %v3651 = vand.u32 %v1227, 4294901760
    %3652 = vmatpush.msra.mxu0 %v3651
    %v3653 = vand.u32 %v1223, 4294901760
    %3654 = vmatpush.msra.mxu0 %v3653
    %v3655 = vand.u32 %v1219, 4294901760
    %3656 = vmatpush.msra.mxu0 %v3655
    %v3657 = vand.u32 %v1215, 4294901760
    %3658 = vmatpush.msra.mxu0 %v3657
    %v3659 = vand.u32 %v1211, 4294901760
    %3660 = vmatpush.msra.mxu0 %v3659
    %v3661 = vand.u32 %v1207, 4294901760
    %3662 = vmatpush.msra.mxu0 %v3661
    %v3663 = vand.u32 %v1203, 4294901760
    %3664 = vmatpush.msra.mxu0 %v3663
    %v3665 = vand.u32 %v1199, 4294901760
    %3666 = vmatpush.msra.mxu0 %v3665
    %v3667 = vand.u32 %v1195, 4294901760
    %3668 = vmatpush.msra.mxu0 %v3667
    %v3669 = vand.u32 %v1191, 4294901760
    %3670 = vmatpush.msra.mxu0 %v3669
    %v3671 = vand.u32 %v1187, 4294901760
    %3672 = vmatpush.msra.mxu0 %v3671
    %v3673 = vand.u32 %v1183, 4294901760
    %3674 = vmatpush.msra.mxu0 %v3673
    %v3675 = vand.u32 %v989, 4294901760
    %v3676 = vsub.f32 %v989, %v3675
    %v3677 = vand.u32 %v3676, 4294901760
    %v3678 = vsub.f32 %v3676, %v3677
    %v3679 = vand.u32 %v3678, 4294901760
    %3680 = vmatmul.f32.gmra.mxu0 %v3679
    %v3681 = vpop.f32.mrf.mxu0
    %v3682 = vadd.f32 %v3641, %v3681
    %3683 = vdwg.mxu0
    %v3684 = vand.u32 %v1243, 4294901760
    %v3685 = vsub.f32 %v1243, %v3684
    %v3686 = vand.u32 %v3685, 4294901760
    %v3687 = vsub.f32 %v3685, %v3686
    %v3688 = vand.u32 %v3687, 4294901760
    %3689 = vmatpush.msra.mxu0 %v3688
    %v3690 = vand.u32 %v1239, 4294901760
    %v3691 = vsub.f32 %v1239, %v3690
    %v3692 = vand.u32 %v3691, 4294901760
    %v3693 = vsub.f32 %v3691, %v3692
    %v3694 = vand.u32 %v3693, 4294901760
    %3695 = vmatpush.msra.mxu0 %v3694
    %v3696 = vand.u32 %v1235, 4294901760
    %v3697 = vsub.f32 %v1235, %v3696
    %v3698 = vand.u32 %v3697, 4294901760
    %v3699 = vsub.f32 %v3697, %v3698
    %v3700 = vand.u32 %v3699, 4294901760
    %3701 = vmatpush.msra.mxu0 %v3700
    %v3702 = vand.u32 %v1231, 4294901760
    %v3703 = vsub.f32 %v1231, %v3702
    %v3704 = vand.u32 %v3703, 4294901760
    %v3705 = vsub.f32 %v3703, %v3704
    %v3706 = vand.u32 %v3705, 4294901760
    %3707 = vmatpush.msra.mxu0 %v3706
    %v3708 = vand.u32 %v1227, 4294901760
    %v3709 = vsub.f32 %v1227, %v3708
    %v3710 = vand.u32 %v3709, 4294901760
    %v3711 = vsub.f32 %v3709, %v3710
    %v3712 = vand.u32 %v3711, 4294901760
    %3713 = vmatpush.msra.mxu0 %v3712
    %v3714 = vand.u32 %v1223, 4294901760
    %v3715 = vsub.f32 %v1223, %v3714
    %v3716 = vand.u32 %v3715, 4294901760
    %v3717 = vsub.f32 %v3715, %v3716
    %v3718 = vand.u32 %v3717, 4294901760
    %3719 = vmatpush.msra.mxu0 %v3718
    %v3720 = vand.u32 %v1219, 4294901760
    %v3721 = vsub.f32 %v1219, %v3720
    %v3722 = vand.u32 %v3721, 4294901760
    %v3723 = vsub.f32 %v3721, %v3722
    %v3724 = vand.u32 %v3723, 4294901760
    %3725 = vmatpush.msra.mxu0 %v3724
    %v3726 = vand.u32 %v1215, 4294901760
    %v3727 = vsub.f32 %v1215, %v3726
    %v3728 = vand.u32 %v3727, 4294901760
    %v3729 = vsub.f32 %v3727, %v3728
    %v3730 = vand.u32 %v3729, 4294901760
    %3731 = vmatpush.msra.mxu0 %v3730
    %v3732 = vand.u32 %v1211, 4294901760
    %v3733 = vsub.f32 %v1211, %v3732
    %v3734 = vand.u32 %v3733, 4294901760
    %v3735 = vsub.f32 %v3733, %v3734
    %v3736 = vand.u32 %v3735, 4294901760
    %3737 = vmatpush.msra.mxu0 %v3736
    %v3738 = vand.u32 %v1207, 4294901760
    %v3739 = vsub.f32 %v1207, %v3738
    %v3740 = vand.u32 %v3739, 4294901760
    %v3741 = vsub.f32 %v3739, %v3740
    %v3742 = vand.u32 %v3741, 4294901760
    %3743 = vmatpush.msra.mxu0 %v3742
    %v3744 = vand.u32 %v1203, 4294901760
    %v3745 = vsub.f32 %v1203, %v3744
    %v3746 = vand.u32 %v3745, 4294901760
    %v3747 = vsub.f32 %v3745, %v3746
    %v3748 = vand.u32 %v3747, 4294901760
    %3749 = vmatpush.msra.mxu0 %v3748
    %v3750 = vand.u32 %v1199, 4294901760
    %v3751 = vsub.f32 %v1199, %v3750
    %v3752 = vand.u32 %v3751, 4294901760
    %v3753 = vsub.f32 %v3751, %v3752
    %v3754 = vand.u32 %v3753, 4294901760
    %3755 = vmatpush.msra.mxu0 %v3754
    %v3756 = vand.u32 %v1195, 4294901760
    %v3757 = vsub.f32 %v1195, %v3756
    %v3758 = vand.u32 %v3757, 4294901760
    %v3759 = vsub.f32 %v3757, %v3758
    %v3760 = vand.u32 %v3759, 4294901760
    %3761 = vmatpush.msra.mxu0 %v3760
    %v3762 = vand.u32 %v1191, 4294901760
    %v3763 = vsub.f32 %v1191, %v3762
    %v3764 = vand.u32 %v3763, 4294901760
    %v3765 = vsub.f32 %v3763, %v3764
    %v3766 = vand.u32 %v3765, 4294901760
    %3767 = vmatpush.msra.mxu0 %v3766
    %v3768 = vand.u32 %v1187, 4294901760
    %v3769 = vsub.f32 %v1187, %v3768
    %v3770 = vand.u32 %v3769, 4294901760
    %v3771 = vsub.f32 %v3769, %v3770
    %v3772 = vand.u32 %v3771, 4294901760
    %3773 = vmatpush.msra.mxu0 %v3772
    %v3774 = vand.u32 %v1183, 4294901760
    %v3775 = vsub.f32 %v1183, %v3774
    %v3776 = vand.u32 %v3775, 4294901760
    %v3777 = vsub.f32 %v3775, %v3776
    %v3778 = vand.u32 %v3777, 4294901760
    %3779 = vmatpush.msra.mxu0 %v3778
    %v3780 = vand.u32 %v989, 4294901760
    %3781 = vmatmul.f32.gmra.mxu0 %v3780
    %v3782 = vpop.f32.mrf.mxu0
    %v3783 = vadd.f32 %v3682, %v3782
    %3784 = vdwg.mxu0
    %v3785 = vand.u32 %v1243, 4294901760
    %v3786 = vsub.f32 %v1243, %v3785
    %3787 = vmatpush.msra.mxu0 %v3786
    %v3788 = vand.u32 %v1239, 4294901760
    %v3789 = vsub.f32 %v1239, %v3788
    %3790 = vmatpush.msra.mxu0 %v3789
    %v3791 = vand.u32 %v1235, 4294901760
    %v3792 = vsub.f32 %v1235, %v3791
    %3793 = vmatpush.msra.mxu0 %v3792
    %v3794 = vand.u32 %v1231, 4294901760
    %v3795 = vsub.f32 %v1231, %v3794
    %3796 = vmatpush.msra.mxu0 %v3795
    %v3797 = vand.u32 %v1227, 4294901760
    %v3798 = vsub.f32 %v1227, %v3797
    %3799 = vmatpush.msra.mxu0 %v3798
    %v3800 = vand.u32 %v1223, 4294901760
    %v3801 = vsub.f32 %v1223, %v3800
    %3802 = vmatpush.msra.mxu0 %v3801
    %v3803 = vand.u32 %v1219, 4294901760
    %v3804 = vsub.f32 %v1219, %v3803
    %3805 = vmatpush.msra.mxu0 %v3804
    %v3806 = vand.u32 %v1215, 4294901760
    %v3807 = vsub.f32 %v1215, %v3806
    %3808 = vmatpush.msra.mxu0 %v3807
    %v3809 = vand.u32 %v1211, 4294901760
    %v3810 = vsub.f32 %v1211, %v3809
    %3811 = vmatpush.msra.mxu0 %v3810
    %v3812 = vand.u32 %v1207, 4294901760
    %v3813 = vsub.f32 %v1207, %v3812
    %3814 = vmatpush.msra.mxu0 %v3813
    %v3815 = vand.u32 %v1203, 4294901760
    %v3816 = vsub.f32 %v1203, %v3815
    %3817 = vmatpush.msra.mxu0 %v3816
    %v3818 = vand.u32 %v1199, 4294901760
    %v3819 = vsub.f32 %v1199, %v3818
    %3820 = vmatpush.msra.mxu0 %v3819
    %v3821 = vand.u32 %v1195, 4294901760
    %v3822 = vsub.f32 %v1195, %v3821
    %3823 = vmatpush.msra.mxu0 %v3822
    %v3824 = vand.u32 %v1191, 4294901760
    %v3825 = vsub.f32 %v1191, %v3824
    %3826 = vmatpush.msra.mxu0 %v3825
    %v3827 = vand.u32 %v1187, 4294901760
    %v3828 = vsub.f32 %v1187, %v3827
    %3829 = vmatpush.msra.mxu0 %v3828
    %v3830 = vand.u32 %v1183, 4294901760
    %v3831 = vsub.f32 %v1183, %v3830
    %3832 = vmatpush.msra.mxu0 %v3831
    %v3833 = vand.u32 %v989, 4294901760
    %v3834 = vsub.f32 %v989, %v3833
    %3835 = vmatmul.f32.gmra.mxu0 %v3834
    %v3836 = vpop.f32.mrf.mxu0
    %v3837 = vadd.f32 %v3783, %v3836
    %3838 = vdwg.mxu0
    %v3839 = vand.u32 %v1243, 4294901760
    %3840 = vmatpush.msra.mxu0 %v3839
    %v3841 = vand.u32 %v1239, 4294901760
    %3842 = vmatpush.msra.mxu0 %v3841
    %v3843 = vand.u32 %v1235, 4294901760
    %3844 = vmatpush.msra.mxu0 %v3843
    %v3845 = vand.u32 %v1231, 4294901760
    %3846 = vmatpush.msra.mxu0 %v3845
    %v3847 = vand.u32 %v1227, 4294901760
    %3848 = vmatpush.msra.mxu0 %v3847
    %v3849 = vand.u32 %v1223, 4294901760
    %3850 = vmatpush.msra.mxu0 %v3849
    %v3851 = vand.u32 %v1219, 4294901760
    %3852 = vmatpush.msra.mxu0 %v3851
    %v3853 = vand.u32 %v1215, 4294901760
    %3854 = vmatpush.msra.mxu0 %v3853
    %v3855 = vand.u32 %v1211, 4294901760
    %3856 = vmatpush.msra.mxu0 %v3855
    %v3857 = vand.u32 %v1207, 4294901760
    %3858 = vmatpush.msra.mxu0 %v3857
    %v3859 = vand.u32 %v1203, 4294901760
    %3860 = vmatpush.msra.mxu0 %v3859
    %v3861 = vand.u32 %v1199, 4294901760
    %3862 = vmatpush.msra.mxu0 %v3861
    %v3863 = vand.u32 %v1195, 4294901760
    %3864 = vmatpush.msra.mxu0 %v3863
    %v3865 = vand.u32 %v1191, 4294901760
    %3866 = vmatpush.msra.mxu0 %v3865
    %v3867 = vand.u32 %v1187, 4294901760
    %3868 = vmatpush.msra.mxu0 %v3867
    %v3869 = vand.u32 %v1183, 4294901760
    %3870 = vmatpush.msra.mxu0 %v3869
    %v3871 = vand.u32 %v989, 4294901760
    %v3872 = vsub.f32 %v989, %v3871
    %v3873 = vand.u32 %v3872, 4294901760
    %3874 = vmatmul.f32.gmra.mxu0 %v3873
    %v3875 = vpop.f32.mrf.mxu0
    %v3876 = vadd.f32 %v3837, %v3875
    %3877 = vdwg.mxu0
    %v3878 = vand.u32 %v1243, 4294901760
    %v3879 = vsub.f32 %v1243, %v3878
    %v3880 = vand.u32 %v3879, 4294901760
    %3881 = vmatpush.msra.mxu0 %v3880
    %v3882 = vand.u32 %v1239, 4294901760
    %v3883 = vsub.f32 %v1239, %v3882
    %v3884 = vand.u32 %v3883, 4294901760
    %3885 = vmatpush.msra.mxu0 %v3884
    %v3886 = vand.u32 %v1235, 4294901760
    %v3887 = vsub.f32 %v1235, %v3886
    %v3888 = vand.u32 %v3887, 4294901760
    %3889 = vmatpush.msra.mxu0 %v3888
    %v3890 = vand.u32 %v1231, 4294901760
    %v3891 = vsub.f32 %v1231, %v3890
    %v3892 = vand.u32 %v3891, 4294901760
    %3893 = vmatpush.msra.mxu0 %v3892
    %v3894 = vand.u32 %v1227, 4294901760
    %v3895 = vsub.f32 %v1227, %v3894
    %v3896 = vand.u32 %v3895, 4294901760
    %3897 = vmatpush.msra.mxu0 %v3896
    %v3898 = vand.u32 %v1223, 4294901760
    %v3899 = vsub.f32 %v1223, %v3898
    %v3900 = vand.u32 %v3899, 4294901760
    %3901 = vmatpush.msra.mxu0 %v3900
    %v3902 = vand.u32 %v1219, 4294901760
    %v3903 = vsub.f32 %v1219, %v3902
    %v3904 = vand.u32 %v3903, 4294901760
    %3905 = vmatpush.msra.mxu0 %v3904
    %v3906 = vand.u32 %v1215, 4294901760
    %v3907 = vsub.f32 %v1215, %v3906
    %v3908 = vand.u32 %v3907, 4294901760
    %3909 = vmatpush.msra.mxu0 %v3908
    %v3910 = vand.u32 %v1211, 4294901760
    %v3911 = vsub.f32 %v1211, %v3910
    %v3912 = vand.u32 %v3911, 4294901760
    %3913 = vmatpush.msra.mxu0 %v3912
    %v3914 = vand.u32 %v1207, 4294901760
    %v3915 = vsub.f32 %v1207, %v3914
    %v3916 = vand.u32 %v3915, 4294901760
    %3917 = vmatpush.msra.mxu0 %v3916
    %v3918 = vand.u32 %v1203, 4294901760
    %v3919 = vsub.f32 %v1203, %v3918
    %v3920 = vand.u32 %v3919, 4294901760
    %3921 = vmatpush.msra.mxu0 %v3920
    %v3922 = vand.u32 %v1199, 4294901760
    %v3923 = vsub.f32 %v1199, %v3922
    %v3924 = vand.u32 %v3923, 4294901760
    %3925 = vmatpush.msra.mxu0 %v3924
    %v3926 = vand.u32 %v1195, 4294901760
    %v3927 = vsub.f32 %v1195, %v3926
    %v3928 = vand.u32 %v3927, 4294901760
    %3929 = vmatpush.msra.mxu0 %v3928
    %v3930 = vand.u32 %v1191, 4294901760
    %v3931 = vsub.f32 %v1191, %v3930
    %v3932 = vand.u32 %v3931, 4294901760
    %3933 = vmatpush.msra.mxu0 %v3932
    %v3934 = vand.u32 %v1187, 4294901760
    %v3935 = vsub.f32 %v1187, %v3934
    %v3936 = vand.u32 %v3935, 4294901760
    %3937 = vmatpush.msra.mxu0 %v3936
    %v3938 = vand.u32 %v1183, 4294901760
    %v3939 = vsub.f32 %v1183, %v3938
    %v3940 = vand.u32 %v3939, 4294901760
    %3941 = vmatpush.msra.mxu0 %v3940
    %v3942 = vand.u32 %v989, 4294901760
    %3943 = vmatmul.f32.gmra.mxu0 %v3942
    %v3944 = vpop.f32.mrf.mxu0
    %v3945 = vadd.f32 %v3876, %v3944
    %3946 = vdwg.mxu0
    %v3947 = vand.u32 %v1243, 4294901760
    %3948 = vmatpush.msra.mxu0 %v3947
    %v3949 = vand.u32 %v1239, 4294901760
    %3950 = vmatpush.msra.mxu0 %v3949
    %v3951 = vand.u32 %v1235, 4294901760
    %3952 = vmatpush.msra.mxu0 %v3951
    %v3953 = vand.u32 %v1231, 4294901760
    %3954 = vmatpush.msra.mxu0 %v3953
    %v3955 = vand.u32 %v1227, 4294901760
    %3956 = vmatpush.msra.mxu0 %v3955
    %v3957 = vand.u32 %v1223, 4294901760
    %3958 = vmatpush.msra.mxu0 %v3957
    %v3959 = vand.u32 %v1219, 4294901760
    %3960 = vmatpush.msra.mxu0 %v3959
    %v3961 = vand.u32 %v1215, 4294901760
    %3962 = vmatpush.msra.mxu0 %v3961
    %v3963 = vand.u32 %v1211, 4294901760
    %3964 = vmatpush.msra.mxu0 %v3963
    %v3965 = vand.u32 %v1207, 4294901760
    %3966 = vmatpush.msra.mxu0 %v3965
    %v3967 = vand.u32 %v1203, 4294901760
    %3968 = vmatpush.msra.mxu0 %v3967
    %v3969 = vand.u32 %v1199, 4294901760
    %3970 = vmatpush.msra.mxu0 %v3969
    %v3971 = vand.u32 %v1195, 4294901760
    %3972 = vmatpush.msra.mxu0 %v3971
    %v3973 = vand.u32 %v1191, 4294901760
    %3974 = vmatpush.msra.mxu0 %v3973
    %v3975 = vand.u32 %v1187, 4294901760
    %3976 = vmatpush.msra.mxu0 %v3975
    %v3977 = vand.u32 %v1183, 4294901760
    %3978 = vmatpush.msra.mxu0 %v3977
    %v3979 = vand.u32 %v989, 4294901760
    %3980 = vmatmul.f32.gmra.mxu0 %v3979
    %v3981 = vpop.f32.mrf.mxu0
    %v3982 = vadd.f32 %v3945, %v3981
    %3983 = vdwg.mxu0
    %v3984 = vand.u32 %v1052, 4294901760
    %3985 = vmatpush.msra.mxu0 %v3984
    %v3986 = vand.u32 %v1048, 4294901760
    %3987 = vmatpush.msra.mxu0 %v3986
    %v3988 = vand.u32 %v1044, 4294901760
    %3989 = vmatpush.msra.mxu0 %v3988
    %v3990 = vand.u32 %v1040, 4294901760
    %3991 = vmatpush.msra.mxu0 %v3990
    %v3992 = vand.u32 %v1036, 4294901760
    %3993 = vmatpush.msra.mxu0 %v3992
    %v3994 = vand.u32 %v1032, 4294901760
    %3995 = vmatpush.msra.mxu0 %v3994
    %v3996 = vand.u32 %v1028, 4294901760
    %3997 = vmatpush.msra.mxu0 %v3996
    %v3998 = vand.u32 %v1024, 4294901760
    %3999 = vmatpush.msra.mxu0 %v3998
    %v4000 = vand.u32 %v1020, 4294901760
    %4001 = vmatpush.msra.mxu0 %v4000
    %v4002 = vand.u32 %v1016, 4294901760
    %4003 = vmatpush.msra.mxu0 %v4002
    %v4004 = vand.u32 %v1012, 4294901760
    %4005 = vmatpush.msra.mxu0 %v4004
    %v4006 = vand.u32 %v1008, 4294901760
    %4007 = vmatpush.msra.mxu0 %v4006
    %v4008 = vand.u32 %v1004, 4294901760
    %4009 = vmatpush.msra.mxu0 %v4008
    %v4010 = vand.u32 %v1000, 4294901760
    %4011 = vmatpush.msra.mxu0 %v4010
    %v4012 = vand.u32 %v996, 4294901760
    %4013 = vmatpush.msra.mxu0 %v4012
    %v4014 = vand.u32 %v992, 4294901760
    %4015 = vmatpush.msra.mxu0 %v4014
    %v4016 = vand.u32 %v986, 4294901760
    %v4017 = vsub.f32 %v986, %v4016
    %v4018 = vand.u32 %v4017, 4294901760
    %v4019 = vsub.f32 %v4017, %v4018
    %v4020 = vand.u32 %v4019, 4294901760
    %4021 = vmatmul.f32.gmra.mxu0 %v4020
    %v4022 = vpop.f32.mrf.mxu0
    %v4023 = vadd.f32 %v1250, %v4022
    %4024 = vdwg.mxu0
    %v4025 = vand.u32 %v1052, 4294901760
    %v4026 = vsub.f32 %v1052, %v4025
    %v4027 = vand.u32 %v4026, 4294901760
    %v4028 = vsub.f32 %v4026, %v4027
    %v4029 = vand.u32 %v4028, 4294901760
    %4030 = vmatpush.msra.mxu0 %v4029
    %v4031 = vand.u32 %v1048, 4294901760
    %v4032 = vsub.f32 %v1048, %v4031
    %v4033 = vand.u32 %v4032, 4294901760
    %v4034 = vsub.f32 %v4032, %v4033
    %v4035 = vand.u32 %v4034, 4294901760
    %4036 = vmatpush.msra.mxu0 %v4035
    %v4037 = vand.u32 %v1044, 4294901760
    %v4038 = vsub.f32 %v1044, %v4037
    %v4039 = vand.u32 %v4038, 4294901760
    %v4040 = vsub.f32 %v4038, %v4039
    %v4041 = vand.u32 %v4040, 4294901760
    %4042 = vmatpush.msra.mxu0 %v4041
    %v4043 = vand.u32 %v1040, 4294901760
    %v4044 = vsub.f32 %v1040, %v4043
    %v4045 = vand.u32 %v4044, 4294901760
    %v4046 = vsub.f32 %v4044, %v4045
    %v4047 = vand.u32 %v4046, 4294901760
    %4048 = vmatpush.msra.mxu0 %v4047
    %v4049 = vand.u32 %v1036, 4294901760
    %v4050 = vsub.f32 %v1036, %v4049
    %v4051 = vand.u32 %v4050, 4294901760
    %v4052 = vsub.f32 %v4050, %v4051
    %v4053 = vand.u32 %v4052, 4294901760
    %4054 = vmatpush.msra.mxu0 %v4053
    %v4055 = vand.u32 %v1032, 4294901760
    %v4056 = vsub.f32 %v1032, %v4055
    %v4057 = vand.u32 %v4056, 4294901760
    %v4058 = vsub.f32 %v4056, %v4057
    %v4059 = vand.u32 %v4058, 4294901760
    %4060 = vmatpush.msra.mxu0 %v4059
    %v4061 = vand.u32 %v1028, 4294901760
    %v4062 = vsub.f32 %v1028, %v4061
    %v4063 = vand.u32 %v4062, 4294901760
    %v4064 = vsub.f32 %v4062, %v4063
    %v4065 = vand.u32 %v4064, 4294901760
    %4066 = vmatpush.msra.mxu0 %v4065
    %v4067 = vand.u32 %v1024, 4294901760
    %v4068 = vsub.f32 %v1024, %v4067
    %v4069 = vand.u32 %v4068, 4294901760
    %v4070 = vsub.f32 %v4068, %v4069
    %v4071 = vand.u32 %v4070, 4294901760
    %4072 = vmatpush.msra.mxu0 %v4071
    %v4073 = vand.u32 %v1020, 4294901760
    %v4074 = vsub.f32 %v1020, %v4073
    %v4075 = vand.u32 %v4074, 4294901760
    %v4076 = vsub.f32 %v4074, %v4075
    %v4077 = vand.u32 %v4076, 4294901760
    %4078 = vmatpush.msra.mxu0 %v4077
    %v4079 = vand.u32 %v1016, 4294901760
    %v4080 = vsub.f32 %v1016, %v4079
    %v4081 = vand.u32 %v4080, 4294901760
    %v4082 = vsub.f32 %v4080, %v4081
    %v4083 = vand.u32 %v4082, 4294901760
    %4084 = vmatpush.msra.mxu0 %v4083
    %v4085 = vand.u32 %v1012, 4294901760
    %v4086 = vsub.f32 %v1012, %v4085
    %v4087 = vand.u32 %v4086, 4294901760
    %v4088 = vsub.f32 %v4086, %v4087
    %v4089 = vand.u32 %v4088, 4294901760
    %4090 = vmatpush.msra.mxu0 %v4089
    %v4091 = vand.u32 %v1008, 4294901760
    %v4092 = vsub.f32 %v1008, %v4091
    %v4093 = vand.u32 %v4092, 4294901760
    %v4094 = vsub.f32 %v4092, %v4093
    %v4095 = vand.u32 %v4094, 4294901760
    %4096 = vmatpush.msra.mxu0 %v4095
    %v4097 = vand.u32 %v1004, 4294901760
    %v4098 = vsub.f32 %v1004, %v4097
    %v4099 = vand.u32 %v4098, 4294901760
    %v4100 = vsub.f32 %v4098, %v4099
    %v4101 = vand.u32 %v4100, 4294901760
    %4102 = vmatpush.msra.mxu0 %v4101
    %v4103 = vand.u32 %v1000, 4294901760
    %v4104 = vsub.f32 %v1000, %v4103
    %v4105 = vand.u32 %v4104, 4294901760
    %v4106 = vsub.f32 %v4104, %v4105
    %v4107 = vand.u32 %v4106, 4294901760
    %4108 = vmatpush.msra.mxu0 %v4107
    %v4109 = vand.u32 %v996, 4294901760
    %v4110 = vsub.f32 %v996, %v4109
    %v4111 = vand.u32 %v4110, 4294901760
    %v4112 = vsub.f32 %v4110, %v4111
    %v4113 = vand.u32 %v4112, 4294901760
    %4114 = vmatpush.msra.mxu0 %v4113
    %v4115 = vand.u32 %v992, 4294901760
    %v4116 = vsub.f32 %v992, %v4115
    %v4117 = vand.u32 %v4116, 4294901760
    %v4118 = vsub.f32 %v4116, %v4117
    %v4119 = vand.u32 %v4118, 4294901760
    %4120 = vmatpush.msra.mxu0 %v4119
    %v4121 = vand.u32 %v986, 4294901760
    %4122 = vmatmul.f32.gmra.mxu0 %v4121
    %v4123 = vpop.f32.mrf.mxu0
    %v4124 = vadd.f32 %v4023, %v4123
    %4125 = vdwg.mxu0
    %v4126 = vand.u32 %v1052, 4294901760
    %v4127 = vsub.f32 %v1052, %v4126
    %4128 = vmatpush.msra.mxu0 %v4127
    %v4129 = vand.u32 %v1048, 4294901760
    %v4130 = vsub.f32 %v1048, %v4129
    %4131 = vmatpush.msra.mxu0 %v4130
    %v4132 = vand.u32 %v1044, 4294901760
    %v4133 = vsub.f32 %v1044, %v4132
    %4134 = vmatpush.msra.mxu0 %v4133
    %v4135 = vand.u32 %v1040, 4294901760
    %v4136 = vsub.f32 %v1040, %v4135
    %4137 = vmatpush.msra.mxu0 %v4136
    %v4138 = vand.u32 %v1036, 4294901760
    %v4139 = vsub.f32 %v1036, %v4138
    %4140 = vmatpush.msra.mxu0 %v4139
    %v4141 = vand.u32 %v1032, 4294901760
    %v4142 = vsub.f32 %v1032, %v4141
    %4143 = vmatpush.msra.mxu0 %v4142
    %v4144 = vand.u32 %v1028, 4294901760
    %v4145 = vsub.f32 %v1028, %v4144
    %4146 = vmatpush.msra.mxu0 %v4145
    %v4147 = vand.u32 %v1024, 4294901760
    %v4148 = vsub.f32 %v1024, %v4147
    %4149 = vmatpush.msra.mxu0 %v4148
    %v4150 = vand.u32 %v1020, 4294901760
    %v4151 = vsub.f32 %v1020, %v4150
    %4152 = vmatpush.msra.mxu0 %v4151
    %v4153 = vand.u32 %v1016, 4294901760
    %v4154 = vsub.f32 %v1016, %v4153
    %4155 = vmatpush.msra.mxu0 %v4154
    %v4156 = vand.u32 %v1012, 4294901760
    %v4157 = vsub.f32 %v1012, %v4156
    %4158 = vmatpush.msra.mxu0 %v4157
    %v4159 = vand.u32 %v1008, 4294901760
    %v4160 = vsub.f32 %v1008, %v4159
    %4161 = vmatpush.msra.mxu0 %v4160
    %v4162 = vand.u32 %v1004, 4294901760
    %v4163 = vsub.f32 %v1004, %v4162
    %4164 = vmatpush.msra.mxu0 %v4163
    %v4165 = vand.u32 %v1000, 4294901760
    %v4166 = vsub.f32 %v1000, %v4165
    %4167 = vmatpush.msra.mxu0 %v4166
    %v4168 = vand.u32 %v996, 4294901760
    %v4169 = vsub.f32 %v996, %v4168
    %4170 = vmatpush.msra.mxu0 %v4169
    %v4171 = vand.u32 %v992, 4294901760
    %v4172 = vsub.f32 %v992, %v4171
    %4173 = vmatpush.msra.mxu0 %v4172
    %v4174 = vand.u32 %v986, 4294901760
    %v4175 = vsub.f32 %v986, %v4174
    %4176 = vmatmul.f32.gmra.mxu0 %v4175
    %v4177 = vpop.f32.mrf.mxu0
    %v4178 = vadd.f32 %v4124, %v4177
    %4179 = vdwg.mxu0
    %v4180 = vand.u32 %v1052, 4294901760
    %4181 = vmatpush.msra.mxu0 %v4180
    %v4182 = vand.u32 %v1048, 4294901760
    %4183 = vmatpush.msra.mxu0 %v4182
    %v4184 = vand.u32 %v1044, 4294901760
    %4185 = vmatpush.msra.mxu0 %v4184
    %v4186 = vand.u32 %v1040, 4294901760
    %4187 = vmatpush.msra.mxu0 %v4186
    %v4188 = vand.u32 %v1036, 4294901760
    %4189 = vmatpush.msra.mxu0 %v4188
    %v4190 = vand.u32 %v1032, 4294901760
    %4191 = vmatpush.msra.mxu0 %v4190
    %v4192 = vand.u32 %v1028, 4294901760
    %4193 = vmatpush.msra.mxu0 %v4192
    %v4194 = vand.u32 %v1024, 4294901760
    %4195 = vmatpush.msra.mxu0 %v4194
    %v4196 = vand.u32 %v1020, 4294901760
    %4197 = vmatpush.msra.mxu0 %v4196
    %v4198 = vand.u32 %v1016, 4294901760
    %4199 = vmatpush.msra.mxu0 %v4198
    %v4200 = vand.u32 %v1012, 4294901760
    %4201 = vmatpush.msra.mxu0 %v4200
    %v4202 = vand.u32 %v1008, 4294901760
    %4203 = vmatpush.msra.mxu0 %v4202
    %v4204 = vand.u32 %v1004, 4294901760
    %4205 = vmatpush.msra.mxu0 %v4204
    %v4206 = vand.u32 %v1000, 4294901760
    %4207 = vmatpush.msra.mxu0 %v4206
    %v4208 = vand.u32 %v996, 4294901760
    %4209 = vmatpush.msra.mxu0 %v4208
    %v4210 = vand.u32 %v992, 4294901760
    %4211 = vmatpush.msra.mxu0 %v4210
    %v4212 = vand.u32 %v986, 4294901760
    %v4213 = vsub.f32 %v986, %v4212
    %v4214 = vand.u32 %v4213, 4294901760
    %4215 = vmatmul.f32.gmra.mxu0 %v4214
    %v4216 = vpop.f32.mrf.mxu0
    %v4217 = vadd.f32 %v4178, %v4216
    %4218 = vdwg.mxu0
    %v4219 = vand.u32 %v1052, 4294901760
    %v4220 = vsub.f32 %v1052, %v4219
    %v4221 = vand.u32 %v4220, 4294901760
    %4222 = vmatpush.msra.mxu0 %v4221
    %v4223 = vand.u32 %v1048, 4294901760
    %v4224 = vsub.f32 %v1048, %v4223
    %v4225 = vand.u32 %v4224, 4294901760
    %4226 = vmatpush.msra.mxu0 %v4225
    %v4227 = vand.u32 %v1044, 4294901760
    %v4228 = vsub.f32 %v1044, %v4227
    %v4229 = vand.u32 %v4228, 4294901760
    %4230 = vmatpush.msra.mxu0 %v4229
    %v4231 = vand.u32 %v1040, 4294901760
    %v4232 = vsub.f32 %v1040, %v4231
    %v4233 = vand.u32 %v4232, 4294901760
    %4234 = vmatpush.msra.mxu0 %v4233
    %v4235 = vand.u32 %v1036, 4294901760
    %v4236 = vsub.f32 %v1036, %v4235
    %v4237 = vand.u32 %v4236, 4294901760
    %4238 = vmatpush.msra.mxu0 %v4237
    %v4239 = vand.u32 %v1032, 4294901760
    %v4240 = vsub.f32 %v1032, %v4239
    %v4241 = vand.u32 %v4240, 4294901760
    %4242 = vmatpush.msra.mxu0 %v4241
    %v4243 = vand.u32 %v1028, 4294901760
    %v4244 = vsub.f32 %v1028, %v4243
    %v4245 = vand.u32 %v4244, 4294901760
    %4246 = vmatpush.msra.mxu0 %v4245
    %v4247 = vand.u32 %v1024, 4294901760
    %v4248 = vsub.f32 %v1024, %v4247
    %v4249 = vand.u32 %v4248, 4294901760
    %4250 = vmatpush.msra.mxu0 %v4249
    %v4251 = vand.u32 %v1020, 4294901760
    %v4252 = vsub.f32 %v1020, %v4251
    %v4253 = vand.u32 %v4252, 4294901760
    %4254 = vmatpush.msra.mxu0 %v4253
    %v4255 = vand.u32 %v1016, 4294901760
    %v4256 = vsub.f32 %v1016, %v4255
    %v4257 = vand.u32 %v4256, 4294901760
    %4258 = vmatpush.msra.mxu0 %v4257
    %v4259 = vand.u32 %v1012, 4294901760
    %v4260 = vsub.f32 %v1012, %v4259
    %v4261 = vand.u32 %v4260, 4294901760
    %4262 = vmatpush.msra.mxu0 %v4261
    %v4263 = vand.u32 %v1008, 4294901760
    %v4264 = vsub.f32 %v1008, %v4263
    %v4265 = vand.u32 %v4264, 4294901760
    %4266 = vmatpush.msra.mxu0 %v4265
    %v4267 = vand.u32 %v1004, 4294901760
    %v4268 = vsub.f32 %v1004, %v4267
    %v4269 = vand.u32 %v4268, 4294901760
    %4270 = vmatpush.msra.mxu0 %v4269
    %v4271 = vand.u32 %v1000, 4294901760
    %v4272 = vsub.f32 %v1000, %v4271
    %v4273 = vand.u32 %v4272, 4294901760
    %4274 = vmatpush.msra.mxu0 %v4273
    %v4275 = vand.u32 %v996, 4294901760
    %v4276 = vsub.f32 %v996, %v4275
    %v4277 = vand.u32 %v4276, 4294901760
    %4278 = vmatpush.msra.mxu0 %v4277
    %v4279 = vand.u32 %v992, 4294901760
    %v4280 = vsub.f32 %v992, %v4279
    %v4281 = vand.u32 %v4280, 4294901760
    %4282 = vmatpush.msra.mxu0 %v4281
    %v4283 = vand.u32 %v986, 4294901760
    %4284 = vmatmul.f32.gmra.mxu0 %v4283
    %v4285 = vpop.f32.mrf.mxu0
    %v4286 = vadd.f32 %v4217, %v4285
    %4287 = vdwg.mxu0
    %v4288 = vand.u32 %v1052, 4294901760
    %4289 = vmatpush.msra.mxu0 %v4288
    %v4290 = vand.u32 %v1048, 4294901760
    %4291 = vmatpush.msra.mxu0 %v4290
    %v4292 = vand.u32 %v1044, 4294901760
    %4293 = vmatpush.msra.mxu0 %v4292
    %v4294 = vand.u32 %v1040, 4294901760
    %4295 = vmatpush.msra.mxu0 %v4294
    %v4296 = vand.u32 %v1036, 4294901760
    %4297 = vmatpush.msra.mxu0 %v4296
    %v4298 = vand.u32 %v1032, 4294901760
    %4299 = vmatpush.msra.mxu0 %v4298
    %v4300 = vand.u32 %v1028, 4294901760
    %4301 = vmatpush.msra.mxu0 %v4300
    %v4302 = vand.u32 %v1024, 4294901760
    %4303 = vmatpush.msra.mxu0 %v4302
    %v4304 = vand.u32 %v1020, 4294901760
    %4305 = vmatpush.msra.mxu0 %v4304
    %v4306 = vand.u32 %v1016, 4294901760
    %4307 = vmatpush.msra.mxu0 %v4306
    %v4308 = vand.u32 %v1012, 4294901760
    %4309 = vmatpush.msra.mxu0 %v4308
    %v4310 = vand.u32 %v1008, 4294901760
    %4311 = vmatpush.msra.mxu0 %v4310
    %v4312 = vand.u32 %v1004, 4294901760
    %4313 = vmatpush.msra.mxu0 %v4312
    %v4314 = vand.u32 %v1000, 4294901760
    %4315 = vmatpush.msra.mxu0 %v4314
    %v4316 = vand.u32 %v996, 4294901760
    %4317 = vmatpush.msra.mxu0 %v4316
    %v4318 = vand.u32 %v992, 4294901760
    %4319 = vmatpush.msra.mxu0 %v4318
    %v4320 = vand.u32 %v986, 4294901760
    %4321 = vmatmul.f32.gmra.mxu0 %v4320
    %v4322 = vpop.f32.mrf.mxu0
    %v4323 = vadd.f32 %v4286, %v4322
    %4324 = vdwg.mxu0
    %v4325 = vand.u32 %v1116, 4294901760
    %4326 = vmatpush.msra.mxu0 %v4325
    %v4327 = vand.u32 %v1112, 4294901760
    %4328 = vmatpush.msra.mxu0 %v4327
    %v4329 = vand.u32 %v1108, 4294901760
    %4330 = vmatpush.msra.mxu0 %v4329
    %v4331 = vand.u32 %v1104, 4294901760
    %4332 = vmatpush.msra.mxu0 %v4331
    %v4333 = vand.u32 %v1100, 4294901760
    %4334 = vmatpush.msra.mxu0 %v4333
    %v4335 = vand.u32 %v1096, 4294901760
    %4336 = vmatpush.msra.mxu0 %v4335
    %v4337 = vand.u32 %v1092, 4294901760
    %4338 = vmatpush.msra.mxu0 %v4337
    %v4339 = vand.u32 %v1088, 4294901760
    %4340 = vmatpush.msra.mxu0 %v4339
    %v4341 = vand.u32 %v1084, 4294901760
    %4342 = vmatpush.msra.mxu0 %v4341
    %v4343 = vand.u32 %v1080, 4294901760
    %4344 = vmatpush.msra.mxu0 %v4343
    %v4345 = vand.u32 %v1076, 4294901760
    %4346 = vmatpush.msra.mxu0 %v4345
    %v4347 = vand.u32 %v1072, 4294901760
    %4348 = vmatpush.msra.mxu0 %v4347
    %v4349 = vand.u32 %v1068, 4294901760
    %4350 = vmatpush.msra.mxu0 %v4349
    %v4351 = vand.u32 %v1064, 4294901760
    %4352 = vmatpush.msra.mxu0 %v4351
    %v4353 = vand.u32 %v1060, 4294901760
    %4354 = vmatpush.msra.mxu0 %v4353
    %v4355 = vand.u32 %v1056, 4294901760
    %4356 = vmatpush.msra.mxu0 %v4355
    %v4357 = vand.u32 %v987, 4294901760
    %v4358 = vsub.f32 %v987, %v4357
    %v4359 = vand.u32 %v4358, 4294901760
    %v4360 = vsub.f32 %v4358, %v4359
    %v4361 = vand.u32 %v4360, 4294901760
    %4362 = vmatmul.f32.gmra.mxu0 %v4361
    %v4363 = vpop.f32.mrf.mxu0
    %v4364 = vadd.f32 %v4323, %v4363
    %4365 = vdwg.mxu0
    %v4366 = vand.u32 %v1116, 4294901760
    %v4367 = vsub.f32 %v1116, %v4366
    %v4368 = vand.u32 %v4367, 4294901760
    %v4369 = vsub.f32 %v4367, %v4368
    %v4370 = vand.u32 %v4369, 4294901760
    %4371 = vmatpush.msra.mxu0 %v4370
    %v4372 = vand.u32 %v1112, 4294901760
    %v4373 = vsub.f32 %v1112, %v4372
    %v4374 = vand.u32 %v4373, 4294901760
    %v4375 = vsub.f32 %v4373, %v4374
    %v4376 = vand.u32 %v4375, 4294901760
    %4377 = vmatpush.msra.mxu0 %v4376
    %v4378 = vand.u32 %v1108, 4294901760
    %v4379 = vsub.f32 %v1108, %v4378
    %v4380 = vand.u32 %v4379, 4294901760
    %v4381 = vsub.f32 %v4379, %v4380
    %v4382 = vand.u32 %v4381, 4294901760
    %4383 = vmatpush.msra.mxu0 %v4382
    %v4384 = vand.u32 %v1104, 4294901760
    %v4385 = vsub.f32 %v1104, %v4384
    %v4386 = vand.u32 %v4385, 4294901760
    %v4387 = vsub.f32 %v4385, %v4386
    %v4388 = vand.u32 %v4387, 4294901760
    %4389 = vmatpush.msra.mxu0 %v4388
    %v4390 = vand.u32 %v1100, 4294901760
    %v4391 = vsub.f32 %v1100, %v4390
    %v4392 = vand.u32 %v4391, 4294901760
    %v4393 = vsub.f32 %v4391, %v4392
    %v4394 = vand.u32 %v4393, 4294901760
    %4395 = vmatpush.msra.mxu0 %v4394
    %v4396 = vand.u32 %v1096, 4294901760
    %v4397 = vsub.f32 %v1096, %v4396
    %v4398 = vand.u32 %v4397, 4294901760
    %v4399 = vsub.f32 %v4397, %v4398
    %v4400 = vand.u32 %v4399, 4294901760
    %4401 = vmatpush.msra.mxu0 %v4400
    %v4402 = vand.u32 %v1092, 4294901760
    %v4403 = vsub.f32 %v1092, %v4402
    %v4404 = vand.u32 %v4403, 4294901760
    %v4405 = vsub.f32 %v4403, %v4404
    %v4406 = vand.u32 %v4405, 4294901760
    %4407 = vmatpush.msra.mxu0 %v4406
    %v4408 = vand.u32 %v1088, 4294901760
    %v4409 = vsub.f32 %v1088, %v4408
    %v4410 = vand.u32 %v4409, 4294901760
    %v4411 = vsub.f32 %v4409, %v4410
    %v4412 = vand.u32 %v4411, 4294901760
    %4413 = vmatpush.msra.mxu0 %v4412
    %v4414 = vand.u32 %v1084, 4294901760
    %v4415 = vsub.f32 %v1084, %v4414
    %v4416 = vand.u32 %v4415, 4294901760
    %v4417 = vsub.f32 %v4415, %v4416
    %v4418 = vand.u32 %v4417, 4294901760
    %4419 = vmatpush.msra.mxu0 %v4418
    %v4420 = vand.u32 %v1080, 4294901760
    %v4421 = vsub.f32 %v1080, %v4420
    %v4422 = vand.u32 %v4421, 4294901760
    %v4423 = vsub.f32 %v4421, %v4422
    %v4424 = vand.u32 %v4423, 4294901760
    %4425 = vmatpush.msra.mxu0 %v4424
    %v4426 = vand.u32 %v1076, 4294901760
    %v4427 = vsub.f32 %v1076, %v4426
    %v4428 = vand.u32 %v4427, 4294901760
    %v4429 = vsub.f32 %v4427, %v4428
    %v4430 = vand.u32 %v4429, 4294901760
    %4431 = vmatpush.msra.mxu0 %v4430
    %v4432 = vand.u32 %v1072, 4294901760
    %v4433 = vsub.f32 %v1072, %v4432
    %v4434 = vand.u32 %v4433, 4294901760
    %v4435 = vsub.f32 %v4433, %v4434
    %v4436 = vand.u32 %v4435, 4294901760
    %4437 = vmatpush.msra.mxu0 %v4436
    %v4438 = vand.u32 %v1068, 4294901760
    %v4439 = vsub.f32 %v1068, %v4438
    %v4440 = vand.u32 %v4439, 4294901760
    %v4441 = vsub.f32 %v4439, %v4440
    %v4442 = vand.u32 %v4441, 4294901760
    %4443 = vmatpush.msra.mxu0 %v4442
    %v4444 = vand.u32 %v1064, 4294901760
    %v4445 = vsub.f32 %v1064, %v4444
    %v4446 = vand.u32 %v4445, 4294901760
    %v4447 = vsub.f32 %v4445, %v4446
    %v4448 = vand.u32 %v4447, 4294901760
    %4449 = vmatpush.msra.mxu0 %v4448
    %v4450 = vand.u32 %v1060, 4294901760
    %v4451 = vsub.f32 %v1060, %v4450
    %v4452 = vand.u32 %v4451, 4294901760
    %v4453 = vsub.f32 %v4451, %v4452
    %v4454 = vand.u32 %v4453, 4294901760
    %4455 = vmatpush.msra.mxu0 %v4454
    %v4456 = vand.u32 %v1056, 4294901760
    %v4457 = vsub.f32 %v1056, %v4456
    %v4458 = vand.u32 %v4457, 4294901760
    %v4459 = vsub.f32 %v4457, %v4458
    %v4460 = vand.u32 %v4459, 4294901760
    %4461 = vmatpush.msra.mxu0 %v4460
    %v4462 = vand.u32 %v987, 4294901760
    %4463 = vmatmul.f32.gmra.mxu0 %v4462
    %v4464 = vpop.f32.mrf.mxu0
    %v4465 = vadd.f32 %v4364, %v4464
    %4466 = vdwg.mxu0
    %v4467 = vand.u32 %v1116, 4294901760
    %v4468 = vsub.f32 %v1116, %v4467
    %4469 = vmatpush.msra.mxu0 %v4468
    %v4470 = vand.u32 %v1112, 4294901760
    %v4471 = vsub.f32 %v1112, %v4470
    %4472 = vmatpush.msra.mxu0 %v4471
    %v4473 = vand.u32 %v1108, 4294901760
    %v4474 = vsub.f32 %v1108, %v4473
    %4475 = vmatpush.msra.mxu0 %v4474
    %v4476 = vand.u32 %v1104, 4294901760
    %v4477 = vsub.f32 %v1104, %v4476
    %4478 = vmatpush.msra.mxu0 %v4477
    %v4479 = vand.u32 %v1100, 4294901760
    %v4480 = vsub.f32 %v1100, %v4479
    %4481 = vmatpush.msra.mxu0 %v4480
    %v4482 = vand.u32 %v1096, 4294901760
    %v4483 = vsub.f32 %v1096, %v4482
    %4484 = vmatpush.msra.mxu0 %v4483
    %v4485 = vand.u32 %v1092, 4294901760
    %v4486 = vsub.f32 %v1092, %v4485
    %4487 = vmatpush.msra.mxu0 %v4486
    %v4488 = vand.u32 %v1088, 4294901760
    %v4489 = vsub.f32 %v1088, %v4488
    %4490 = vmatpush.msra.mxu0 %v4489
    %v4491 = vand.u32 %v1084, 4294901760
    %v4492 = vsub.f32 %v1084, %v4491
    %4493 = vmatpush.msra.mxu0 %v4492
    %v4494 = vand.u32 %v1080, 4294901760
    %v4495 = vsub.f32 %v1080, %v4494
    %4496 = vmatpush.msra.mxu0 %v4495
    %v4497 = vand.u32 %v1076, 4294901760
    %v4498 = vsub.f32 %v1076, %v4497
    %4499 = vmatpush.msra.mxu0 %v4498
    %v4500 = vand.u32 %v1072, 4294901760
    %v4501 = vsub.f32 %v1072, %v4500
    %4502 = vmatpush.msra.mxu0 %v4501
    %v4503 = vand.u32 %v1068, 4294901760
    %v4504 = vsub.f32 %v1068, %v4503
    %4505 = vmatpush.msra.mxu0 %v4504
    %v4506 = vand.u32 %v1064, 4294901760
    %v4507 = vsub.f32 %v1064, %v4506
    %4508 = vmatpush.msra.mxu0 %v4507
    %v4509 = vand.u32 %v1060, 4294901760
    %v4510 = vsub.f32 %v1060, %v4509
    %4511 = vmatpush.msra.mxu0 %v4510
    %v4512 = vand.u32 %v1056, 4294901760
    %v4513 = vsub.f32 %v1056, %v4512
    %4514 = vmatpush.msra.mxu0 %v4513
    %v4515 = vand.u32 %v987, 4294901760
    %v4516 = vsub.f32 %v987, %v4515
    %4517 = vmatmul.f32.gmra.mxu0 %v4516
    %v4518 = vpop.f32.mrf.mxu0
    %v4519 = vadd.f32 %v4465, %v4518
    %4520 = vdwg.mxu0
    %v4521 = vand.u32 %v1116, 4294901760
    %4522 = vmatpush.msra.mxu0 %v4521
    %v4523 = vand.u32 %v1112, 4294901760
    %4524 = vmatpush.msra.mxu0 %v4523
    %v4525 = vand.u32 %v1108, 4294901760
    %4526 = vmatpush.msra.mxu0 %v4525
    %v4527 = vand.u32 %v1104, 4294901760
    %4528 = vmatpush.msra.mxu0 %v4527
    %v4529 = vand.u32 %v1100, 4294901760
    %4530 = vmatpush.msra.mxu0 %v4529
    %v4531 = vand.u32 %v1096, 4294901760
    %4532 = vmatpush.msra.mxu0 %v4531
    %v4533 = vand.u32 %v1092, 4294901760
    %4534 = vmatpush.msra.mxu0 %v4533
    %v4535 = vand.u32 %v1088, 4294901760
    %4536 = vmatpush.msra.mxu0 %v4535
    %v4537 = vand.u32 %v1084, 4294901760
    %4538 = vmatpush.msra.mxu0 %v4537
    %v4539 = vand.u32 %v1080, 4294901760
    %4540 = vmatpush.msra.mxu0 %v4539
    %v4541 = vand.u32 %v1076, 4294901760
    %4542 = vmatpush.msra.mxu0 %v4541
    %v4543 = vand.u32 %v1072, 4294901760
    %4544 = vmatpush.msra.mxu0 %v4543
    %v4545 = vand.u32 %v1068, 4294901760
    %4546 = vmatpush.msra.mxu0 %v4545
    %v4547 = vand.u32 %v1064, 4294901760
    %4548 = vmatpush.msra.mxu0 %v4547
    %v4549 = vand.u32 %v1060, 4294901760
    %4550 = vmatpush.msra.mxu0 %v4549
    %v4551 = vand.u32 %v1056, 4294901760
    %4552 = vmatpush.msra.mxu0 %v4551
    %v4553 = vand.u32 %v987, 4294901760
    %v4554 = vsub.f32 %v987, %v4553
    %v4555 = vand.u32 %v4554, 4294901760
    %4556 = vmatmul.f32.gmra.mxu0 %v4555
    %v4557 = vpop.f32.mrf.mxu0
    %v4558 = vadd.f32 %v4519, %v4557
    %4559 = vdwg.mxu0
    %v4560 = vand.u32 %v1116, 4294901760
    %v4561 = vsub.f32 %v1116, %v4560
    %v4562 = vand.u32 %v4561, 4294901760
    %4563 = vmatpush.msra.mxu0 %v4562
    %v4564 = vand.u32 %v1112, 4294901760
    %v4565 = vsub.f32 %v1112, %v4564
    %v4566 = vand.u32 %v4565, 4294901760
    %4567 = vmatpush.msra.mxu0 %v4566
    %v4568 = vand.u32 %v1108, 4294901760
    %v4569 = vsub.f32 %v1108, %v4568
    %v4570 = vand.u32 %v4569, 4294901760
    %4571 = vmatpush.msra.mxu0 %v4570
    %v4572 = vand.u32 %v1104, 4294901760
    %v4573 = vsub.f32 %v1104, %v4572
    %v4574 = vand.u32 %v4573, 4294901760
    %4575 = vmatpush.msra.mxu0 %v4574
    %v4576 = vand.u32 %v1100, 4294901760
    %v4577 = vsub.f32 %v1100, %v4576
    %v4578 = vand.u32 %v4577, 4294901760
    %4579 = vmatpush.msra.mxu0 %v4578
    %v4580 = vand.u32 %v1096, 4294901760
    %v4581 = vsub.f32 %v1096, %v4580
    %v4582 = vand.u32 %v4581, 4294901760
    %4583 = vmatpush.msra.mxu0 %v4582
    %v4584 = vand.u32 %v1092, 4294901760
    %v4585 = vsub.f32 %v1092, %v4584
    %v4586 = vand.u32 %v4585, 4294901760
    %4587 = vmatpush.msra.mxu0 %v4586
    %v4588 = vand.u32 %v1088, 4294901760
    %v4589 = vsub.f32 %v1088, %v4588
    %v4590 = vand.u32 %v4589, 4294901760
    %4591 = vmatpush.msra.mxu0 %v4590
    %v4592 = vand.u32 %v1084, 4294901760
    %v4593 = vsub.f32 %v1084, %v4592
    %v4594 = vand.u32 %v4593, 4294901760
    %4595 = vmatpush.msra.mxu0 %v4594
    %v4596 = vand.u32 %v1080, 4294901760
    %v4597 = vsub.f32 %v1080, %v4596
    %v4598 = vand.u32 %v4597, 4294901760
    %4599 = vmatpush.msra.mxu0 %v4598
    %v4600 = vand.u32 %v1076, 4294901760
    %v4601 = vsub.f32 %v1076, %v4600
    %v4602 = vand.u32 %v4601, 4294901760
    %4603 = vmatpush.msra.mxu0 %v4602
    %v4604 = vand.u32 %v1072, 4294901760
    %v4605 = vsub.f32 %v1072, %v4604
    %v4606 = vand.u32 %v4605, 4294901760
    %4607 = vmatpush.msra.mxu0 %v4606
    %v4608 = vand.u32 %v1068, 4294901760
    %v4609 = vsub.f32 %v1068, %v4608
    %v4610 = vand.u32 %v4609, 4294901760
    %4611 = vmatpush.msra.mxu0 %v4610
    %v4612 = vand.u32 %v1064, 4294901760
    %v4613 = vsub.f32 %v1064, %v4612
    %v4614 = vand.u32 %v4613, 4294901760
    %4615 = vmatpush.msra.mxu0 %v4614
    %v4616 = vand.u32 %v1060, 4294901760
    %v4617 = vsub.f32 %v1060, %v4616
    %v4618 = vand.u32 %v4617, 4294901760
    %4619 = vmatpush.msra.mxu0 %v4618
    %v4620 = vand.u32 %v1056, 4294901760
    %v4621 = vsub.f32 %v1056, %v4620
    %v4622 = vand.u32 %v4621, 4294901760
    %4623 = vmatpush.msra.mxu0 %v4622
    %v4624 = vand.u32 %v987, 4294901760
    %4625 = vmatmul.f32.gmra.mxu0 %v4624
    %v4626 = vpop.f32.mrf.mxu0
    %v4627 = vadd.f32 %v4558, %v4626
    %4628 = vdwg.mxu0
    %v4629 = vand.u32 %v1116, 4294901760
    %4630 = vmatpush.msra.mxu0 %v4629
    %v4631 = vand.u32 %v1112, 4294901760
    %4632 = vmatpush.msra.mxu0 %v4631
    %v4633 = vand.u32 %v1108, 4294901760
    %4634 = vmatpush.msra.mxu0 %v4633
    %v4635 = vand.u32 %v1104, 4294901760
    %4636 = vmatpush.msra.mxu0 %v4635
    %v4637 = vand.u32 %v1100, 4294901760
    %4638 = vmatpush.msra.mxu0 %v4637
    %v4639 = vand.u32 %v1096, 4294901760
    %4640 = vmatpush.msra.mxu0 %v4639
    %v4641 = vand.u32 %v1092, 4294901760
    %4642 = vmatpush.msra.mxu0 %v4641
    %v4643 = vand.u32 %v1088, 4294901760
    %4644 = vmatpush.msra.mxu0 %v4643
    %v4645 = vand.u32 %v1084, 4294901760
    %4646 = vmatpush.msra.mxu0 %v4645
    %v4647 = vand.u32 %v1080, 4294901760
    %4648 = vmatpush.msra.mxu0 %v4647
    %v4649 = vand.u32 %v1076, 4294901760
    %4650 = vmatpush.msra.mxu0 %v4649
    %v4651 = vand.u32 %v1072, 4294901760
    %4652 = vmatpush.msra.mxu0 %v4651
    %v4653 = vand.u32 %v1068, 4294901760
    %4654 = vmatpush.msra.mxu0 %v4653
    %v4655 = vand.u32 %v1064, 4294901760
    %4656 = vmatpush.msra.mxu0 %v4655
    %v4657 = vand.u32 %v1060, 4294901760
    %4658 = vmatpush.msra.mxu0 %v4657
    %v4659 = vand.u32 %v1056, 4294901760
    %4660 = vmatpush.msra.mxu0 %v4659
    %v4661 = vand.u32 %v987, 4294901760
    %4662 = vmatmul.f32.gmra.mxu0 %v4661
    %v4663 = vpop.f32.mrf.mxu0
    %v4664 = vadd.f32 %v4627, %v4663
    %4665 = vdwg.mxu0
    %v4666 = vand.u32 %v1180, 4294901760
    %4667 = vmatpush.msra.mxu0 %v4666
    %v4668 = vand.u32 %v1176, 4294901760
    %4669 = vmatpush.msra.mxu0 %v4668
    %v4670 = vand.u32 %v1172, 4294901760
    %4671 = vmatpush.msra.mxu0 %v4670
    %v4672 = vand.u32 %v1168, 4294901760
    %4673 = vmatpush.msra.mxu0 %v4672
    %v4674 = vand.u32 %v1164, 4294901760
    %4675 = vmatpush.msra.mxu0 %v4674
    %v4676 = vand.u32 %v1160, 4294901760
    %4677 = vmatpush.msra.mxu0 %v4676
    %v4678 = vand.u32 %v1156, 4294901760
    %4679 = vmatpush.msra.mxu0 %v4678
    %v4680 = vand.u32 %v1152, 4294901760
    %4681 = vmatpush.msra.mxu0 %v4680
    %v4682 = vand.u32 %v1148, 4294901760
    %4683 = vmatpush.msra.mxu0 %v4682
    %v4684 = vand.u32 %v1144, 4294901760
    %4685 = vmatpush.msra.mxu0 %v4684
    %v4686 = vand.u32 %v1140, 4294901760
    %4687 = vmatpush.msra.mxu0 %v4686
    %v4688 = vand.u32 %v1136, 4294901760
    %4689 = vmatpush.msra.mxu0 %v4688
    %v4690 = vand.u32 %v1132, 4294901760
    %4691 = vmatpush.msra.mxu0 %v4690
    %v4692 = vand.u32 %v1128, 4294901760
    %4693 = vmatpush.msra.mxu0 %v4692
    %v4694 = vand.u32 %v1124, 4294901760
    %4695 = vmatpush.msra.mxu0 %v4694
    %v4696 = vand.u32 %v1120, 4294901760
    %4697 = vmatpush.msra.mxu0 %v4696
    %v4698 = vand.u32 %v988, 4294901760
    %v4699 = vsub.f32 %v988, %v4698
    %v4700 = vand.u32 %v4699, 4294901760
    %v4701 = vsub.f32 %v4699, %v4700
    %v4702 = vand.u32 %v4701, 4294901760
    %4703 = vmatmul.f32.gmra.mxu0 %v4702
    %v4704 = vpop.f32.mrf.mxu0
    %v4705 = vadd.f32 %v4664, %v4704
    %4706 = vdwg.mxu0
    %v4707 = vand.u32 %v1180, 4294901760
    %v4708 = vsub.f32 %v1180, %v4707
    %v4709 = vand.u32 %v4708, 4294901760
    %v4710 = vsub.f32 %v4708, %v4709
    %v4711 = vand.u32 %v4710, 4294901760
    %4712 = vmatpush.msra.mxu0 %v4711
    %v4713 = vand.u32 %v1176, 4294901760
    %v4714 = vsub.f32 %v1176, %v4713
    %v4715 = vand.u32 %v4714, 4294901760
    %v4716 = vsub.f32 %v4714, %v4715
    %v4717 = vand.u32 %v4716, 4294901760
    %4718 = vmatpush.msra.mxu0 %v4717
    %v4719 = vand.u32 %v1172, 4294901760
    %v4720 = vsub.f32 %v1172, %v4719
    %v4721 = vand.u32 %v4720, 4294901760
    %v4722 = vsub.f32 %v4720, %v4721
    %v4723 = vand.u32 %v4722, 4294901760
    %4724 = vmatpush.msra.mxu0 %v4723
    %v4725 = vand.u32 %v1168, 4294901760
    %v4726 = vsub.f32 %v1168, %v4725
    %v4727 = vand.u32 %v4726, 4294901760
    %v4728 = vsub.f32 %v4726, %v4727
    %v4729 = vand.u32 %v4728, 4294901760
    %4730 = vmatpush.msra.mxu0 %v4729
    %v4731 = vand.u32 %v1164, 4294901760
    %v4732 = vsub.f32 %v1164, %v4731
    %v4733 = vand.u32 %v4732, 4294901760
    %v4734 = vsub.f32 %v4732, %v4733
    %v4735 = vand.u32 %v4734, 4294901760
    %4736 = vmatpush.msra.mxu0 %v4735
    %v4737 = vand.u32 %v1160, 4294901760
    %v4738 = vsub.f32 %v1160, %v4737
    %v4739 = vand.u32 %v4738, 4294901760
    %v4740 = vsub.f32 %v4738, %v4739
    %v4741 = vand.u32 %v4740, 4294901760
    %4742 = vmatpush.msra.mxu0 %v4741
    %v4743 = vand.u32 %v1156, 4294901760
    %v4744 = vsub.f32 %v1156, %v4743
    %v4745 = vand.u32 %v4744, 4294901760
    %v4746 = vsub.f32 %v4744, %v4745
    %v4747 = vand.u32 %v4746, 4294901760
    %4748 = vmatpush.msra.mxu0 %v4747
    %v4749 = vand.u32 %v1152, 4294901760
    %v4750 = vsub.f32 %v1152, %v4749
    %v4751 = vand.u32 %v4750, 4294901760
    %v4752 = vsub.f32 %v4750, %v4751
    %v4753 = vand.u32 %v4752, 4294901760
    %4754 = vmatpush.msra.mxu0 %v4753
    %v4755 = vand.u32 %v1148, 4294901760
    %v4756 = vsub.f32 %v1148, %v4755
    %v4757 = vand.u32 %v4756, 4294901760
    %v4758 = vsub.f32 %v4756, %v4757
    %v4759 = vand.u32 %v4758, 4294901760
    %4760 = vmatpush.msra.mxu0 %v4759
    %v4761 = vand.u32 %v1144, 4294901760
    %v4762 = vsub.f32 %v1144, %v4761
    %v4763 = vand.u32 %v4762, 4294901760
    %v4764 = vsub.f32 %v4762, %v4763
    %v4765 = vand.u32 %v4764, 4294901760
    %4766 = vmatpush.msra.mxu0 %v4765
    %v4767 = vand.u32 %v1140, 4294901760
    %v4768 = vsub.f32 %v1140, %v4767
    %v4769 = vand.u32 %v4768, 4294901760
    %v4770 = vsub.f32 %v4768, %v4769
    %v4771 = vand.u32 %v4770, 4294901760
    %4772 = vmatpush.msra.mxu0 %v4771
    %v4773 = vand.u32 %v1136, 4294901760
    %v4774 = vsub.f32 %v1136, %v4773
    %v4775 = vand.u32 %v4774, 4294901760
    %v4776 = vsub.f32 %v4774, %v4775
    %v4777 = vand.u32 %v4776, 4294901760
    %4778 = vmatpush.msra.mxu0 %v4777
    %v4779 = vand.u32 %v1132, 4294901760
    %v4780 = vsub.f32 %v1132, %v4779
    %v4781 = vand.u32 %v4780, 4294901760
    %v4782 = vsub.f32 %v4780, %v4781
    %v4783 = vand.u32 %v4782, 4294901760
    %4784 = vmatpush.msra.mxu0 %v4783
    %v4785 = vand.u32 %v1128, 4294901760
    %v4786 = vsub.f32 %v1128, %v4785
    %v4787 = vand.u32 %v4786, 4294901760
    %v4788 = vsub.f32 %v4786, %v4787
    %v4789 = vand.u32 %v4788, 4294901760
    %4790 = vmatpush.msra.mxu0 %v4789
    %v4791 = vand.u32 %v1124, 4294901760
    %v4792 = vsub.f32 %v1124, %v4791
    %v4793 = vand.u32 %v4792, 4294901760
    %v4794 = vsub.f32 %v4792, %v4793
    %v4795 = vand.u32 %v4794, 4294901760
    %4796 = vmatpush.msra.mxu0 %v4795
    %v4797 = vand.u32 %v1120, 4294901760
    %v4798 = vsub.f32 %v1120, %v4797
    %v4799 = vand.u32 %v4798, 4294901760
    %v4800 = vsub.f32 %v4798, %v4799
    %v4801 = vand.u32 %v4800, 4294901760
    %4802 = vmatpush.msra.mxu0 %v4801
    %v4803 = vand.u32 %v988, 4294901760
    %4804 = vmatmul.f32.gmra.mxu0 %v4803
    %v4805 = vpop.f32.mrf.mxu0
    %v4806 = vadd.f32 %v4705, %v4805
    %4807 = vdwg.mxu0
    %v4808 = vand.u32 %v1180, 4294901760
    %v4809 = vsub.f32 %v1180, %v4808
    %4810 = vmatpush.msra.mxu0 %v4809
    %v4811 = vand.u32 %v1176, 4294901760
    %v4812 = vsub.f32 %v1176, %v4811
    %4813 = vmatpush.msra.mxu0 %v4812
    %v4814 = vand.u32 %v1172, 4294901760
    %v4815 = vsub.f32 %v1172, %v4814
    %4816 = vmatpush.msra.mxu0 %v4815
    %v4817 = vand.u32 %v1168, 4294901760
    %v4818 = vsub.f32 %v1168, %v4817
    %4819 = vmatpush.msra.mxu0 %v4818
    %v4820 = vand.u32 %v1164, 4294901760
    %v4821 = vsub.f32 %v1164, %v4820
    %4822 = vmatpush.msra.mxu0 %v4821
    %v4823 = vand.u32 %v1160, 4294901760
    %v4824 = vsub.f32 %v1160, %v4823
    %4825 = vmatpush.msra.mxu0 %v4824
    %v4826 = vand.u32 %v1156, 4294901760
    %v4827 = vsub.f32 %v1156, %v4826
    %4828 = vmatpush.msra.mxu0 %v4827
    %v4829 = vand.u32 %v1152, 4294901760
    %v4830 = vsub.f32 %v1152, %v4829
    %4831 = vmatpush.msra.mxu0 %v4830
    %v4832 = vand.u32 %v1148, 4294901760
    %v4833 = vsub.f32 %v1148, %v4832
    %4834 = vmatpush.msra.mxu0 %v4833
    %v4835 = vand.u32 %v1144, 4294901760
    %v4836 = vsub.f32 %v1144, %v4835
    %4837 = vmatpush.msra.mxu0 %v4836
    %v4838 = vand.u32 %v1140, 4294901760
    %v4839 = vsub.f32 %v1140, %v4838
    %4840 = vmatpush.msra.mxu0 %v4839
    %v4841 = vand.u32 %v1136, 4294901760
    %v4842 = vsub.f32 %v1136, %v4841
    %4843 = vmatpush.msra.mxu0 %v4842
    %v4844 = vand.u32 %v1132, 4294901760
    %v4845 = vsub.f32 %v1132, %v4844
    %4846 = vmatpush.msra.mxu0 %v4845
    %v4847 = vand.u32 %v1128, 4294901760
    %v4848 = vsub.f32 %v1128, %v4847
    %4849 = vmatpush.msra.mxu0 %v4848
    %v4850 = vand.u32 %v1124, 4294901760
    %v4851 = vsub.f32 %v1124, %v4850
    %4852 = vmatpush.msra.mxu0 %v4851
    %v4853 = vand.u32 %v1120, 4294901760
    %v4854 = vsub.f32 %v1120, %v4853
    %4855 = vmatpush.msra.mxu0 %v4854
    %v4856 = vand.u32 %v988, 4294901760
    %v4857 = vsub.f32 %v988, %v4856
    %4858 = vmatmul.f32.gmra.mxu0 %v4857
    %v4859 = vpop.f32.mrf.mxu0
    %v4860 = vadd.f32 %v4806, %v4859
    %4861 = vdwg.mxu0
    %v4862 = vand.u32 %v1180, 4294901760
    %4863 = vmatpush.msra.mxu0 %v4862
    %v4864 = vand.u32 %v1176, 4294901760
    %4865 = vmatpush.msra.mxu0 %v4864
    %v4866 = vand.u32 %v1172, 4294901760
    %4867 = vmatpush.msra.mxu0 %v4866
    %v4868 = vand.u32 %v1168, 4294901760
    %4869 = vmatpush.msra.mxu0 %v4868
    %v4870 = vand.u32 %v1164, 4294901760
    %4871 = vmatpush.msra.mxu0 %v4870
    %v4872 = vand.u32 %v1160, 4294901760
    %4873 = vmatpush.msra.mxu0 %v4872
    %v4874 = vand.u32 %v1156, 4294901760
    %4875 = vmatpush.msra.mxu0 %v4874
    %v4876 = vand.u32 %v1152, 4294901760
    %4877 = vmatpush.msra.mxu0 %v4876
    %v4878 = vand.u32 %v1148, 4294901760
    %4879 = vmatpush.msra.mxu0 %v4878
    %v4880 = vand.u32 %v1144, 4294901760
    %4881 = vmatpush.msra.mxu0 %v4880
    %v4882 = vand.u32 %v1140, 4294901760
    %4883 = vmatpush.msra.mxu0 %v4882
    %v4884 = vand.u32 %v1136, 4294901760
    %4885 = vmatpush.msra.mxu0 %v4884
    %v4886 = vand.u32 %v1132, 4294901760
    %4887 = vmatpush.msra.mxu0 %v4886
    %v4888 = vand.u32 %v1128, 4294901760
    %4889 = vmatpush.msra.mxu0 %v4888
    %v4890 = vand.u32 %v1124, 4294901760
    %4891 = vmatpush.msra.mxu0 %v4890
    %v4892 = vand.u32 %v1120, 4294901760
    %4893 = vmatpush.msra.mxu0 %v4892
    %v4894 = vand.u32 %v988, 4294901760
    %v4895 = vsub.f32 %v988, %v4894
    %v4896 = vand.u32 %v4895, 4294901760
    %4897 = vmatmul.f32.gmra.mxu0 %v4896
    %v4898 = vpop.f32.mrf.mxu0
    %v4899 = vadd.f32 %v4860, %v4898
    %4900 = vdwg.mxu0
    %v4901 = vand.u32 %v1180, 4294901760
    %v4902 = vsub.f32 %v1180, %v4901
    %v4903 = vand.u32 %v4902, 4294901760
    %4904 = vmatpush.msra.mxu0 %v4903
    %v4905 = vand.u32 %v1176, 4294901760
    %v4906 = vsub.f32 %v1176, %v4905
    %v4907 = vand.u32 %v4906, 4294901760
    %4908 = vmatpush.msra.mxu0 %v4907
    %v4909 = vand.u32 %v1172, 4294901760
    %v4910 = vsub.f32 %v1172, %v4909
    %v4911 = vand.u32 %v4910, 4294901760
    %4912 = vmatpush.msra.mxu0 %v4911
    %v4913 = vand.u32 %v1168, 4294901760
    %v4914 = vsub.f32 %v1168, %v4913
    %v4915 = vand.u32 %v4914, 4294901760
    %4916 = vmatpush.msra.mxu0 %v4915
    %v4917 = vand.u32 %v1164, 4294901760
    %v4918 = vsub.f32 %v1164, %v4917
    %v4919 = vand.u32 %v4918, 4294901760
    %4920 = vmatpush.msra.mxu0 %v4919
    %v4921 = vand.u32 %v1160, 4294901760
    %v4922 = vsub.f32 %v1160, %v4921
    %v4923 = vand.u32 %v4922, 4294901760
    %4924 = vmatpush.msra.mxu0 %v4923
    %v4925 = vand.u32 %v1156, 4294901760
    %v4926 = vsub.f32 %v1156, %v4925
    %v4927 = vand.u32 %v4926, 4294901760
    %4928 = vmatpush.msra.mxu0 %v4927
    %v4929 = vand.u32 %v1152, 4294901760
    %v4930 = vsub.f32 %v1152, %v4929
    %v4931 = vand.u32 %v4930, 4294901760
    %4932 = vmatpush.msra.mxu0 %v4931
    %v4933 = vand.u32 %v1148, 4294901760
    %v4934 = vsub.f32 %v1148, %v4933
    %v4935 = vand.u32 %v4934, 4294901760
    %4936 = vmatpush.msra.mxu0 %v4935
    %v4937 = vand.u32 %v1144, 4294901760
    %v4938 = vsub.f32 %v1144, %v4937
    %v4939 = vand.u32 %v4938, 4294901760
    %4940 = vmatpush.msra.mxu0 %v4939
    %v4941 = vand.u32 %v1140, 4294901760
    %v4942 = vsub.f32 %v1140, %v4941
    %v4943 = vand.u32 %v4942, 4294901760
    %4944 = vmatpush.msra.mxu0 %v4943
    %v4945 = vand.u32 %v1136, 4294901760
    %v4946 = vsub.f32 %v1136, %v4945
    %v4947 = vand.u32 %v4946, 4294901760
    %4948 = vmatpush.msra.mxu0 %v4947
    %v4949 = vand.u32 %v1132, 4294901760
    %v4950 = vsub.f32 %v1132, %v4949
    %v4951 = vand.u32 %v4950, 4294901760
    %4952 = vmatpush.msra.mxu0 %v4951
    %v4953 = vand.u32 %v1128, 4294901760
    %v4954 = vsub.f32 %v1128, %v4953
    %v4955 = vand.u32 %v4954, 4294901760
    %4956 = vmatpush.msra.mxu0 %v4955
    %v4957 = vand.u32 %v1124, 4294901760
    %v4958 = vsub.f32 %v1124, %v4957
    %v4959 = vand.u32 %v4958, 4294901760
    %4960 = vmatpush.msra.mxu0 %v4959
    %v4961 = vand.u32 %v1120, 4294901760
    %v4962 = vsub.f32 %v1120, %v4961
    %v4963 = vand.u32 %v4962, 4294901760
    %4964 = vmatpush.msra.mxu0 %v4963
    %v4965 = vand.u32 %v988, 4294901760
    %4966 = vmatmul.f32.gmra.mxu0 %v4965
    %v4967 = vpop.f32.mrf.mxu0
    %v4968 = vadd.f32 %v4899, %v4967
    %4969 = vdwg.mxu0
    %v4970 = vand.u32 %v1180, 4294901760
    %4971 = vmatpush.msra.mxu0 %v4970
    %v4972 = vand.u32 %v1176, 4294901760
    %4973 = vmatpush.msra.mxu0 %v4972
    %v4974 = vand.u32 %v1172, 4294901760
    %4975 = vmatpush.msra.mxu0 %v4974
    %v4976 = vand.u32 %v1168, 4294901760
    %4977 = vmatpush.msra.mxu0 %v4976
    %v4978 = vand.u32 %v1164, 4294901760
    %4979 = vmatpush.msra.mxu0 %v4978
    %v4980 = vand.u32 %v1160, 4294901760
    %4981 = vmatpush.msra.mxu0 %v4980
    %v4982 = vand.u32 %v1156, 4294901760
    %4983 = vmatpush.msra.mxu0 %v4982
    %v4984 = vand.u32 %v1152, 4294901760
    %4985 = vmatpush.msra.mxu0 %v4984
    %v4986 = vand.u32 %v1148, 4294901760
    %4987 = vmatpush.msra.mxu0 %v4986
    %v4988 = vand.u32 %v1144, 4294901760
    %4989 = vmatpush.msra.mxu0 %v4988
    %v4990 = vand.u32 %v1140, 4294901760
    %4991 = vmatpush.msra.mxu0 %v4990
    %v4992 = vand.u32 %v1136, 4294901760
    %4993 = vmatpush.msra.mxu0 %v4992
    %v4994 = vand.u32 %v1132, 4294901760
    %4995 = vmatpush.msra.mxu0 %v4994
    %v4996 = vand.u32 %v1128, 4294901760
    %4997 = vmatpush.msra.mxu0 %v4996
    %v4998 = vand.u32 %v1124, 4294901760
    %4999 = vmatpush.msra.mxu0 %v4998
    %v5000 = vand.u32 %v1120, 4294901760
    %5001 = vmatpush.msra.mxu0 %v5000
    %v5002 = vand.u32 %v988, 4294901760
    %5003 = vmatmul.f32.gmra.mxu0 %v5002
    %v5004 = vpop.f32.mrf.mxu0
    %v5005 = vadd.f32 %v4968, %v5004
    %5006 = vdwg.mxu0
    %v5007 = vand.u32 %v1244, 4294901760
    %5008 = vmatpush.msra.mxu0 %v5007
    %v5009 = vand.u32 %v1240, 4294901760
    %5010 = vmatpush.msra.mxu0 %v5009
    %v5011 = vand.u32 %v1236, 4294901760
    %5012 = vmatpush.msra.mxu0 %v5011
    %v5013 = vand.u32 %v1232, 4294901760
    %5014 = vmatpush.msra.mxu0 %v5013
    %v5015 = vand.u32 %v1228, 4294901760
    %5016 = vmatpush.msra.mxu0 %v5015
    %v5017 = vand.u32 %v1224, 4294901760
    %5018 = vmatpush.msra.mxu0 %v5017
    %v5019 = vand.u32 %v1220, 4294901760
    %5020 = vmatpush.msra.mxu0 %v5019
    %v5021 = vand.u32 %v1216, 4294901760
    %5022 = vmatpush.msra.mxu0 %v5021
    %v5023 = vand.u32 %v1212, 4294901760
    %5024 = vmatpush.msra.mxu0 %v5023
    %v5025 = vand.u32 %v1208, 4294901760
    %5026 = vmatpush.msra.mxu0 %v5025
    %v5027 = vand.u32 %v1204, 4294901760
    %5028 = vmatpush.msra.mxu0 %v5027
    %v5029 = vand.u32 %v1200, 4294901760
    %5030 = vmatpush.msra.mxu0 %v5029
    %v5031 = vand.u32 %v1196, 4294901760
    %5032 = vmatpush.msra.mxu0 %v5031
    %v5033 = vand.u32 %v1192, 4294901760
    %5034 = vmatpush.msra.mxu0 %v5033
    %v5035 = vand.u32 %v1188, 4294901760
    %5036 = vmatpush.msra.mxu0 %v5035
    %v5037 = vand.u32 %v1184, 4294901760
    %5038 = vmatpush.msra.mxu0 %v5037
    %v5039 = vand.u32 %v989, 4294901760
    %v5040 = vsub.f32 %v989, %v5039
    %v5041 = vand.u32 %v5040, 4294901760
    %v5042 = vsub.f32 %v5040, %v5041
    %v5043 = vand.u32 %v5042, 4294901760
    %5044 = vmatmul.f32.gmra.mxu0 %v5043
    %v5045 = vpop.f32.mrf.mxu0
    %v5046 = vadd.f32 %v5005, %v5045
    %5047 = vdwg.mxu0
    %v5048 = vand.u32 %v1244, 4294901760
    %v5049 = vsub.f32 %v1244, %v5048
    %v5050 = vand.u32 %v5049, 4294901760
    %v5051 = vsub.f32 %v5049, %v5050
    %v5052 = vand.u32 %v5051, 4294901760
    %5053 = vmatpush.msra.mxu0 %v5052
    %v5054 = vand.u32 %v1240, 4294901760
    %v5055 = vsub.f32 %v1240, %v5054
    %v5056 = vand.u32 %v5055, 4294901760
    %v5057 = vsub.f32 %v5055, %v5056
    %v5058 = vand.u32 %v5057, 4294901760
    %5059 = vmatpush.msra.mxu0 %v5058
    %v5060 = vand.u32 %v1236, 4294901760
    %v5061 = vsub.f32 %v1236, %v5060
    %v5062 = vand.u32 %v5061, 4294901760
    %v5063 = vsub.f32 %v5061, %v5062
    %v5064 = vand.u32 %v5063, 4294901760
    %5065 = vmatpush.msra.mxu0 %v5064
    %v5066 = vand.u32 %v1232, 4294901760
    %v5067 = vsub.f32 %v1232, %v5066
    %v5068 = vand.u32 %v5067, 4294901760
    %v5069 = vsub.f32 %v5067, %v5068
    %v5070 = vand.u32 %v5069, 4294901760
    %5071 = vmatpush.msra.mxu0 %v5070
    %v5072 = vand.u32 %v1228, 4294901760
    %v5073 = vsub.f32 %v1228, %v5072
    %v5074 = vand.u32 %v5073, 4294901760
    %v5075 = vsub.f32 %v5073, %v5074
    %v5076 = vand.u32 %v5075, 4294901760
    %5077 = vmatpush.msra.mxu0 %v5076
    %v5078 = vand.u32 %v1224, 4294901760
    %v5079 = vsub.f32 %v1224, %v5078
    %v5080 = vand.u32 %v5079, 4294901760
    %v5081 = vsub.f32 %v5079, %v5080
    %v5082 = vand.u32 %v5081, 4294901760
    %5083 = vmatpush.msra.mxu0 %v5082
    %v5084 = vand.u32 %v1220, 4294901760
    %v5085 = vsub.f32 %v1220, %v5084
    %v5086 = vand.u32 %v5085, 4294901760
    %v5087 = vsub.f32 %v5085, %v5086
    %v5088 = vand.u32 %v5087, 4294901760
    %5089 = vmatpush.msra.mxu0 %v5088
    %v5090 = vand.u32 %v1216, 4294901760
    %v5091 = vsub.f32 %v1216, %v5090
    %v5092 = vand.u32 %v5091, 4294901760
    %v5093 = vsub.f32 %v5091, %v5092
    %v5094 = vand.u32 %v5093, 4294901760
    %5095 = vmatpush.msra.mxu0 %v5094
    %v5096 = vand.u32 %v1212, 4294901760
    %v5097 = vsub.f32 %v1212, %v5096
    %v5098 = vand.u32 %v5097, 4294901760
    %v5099 = vsub.f32 %v5097, %v5098
    %v5100 = vand.u32 %v5099, 4294901760
    %5101 = vmatpush.msra.mxu0 %v5100
    %v5102 = vand.u32 %v1208, 4294901760
    %v5103 = vsub.f32 %v1208, %v5102
    %v5104 = vand.u32 %v5103, 4294901760
    %v5105 = vsub.f32 %v5103, %v5104
    %v5106 = vand.u32 %v5105, 4294901760
    %5107 = vmatpush.msra.mxu0 %v5106
    %v5108 = vand.u32 %v1204, 4294901760
    %v5109 = vsub.f32 %v1204, %v5108
    %v5110 = vand.u32 %v5109, 4294901760
    %v5111 = vsub.f32 %v5109, %v5110
    %v5112 = vand.u32 %v5111, 4294901760
    %5113 = vmatpush.msra.mxu0 %v5112
    %v5114 = vand.u32 %v1200, 4294901760
    %v5115 = vsub.f32 %v1200, %v5114
    %v5116 = vand.u32 %v5115, 4294901760
    %v5117 = vsub.f32 %v5115, %v5116
    %v5118 = vand.u32 %v5117, 4294901760
    %5119 = vmatpush.msra.mxu0 %v5118
    %v5120 = vand.u32 %v1196, 4294901760
    %v5121 = vsub.f32 %v1196, %v5120
    %v5122 = vand.u32 %v5121, 4294901760
    %v5123 = vsub.f32 %v5121, %v5122
    %v5124 = vand.u32 %v5123, 4294901760
    %5125 = vmatpush.msra.mxu0 %v5124
    %v5126 = vand.u32 %v1192, 4294901760
    %v5127 = vsub.f32 %v1192, %v5126
    %v5128 = vand.u32 %v5127, 4294901760
    %v5129 = vsub.f32 %v5127, %v5128
    %v5130 = vand.u32 %v5129, 4294901760
    %5131 = vmatpush.msra.mxu0 %v5130
    %v5132 = vand.u32 %v1188, 4294901760
    %v5133 = vsub.f32 %v1188, %v5132
    %v5134 = vand.u32 %v5133, 4294901760
    %v5135 = vsub.f32 %v5133, %v5134
    %v5136 = vand.u32 %v5135, 4294901760
    %5137 = vmatpush.msra.mxu0 %v5136
    %v5138 = vand.u32 %v1184, 4294901760
    %v5139 = vsub.f32 %v1184, %v5138
    %v5140 = vand.u32 %v5139, 4294901760
    %v5141 = vsub.f32 %v5139, %v5140
    %v5142 = vand.u32 %v5141, 4294901760
    %5143 = vmatpush.msra.mxu0 %v5142
    %v5144 = vand.u32 %v989, 4294901760
    %5145 = vmatmul.f32.gmra.mxu0 %v5144
    %v5146 = vpop.f32.mrf.mxu0
    %v5147 = vadd.f32 %v5046, %v5146
    %5148 = vdwg.mxu0
    %v5149 = vand.u32 %v1244, 4294901760
    %v5150 = vsub.f32 %v1244, %v5149
    %5151 = vmatpush.msra.mxu0 %v5150
    %v5152 = vand.u32 %v1240, 4294901760
    %v5153 = vsub.f32 %v1240, %v5152
    %5154 = vmatpush.msra.mxu0 %v5153
    %v5155 = vand.u32 %v1236, 4294901760
    %v5156 = vsub.f32 %v1236, %v5155
    %5157 = vmatpush.msra.mxu0 %v5156
    %v5158 = vand.u32 %v1232, 4294901760
    %v5159 = vsub.f32 %v1232, %v5158
    %5160 = vmatpush.msra.mxu0 %v5159
    %v5161 = vand.u32 %v1228, 4294901760
    %v5162 = vsub.f32 %v1228, %v5161
    %5163 = vmatpush.msra.mxu0 %v5162
    %v5164 = vand.u32 %v1224, 4294901760
    %v5165 = vsub.f32 %v1224, %v5164
    %5166 = vmatpush.msra.mxu0 %v5165
    %v5167 = vand.u32 %v1220, 4294901760
    %v5168 = vsub.f32 %v1220, %v5167
    %5169 = vmatpush.msra.mxu0 %v5168
    %v5170 = vand.u32 %v1216, 4294901760
    %v5171 = vsub.f32 %v1216, %v5170
    %5172 = vmatpush.msra.mxu0 %v5171
    %v5173 = vand.u32 %v1212, 4294901760
    %v5174 = vsub.f32 %v1212, %v5173
    %5175 = vmatpush.msra.mxu0 %v5174
    %v5176 = vand.u32 %v1208, 4294901760
    %v5177 = vsub.f32 %v1208, %v5176
    %5178 = vmatpush.msra.mxu0 %v5177
    %v5179 = vand.u32 %v1204, 4294901760
    %v5180 = vsub.f32 %v1204, %v5179
    %5181 = vmatpush.msra.mxu0 %v5180
    %v5182 = vand.u32 %v1200, 4294901760
    %v5183 = vsub.f32 %v1200, %v5182
    %5184 = vmatpush.msra.mxu0 %v5183
    %v5185 = vand.u32 %v1196, 4294901760
    %v5186 = vsub.f32 %v1196, %v5185
    %5187 = vmatpush.msra.mxu0 %v5186
    %v5188 = vand.u32 %v1192, 4294901760
    %v5189 = vsub.f32 %v1192, %v5188
    %5190 = vmatpush.msra.mxu0 %v5189
    %v5191 = vand.u32 %v1188, 4294901760
    %v5192 = vsub.f32 %v1188, %v5191
    %5193 = vmatpush.msra.mxu0 %v5192
    %v5194 = vand.u32 %v1184, 4294901760
    %v5195 = vsub.f32 %v1184, %v5194
    %5196 = vmatpush.msra.mxu0 %v5195
    %v5197 = vand.u32 %v989, 4294901760
    %v5198 = vsub.f32 %v989, %v5197
    %5199 = vmatmul.f32.gmra.mxu0 %v5198
    %v5200 = vpop.f32.mrf.mxu0
    %v5201 = vadd.f32 %v5147, %v5200
    %5202 = vdwg.mxu0
    %v5203 = vand.u32 %v1244, 4294901760
    %5204 = vmatpush.msra.mxu0 %v5203
    %v5205 = vand.u32 %v1240, 4294901760
    %5206 = vmatpush.msra.mxu0 %v5205
    %v5207 = vand.u32 %v1236, 4294901760
    %5208 = vmatpush.msra.mxu0 %v5207
    %v5209 = vand.u32 %v1232, 4294901760
    %5210 = vmatpush.msra.mxu0 %v5209
    %v5211 = vand.u32 %v1228, 4294901760
    %5212 = vmatpush.msra.mxu0 %v5211
    %v5213 = vand.u32 %v1224, 4294901760
    %5214 = vmatpush.msra.mxu0 %v5213
    %v5215 = vand.u32 %v1220, 4294901760
    %5216 = vmatpush.msra.mxu0 %v5215
    %v5217 = vand.u32 %v1216, 4294901760
    %5218 = vmatpush.msra.mxu0 %v5217
    %v5219 = vand.u32 %v1212, 4294901760
    %5220 = vmatpush.msra.mxu0 %v5219
    %v5221 = vand.u32 %v1208, 4294901760
    %5222 = vmatpush.msra.mxu0 %v5221
    %v5223 = vand.u32 %v1204, 4294901760
    %5224 = vmatpush.msra.mxu0 %v5223
    %v5225 = vand.u32 %v1200, 4294901760
    %5226 = vmatpush.msra.mxu0 %v5225
    %v5227 = vand.u32 %v1196, 4294901760
    %5228 = vmatpush.msra.mxu0 %v5227
    %v5229 = vand.u32 %v1192, 4294901760
    %5230 = vmatpush.msra.mxu0 %v5229
    %v5231 = vand.u32 %v1188, 4294901760
    %5232 = vmatpush.msra.mxu0 %v5231
    %v5233 = vand.u32 %v1184, 4294901760
    %5234 = vmatpush.msra.mxu0 %v5233
    %v5235 = vand.u32 %v989, 4294901760
    %v5236 = vsub.f32 %v989, %v5235
    %v5237 = vand.u32 %v5236, 4294901760
    %5238 = vmatmul.f32.gmra.mxu0 %v5237
    %v5239 = vpop.f32.mrf.mxu0
    %v5240 = vadd.f32 %v5201, %v5239
    %5241 = vdwg.mxu0
    %v5242 = vand.u32 %v1244, 4294901760
    %v5243 = vsub.f32 %v1244, %v5242
    %v5244 = vand.u32 %v5243, 4294901760
    %5245 = vmatpush.msra.mxu0 %v5244
    %v5246 = vand.u32 %v1240, 4294901760
    %v5247 = vsub.f32 %v1240, %v5246
    %v5248 = vand.u32 %v5247, 4294901760
    %5249 = vmatpush.msra.mxu0 %v5248
    %v5250 = vand.u32 %v1236, 4294901760
    %v5251 = vsub.f32 %v1236, %v5250
    %v5252 = vand.u32 %v5251, 4294901760
    %5253 = vmatpush.msra.mxu0 %v5252
    %v5254 = vand.u32 %v1232, 4294901760
    %v5255 = vsub.f32 %v1232, %v5254
    %v5256 = vand.u32 %v5255, 4294901760
    %5257 = vmatpush.msra.mxu0 %v5256
    %v5258 = vand.u32 %v1228, 4294901760
    %v5259 = vsub.f32 %v1228, %v5258
    %v5260 = vand.u32 %v5259, 4294901760
    %5261 = vmatpush.msra.mxu0 %v5260
    %v5262 = vand.u32 %v1224, 4294901760
    %v5263 = vsub.f32 %v1224, %v5262
    %v5264 = vand.u32 %v5263, 4294901760
    %5265 = vmatpush.msra.mxu0 %v5264
    %v5266 = vand.u32 %v1220, 4294901760
    %v5267 = vsub.f32 %v1220, %v5266
    %v5268 = vand.u32 %v5267, 4294901760
    %5269 = vmatpush.msra.mxu0 %v5268
    %v5270 = vand.u32 %v1216, 4294901760
    %v5271 = vsub.f32 %v1216, %v5270
    %v5272 = vand.u32 %v5271, 4294901760
    %5273 = vmatpush.msra.mxu0 %v5272
    %v5274 = vand.u32 %v1212, 4294901760
    %v5275 = vsub.f32 %v1212, %v5274
    %v5276 = vand.u32 %v5275, 4294901760
    %5277 = vmatpush.msra.mxu0 %v5276
    %v5278 = vand.u32 %v1208, 4294901760
    %v5279 = vsub.f32 %v1208, %v5278
    %v5280 = vand.u32 %v5279, 4294901760
    %5281 = vmatpush.msra.mxu0 %v5280
    %v5282 = vand.u32 %v1204, 4294901760
    %v5283 = vsub.f32 %v1204, %v5282
    %v5284 = vand.u32 %v5283, 4294901760
    %5285 = vmatpush.msra.mxu0 %v5284
    %v5286 = vand.u32 %v1200, 4294901760
    %v5287 = vsub.f32 %v1200, %v5286
    %v5288 = vand.u32 %v5287, 4294901760
    %5289 = vmatpush.msra.mxu0 %v5288
    %v5290 = vand.u32 %v1196, 4294901760
    %v5291 = vsub.f32 %v1196, %v5290
    %v5292 = vand.u32 %v5291, 4294901760
    %5293 = vmatpush.msra.mxu0 %v5292
    %v5294 = vand.u32 %v1192, 4294901760
    %v5295 = vsub.f32 %v1192, %v5294
    %v5296 = vand.u32 %v5295, 4294901760
    %5297 = vmatpush.msra.mxu0 %v5296
    %v5298 = vand.u32 %v1188, 4294901760
    %v5299 = vsub.f32 %v1188, %v5298
    %v5300 = vand.u32 %v5299, 4294901760
    %5301 = vmatpush.msra.mxu0 %v5300
    %v5302 = vand.u32 %v1184, 4294901760
    %v5303 = vsub.f32 %v1184, %v5302
    %v5304 = vand.u32 %v5303, 4294901760
    %5305 = vmatpush.msra.mxu0 %v5304
    %v5306 = vand.u32 %v989, 4294901760
    %5307 = vmatmul.f32.gmra.mxu0 %v5306
    %v5308 = vpop.f32.mrf.mxu0
    %v5309 = vadd.f32 %v5240, %v5308
    %5310 = vdwg.mxu0
    %v5311 = vand.u32 %v1244, 4294901760
    %5312 = vmatpush.msra.mxu0 %v5311
    %v5313 = vand.u32 %v1240, 4294901760
    %5314 = vmatpush.msra.mxu0 %v5313
    %v5315 = vand.u32 %v1236, 4294901760
    %5316 = vmatpush.msra.mxu0 %v5315
    %v5317 = vand.u32 %v1232, 4294901760
    %5318 = vmatpush.msra.mxu0 %v5317
    %v5319 = vand.u32 %v1228, 4294901760
    %5320 = vmatpush.msra.mxu0 %v5319
    %v5321 = vand.u32 %v1224, 4294901760
    %5322 = vmatpush.msra.mxu0 %v5321
    %v5323 = vand.u32 %v1220, 4294901760
    %5324 = vmatpush.msra.mxu0 %v5323
    %v5325 = vand.u32 %v1216, 4294901760
    %5326 = vmatpush.msra.mxu0 %v5325
    %v5327 = vand.u32 %v1212, 4294901760
    %5328 = vmatpush.msra.mxu0 %v5327
    %v5329 = vand.u32 %v1208, 4294901760
    %5330 = vmatpush.msra.mxu0 %v5329
    %v5331 = vand.u32 %v1204, 4294901760
    %5332 = vmatpush.msra.mxu0 %v5331
    %v5333 = vand.u32 %v1200, 4294901760
    %5334 = vmatpush.msra.mxu0 %v5333
    %v5335 = vand.u32 %v1196, 4294901760
    %5336 = vmatpush.msra.mxu0 %v5335
    %v5337 = vand.u32 %v1192, 4294901760
    %5338 = vmatpush.msra.mxu0 %v5337
    %v5339 = vand.u32 %v1188, 4294901760
    %5340 = vmatpush.msra.mxu0 %v5339
    %v5341 = vand.u32 %v1184, 4294901760
    %5342 = vmatpush.msra.mxu0 %v5341
    %v5343 = vand.u32 %v989, 4294901760
    %5344 = vmatmul.f32.gmra.mxu0 %v5343
    %v5345 = vpop.f32.mrf.mxu0
    %v5346 = vadd.f32 %v5309, %v5345
    %5347 = vdwg.mxu0
    %v5348 = vand.u32 %v1053, 4294901760
    %5349 = vmatpush.msra.mxu0 %v5348
    %v5350 = vand.u32 %v1049, 4294901760
    %5351 = vmatpush.msra.mxu0 %v5350
    %v5352 = vand.u32 %v1045, 4294901760
    %5353 = vmatpush.msra.mxu0 %v5352
    %v5354 = vand.u32 %v1041, 4294901760
    %5355 = vmatpush.msra.mxu0 %v5354
    %v5356 = vand.u32 %v1037, 4294901760
    %5357 = vmatpush.msra.mxu0 %v5356
    %v5358 = vand.u32 %v1033, 4294901760
    %5359 = vmatpush.msra.mxu0 %v5358
    %v5360 = vand.u32 %v1029, 4294901760
    %5361 = vmatpush.msra.mxu0 %v5360
    %v5362 = vand.u32 %v1025, 4294901760
    %5363 = vmatpush.msra.mxu0 %v5362
    %v5364 = vand.u32 %v1021, 4294901760
    %5365 = vmatpush.msra.mxu0 %v5364
    %v5366 = vand.u32 %v1017, 4294901760
    %5367 = vmatpush.msra.mxu0 %v5366
    %v5368 = vand.u32 %v1013, 4294901760
    %5369 = vmatpush.msra.mxu0 %v5368
    %v5370 = vand.u32 %v1009, 4294901760
    %5371 = vmatpush.msra.mxu0 %v5370
    %v5372 = vand.u32 %v1005, 4294901760
    %5373 = vmatpush.msra.mxu0 %v5372
    %v5374 = vand.u32 %v1001, 4294901760
    %5375 = vmatpush.msra.mxu0 %v5374
    %v5376 = vand.u32 %v997, 4294901760
    %5377 = vmatpush.msra.mxu0 %v5376
    %v5378 = vand.u32 %v993, 4294901760
    %5379 = vmatpush.msra.mxu0 %v5378
    %v5380 = vand.u32 %v986, 4294901760
    %v5381 = vsub.f32 %v986, %v5380
    %v5382 = vand.u32 %v5381, 4294901760
    %v5383 = vsub.f32 %v5381, %v5382
    %v5384 = vand.u32 %v5383, 4294901760
    %5385 = vmatmul.f32.gmra.mxu0 %v5384
    %v5386 = vpop.f32.mrf.mxu0
    %v5387 = vadd.f32 %v1251, %v5386
    %5388 = vdwg.mxu0
    %v5389 = vand.u32 %v1053, 4294901760
    %v5390 = vsub.f32 %v1053, %v5389
    %v5391 = vand.u32 %v5390, 4294901760
    %v5392 = vsub.f32 %v5390, %v5391
    %v5393 = vand.u32 %v5392, 4294901760
    %5394 = vmatpush.msra.mxu0 %v5393
    %v5395 = vand.u32 %v1049, 4294901760
    %v5396 = vsub.f32 %v1049, %v5395
    %v5397 = vand.u32 %v5396, 4294901760
    %v5398 = vsub.f32 %v5396, %v5397
    %v5399 = vand.u32 %v5398, 4294901760
    %5400 = vmatpush.msra.mxu0 %v5399
    %v5401 = vand.u32 %v1045, 4294901760
    %v5402 = vsub.f32 %v1045, %v5401
    %v5403 = vand.u32 %v5402, 4294901760
    %v5404 = vsub.f32 %v5402, %v5403
    %v5405 = vand.u32 %v5404, 4294901760
    %5406 = vmatpush.msra.mxu0 %v5405
    %v5407 = vand.u32 %v1041, 4294901760
    %v5408 = vsub.f32 %v1041, %v5407
    %v5409 = vand.u32 %v5408, 4294901760
    %v5410 = vsub.f32 %v5408, %v5409
    %v5411 = vand.u32 %v5410, 4294901760
    %5412 = vmatpush.msra.mxu0 %v5411
    %v5413 = vand.u32 %v1037, 4294901760
    %v5414 = vsub.f32 %v1037, %v5413
    %v5415 = vand.u32 %v5414, 4294901760
    %v5416 = vsub.f32 %v5414, %v5415
    %v5417 = vand.u32 %v5416, 4294901760
    %5418 = vmatpush.msra.mxu0 %v5417
    %v5419 = vand.u32 %v1033, 4294901760
    %v5420 = vsub.f32 %v1033, %v5419
    %v5421 = vand.u32 %v5420, 4294901760
    %v5422 = vsub.f32 %v5420, %v5421
    %v5423 = vand.u32 %v5422, 4294901760
    %5424 = vmatpush.msra.mxu0 %v5423
    %v5425 = vand.u32 %v1029, 4294901760
    %v5426 = vsub.f32 %v1029, %v5425
    %v5427 = vand.u32 %v5426, 4294901760
    %v5428 = vsub.f32 %v5426, %v5427
    %v5429 = vand.u32 %v5428, 4294901760
    %5430 = vmatpush.msra.mxu0 %v5429
    %v5431 = vand.u32 %v1025, 4294901760
    %v5432 = vsub.f32 %v1025, %v5431
    %v5433 = vand.u32 %v5432, 4294901760
    %v5434 = vsub.f32 %v5432, %v5433
    %v5435 = vand.u32 %v5434, 4294901760
    %5436 = vmatpush.msra.mxu0 %v5435
    %v5437 = vand.u32 %v1021, 4294901760
    %v5438 = vsub.f32 %v1021, %v5437
    %v5439 = vand.u32 %v5438, 4294901760
    %v5440 = vsub.f32 %v5438, %v5439
    %v5441 = vand.u32 %v5440, 4294901760
    %5442 = vmatpush.msra.mxu0 %v5441
    %v5443 = vand.u32 %v1017, 4294901760
    %v5444 = vsub.f32 %v1017, %v5443
    %v5445 = vand.u32 %v5444, 4294901760
    %v5446 = vsub.f32 %v5444, %v5445
    %v5447 = vand.u32 %v5446, 4294901760
    %5448 = vmatpush.msra.mxu0 %v5447
    %v5449 = vand.u32 %v1013, 4294901760
    %v5450 = vsub.f32 %v1013, %v5449
    %v5451 = vand.u32 %v5450, 4294901760
    %v5452 = vsub.f32 %v5450, %v5451
    %v5453 = vand.u32 %v5452, 4294901760
    %5454 = vmatpush.msra.mxu0 %v5453
    %v5455 = vand.u32 %v1009, 4294901760
    %v5456 = vsub.f32 %v1009, %v5455
    %v5457 = vand.u32 %v5456, 4294901760
    %v5458 = vsub.f32 %v5456, %v5457
    %v5459 = vand.u32 %v5458, 4294901760
    %5460 = vmatpush.msra.mxu0 %v5459
    %v5461 = vand.u32 %v1005, 4294901760
    %v5462 = vsub.f32 %v1005, %v5461
    %v5463 = vand.u32 %v5462, 4294901760
    %v5464 = vsub.f32 %v5462, %v5463
    %v5465 = vand.u32 %v5464, 4294901760
    %5466 = vmatpush.msra.mxu0 %v5465
    %v5467 = vand.u32 %v1001, 4294901760
    %v5468 = vsub.f32 %v1001, %v5467
    %v5469 = vand.u32 %v5468, 4294901760
    %v5470 = vsub.f32 %v5468, %v5469
    %v5471 = vand.u32 %v5470, 4294901760
    %5472 = vmatpush.msra.mxu0 %v5471
    %v5473 = vand.u32 %v997, 4294901760
    %v5474 = vsub.f32 %v997, %v5473
    %v5475 = vand.u32 %v5474, 4294901760
    %v5476 = vsub.f32 %v5474, %v5475
    %v5477 = vand.u32 %v5476, 4294901760
    %5478 = vmatpush.msra.mxu0 %v5477
    %v5479 = vand.u32 %v993, 4294901760
    %v5480 = vsub.f32 %v993, %v5479
    %v5481 = vand.u32 %v5480, 4294901760
    %v5482 = vsub.f32 %v5480, %v5481
    %v5483 = vand.u32 %v5482, 4294901760
    %5484 = vmatpush.msra.mxu0 %v5483
    %v5485 = vand.u32 %v986, 4294901760
    %5486 = vmatmul.f32.gmra.mxu0 %v5485
    %v5487 = vpop.f32.mrf.mxu0
    %v5488 = vadd.f32 %v5387, %v5487
    %5489 = vdwg.mxu0
    %v5490 = vand.u32 %v1053, 4294901760
    %v5491 = vsub.f32 %v1053, %v5490
    %5492 = vmatpush.msra.mxu0 %v5491
    %v5493 = vand.u32 %v1049, 4294901760
    %v5494 = vsub.f32 %v1049, %v5493
    %5495 = vmatpush.msra.mxu0 %v5494
    %v5496 = vand.u32 %v1045, 4294901760
    %v5497 = vsub.f32 %v1045, %v5496
    %5498 = vmatpush.msra.mxu0 %v5497
    %v5499 = vand.u32 %v1041, 4294901760
    %v5500 = vsub.f32 %v1041, %v5499
    %5501 = vmatpush.msra.mxu0 %v5500
    %v5502 = vand.u32 %v1037, 4294901760
    %v5503 = vsub.f32 %v1037, %v5502
    %5504 = vmatpush.msra.mxu0 %v5503
    %v5505 = vand.u32 %v1033, 4294901760
    %v5506 = vsub.f32 %v1033, %v5505
    %5507 = vmatpush.msra.mxu0 %v5506
    %v5508 = vand.u32 %v1029, 4294901760
    %v5509 = vsub.f32 %v1029, %v5508
    %5510 = vmatpush.msra.mxu0 %v5509
    %v5511 = vand.u32 %v1025, 4294901760
    %v5512 = vsub.f32 %v1025, %v5511
    %5513 = vmatpush.msra.mxu0 %v5512
    %v5514 = vand.u32 %v1021, 4294901760
    %v5515 = vsub.f32 %v1021, %v5514
    %5516 = vmatpush.msra.mxu0 %v5515
    %v5517 = vand.u32 %v1017, 4294901760
    %v5518 = vsub.f32 %v1017, %v5517
    %5519 = vmatpush.msra.mxu0 %v5518
    %v5520 = vand.u32 %v1013, 4294901760
    %v5521 = vsub.f32 %v1013, %v5520
    %5522 = vmatpush.msra.mxu0 %v5521
    %v5523 = vand.u32 %v1009, 4294901760
    %v5524 = vsub.f32 %v1009, %v5523
    %5525 = vmatpush.msra.mxu0 %v5524
    %v5526 = vand.u32 %v1005, 4294901760
    %v5527 = vsub.f32 %v1005, %v5526
    %5528 = vmatpush.msra.mxu0 %v5527
    %v5529 = vand.u32 %v1001, 4294901760
    %v5530 = vsub.f32 %v1001, %v5529
    %5531 = vmatpush.msra.mxu0 %v5530
    %v5532 = vand.u32 %v997, 4294901760
    %v5533 = vsub.f32 %v997, %v5532
    %5534 = vmatpush.msra.mxu0 %v5533
    %v5535 = vand.u32 %v993, 4294901760
    %v5536 = vsub.f32 %v993, %v5535
    %5537 = vmatpush.msra.mxu0 %v5536
    %v5538 = vand.u32 %v986, 4294901760
    %v5539 = vsub.f32 %v986, %v5538
    %5540 = vmatmul.f32.gmra.mxu0 %v5539
    %v5541 = vpop.f32.mrf.mxu0
    %v5542 = vadd.f32 %v5488, %v5541
    %5543 = vdwg.mxu0
    %v5544 = vand.u32 %v1053, 4294901760
    %5545 = vmatpush.msra.mxu0 %v5544
    %v5546 = vand.u32 %v1049, 4294901760
    %5547 = vmatpush.msra.mxu0 %v5546
    %v5548 = vand.u32 %v1045, 4294901760
    %5549 = vmatpush.msra.mxu0 %v5548
    %v5550 = vand.u32 %v1041, 4294901760
    %5551 = vmatpush.msra.mxu0 %v5550
    %v5552 = vand.u32 %v1037, 4294901760
    %5553 = vmatpush.msra.mxu0 %v5552
    %v5554 = vand.u32 %v1033, 4294901760
    %5555 = vmatpush.msra.mxu0 %v5554
    %v5556 = vand.u32 %v1029, 4294901760
    %5557 = vmatpush.msra.mxu0 %v5556
    %v5558 = vand.u32 %v1025, 4294901760
    %5559 = vmatpush.msra.mxu0 %v5558
    %v5560 = vand.u32 %v1021, 4294901760
    %5561 = vmatpush.msra.mxu0 %v5560
    %v5562 = vand.u32 %v1017, 4294901760
    %5563 = vmatpush.msra.mxu0 %v5562
    %v5564 = vand.u32 %v1013, 4294901760
    %5565 = vmatpush.msra.mxu0 %v5564
    %v5566 = vand.u32 %v1009, 4294901760
    %5567 = vmatpush.msra.mxu0 %v5566
    %v5568 = vand.u32 %v1005, 4294901760
    %5569 = vmatpush.msra.mxu0 %v5568
    %v5570 = vand.u32 %v1001, 4294901760
    %5571 = vmatpush.msra.mxu0 %v5570
    %v5572 = vand.u32 %v997, 4294901760
    %5573 = vmatpush.msra.mxu0 %v5572
    %v5574 = vand.u32 %v993, 4294901760
    %5575 = vmatpush.msra.mxu0 %v5574
    %v5576 = vand.u32 %v986, 4294901760
    %v5577 = vsub.f32 %v986, %v5576
    %v5578 = vand.u32 %v5577, 4294901760
    %5579 = vmatmul.f32.gmra.mxu0 %v5578
    %v5580 = vpop.f32.mrf.mxu0
    %v5581 = vadd.f32 %v5542, %v5580
    %5582 = vdwg.mxu0
    %v5583 = vand.u32 %v1053, 4294901760
    %v5584 = vsub.f32 %v1053, %v5583
    %v5585 = vand.u32 %v5584, 4294901760
    %5586 = vmatpush.msra.mxu0 %v5585
    %v5587 = vand.u32 %v1049, 4294901760
    %v5588 = vsub.f32 %v1049, %v5587
    %v5589 = vand.u32 %v5588, 4294901760
    %5590 = vmatpush.msra.mxu0 %v5589
    %v5591 = vand.u32 %v1045, 4294901760
    %v5592 = vsub.f32 %v1045, %v5591
    %v5593 = vand.u32 %v5592, 4294901760
    %5594 = vmatpush.msra.mxu0 %v5593
    %v5595 = vand.u32 %v1041, 4294901760
    %v5596 = vsub.f32 %v1041, %v5595
    %v5597 = vand.u32 %v5596, 4294901760
    %5598 = vmatpush.msra.mxu0 %v5597
    %v5599 = vand.u32 %v1037, 4294901760
    %v5600 = vsub.f32 %v1037, %v5599
    %v5601 = vand.u32 %v5600, 4294901760
    %5602 = vmatpush.msra.mxu0 %v5601
    %v5603 = vand.u32 %v1033, 4294901760
    %v5604 = vsub.f32 %v1033, %v5603
    %v5605 = vand.u32 %v5604, 4294901760
    %5606 = vmatpush.msra.mxu0 %v5605
    %v5607 = vand.u32 %v1029, 4294901760
    %v5608 = vsub.f32 %v1029, %v5607
    %v5609 = vand.u32 %v5608, 4294901760
    %5610 = vmatpush.msra.mxu0 %v5609
    %v5611 = vand.u32 %v1025, 4294901760
    %v5612 = vsub.f32 %v1025, %v5611
    %v5613 = vand.u32 %v5612, 4294901760
    %5614 = vmatpush.msra.mxu0 %v5613
    %v5615 = vand.u32 %v1021, 4294901760
    %v5616 = vsub.f32 %v1021, %v5615
    %v5617 = vand.u32 %v5616, 4294901760
    %5618 = vmatpush.msra.mxu0 %v5617
    %v5619 = vand.u32 %v1017, 4294901760
    %v5620 = vsub.f32 %v1017, %v5619
    %v5621 = vand.u32 %v5620, 4294901760
    %5622 = vmatpush.msra.mxu0 %v5621
    %v5623 = vand.u32 %v1013, 4294901760
    %v5624 = vsub.f32 %v1013, %v5623
    %v5625 = vand.u32 %v5624, 4294901760
    %5626 = vmatpush.msra.mxu0 %v5625
    %v5627 = vand.u32 %v1009, 4294901760
    %v5628 = vsub.f32 %v1009, %v5627
    %v5629 = vand.u32 %v5628, 4294901760
    %5630 = vmatpush.msra.mxu0 %v5629
    %v5631 = vand.u32 %v1005, 4294901760
    %v5632 = vsub.f32 %v1005, %v5631
    %v5633 = vand.u32 %v5632, 4294901760
    %5634 = vmatpush.msra.mxu0 %v5633
    %v5635 = vand.u32 %v1001, 4294901760
    %v5636 = vsub.f32 %v1001, %v5635
    %v5637 = vand.u32 %v5636, 4294901760
    %5638 = vmatpush.msra.mxu0 %v5637
    %v5639 = vand.u32 %v997, 4294901760
    %v5640 = vsub.f32 %v997, %v5639
    %v5641 = vand.u32 %v5640, 4294901760
    %5642 = vmatpush.msra.mxu0 %v5641
    %v5643 = vand.u32 %v993, 4294901760
    %v5644 = vsub.f32 %v993, %v5643
    %v5645 = vand.u32 %v5644, 4294901760
    %5646 = vmatpush.msra.mxu0 %v5645
    %v5647 = vand.u32 %v986, 4294901760
    %5648 = vmatmul.f32.gmra.mxu0 %v5647
    %v5649 = vpop.f32.mrf.mxu0
    %v5650 = vadd.f32 %v5581, %v5649
    %5651 = vdwg.mxu0
    %v5652 = vand.u32 %v1053, 4294901760
    %5653 = vmatpush.msra.mxu0 %v5652
    %v5654 = vand.u32 %v1049, 4294901760
    %5655 = vmatpush.msra.mxu0 %v5654
    %v5656 = vand.u32 %v1045, 4294901760
    %5657 = vmatpush.msra.mxu0 %v5656
    %v5658 = vand.u32 %v1041, 4294901760
    %5659 = vmatpush.msra.mxu0 %v5658
    %v5660 = vand.u32 %v1037, 4294901760
    %5661 = vmatpush.msra.mxu0 %v5660
    %v5662 = vand.u32 %v1033, 4294901760
    %5663 = vmatpush.msra.mxu0 %v5662
    %v5664 = vand.u32 %v1029, 4294901760
    %5665 = vmatpush.msra.mxu0 %v5664
    %v5666 = vand.u32 %v1025, 4294901760
    %5667 = vmatpush.msra.mxu0 %v5666
    %v5668 = vand.u32 %v1021, 4294901760
    %5669 = vmatpush.msra.mxu0 %v5668
    %v5670 = vand.u32 %v1017, 4294901760
    %5671 = vmatpush.msra.mxu0 %v5670
    %v5672 = vand.u32 %v1013, 4294901760
    %5673 = vmatpush.msra.mxu0 %v5672
    %v5674 = vand.u32 %v1009, 4294901760
    %5675 = vmatpush.msra.mxu0 %v5674
    %v5676 = vand.u32 %v1005, 4294901760
    %5677 = vmatpush.msra.mxu0 %v5676
    %v5678 = vand.u32 %v1001, 4294901760
    %5679 = vmatpush.msra.mxu0 %v5678
    %v5680 = vand.u32 %v997, 4294901760
    %5681 = vmatpush.msra.mxu0 %v5680
    %v5682 = vand.u32 %v993, 4294901760
    %5683 = vmatpush.msra.mxu0 %v5682
    %v5684 = vand.u32 %v986, 4294901760
    %5685 = vmatmul.f32.gmra.mxu0 %v5684
    %v5686 = vpop.f32.mrf.mxu0
    %v5687 = vadd.f32 %v5650, %v5686
    %5688 = vdwg.mxu0
    %v5689 = vand.u32 %v1117, 4294901760
    %5690 = vmatpush.msra.mxu0 %v5689
    %v5691 = vand.u32 %v1113, 4294901760
    %5692 = vmatpush.msra.mxu0 %v5691
    %v5693 = vand.u32 %v1109, 4294901760
    %5694 = vmatpush.msra.mxu0 %v5693
    %v5695 = vand.u32 %v1105, 4294901760
    %5696 = vmatpush.msra.mxu0 %v5695
    %v5697 = vand.u32 %v1101, 4294901760
    %5698 = vmatpush.msra.mxu0 %v5697
    %v5699 = vand.u32 %v1097, 4294901760
    %5700 = vmatpush.msra.mxu0 %v5699
    %v5701 = vand.u32 %v1093, 4294901760
    %5702 = vmatpush.msra.mxu0 %v5701
    %v5703 = vand.u32 %v1089, 4294901760
    %5704 = vmatpush.msra.mxu0 %v5703
    %v5705 = vand.u32 %v1085, 4294901760
    %5706 = vmatpush.msra.mxu0 %v5705
    %v5707 = vand.u32 %v1081, 4294901760
    %5708 = vmatpush.msra.mxu0 %v5707
    %v5709 = vand.u32 %v1077, 4294901760
    %5710 = vmatpush.msra.mxu0 %v5709
    %v5711 = vand.u32 %v1073, 4294901760
    %5712 = vmatpush.msra.mxu0 %v5711
    %v5713 = vand.u32 %v1069, 4294901760
    %5714 = vmatpush.msra.mxu0 %v5713
    %v5715 = vand.u32 %v1065, 4294901760
    %5716 = vmatpush.msra.mxu0 %v5715
    %v5717 = vand.u32 %v1061, 4294901760
    %5718 = vmatpush.msra.mxu0 %v5717
    %v5719 = vand.u32 %v1057, 4294901760
    %5720 = vmatpush.msra.mxu0 %v5719
    %v5721 = vand.u32 %v987, 4294901760
    %v5722 = vsub.f32 %v987, %v5721
    %v5723 = vand.u32 %v5722, 4294901760
    %v5724 = vsub.f32 %v5722, %v5723
    %v5725 = vand.u32 %v5724, 4294901760
    %5726 = vmatmul.f32.gmra.mxu0 %v5725
    %v5727 = vpop.f32.mrf.mxu0
    %v5728 = vadd.f32 %v5687, %v5727
    %5729 = vdwg.mxu0
    %v5730 = vand.u32 %v1117, 4294901760
    %v5731 = vsub.f32 %v1117, %v5730
    %v5732 = vand.u32 %v5731, 4294901760
    %v5733 = vsub.f32 %v5731, %v5732
    %v5734 = vand.u32 %v5733, 4294901760
    %5735 = vmatpush.msra.mxu0 %v5734
    %v5736 = vand.u32 %v1113, 4294901760
    %v5737 = vsub.f32 %v1113, %v5736
    %v5738 = vand.u32 %v5737, 4294901760
    %v5739 = vsub.f32 %v5737, %v5738
    %v5740 = vand.u32 %v5739, 4294901760
    %5741 = vmatpush.msra.mxu0 %v5740
    %v5742 = vand.u32 %v1109, 4294901760
    %v5743 = vsub.f32 %v1109, %v5742
    %v5744 = vand.u32 %v5743, 4294901760
    %v5745 = vsub.f32 %v5743, %v5744
    %v5746 = vand.u32 %v5745, 4294901760
    %5747 = vmatpush.msra.mxu0 %v5746
    %v5748 = vand.u32 %v1105, 4294901760
    %v5749 = vsub.f32 %v1105, %v5748
    %v5750 = vand.u32 %v5749, 4294901760
    %v5751 = vsub.f32 %v5749, %v5750
    %v5752 = vand.u32 %v5751, 4294901760
    %5753 = vmatpush.msra.mxu0 %v5752
    %v5754 = vand.u32 %v1101, 4294901760
    %v5755 = vsub.f32 %v1101, %v5754
    %v5756 = vand.u32 %v5755, 4294901760
    %v5757 = vsub.f32 %v5755, %v5756
    %v5758 = vand.u32 %v5757, 4294901760
    %5759 = vmatpush.msra.mxu0 %v5758
    %v5760 = vand.u32 %v1097, 4294901760
    %v5761 = vsub.f32 %v1097, %v5760
    %v5762 = vand.u32 %v5761, 4294901760
    %v5763 = vsub.f32 %v5761, %v5762
    %v5764 = vand.u32 %v5763, 4294901760
    %5765 = vmatpush.msra.mxu0 %v5764
    %v5766 = vand.u32 %v1093, 4294901760
    %v5767 = vsub.f32 %v1093, %v5766
    %v5768 = vand.u32 %v5767, 4294901760
    %v5769 = vsub.f32 %v5767, %v5768
    %v5770 = vand.u32 %v5769, 4294901760
    %5771 = vmatpush.msra.mxu0 %v5770
    %v5772 = vand.u32 %v1089, 4294901760
    %v5773 = vsub.f32 %v1089, %v5772
    %v5774 = vand.u32 %v5773, 4294901760
    %v5775 = vsub.f32 %v5773, %v5774
    %v5776 = vand.u32 %v5775, 4294901760
    %5777 = vmatpush.msra.mxu0 %v5776
    %v5778 = vand.u32 %v1085, 4294901760
    %v5779 = vsub.f32 %v1085, %v5778
    %v5780 = vand.u32 %v5779, 4294901760
    %v5781 = vsub.f32 %v5779, %v5780
    %v5782 = vand.u32 %v5781, 4294901760
    %5783 = vmatpush.msra.mxu0 %v5782
    %v5784 = vand.u32 %v1081, 4294901760
    %v5785 = vsub.f32 %v1081, %v5784
    %v5786 = vand.u32 %v5785, 4294901760
    %v5787 = vsub.f32 %v5785, %v5786
    %v5788 = vand.u32 %v5787, 4294901760
    %5789 = vmatpush.msra.mxu0 %v5788
    %v5790 = vand.u32 %v1077, 4294901760
    %v5791 = vsub.f32 %v1077, %v5790
    %v5792 = vand.u32 %v5791, 4294901760
    %v5793 = vsub.f32 %v5791, %v5792
    %v5794 = vand.u32 %v5793, 4294901760
    %5795 = vmatpush.msra.mxu0 %v5794
    %v5796 = vand.u32 %v1073, 4294901760
    %v5797 = vsub.f32 %v1073, %v5796
    %v5798 = vand.u32 %v5797, 4294901760
    %v5799 = vsub.f32 %v5797, %v5798
    %v5800 = vand.u32 %v5799, 4294901760
    %5801 = vmatpush.msra.mxu0 %v5800
    %v5802 = vand.u32 %v1069, 4294901760
    %v5803 = vsub.f32 %v1069, %v5802
    %v5804 = vand.u32 %v5803, 4294901760
    %v5805 = vsub.f32 %v5803, %v5804
    %v5806 = vand.u32 %v5805, 4294901760
    %5807 = vmatpush.msra.mxu0 %v5806
    %v5808 = vand.u32 %v1065, 4294901760
    %v5809 = vsub.f32 %v1065, %v5808
    %v5810 = vand.u32 %v5809, 4294901760
    %v5811 = vsub.f32 %v5809, %v5810
    %v5812 = vand.u32 %v5811, 4294901760
    %5813 = vmatpush.msra.mxu0 %v5812
    %v5814 = vand.u32 %v1061, 4294901760
    %v5815 = vsub.f32 %v1061, %v5814
    %v5816 = vand.u32 %v5815, 4294901760
    %v5817 = vsub.f32 %v5815, %v5816
    %v5818 = vand.u32 %v5817, 4294901760
    %5819 = vmatpush.msra.mxu0 %v5818
    %v5820 = vand.u32 %v1057, 4294901760
    %v5821 = vsub.f32 %v1057, %v5820
    %v5822 = vand.u32 %v5821, 4294901760
    %v5823 = vsub.f32 %v5821, %v5822
    %v5824 = vand.u32 %v5823, 4294901760
    %5825 = vmatpush.msra.mxu0 %v5824
    %v5826 = vand.u32 %v987, 4294901760
    %5827 = vmatmul.f32.gmra.mxu0 %v5826
    %v5828 = vpop.f32.mrf.mxu0
    %v5829 = vadd.f32 %v5728, %v5828
    %5830 = vdwg.mxu0
    %v5831 = vand.u32 %v1117, 4294901760
    %v5832 = vsub.f32 %v1117, %v5831
    %5833 = vmatpush.msra.mxu0 %v5832
    %v5834 = vand.u32 %v1113, 4294901760
    %v5835 = vsub.f32 %v1113, %v5834
    %5836 = vmatpush.msra.mxu0 %v5835
    %v5837 = vand.u32 %v1109, 4294901760
    %v5838 = vsub.f32 %v1109, %v5837
    %5839 = vmatpush.msra.mxu0 %v5838
    %v5840 = vand.u32 %v1105, 4294901760
    %v5841 = vsub.f32 %v1105, %v5840
    %5842 = vmatpush.msra.mxu0 %v5841
    %v5843 = vand.u32 %v1101, 4294901760
    %v5844 = vsub.f32 %v1101, %v5843
    %5845 = vmatpush.msra.mxu0 %v5844
    %v5846 = vand.u32 %v1097, 4294901760
    %v5847 = vsub.f32 %v1097, %v5846
    %5848 = vmatpush.msra.mxu0 %v5847
    %v5849 = vand.u32 %v1093, 4294901760
    %v5850 = vsub.f32 %v1093, %v5849
    %5851 = vmatpush.msra.mxu0 %v5850
    %v5852 = vand.u32 %v1089, 4294901760
    %v5853 = vsub.f32 %v1089, %v5852
    %5854 = vmatpush.msra.mxu0 %v5853
    %v5855 = vand.u32 %v1085, 4294901760
    %v5856 = vsub.f32 %v1085, %v5855
    %5857 = vmatpush.msra.mxu0 %v5856
    %v5858 = vand.u32 %v1081, 4294901760
    %v5859 = vsub.f32 %v1081, %v5858
    %5860 = vmatpush.msra.mxu0 %v5859
    %v5861 = vand.u32 %v1077, 4294901760
    %v5862 = vsub.f32 %v1077, %v5861
    %5863 = vmatpush.msra.mxu0 %v5862
    %v5864 = vand.u32 %v1073, 4294901760
    %v5865 = vsub.f32 %v1073, %v5864
    %5866 = vmatpush.msra.mxu0 %v5865
    %v5867 = vand.u32 %v1069, 4294901760
    %v5868 = vsub.f32 %v1069, %v5867
    %5869 = vmatpush.msra.mxu0 %v5868
    %v5870 = vand.u32 %v1065, 4294901760
    %v5871 = vsub.f32 %v1065, %v5870
    %5872 = vmatpush.msra.mxu0 %v5871
    %v5873 = vand.u32 %v1061, 4294901760
    %v5874 = vsub.f32 %v1061, %v5873
    %5875 = vmatpush.msra.mxu0 %v5874
    %v5876 = vand.u32 %v1057, 4294901760
    %v5877 = vsub.f32 %v1057, %v5876
    %5878 = vmatpush.msra.mxu0 %v5877
    %v5879 = vand.u32 %v987, 4294901760
    %v5880 = vsub.f32 %v987, %v5879
    %5881 = vmatmul.f32.gmra.mxu0 %v5880
    %v5882 = vpop.f32.mrf.mxu0
    %v5883 = vadd.f32 %v5829, %v5882
    %5884 = vdwg.mxu0
    %v5885 = vand.u32 %v1117, 4294901760
    %5886 = vmatpush.msra.mxu0 %v5885
    %v5887 = vand.u32 %v1113, 4294901760
    %5888 = vmatpush.msra.mxu0 %v5887
    %v5889 = vand.u32 %v1109, 4294901760
    %5890 = vmatpush.msra.mxu0 %v5889
    %v5891 = vand.u32 %v1105, 4294901760
    %5892 = vmatpush.msra.mxu0 %v5891
    %v5893 = vand.u32 %v1101, 4294901760
    %5894 = vmatpush.msra.mxu0 %v5893
    %v5895 = vand.u32 %v1097, 4294901760
    %5896 = vmatpush.msra.mxu0 %v5895
    %v5897 = vand.u32 %v1093, 4294901760
    %5898 = vmatpush.msra.mxu0 %v5897
    %v5899 = vand.u32 %v1089, 4294901760
    %5900 = vmatpush.msra.mxu0 %v5899
    %v5901 = vand.u32 %v1085, 4294901760
    %5902 = vmatpush.msra.mxu0 %v5901
    %v5903 = vand.u32 %v1081, 4294901760
    %5904 = vmatpush.msra.mxu0 %v5903
    %v5905 = vand.u32 %v1077, 4294901760
    %5906 = vmatpush.msra.mxu0 %v5905
    %v5907 = vand.u32 %v1073, 4294901760
    %5908 = vmatpush.msra.mxu0 %v5907
    %v5909 = vand.u32 %v1069, 4294901760
    %5910 = vmatpush.msra.mxu0 %v5909
    %v5911 = vand.u32 %v1065, 4294901760
    %5912 = vmatpush.msra.mxu0 %v5911
    %v5913 = vand.u32 %v1061, 4294901760
    %5914 = vmatpush.msra.mxu0 %v5913
    %v5915 = vand.u32 %v1057, 4294901760
    %5916 = vmatpush.msra.mxu0 %v5915
    %v5917 = vand.u32 %v987, 4294901760
    %v5918 = vsub.f32 %v987, %v5917
    %v5919 = vand.u32 %v5918, 4294901760
    %5920 = vmatmul.f32.gmra.mxu0 %v5919
    %v5921 = vpop.f32.mrf.mxu0
    %v5922 = vadd.f32 %v5883, %v5921
    %5923 = vdwg.mxu0
    %v5924 = vand.u32 %v1117, 4294901760
    %v5925 = vsub.f32 %v1117, %v5924
    %v5926 = vand.u32 %v5925, 4294901760
    %5927 = vmatpush.msra.mxu0 %v5926
    %v5928 = vand.u32 %v1113, 4294901760
    %v5929 = vsub.f32 %v1113, %v5928
    %v5930 = vand.u32 %v5929, 4294901760
    %5931 = vmatpush.msra.mxu0 %v5930
    %v5932 = vand.u32 %v1109, 4294901760
    %v5933 = vsub.f32 %v1109, %v5932
    %v5934 = vand.u32 %v5933, 4294901760
    %5935 = vmatpush.msra.mxu0 %v5934
    %v5936 = vand.u32 %v1105, 4294901760
    %v5937 = vsub.f32 %v1105, %v5936
    %v5938 = vand.u32 %v5937, 4294901760
    %5939 = vmatpush.msra.mxu0 %v5938
    %v5940 = vand.u32 %v1101, 4294901760
    %v5941 = vsub.f32 %v1101, %v5940
    %v5942 = vand.u32 %v5941, 4294901760
    %5943 = vmatpush.msra.mxu0 %v5942
    %v5944 = vand.u32 %v1097, 4294901760
    %v5945 = vsub.f32 %v1097, %v5944
    %v5946 = vand.u32 %v5945, 4294901760
    %5947 = vmatpush.msra.mxu0 %v5946
    %v5948 = vand.u32 %v1093, 4294901760
    %v5949 = vsub.f32 %v1093, %v5948
    %v5950 = vand.u32 %v5949, 4294901760
    %5951 = vmatpush.msra.mxu0 %v5950
    %v5952 = vand.u32 %v1089, 4294901760
    %v5953 = vsub.f32 %v1089, %v5952
    %v5954 = vand.u32 %v5953, 4294901760
    %5955 = vmatpush.msra.mxu0 %v5954
    %v5956 = vand.u32 %v1085, 4294901760
    %v5957 = vsub.f32 %v1085, %v5956
    %v5958 = vand.u32 %v5957, 4294901760
    %5959 = vmatpush.msra.mxu0 %v5958
    %v5960 = vand.u32 %v1081, 4294901760
    %v5961 = vsub.f32 %v1081, %v5960
    %v5962 = vand.u32 %v5961, 4294901760
    %5963 = vmatpush.msra.mxu0 %v5962
    %v5964 = vand.u32 %v1077, 4294901760
    %v5965 = vsub.f32 %v1077, %v5964
    %v5966 = vand.u32 %v5965, 4294901760
    %5967 = vmatpush.msra.mxu0 %v5966
    %v5968 = vand.u32 %v1073, 4294901760
    %v5969 = vsub.f32 %v1073, %v5968
    %v5970 = vand.u32 %v5969, 4294901760
    %5971 = vmatpush.msra.mxu0 %v5970
    %v5972 = vand.u32 %v1069, 4294901760
    %v5973 = vsub.f32 %v1069, %v5972
    %v5974 = vand.u32 %v5973, 4294901760
    %5975 = vmatpush.msra.mxu0 %v5974
    %v5976 = vand.u32 %v1065, 4294901760
    %v5977 = vsub.f32 %v1065, %v5976
    %v5978 = vand.u32 %v5977, 4294901760
    %5979 = vmatpush.msra.mxu0 %v5978
    %v5980 = vand.u32 %v1061, 4294901760
    %v5981 = vsub.f32 %v1061, %v5980
    %v5982 = vand.u32 %v5981, 4294901760
    %5983 = vmatpush.msra.mxu0 %v5982
    %v5984 = vand.u32 %v1057, 4294901760
    %v5985 = vsub.f32 %v1057, %v5984
    %v5986 = vand.u32 %v5985, 4294901760
    %5987 = vmatpush.msra.mxu0 %v5986
    %v5988 = vand.u32 %v987, 4294901760
    %5989 = vmatmul.f32.gmra.mxu0 %v5988
    %v5990 = vpop.f32.mrf.mxu0
    %v5991 = vadd.f32 %v5922, %v5990
    %5992 = vdwg.mxu0
    %v5993 = vand.u32 %v1117, 4294901760
    %5994 = vmatpush.msra.mxu0 %v5993
    %v5995 = vand.u32 %v1113, 4294901760
    %5996 = vmatpush.msra.mxu0 %v5995
    %v5997 = vand.u32 %v1109, 4294901760
    %5998 = vmatpush.msra.mxu0 %v5997
    %v5999 = vand.u32 %v1105, 4294901760
    %6000 = vmatpush.msra.mxu0 %v5999
    %v6001 = vand.u32 %v1101, 4294901760
    %6002 = vmatpush.msra.mxu0 %v6001
    %v6003 = vand.u32 %v1097, 4294901760
    %6004 = vmatpush.msra.mxu0 %v6003
    %v6005 = vand.u32 %v1093, 4294901760
    %6006 = vmatpush.msra.mxu0 %v6005
    %v6007 = vand.u32 %v1089, 4294901760
    %6008 = vmatpush.msra.mxu0 %v6007
    %v6009 = vand.u32 %v1085, 4294901760
    %6010 = vmatpush.msra.mxu0 %v6009
    %v6011 = vand.u32 %v1081, 4294901760
    %6012 = vmatpush.msra.mxu0 %v6011
    %v6013 = vand.u32 %v1077, 4294901760
    %6014 = vmatpush.msra.mxu0 %v6013
    %v6015 = vand.u32 %v1073, 4294901760
    %6016 = vmatpush.msra.mxu0 %v6015
    %v6017 = vand.u32 %v1069, 4294901760
    %6018 = vmatpush.msra.mxu0 %v6017
    %v6019 = vand.u32 %v1065, 4294901760
    %6020 = vmatpush.msra.mxu0 %v6019
    %v6021 = vand.u32 %v1061, 4294901760
    %6022 = vmatpush.msra.mxu0 %v6021
    %v6023 = vand.u32 %v1057, 4294901760
    %6024 = vmatpush.msra.mxu0 %v6023
    %v6025 = vand.u32 %v987, 4294901760
    %6026 = vmatmul.f32.gmra.mxu0 %v6025
    %v6027 = vpop.f32.mrf.mxu0
    %v6028 = vadd.f32 %v5991, %v6027
    %6029 = vdwg.mxu0
    %v6030 = vand.u32 %v1181, 4294901760
    %6031 = vmatpush.msra.mxu0 %v6030
    %v6032 = vand.u32 %v1177, 4294901760
    %6033 = vmatpush.msra.mxu0 %v6032
    %v6034 = vand.u32 %v1173, 4294901760
    %6035 = vmatpush.msra.mxu0 %v6034
    %v6036 = vand.u32 %v1169, 4294901760
    %6037 = vmatpush.msra.mxu0 %v6036
    %v6038 = vand.u32 %v1165, 4294901760
    %6039 = vmatpush.msra.mxu0 %v6038
    %v6040 = vand.u32 %v1161, 4294901760
    %6041 = vmatpush.msra.mxu0 %v6040
    %v6042 = vand.u32 %v1157, 4294901760
    %6043 = vmatpush.msra.mxu0 %v6042
    %v6044 = vand.u32 %v1153, 4294901760
    %6045 = vmatpush.msra.mxu0 %v6044
    %v6046 = vand.u32 %v1149, 4294901760
    %6047 = vmatpush.msra.mxu0 %v6046
    %v6048 = vand.u32 %v1145, 4294901760
    %6049 = vmatpush.msra.mxu0 %v6048
    %v6050 = vand.u32 %v1141, 4294901760
    %6051 = vmatpush.msra.mxu0 %v6050
    %v6052 = vand.u32 %v1137, 4294901760
    %6053 = vmatpush.msra.mxu0 %v6052
    %v6054 = vand.u32 %v1133, 4294901760
    %6055 = vmatpush.msra.mxu0 %v6054
    %v6056 = vand.u32 %v1129, 4294901760
    %6057 = vmatpush.msra.mxu0 %v6056
    %v6058 = vand.u32 %v1125, 4294901760
    %6059 = vmatpush.msra.mxu0 %v6058
    %v6060 = vand.u32 %v1121, 4294901760
    %6061 = vmatpush.msra.mxu0 %v6060
    %v6062 = vand.u32 %v988, 4294901760
    %v6063 = vsub.f32 %v988, %v6062
    %v6064 = vand.u32 %v6063, 4294901760
    %v6065 = vsub.f32 %v6063, %v6064
    %v6066 = vand.u32 %v6065, 4294901760
    %6067 = vmatmul.f32.gmra.mxu0 %v6066
    %v6068 = vpop.f32.mrf.mxu0
    %v6069 = vadd.f32 %v6028, %v6068
    %6070 = vdwg.mxu0
    %v6071 = vand.u32 %v1181, 4294901760
    %v6072 = vsub.f32 %v1181, %v6071
    %v6073 = vand.u32 %v6072, 4294901760
    %v6074 = vsub.f32 %v6072, %v6073
    %v6075 = vand.u32 %v6074, 4294901760
    %6076 = vmatpush.msra.mxu0 %v6075
    %v6077 = vand.u32 %v1177, 4294901760
    %v6078 = vsub.f32 %v1177, %v6077
    %v6079 = vand.u32 %v6078, 4294901760
    %v6080 = vsub.f32 %v6078, %v6079
    %v6081 = vand.u32 %v6080, 4294901760
    %6082 = vmatpush.msra.mxu0 %v6081
    %v6083 = vand.u32 %v1173, 4294901760
    %v6084 = vsub.f32 %v1173, %v6083
    %v6085 = vand.u32 %v6084, 4294901760
    %v6086 = vsub.f32 %v6084, %v6085
    %v6087 = vand.u32 %v6086, 4294901760
    %6088 = vmatpush.msra.mxu0 %v6087
    %v6089 = vand.u32 %v1169, 4294901760
    %v6090 = vsub.f32 %v1169, %v6089
    %v6091 = vand.u32 %v6090, 4294901760
    %v6092 = vsub.f32 %v6090, %v6091
    %v6093 = vand.u32 %v6092, 4294901760
    %6094 = vmatpush.msra.mxu0 %v6093
    %v6095 = vand.u32 %v1165, 4294901760
    %v6096 = vsub.f32 %v1165, %v6095
    %v6097 = vand.u32 %v6096, 4294901760
    %v6098 = vsub.f32 %v6096, %v6097
    %v6099 = vand.u32 %v6098, 4294901760
    %6100 = vmatpush.msra.mxu0 %v6099
    %v6101 = vand.u32 %v1161, 4294901760
    %v6102 = vsub.f32 %v1161, %v6101
    %v6103 = vand.u32 %v6102, 4294901760
    %v6104 = vsub.f32 %v6102, %v6103
    %v6105 = vand.u32 %v6104, 4294901760
    %6106 = vmatpush.msra.mxu0 %v6105
    %v6107 = vand.u32 %v1157, 4294901760
    %v6108 = vsub.f32 %v1157, %v6107
    %v6109 = vand.u32 %v6108, 4294901760
    %v6110 = vsub.f32 %v6108, %v6109
    %v6111 = vand.u32 %v6110, 4294901760
    %6112 = vmatpush.msra.mxu0 %v6111
    %v6113 = vand.u32 %v1153, 4294901760
    %v6114 = vsub.f32 %v1153, %v6113
    %v6115 = vand.u32 %v6114, 4294901760
    %v6116 = vsub.f32 %v6114, %v6115
    %v6117 = vand.u32 %v6116, 4294901760
    %6118 = vmatpush.msra.mxu0 %v6117
    %v6119 = vand.u32 %v1149, 4294901760
    %v6120 = vsub.f32 %v1149, %v6119
    %v6121 = vand.u32 %v6120, 4294901760
    %v6122 = vsub.f32 %v6120, %v6121
    %v6123 = vand.u32 %v6122, 4294901760
    %6124 = vmatpush.msra.mxu0 %v6123
    %v6125 = vand.u32 %v1145, 4294901760
    %v6126 = vsub.f32 %v1145, %v6125
    %v6127 = vand.u32 %v6126, 4294901760
    %v6128 = vsub.f32 %v6126, %v6127
    %v6129 = vand.u32 %v6128, 4294901760
    %6130 = vmatpush.msra.mxu0 %v6129
    %v6131 = vand.u32 %v1141, 4294901760
    %v6132 = vsub.f32 %v1141, %v6131
    %v6133 = vand.u32 %v6132, 4294901760
    %v6134 = vsub.f32 %v6132, %v6133
    %v6135 = vand.u32 %v6134, 4294901760
    %6136 = vmatpush.msra.mxu0 %v6135
    %v6137 = vand.u32 %v1137, 4294901760
    %v6138 = vsub.f32 %v1137, %v6137
    %v6139 = vand.u32 %v6138, 4294901760
    %v6140 = vsub.f32 %v6138, %v6139
    %v6141 = vand.u32 %v6140, 4294901760
    %6142 = vmatpush.msra.mxu0 %v6141
    %v6143 = vand.u32 %v1133, 4294901760
    %v6144 = vsub.f32 %v1133, %v6143
    %v6145 = vand.u32 %v6144, 4294901760
    %v6146 = vsub.f32 %v6144, %v6145
    %v6147 = vand.u32 %v6146, 4294901760
    %6148 = vmatpush.msra.mxu0 %v6147
    %v6149 = vand.u32 %v1129, 4294901760
    %v6150 = vsub.f32 %v1129, %v6149
    %v6151 = vand.u32 %v6150, 4294901760
    %v6152 = vsub.f32 %v6150, %v6151
    %v6153 = vand.u32 %v6152, 4294901760
    %6154 = vmatpush.msra.mxu0 %v6153
    %v6155 = vand.u32 %v1125, 4294901760
    %v6156 = vsub.f32 %v1125, %v6155
    %v6157 = vand.u32 %v6156, 4294901760
    %v6158 = vsub.f32 %v6156, %v6157
    %v6159 = vand.u32 %v6158, 4294901760
    %6160 = vmatpush.msra.mxu0 %v6159
    %v6161 = vand.u32 %v1121, 4294901760
    %v6162 = vsub.f32 %v1121, %v6161
    %v6163 = vand.u32 %v6162, 4294901760
    %v6164 = vsub.f32 %v6162, %v6163
    %v6165 = vand.u32 %v6164, 4294901760
    %6166 = vmatpush.msra.mxu0 %v6165
    %v6167 = vand.u32 %v988, 4294901760
    %6168 = vmatmul.f32.gmra.mxu0 %v6167
    %v6169 = vpop.f32.mrf.mxu0
    %v6170 = vadd.f32 %v6069, %v6169
    %6171 = vdwg.mxu0
    %v6172 = vand.u32 %v1181, 4294901760
    %v6173 = vsub.f32 %v1181, %v6172
    %6174 = vmatpush.msra.mxu0 %v6173
    %v6175 = vand.u32 %v1177, 4294901760
    %v6176 = vsub.f32 %v1177, %v6175
    %6177 = vmatpush.msra.mxu0 %v6176
    %v6178 = vand.u32 %v1173, 4294901760
    %v6179 = vsub.f32 %v1173, %v6178
    %6180 = vmatpush.msra.mxu0 %v6179
    %v6181 = vand.u32 %v1169, 4294901760
    %v6182 = vsub.f32 %v1169, %v6181
    %6183 = vmatpush.msra.mxu0 %v6182
    %v6184 = vand.u32 %v1165, 4294901760
    %v6185 = vsub.f32 %v1165, %v6184
    %6186 = vmatpush.msra.mxu0 %v6185
    %v6187 = vand.u32 %v1161, 4294901760
    %v6188 = vsub.f32 %v1161, %v6187
    %6189 = vmatpush.msra.mxu0 %v6188
    %v6190 = vand.u32 %v1157, 4294901760
    %v6191 = vsub.f32 %v1157, %v6190
    %6192 = vmatpush.msra.mxu0 %v6191
    %v6193 = vand.u32 %v1153, 4294901760
    %v6194 = vsub.f32 %v1153, %v6193
    %6195 = vmatpush.msra.mxu0 %v6194
    %v6196 = vand.u32 %v1149, 4294901760
    %v6197 = vsub.f32 %v1149, %v6196
    %6198 = vmatpush.msra.mxu0 %v6197
    %v6199 = vand.u32 %v1145, 4294901760
    %v6200 = vsub.f32 %v1145, %v6199
    %6201 = vmatpush.msra.mxu0 %v6200
    %v6202 = vand.u32 %v1141, 4294901760
    %v6203 = vsub.f32 %v1141, %v6202
    %6204 = vmatpush.msra.mxu0 %v6203
    %v6205 = vand.u32 %v1137, 4294901760
    %v6206 = vsub.f32 %v1137, %v6205
    %6207 = vmatpush.msra.mxu0 %v6206
    %v6208 = vand.u32 %v1133, 4294901760
    %v6209 = vsub.f32 %v1133, %v6208
    %6210 = vmatpush.msra.mxu0 %v6209
    %v6211 = vand.u32 %v1129, 4294901760
    %v6212 = vsub.f32 %v1129, %v6211
    %6213 = vmatpush.msra.mxu0 %v6212
    %v6214 = vand.u32 %v1125, 4294901760
    %v6215 = vsub.f32 %v1125, %v6214
    %6216 = vmatpush.msra.mxu0 %v6215
    %v6217 = vand.u32 %v1121, 4294901760
    %v6218 = vsub.f32 %v1121, %v6217
    %6219 = vmatpush.msra.mxu0 %v6218
    %v6220 = vand.u32 %v988, 4294901760
    %v6221 = vsub.f32 %v988, %v6220
    %6222 = vmatmul.f32.gmra.mxu0 %v6221
    %v6223 = vpop.f32.mrf.mxu0
    %v6224 = vadd.f32 %v6170, %v6223
    %6225 = vdwg.mxu0
    %v6226 = vand.u32 %v1181, 4294901760
    %6227 = vmatpush.msra.mxu0 %v6226
    %v6228 = vand.u32 %v1177, 4294901760
    %6229 = vmatpush.msra.mxu0 %v6228
    %v6230 = vand.u32 %v1173, 4294901760
    %6231 = vmatpush.msra.mxu0 %v6230
    %v6232 = vand.u32 %v1169, 4294901760
    %6233 = vmatpush.msra.mxu0 %v6232
    %v6234 = vand.u32 %v1165, 4294901760
    %6235 = vmatpush.msra.mxu0 %v6234
    %v6236 = vand.u32 %v1161, 4294901760
    %6237 = vmatpush.msra.mxu0 %v6236
    %v6238 = vand.u32 %v1157, 4294901760
    %6239 = vmatpush.msra.mxu0 %v6238
    %v6240 = vand.u32 %v1153, 4294901760
    %6241 = vmatpush.msra.mxu0 %v6240
    %v6242 = vand.u32 %v1149, 4294901760
    %6243 = vmatpush.msra.mxu0 %v6242
    %v6244 = vand.u32 %v1145, 4294901760
    %6245 = vmatpush.msra.mxu0 %v6244
    %v6246 = vand.u32 %v1141, 4294901760
    %6247 = vmatpush.msra.mxu0 %v6246
    %v6248 = vand.u32 %v1137, 4294901760
    %6249 = vmatpush.msra.mxu0 %v6248
    %v6250 = vand.u32 %v1133, 4294901760
    %6251 = vmatpush.msra.mxu0 %v6250
    %v6252 = vand.u32 %v1129, 4294901760
    %6253 = vmatpush.msra.mxu0 %v6252
    %v6254 = vand.u32 %v1125, 4294901760
    %6255 = vmatpush.msra.mxu0 %v6254
    %v6256 = vand.u32 %v1121, 4294901760
    %6257 = vmatpush.msra.mxu0 %v6256
    %v6258 = vand.u32 %v988, 4294901760
    %v6259 = vsub.f32 %v988, %v6258
    %v6260 = vand.u32 %v6259, 4294901760
    %6261 = vmatmul.f32.gmra.mxu0 %v6260
    %v6262 = vpop.f32.mrf.mxu0
    %v6263 = vadd.f32 %v6224, %v6262
    %6264 = vdwg.mxu0
    %v6265 = vand.u32 %v1181, 4294901760
    %v6266 = vsub.f32 %v1181, %v6265
    %v6267 = vand.u32 %v6266, 4294901760
    %6268 = vmatpush.msra.mxu0 %v6267
    %v6269 = vand.u32 %v1177, 4294901760
    %v6270 = vsub.f32 %v1177, %v6269
    %v6271 = vand.u32 %v6270, 4294901760
    %6272 = vmatpush.msra.mxu0 %v6271
    %v6273 = vand.u32 %v1173, 4294901760
    %v6274 = vsub.f32 %v1173, %v6273
    %v6275 = vand.u32 %v6274, 4294901760
    %6276 = vmatpush.msra.mxu0 %v6275
    %v6277 = vand.u32 %v1169, 4294901760
    %v6278 = vsub.f32 %v1169, %v6277
    %v6279 = vand.u32 %v6278, 4294901760
    %6280 = vmatpush.msra.mxu0 %v6279
    %v6281 = vand.u32 %v1165, 4294901760
    %v6282 = vsub.f32 %v1165, %v6281
    %v6283 = vand.u32 %v6282, 4294901760
    %6284 = vmatpush.msra.mxu0 %v6283
    %v6285 = vand.u32 %v1161, 4294901760
    %v6286 = vsub.f32 %v1161, %v6285
    %v6287 = vand.u32 %v6286, 4294901760
    %6288 = vmatpush.msra.mxu0 %v6287
    %v6289 = vand.u32 %v1157, 4294901760
    %v6290 = vsub.f32 %v1157, %v6289
    %v6291 = vand.u32 %v6290, 4294901760
    %6292 = vmatpush.msra.mxu0 %v6291
    %v6293 = vand.u32 %v1153, 4294901760
    %v6294 = vsub.f32 %v1153, %v6293
    %v6295 = vand.u32 %v6294, 4294901760
    %6296 = vmatpush.msra.mxu0 %v6295
    %v6297 = vand.u32 %v1149, 4294901760
    %v6298 = vsub.f32 %v1149, %v6297
    %v6299 = vand.u32 %v6298, 4294901760
    %6300 = vmatpush.msra.mxu0 %v6299
    %v6301 = vand.u32 %v1145, 4294901760
    %v6302 = vsub.f32 %v1145, %v6301
    %v6303 = vand.u32 %v6302, 4294901760
    %6304 = vmatpush.msra.mxu0 %v6303
    %v6305 = vand.u32 %v1141, 4294901760
    %v6306 = vsub.f32 %v1141, %v6305
    %v6307 = vand.u32 %v6306, 4294901760
    %6308 = vmatpush.msra.mxu0 %v6307
    %v6309 = vand.u32 %v1137, 4294901760
    %v6310 = vsub.f32 %v1137, %v6309
    %v6311 = vand.u32 %v6310, 4294901760
    %6312 = vmatpush.msra.mxu0 %v6311
    %v6313 = vand.u32 %v1133, 4294901760
    %v6314 = vsub.f32 %v1133, %v6313
    %v6315 = vand.u32 %v6314, 4294901760
    %6316 = vmatpush.msra.mxu0 %v6315
    %v6317 = vand.u32 %v1129, 4294901760
    %v6318 = vsub.f32 %v1129, %v6317
    %v6319 = vand.u32 %v6318, 4294901760
    %6320 = vmatpush.msra.mxu0 %v6319
    %v6321 = vand.u32 %v1125, 4294901760
    %v6322 = vsub.f32 %v1125, %v6321
    %v6323 = vand.u32 %v6322, 4294901760
    %6324 = vmatpush.msra.mxu0 %v6323
    %v6325 = vand.u32 %v1121, 4294901760
    %v6326 = vsub.f32 %v1121, %v6325
    %v6327 = vand.u32 %v6326, 4294901760
    %6328 = vmatpush.msra.mxu0 %v6327
    %v6329 = vand.u32 %v988, 4294901760
    %6330 = vmatmul.f32.gmra.mxu0 %v6329
    %v6331 = vpop.f32.mrf.mxu0
    %v6332 = vadd.f32 %v6263, %v6331
    %6333 = vdwg.mxu0
    %v6334 = vand.u32 %v1181, 4294901760
    %6335 = vmatpush.msra.mxu0 %v6334
    %v6336 = vand.u32 %v1177, 4294901760
    %6337 = vmatpush.msra.mxu0 %v6336
    %v6338 = vand.u32 %v1173, 4294901760
    %6339 = vmatpush.msra.mxu0 %v6338
    %v6340 = vand.u32 %v1169, 4294901760
    %6341 = vmatpush.msra.mxu0 %v6340
    %v6342 = vand.u32 %v1165, 4294901760
    %6343 = vmatpush.msra.mxu0 %v6342
    %v6344 = vand.u32 %v1161, 4294901760
    %6345 = vmatpush.msra.mxu0 %v6344
    %v6346 = vand.u32 %v1157, 4294901760
    %6347 = vmatpush.msra.mxu0 %v6346
    %v6348 = vand.u32 %v1153, 4294901760
    %6349 = vmatpush.msra.mxu0 %v6348
    %v6350 = vand.u32 %v1149, 4294901760
    %6351 = vmatpush.msra.mxu0 %v6350
    %v6352 = vand.u32 %v1145, 4294901760
    %6353 = vmatpush.msra.mxu0 %v6352
    %v6354 = vand.u32 %v1141, 4294901760
    %6355 = vmatpush.msra.mxu0 %v6354
    %v6356 = vand.u32 %v1137, 4294901760
    %6357 = vmatpush.msra.mxu0 %v6356
    %v6358 = vand.u32 %v1133, 4294901760
    %6359 = vmatpush.msra.mxu0 %v6358
    %v6360 = vand.u32 %v1129, 4294901760
    %6361 = vmatpush.msra.mxu0 %v6360
    %v6362 = vand.u32 %v1125, 4294901760
    %6363 = vmatpush.msra.mxu0 %v6362
    %v6364 = vand.u32 %v1121, 4294901760
    %6365 = vmatpush.msra.mxu0 %v6364
    %v6366 = vand.u32 %v988, 4294901760
    %6367 = vmatmul.f32.gmra.mxu0 %v6366
    %v6368 = vpop.f32.mrf.mxu0
    %v6369 = vadd.f32 %v6332, %v6368
    %6370 = vdwg.mxu0
    %v6371 = vand.u32 %v1245, 4294901760
    %6372 = vmatpush.msra.mxu0 %v6371
    %v6373 = vand.u32 %v1241, 4294901760
    %6374 = vmatpush.msra.mxu0 %v6373
    %v6375 = vand.u32 %v1237, 4294901760
    %6376 = vmatpush.msra.mxu0 %v6375
    %v6377 = vand.u32 %v1233, 4294901760
    %6378 = vmatpush.msra.mxu0 %v6377
    %v6379 = vand.u32 %v1229, 4294901760
    %6380 = vmatpush.msra.mxu0 %v6379
    %v6381 = vand.u32 %v1225, 4294901760
    %6382 = vmatpush.msra.mxu0 %v6381
    %v6383 = vand.u32 %v1221, 4294901760
    %6384 = vmatpush.msra.mxu0 %v6383
    %v6385 = vand.u32 %v1217, 4294901760
    %6386 = vmatpush.msra.mxu0 %v6385
    %v6387 = vand.u32 %v1213, 4294901760
    %6388 = vmatpush.msra.mxu0 %v6387
    %v6389 = vand.u32 %v1209, 4294901760
    %6390 = vmatpush.msra.mxu0 %v6389
    %v6391 = vand.u32 %v1205, 4294901760
    %6392 = vmatpush.msra.mxu0 %v6391
    %v6393 = vand.u32 %v1201, 4294901760
    %6394 = vmatpush.msra.mxu0 %v6393
    %v6395 = vand.u32 %v1197, 4294901760
    %6396 = vmatpush.msra.mxu0 %v6395
    %v6397 = vand.u32 %v1193, 4294901760
    %6398 = vmatpush.msra.mxu0 %v6397
    %v6399 = vand.u32 %v1189, 4294901760
    %6400 = vmatpush.msra.mxu0 %v6399
    %v6401 = vand.u32 %v1185, 4294901760
    %6402 = vmatpush.msra.mxu0 %v6401
    %v6403 = vand.u32 %v989, 4294901760
    %v6404 = vsub.f32 %v989, %v6403
    %v6405 = vand.u32 %v6404, 4294901760
    %v6406 = vsub.f32 %v6404, %v6405
    %v6407 = vand.u32 %v6406, 4294901760
    %6408 = vmatmul.f32.gmra.mxu0 %v6407
    %v6409 = vpop.f32.mrf.mxu0
    %v6410 = vadd.f32 %v6369, %v6409
    %6411 = vdwg.mxu0
    %v6412 = vand.u32 %v1245, 4294901760
    %v6413 = vsub.f32 %v1245, %v6412
    %v6414 = vand.u32 %v6413, 4294901760
    %v6415 = vsub.f32 %v6413, %v6414
    %v6416 = vand.u32 %v6415, 4294901760
    %6417 = vmatpush.msra.mxu0 %v6416
    %v6418 = vand.u32 %v1241, 4294901760
    %v6419 = vsub.f32 %v1241, %v6418
    %v6420 = vand.u32 %v6419, 4294901760
    %v6421 = vsub.f32 %v6419, %v6420
    %v6422 = vand.u32 %v6421, 4294901760
    %6423 = vmatpush.msra.mxu0 %v6422
    %v6424 = vand.u32 %v1237, 4294901760
    %v6425 = vsub.f32 %v1237, %v6424
    %v6426 = vand.u32 %v6425, 4294901760
    %v6427 = vsub.f32 %v6425, %v6426
    %v6428 = vand.u32 %v6427, 4294901760
    %6429 = vmatpush.msra.mxu0 %v6428
    %v6430 = vand.u32 %v1233, 4294901760
    %v6431 = vsub.f32 %v1233, %v6430
    %v6432 = vand.u32 %v6431, 4294901760
    %v6433 = vsub.f32 %v6431, %v6432
    %v6434 = vand.u32 %v6433, 4294901760
    %6435 = vmatpush.msra.mxu0 %v6434
    %v6436 = vand.u32 %v1229, 4294901760
    %v6437 = vsub.f32 %v1229, %v6436
    %v6438 = vand.u32 %v6437, 4294901760
    %v6439 = vsub.f32 %v6437, %v6438
    %v6440 = vand.u32 %v6439, 4294901760
    %6441 = vmatpush.msra.mxu0 %v6440
    %v6442 = vand.u32 %v1225, 4294901760
    %v6443 = vsub.f32 %v1225, %v6442
    %v6444 = vand.u32 %v6443, 4294901760
    %v6445 = vsub.f32 %v6443, %v6444
    %v6446 = vand.u32 %v6445, 4294901760
    %6447 = vmatpush.msra.mxu0 %v6446
    %v6448 = vand.u32 %v1221, 4294901760
    %v6449 = vsub.f32 %v1221, %v6448
    %v6450 = vand.u32 %v6449, 4294901760
    %v6451 = vsub.f32 %v6449, %v6450
    %v6452 = vand.u32 %v6451, 4294901760
    %6453 = vmatpush.msra.mxu0 %v6452
    %v6454 = vand.u32 %v1217, 4294901760
    %v6455 = vsub.f32 %v1217, %v6454
    %v6456 = vand.u32 %v6455, 4294901760
    %v6457 = vsub.f32 %v6455, %v6456
    %v6458 = vand.u32 %v6457, 4294901760
    %6459 = vmatpush.msra.mxu0 %v6458
    %v6460 = vand.u32 %v1213, 4294901760
    %v6461 = vsub.f32 %v1213, %v6460
    %v6462 = vand.u32 %v6461, 4294901760
    %v6463 = vsub.f32 %v6461, %v6462
    %v6464 = vand.u32 %v6463, 4294901760
    %6465 = vmatpush.msra.mxu0 %v6464
    %v6466 = vand.u32 %v1209, 4294901760
    %v6467 = vsub.f32 %v1209, %v6466
    %v6468 = vand.u32 %v6467, 4294901760
    %v6469 = vsub.f32 %v6467, %v6468
    %v6470 = vand.u32 %v6469, 4294901760
    %6471 = vmatpush.msra.mxu0 %v6470
    %v6472 = vand.u32 %v1205, 4294901760
    %v6473 = vsub.f32 %v1205, %v6472
    %v6474 = vand.u32 %v6473, 4294901760
    %v6475 = vsub.f32 %v6473, %v6474
    %v6476 = vand.u32 %v6475, 4294901760
    %6477 = vmatpush.msra.mxu0 %v6476
    %v6478 = vand.u32 %v1201, 4294901760
    %v6479 = vsub.f32 %v1201, %v6478
    %v6480 = vand.u32 %v6479, 4294901760
    %v6481 = vsub.f32 %v6479, %v6480
    %v6482 = vand.u32 %v6481, 4294901760
    %6483 = vmatpush.msra.mxu0 %v6482
    %v6484 = vand.u32 %v1197, 4294901760
    %v6485 = vsub.f32 %v1197, %v6484
    %v6486 = vand.u32 %v6485, 4294901760
    %v6487 = vsub.f32 %v6485, %v6486
    %v6488 = vand.u32 %v6487, 4294901760
    %6489 = vmatpush.msra.mxu0 %v6488
    %v6490 = vand.u32 %v1193, 4294901760
    %v6491 = vsub.f32 %v1193, %v6490
    %v6492 = vand.u32 %v6491, 4294901760
    %v6493 = vsub.f32 %v6491, %v6492
    %v6494 = vand.u32 %v6493, 4294901760
    %6495 = vmatpush.msra.mxu0 %v6494
    %v6496 = vand.u32 %v1189, 4294901760
    %v6497 = vsub.f32 %v1189, %v6496
    %v6498 = vand.u32 %v6497, 4294901760
    %v6499 = vsub.f32 %v6497, %v6498
    %v6500 = vand.u32 %v6499, 4294901760
    %6501 = vmatpush.msra.mxu0 %v6500
    %v6502 = vand.u32 %v1185, 4294901760
    %v6503 = vsub.f32 %v1185, %v6502
    %v6504 = vand.u32 %v6503, 4294901760
    %v6505 = vsub.f32 %v6503, %v6504
    %v6506 = vand.u32 %v6505, 4294901760
    %6507 = vmatpush.msra.mxu0 %v6506
    %v6508 = vand.u32 %v989, 4294901760
    %6509 = vmatmul.f32.gmra.mxu0 %v6508
    %v6510 = vpop.f32.mrf.mxu0
    %v6511 = vadd.f32 %v6410, %v6510
    %6512 = vdwg.mxu0
    %v6513 = vand.u32 %v1245, 4294901760
    %v6514 = vsub.f32 %v1245, %v6513
    %6515 = vmatpush.msra.mxu0 %v6514
    %v6516 = vand.u32 %v1241, 4294901760
    %v6517 = vsub.f32 %v1241, %v6516
    %6518 = vmatpush.msra.mxu0 %v6517
    %v6519 = vand.u32 %v1237, 4294901760
    %v6520 = vsub.f32 %v1237, %v6519
    %6521 = vmatpush.msra.mxu0 %v6520
    %v6522 = vand.u32 %v1233, 4294901760
    %v6523 = vsub.f32 %v1233, %v6522
    %6524 = vmatpush.msra.mxu0 %v6523
    %v6525 = vand.u32 %v1229, 4294901760
    %v6526 = vsub.f32 %v1229, %v6525
    %6527 = vmatpush.msra.mxu0 %v6526
    %v6528 = vand.u32 %v1225, 4294901760
    %v6529 = vsub.f32 %v1225, %v6528
    %6530 = vmatpush.msra.mxu0 %v6529
    %v6531 = vand.u32 %v1221, 4294901760
    %v6532 = vsub.f32 %v1221, %v6531
    %6533 = vmatpush.msra.mxu0 %v6532
    %v6534 = vand.u32 %v1217, 4294901760
    %v6535 = vsub.f32 %v1217, %v6534
    %6536 = vmatpush.msra.mxu0 %v6535
    %v6537 = vand.u32 %v1213, 4294901760
    %v6538 = vsub.f32 %v1213, %v6537
    %6539 = vmatpush.msra.mxu0 %v6538
    %v6540 = vand.u32 %v1209, 4294901760
    %v6541 = vsub.f32 %v1209, %v6540
    %6542 = vmatpush.msra.mxu0 %v6541
    %v6543 = vand.u32 %v1205, 4294901760
    %v6544 = vsub.f32 %v1205, %v6543
    %6545 = vmatpush.msra.mxu0 %v6544
    %v6546 = vand.u32 %v1201, 4294901760
    %v6547 = vsub.f32 %v1201, %v6546
    %6548 = vmatpush.msra.mxu0 %v6547
    %v6549 = vand.u32 %v1197, 4294901760
    %v6550 = vsub.f32 %v1197, %v6549
    %6551 = vmatpush.msra.mxu0 %v6550
    %v6552 = vand.u32 %v1193, 4294901760
    %v6553 = vsub.f32 %v1193, %v6552
    %6554 = vmatpush.msra.mxu0 %v6553
    %v6555 = vand.u32 %v1189, 4294901760
    %v6556 = vsub.f32 %v1189, %v6555
    %6557 = vmatpush.msra.mxu0 %v6556
    %v6558 = vand.u32 %v1185, 4294901760
    %v6559 = vsub.f32 %v1185, %v6558
    %6560 = vmatpush.msra.mxu0 %v6559
    %v6561 = vand.u32 %v989, 4294901760
    %v6562 = vsub.f32 %v989, %v6561
    %6563 = vmatmul.f32.gmra.mxu0 %v6562
    %v6564 = vpop.f32.mrf.mxu0
    %v6565 = vadd.f32 %v6511, %v6564
    %6566 = vdwg.mxu0
    %v6567 = vand.u32 %v1245, 4294901760
    %6568 = vmatpush.msra.mxu0 %v6567
    %v6569 = vand.u32 %v1241, 4294901760
    %6570 = vmatpush.msra.mxu0 %v6569
    %v6571 = vand.u32 %v1237, 4294901760
    %6572 = vmatpush.msra.mxu0 %v6571
    %v6573 = vand.u32 %v1233, 4294901760
    %6574 = vmatpush.msra.mxu0 %v6573
    %v6575 = vand.u32 %v1229, 4294901760
    %6576 = vmatpush.msra.mxu0 %v6575
    %v6577 = vand.u32 %v1225, 4294901760
    %6578 = vmatpush.msra.mxu0 %v6577
    %v6579 = vand.u32 %v1221, 4294901760
    %6580 = vmatpush.msra.mxu0 %v6579
    %v6581 = vand.u32 %v1217, 4294901760
    %6582 = vmatpush.msra.mxu0 %v6581
    %v6583 = vand.u32 %v1213, 4294901760
    %6584 = vmatpush.msra.mxu0 %v6583
    %v6585 = vand.u32 %v1209, 4294901760
    %6586 = vmatpush.msra.mxu0 %v6585
    %v6587 = vand.u32 %v1205, 4294901760
    %6588 = vmatpush.msra.mxu0 %v6587
    %v6589 = vand.u32 %v1201, 4294901760
    %6590 = vmatpush.msra.mxu0 %v6589
    %v6591 = vand.u32 %v1197, 4294901760
    %6592 = vmatpush.msra.mxu0 %v6591
    %v6593 = vand.u32 %v1193, 4294901760
    %6594 = vmatpush.msra.mxu0 %v6593
    %v6595 = vand.u32 %v1189, 4294901760
    %6596 = vmatpush.msra.mxu0 %v6595
    %v6597 = vand.u32 %v1185, 4294901760
    %6598 = vmatpush.msra.mxu0 %v6597
    %v6599 = vand.u32 %v989, 4294901760
    %v6600 = vsub.f32 %v989, %v6599
    %v6601 = vand.u32 %v6600, 4294901760
    %6602 = vmatmul.f32.gmra.mxu0 %v6601
    %v6603 = vpop.f32.mrf.mxu0
    %v6604 = vadd.f32 %v6565, %v6603
    %6605 = vdwg.mxu0
    %v6606 = vand.u32 %v1245, 4294901760
    %v6607 = vsub.f32 %v1245, %v6606
    %v6608 = vand.u32 %v6607, 4294901760
    %6609 = vmatpush.msra.mxu0 %v6608
    %v6610 = vand.u32 %v1241, 4294901760
    %v6611 = vsub.f32 %v1241, %v6610
    %v6612 = vand.u32 %v6611, 4294901760
    %6613 = vmatpush.msra.mxu0 %v6612
    %v6614 = vand.u32 %v1237, 4294901760
    %v6615 = vsub.f32 %v1237, %v6614
    %v6616 = vand.u32 %v6615, 4294901760
    %6617 = vmatpush.msra.mxu0 %v6616
    %v6618 = vand.u32 %v1233, 4294901760
    %v6619 = vsub.f32 %v1233, %v6618
    %v6620 = vand.u32 %v6619, 4294901760
    %6621 = vmatpush.msra.mxu0 %v6620
    %v6622 = vand.u32 %v1229, 4294901760
    %v6623 = vsub.f32 %v1229, %v6622
    %v6624 = vand.u32 %v6623, 4294901760
    %6625 = vmatpush.msra.mxu0 %v6624
    %v6626 = vand.u32 %v1225, 4294901760
    %v6627 = vsub.f32 %v1225, %v6626
    %v6628 = vand.u32 %v6627, 4294901760
    %6629 = vmatpush.msra.mxu0 %v6628
    %v6630 = vand.u32 %v1221, 4294901760
    %v6631 = vsub.f32 %v1221, %v6630
    %v6632 = vand.u32 %v6631, 4294901760
    %6633 = vmatpush.msra.mxu0 %v6632
    %v6634 = vand.u32 %v1217, 4294901760
    %v6635 = vsub.f32 %v1217, %v6634
    %v6636 = vand.u32 %v6635, 4294901760
    %6637 = vmatpush.msra.mxu0 %v6636
    %v6638 = vand.u32 %v1213, 4294901760
    %v6639 = vsub.f32 %v1213, %v6638
    %v6640 = vand.u32 %v6639, 4294901760
    %6641 = vmatpush.msra.mxu0 %v6640
    %v6642 = vand.u32 %v1209, 4294901760
    %v6643 = vsub.f32 %v1209, %v6642
    %v6644 = vand.u32 %v6643, 4294901760
    %6645 = vmatpush.msra.mxu0 %v6644
    %v6646 = vand.u32 %v1205, 4294901760
    %v6647 = vsub.f32 %v1205, %v6646
    %v6648 = vand.u32 %v6647, 4294901760
    %6649 = vmatpush.msra.mxu0 %v6648
    %v6650 = vand.u32 %v1201, 4294901760
    %v6651 = vsub.f32 %v1201, %v6650
    %v6652 = vand.u32 %v6651, 4294901760
    %6653 = vmatpush.msra.mxu0 %v6652
    %v6654 = vand.u32 %v1197, 4294901760
    %v6655 = vsub.f32 %v1197, %v6654
    %v6656 = vand.u32 %v6655, 4294901760
    %6657 = vmatpush.msra.mxu0 %v6656
    %v6658 = vand.u32 %v1193, 4294901760
    %v6659 = vsub.f32 %v1193, %v6658
    %v6660 = vand.u32 %v6659, 4294901760
    %6661 = vmatpush.msra.mxu0 %v6660
    %v6662 = vand.u32 %v1189, 4294901760
    %v6663 = vsub.f32 %v1189, %v6662
    %v6664 = vand.u32 %v6663, 4294901760
    %6665 = vmatpush.msra.mxu0 %v6664
    %v6666 = vand.u32 %v1185, 4294901760
    %v6667 = vsub.f32 %v1185, %v6666
    %v6668 = vand.u32 %v6667, 4294901760
    %6669 = vmatpush.msra.mxu0 %v6668
    %v6670 = vand.u32 %v989, 4294901760
    %6671 = vmatmul.f32.gmra.mxu0 %v6670
    %v6672 = vpop.f32.mrf.mxu0
    %v6673 = vadd.f32 %v6604, %v6672
    %6674 = vdwg.mxu0
    %v6675 = vand.u32 %v1245, 4294901760
    %6676 = vmatpush.msra.mxu0 %v6675
    %v6677 = vand.u32 %v1241, 4294901760
    %6678 = vmatpush.msra.mxu0 %v6677
    %v6679 = vand.u32 %v1237, 4294901760
    %6680 = vmatpush.msra.mxu0 %v6679
    %v6681 = vand.u32 %v1233, 4294901760
    %6682 = vmatpush.msra.mxu0 %v6681
    %v6683 = vand.u32 %v1229, 4294901760
    %6684 = vmatpush.msra.mxu0 %v6683
    %v6685 = vand.u32 %v1225, 4294901760
    %6686 = vmatpush.msra.mxu0 %v6685
    %v6687 = vand.u32 %v1221, 4294901760
    %6688 = vmatpush.msra.mxu0 %v6687
    %v6689 = vand.u32 %v1217, 4294901760
    %6690 = vmatpush.msra.mxu0 %v6689
    %v6691 = vand.u32 %v1213, 4294901760
    %6692 = vmatpush.msra.mxu0 %v6691
    %v6693 = vand.u32 %v1209, 4294901760
    %6694 = vmatpush.msra.mxu0 %v6693
    %v6695 = vand.u32 %v1205, 4294901760
    %6696 = vmatpush.msra.mxu0 %v6695
    %v6697 = vand.u32 %v1201, 4294901760
    %6698 = vmatpush.msra.mxu0 %v6697
    %v6699 = vand.u32 %v1197, 4294901760
    %6700 = vmatpush.msra.mxu0 %v6699
    %v6701 = vand.u32 %v1193, 4294901760
    %6702 = vmatpush.msra.mxu0 %v6701
    %v6703 = vand.u32 %v1189, 4294901760
    %6704 = vmatpush.msra.mxu0 %v6703
    %v6705 = vand.u32 %v1185, 4294901760
    %6706 = vmatpush.msra.mxu0 %v6705
    %v6707 = vand.u32 %v989, 4294901760
    %6708 = vmatmul.f32.gmra.mxu0 %v6707
    %v6709 = vpop.f32.mrf.mxu0
    %v6710 = vadd.f32 %v6673, %v6709
    %6711 = vdwg.mxu0
    %v6712 = vmul.f32 %v2618, 0.5
    %v6713 = vmul.f32 %v3982, 0.5
    %v6714 = vmul.f32 %v5346, 0.5
    %v6715 = vmul.f32 %v6710, 0.5
    %v6716 = vmul.f32 %v2618, 0.70710677
    %v6717 = vmul.f32 %v3982, 0.70710677
    %v6718 = vmul.f32 %v5346, 0.70710677
    %v6719 = vmul.f32 %v6710, 0.70710677
    %v6720 = vmul.f32 %v6716, %v6716
    %v6721 = vmin.f32 16.0, %v6720
    %v6722 = vmul.f32 %v6721, 2.1237322e-06
    %v6723 = vadd.f32 %v6722, 0.00028619796
    %v6724 = vmul.f32 %v6721, %v6723
    %v6725 = vadd.f32 %v6724, 0.0036580483
    %v6726 = vmul.f32 %v6721, %v6725
    %v6727 = vadd.f32 %v6726, 0.05243302
    %v6728 = vmul.f32 %v6721, %v6727
    %v6729 = vadd.f32 %v6728, 0.18741608
    %v6730 = vmul.f32 %v6721, %v6729
    %v6731 = vadd.f32 %v6730, 1.1283791
    %v6732 = vmul.f32 %v6716, %v6731
    %v6733 = vmul.f32 %v6721, 3.8918573e-05
    %v6734 = vadd.f32 %v6733, 0.001143296
    %v6735 = vmul.f32 %v6721, %v6734
    %v6736 = vadd.f32 %v6735, 0.014752088
    %v6737 = vmul.f32 %v6721, %v6736
    %v6738 = vadd.f32 %v6737, 0.112945676
    %v6739 = vmul.f32 %v6721, %v6738
    %v6740 = vadd.f32 %v6739, 0.4994258
    %v6741 = vmul.f32 %v6721, %v6740
    %v6742 = vadd.f32 %v6741, 1.0
    %v6743 = vrcp.pop %v6742
    %v6744 = vmul.f32 %v6742, %v6743
    %v6745 = vsub.f32 1.0, %v6744
    %v6746 = vmul.f32 %v6743, %v6745
    %v6747 = vadd.f32 %v6743, %v6746
    %vm6748 = vweird.f32 %v6742
    %vm6749 = vweird.f32 %v6743
    %vm6750 = vmor %vm6748, %vm6749
    %v6751 = vsel %vm6750, %v6743, %v6747
    %v6752 = vand.u32 2147483647, %v6742
    %vm6753 = vcmp.eq.f32.partialorder %v6752, 8.507059e+37
    %v6754 = vand.u32 %v6742, 2147483648
    %v6755 = vor.u32 1.1754944e-38, %v6754
    %v6756 = vsel %vm6753, %v6755, %v6751
    %v6757 = vmul.f32 %v6732, %v6756
    %v6758 = vmin.f32 %v6757, 1.0
    %v6759 = vmax.f32 %v6758, -1.0
    %v6760 = vmul.f32 %v6717, %v6717
    %v6761 = vmin.f32 16.0, %v6760
    %v6762 = vmul.f32 %v6761, 2.1237322e-06
    %v6763 = vadd.f32 %v6762, 0.00028619796
    %v6764 = vmul.f32 %v6761, %v6763
    %v6765 = vadd.f32 %v6764, 0.0036580483
    %v6766 = vmul.f32 %v6761, %v6765
    %v6767 = vadd.f32 %v6766, 0.05243302
    %v6768 = vmul.f32 %v6761, %v6767
    %v6769 = vadd.f32 %v6768, 0.18741608
    %v6770 = vmul.f32 %v6761, %v6769
    %v6771 = vadd.f32 %v6770, 1.1283791
    %v6772 = vmul.f32 %v6717, %v6771
    %v6773 = vmul.f32 %v6761, 3.8918573e-05
    %v6774 = vadd.f32 %v6773, 0.001143296
    %v6775 = vmul.f32 %v6761, %v6774
    %v6776 = vadd.f32 %v6775, 0.014752088
    %v6777 = vmul.f32 %v6761, %v6776
    %v6778 = vadd.f32 %v6777, 0.112945676
    %v6779 = vmul.f32 %v6761, %v6778
    %v6780 = vadd.f32 %v6779, 0.4994258
    %v6781 = vmul.f32 %v6761, %v6780
    %v6782 = vadd.f32 %v6781, 1.0
    %v6783 = vrcp.pop %v6782
    %v6784 = vmul.f32 %v6782, %v6783
    %v6785 = vsub.f32 1.0, %v6784
    %v6786 = vmul.f32 %v6783, %v6785
    %v6787 = vadd.f32 %v6783, %v6786
    %vm6788 = vweird.f32 %v6782
    %vm6789 = vweird.f32 %v6783
    %vm6790 = vmor %vm6788, %vm6789
    %v6791 = vsel %vm6790, %v6783, %v6787
    %v6792 = vand.u32 2147483647, %v6782
    %vm6793 = vcmp.eq.f32.partialorder %v6792, 8.507059e+37
    %v6794 = vand.u32 %v6782, 2147483648
    %v6795 = vor.u32 1.1754944e-38, %v6794
    %v6796 = vsel %vm6793, %v6795, %v6791
    %v6797 = vmul.f32 %v6772, %v6796
    %v6798 = vmin.f32 %v6797, 1.0
    %v6799 = vmax.f32 %v6798, -1.0
    %v6800 = vmul.f32 %v6718, %v6718
    %v6801 = vmin.f32 16.0, %v6800
    %v6802 = vmul.f32 %v6801, 2.1237322e-06
    %v6803 = vadd.f32 %v6802, 0.00028619796
    %v6804 = vmul.f32 %v6801, %v6803
    %v6805 = vadd.f32 %v6804, 0.0036580483
    %v6806 = vmul.f32 %v6801, %v6805
    %v6807 = vadd.f32 %v6806, 0.05243302
    %v6808 = vmul.f32 %v6801, %v6807
    %v6809 = vadd.f32 %v6808, 0.18741608
    %v6810 = vmul.f32 %v6801, %v6809
    %v6811 = vadd.f32 %v6810, 1.1283791
    %v6812 = vmul.f32 %v6718, %v6811
    %v6813 = vmul.f32 %v6801, 3.8918573e-05
    %v6814 = vadd.f32 %v6813, 0.001143296
    %v6815 = vmul.f32 %v6801, %v6814
    %v6816 = vadd.f32 %v6815, 0.014752088
    %v6817 = vmul.f32 %v6801, %v6816
    %v6818 = vadd.f32 %v6817, 0.112945676
    %v6819 = vmul.f32 %v6801, %v6818
    %v6820 = vadd.f32 %v6819, 0.4994258
    %v6821 = vmul.f32 %v6801, %v6820
    %v6822 = vadd.f32 %v6821, 1.0
    %v6823 = vrcp.pop %v6822
    %v6824 = vmul.f32 %v6822, %v6823
    %v6825 = vsub.f32 1.0, %v6824
    %v6826 = vmul.f32 %v6823, %v6825
    %v6827 = vadd.f32 %v6823, %v6826
    %vm6828 = vweird.f32 %v6822
    %vm6829 = vweird.f32 %v6823
    %vm6830 = vmor %vm6828, %vm6829
    %v6831 = vsel %vm6830, %v6823, %v6827
    %v6832 = vand.u32 2147483647, %v6822
    %vm6833 = vcmp.eq.f32.partialorder %v6832, 8.507059e+37
    %v6834 = vand.u32 %v6822, 2147483648
    %v6835 = vor.u32 1.1754944e-38, %v6834
    %v6836 = vsel %vm6833, %v6835, %v6831
    %v6837 = vmul.f32 %v6812, %v6836
    %v6838 = vmin.f32 %v6837, 1.0
    %v6839 = vmax.f32 %v6838, -1.0
    %v6840 = vmul.f32 %v6719, %v6719
    %v6841 = vmin.f32 16.0, %v6840
    %v6842 = vmul.f32 %v6841, 2.1237322e-06
    %v6843 = vadd.f32 %v6842, 0.00028619796
    %v6844 = vmul.f32 %v6841, %v6843
    %v6845 = vadd.f32 %v6844, 0.0036580483
    %v6846 = vmul.f32 %v6841, %v6845
    %v6847 = vadd.f32 %v6846, 0.05243302
    %v6848 = vmul.f32 %v6841, %v6847
    %v6849 = vadd.f32 %v6848, 0.18741608
    %v6850 = vmul.f32 %v6841, %v6849
    %v6851 = vadd.f32 %v6850, 1.1283791
    %v6852 = vmul.f32 %v6719, %v6851
    %v6853 = vmul.f32 %v6841, 3.8918573e-05
    %v6854 = vadd.f32 %v6853, 0.001143296
    %v6855 = vmul.f32 %v6841, %v6854
    %v6856 = vadd.f32 %v6855, 0.014752088
    %v6857 = vmul.f32 %v6841, %v6856
    %v6858 = vadd.f32 %v6857, 0.112945676
    %v6859 = vmul.f32 %v6841, %v6858
    %v6860 = vadd.f32 %v6859, 0.4994258
    %v6861 = vmul.f32 %v6841, %v6860
    %v6862 = vadd.f32 %v6861, 1.0
    %v6863 = vrcp.pop %v6862
    %v6864 = vmul.f32 %v6862, %v6863
    %v6865 = vsub.f32 1.0, %v6864
    %v6866 = vmul.f32 %v6863, %v6865
    %v6867 = vadd.f32 %v6863, %v6866
    %vm6868 = vweird.f32 %v6862
    %vm6869 = vweird.f32 %v6863
    %vm6870 = vmor %vm6868, %vm6869
    %v6871 = vsel %vm6870, %v6863, %v6867
    %v6872 = vand.u32 2147483647, %v6862
    %vm6873 = vcmp.eq.f32.partialorder %v6872, 8.507059e+37
    %v6874 = vand.u32 %v6862, 2147483648
    %v6875 = vor.u32 1.1754944e-38, %v6874
    %v6876 = vsel %vm6873, %v6875, %v6871
    %v6877 = vmul.f32 %v6852, %v6876
    %v6878 = vmin.f32 %v6877, 1.0
    %v6879 = vmax.f32 %v6878, -1.0
    %v6880 = vadd.f32 %v6759, 1.0
    %v6881 = vadd.f32 %v6799, 1.0
    %v6882 = vadd.f32 %v6839, 1.0
    %v6883 = vadd.f32 %v6879, 1.0
    %v6884 = vmul.f32 %v6712, %v6880
    %v6885 = vmul.f32 %v6713, %v6881
    %v6886 = vmul.f32 %v6714, %v6882
    %v6887 = vmul.f32 %v6715, %v6883
    %v6888 = vld [vmem:[%s5] sm:$0xff]
    %v6889 = vld [vmem:[%s5 + $0x8] sm:$0xff]
    %v6890 = vld [vmem:[%s5 + $0x10] sm:$0xff]
    %v6891 = vld [vmem:[%s5 + $0x18] sm:$0xff]
    %v6892 = vld [vmem:[%s5 + $0x20] sm:$0xff]
    %v6893 = vld [vmem:[%s5 + $0x28] sm:$0xff]
    %v6894 = vld [vmem:[%s5 + $0x30] sm:$0xff]
    %v6895 = vld [vmem:[%s5 + $0x38] sm:$0xff]
    %v6896 = vld [vmem:[%s5 + $0x40] sm:$0xff]
    %v6897 = vld [vmem:[%s5 + $0x48] sm:$0xff]
    %v6898 = vld [vmem:[%s5 + $0x50] sm:$0xff]
    %v6899 = vld [vmem:[%s5 + $0x58] sm:$0xff]
    %v6900 = vld [vmem:[%s5 + $0x60] sm:$0xff]
    %v6901 = vld [vmem:[%s5 + $0x68] sm:$0xff]
    %v6902 = vld [vmem:[%s5 + $0x70] sm:$0xff]
    %v6903 = vld [vmem:[%s5 + $0x78] sm:$0xff]
    %v6904 = vld [vmem:[%s5 + $0x80] sm:$0xff]
    %v6905 = vld [vmem:[%s5 + $0x88] sm:$0xff]
    %v6906 = vld [vmem:[%s5 + $0x90] sm:$0xff]
    %v6907 = vld [vmem:[%s5 + $0x98] sm:$0xff]
    %v6908 = vld [vmem:[%s5 + $0xa0] sm:$0xff]
    %v6909 = vld [vmem:[%s5 + $0xa8] sm:$0xff]
    %v6910 = vld [vmem:[%s5 + $0xb0] sm:$0xff]
    %v6911 = vld [vmem:[%s5 + $0xb8] sm:$0xff]
    %v6912 = vld [vmem:[%s5 + $0xc0] sm:$0xff]
    %v6913 = vld [vmem:[%s5 + $0xc8] sm:$0xff]
    %v6914 = vld [vmem:[%s5 + $0xd0] sm:$0xff]
    %v6915 = vld [vmem:[%s5 + $0xd8] sm:$0xff]
    %v6916 = vld [vmem:[%s5 + $0xe0] sm:$0xff]
    %v6917 = vld [vmem:[%s5 + $0xe8] sm:$0xff]
    %v6918 = vld [vmem:[%s5 + $0xf0] sm:$0xff]
    %v6919 = vld [vmem:[%s5 + $0xf8] sm:$0xff]
    %v6920 = vld [vmem:[%s5 + $0x100] sm:$0xff]
    %v6921 = vld [vmem:[%s5 + $0x108] sm:$0xff]
    %v6922 = vld [vmem:[%s5 + $0x110] sm:$0xff]
    %v6923 = vld [vmem:[%s5 + $0x118] sm:$0xff]
    %v6924 = vld [vmem:[%s5 + $0x120] sm:$0xff]
    %v6925 = vld [vmem:[%s5 + $0x128] sm:$0xff]
    %v6926 = vld [vmem:[%s5 + $0x130] sm:$0xff]
    %v6927 = vld [vmem:[%s5 + $0x138] sm:$0xff]
    %v6928 = vld [vmem:[%s5 + $0x140] sm:$0xff]
    %v6929 = vld [vmem:[%s5 + $0x148] sm:$0xff]
    %v6930 = vld [vmem:[%s5 + $0x150] sm:$0xff]
    %v6931 = vld [vmem:[%s5 + $0x158] sm:$0xff]
    %v6932 = vld [vmem:[%s5 + $0x160] sm:$0xff]
    %v6933 = vld [vmem:[%s5 + $0x168] sm:$0xff]
    %v6934 = vld [vmem:[%s5 + $0x170] sm:$0xff]
    %v6935 = vld [vmem:[%s5 + $0x178] sm:$0xff]
    %v6936 = vld [vmem:[%s5 + $0x180] sm:$0xff]
    %v6937 = vld [vmem:[%s5 + $0x188] sm:$0xff]
    %v6938 = vld [vmem:[%s5 + $0x190] sm:$0xff]
    %v6939 = vld [vmem:[%s5 + $0x198] sm:$0xff]
    %v6940 = vld [vmem:[%s5 + $0x1a0] sm:$0xff]
    %v6941 = vld [vmem:[%s5 + $0x1a8] sm:$0xff]
    %v6942 = vld [vmem:[%s5 + $0x1b0] sm:$0xff]
    %v6943 = vld [vmem:[%s5 + $0x1b8] sm:$0xff]
    %v6944 = vld [vmem:[%s5 + $0x1c0] sm:$0xff]
    %v6945 = vld [vmem:[%s5 + $0x1c8] sm:$0xff]
    %v6946 = vld [vmem:[%s5 + $0x1d0] sm:$0xff]
    %v6947 = vld [vmem:[%s5 + $0x1d8] sm:$0xff]
    %v6948 = vld [vmem:[%s5 + $0x1e0] sm:$0xff]
    %v6949 = vld [vmem:[%s5 + $0x1e8] sm:$0xff]
    %v6950 = vld [vmem:[%s5 + $0x1f0] sm:$0xff]
    %v6951 = vld [vmem:[%s5 + $0x1f8] sm:$0xff]
    %v6952 = vld [vmem:[%s6] sm:$0x1]
    %v6954 = vperm.slane %v6952, 0
    %v6956 = vand.u32 %v6903, 4294901760
    %6957 = vmatpush.msra.mxu0 %v6956
    %v6958 = vand.u32 %v6902, 4294901760
    %6959 = vmatpush.msra.mxu0 %v6958
    %v6960 = vand.u32 %v6901, 4294901760
    %6961 = vmatpush.msra.mxu0 %v6960
    %v6962 = vand.u32 %v6900, 4294901760
    %6963 = vmatpush.msra.mxu0 %v6962
    %v6964 = vand.u32 %v6899, 4294901760
    %6965 = vmatpush.msra.mxu0 %v6964
    %v6966 = vand.u32 %v6898, 4294901760
    %6967 = vmatpush.msra.mxu0 %v6966
    %v6968 = vand.u32 %v6897, 4294901760
    %6969 = vmatpush.msra.mxu0 %v6968
    %v6970 = vand.u32 %v6896, 4294901760
    %6971 = vmatpush.msra.mxu0 %v6970
    %v6972 = vand.u32 %v6895, 4294901760
    %6973 = vmatpush.msra.mxu0 %v6972
    %v6974 = vand.u32 %v6894, 4294901760
    %6975 = vmatpush.msra.mxu0 %v6974
    %v6976 = vand.u32 %v6893, 4294901760
    %6977 = vmatpush.msra.mxu0 %v6976
    %v6978 = vand.u32 %v6892, 4294901760
    %6979 = vmatpush.msra.mxu0 %v6978
    %v6980 = vand.u32 %v6891, 4294901760
    %6981 = vmatpush.msra.mxu0 %v6980
    %v6982 = vand.u32 %v6890, 4294901760
    %6983 = vmatpush.msra.mxu0 %v6982
    %v6984 = vand.u32 %v6889, 4294901760
    %6985 = vmatpush.msra.mxu0 %v6984
    %v6986 = vand.u32 %v6888, 4294901760
    %6987 = vmatpush.msra.mxu0 %v6986
    %v6988 = vand.u32 %v6884, 4294901760
    %v6989 = vsub.f32 %v6884, %v6988
    %v6990 = vand.u32 %v6989, 4294901760
    %v6991 = vsub.f32 %v6989, %v6990
    %v6992 = vand.u32 %v6991, 4294901760
    %6993 = vmatmul.f32.gmra.mxu0 %v6992
    %v6994 = vpop.f32.mrf.mxu0
    %v6995 = vadd.f32 %v6954, %v6994
    %6996 = vdwg.mxu0
    %v6997 = vand.u32 %v6903, 4294901760
    %v6998 = vsub.f32 %v6903, %v6997
    %v6999 = vand.u32 %v6998, 4294901760
    %v7000 = vsub.f32 %v6998, %v6999
    %v7001 = vand.u32 %v7000, 4294901760
    %7002 = vmatpush.msra.mxu0 %v7001
    %v7003 = vand.u32 %v6902, 4294901760
    %v7004 = vsub.f32 %v6902, %v7003
    %v7005 = vand.u32 %v7004, 4294901760
    %v7006 = vsub.f32 %v7004, %v7005
    %v7007 = vand.u32 %v7006, 4294901760
    %7008 = vmatpush.msra.mxu0 %v7007
    %v7009 = vand.u32 %v6901, 4294901760
    %v7010 = vsub.f32 %v6901, %v7009
    %v7011 = vand.u32 %v7010, 4294901760
    %v7012 = vsub.f32 %v7010, %v7011
    %v7013 = vand.u32 %v7012, 4294901760
    %7014 = vmatpush.msra.mxu0 %v7013
    %v7015 = vand.u32 %v6900, 4294901760
    %v7016 = vsub.f32 %v6900, %v7015
    %v7017 = vand.u32 %v7016, 4294901760
    %v7018 = vsub.f32 %v7016, %v7017
    %v7019 = vand.u32 %v7018, 4294901760
    %7020 = vmatpush.msra.mxu0 %v7019
    %v7021 = vand.u32 %v6899, 4294901760
    %v7022 = vsub.f32 %v6899, %v7021
    %v7023 = vand.u32 %v7022, 4294901760
    %v7024 = vsub.f32 %v7022, %v7023
    %v7025 = vand.u32 %v7024, 4294901760
    %7026 = vmatpush.msra.mxu0 %v7025
    %v7027 = vand.u32 %v6898, 4294901760
    %v7028 = vsub.f32 %v6898, %v7027
    %v7029 = vand.u32 %v7028, 4294901760
    %v7030 = vsub.f32 %v7028, %v7029
    %v7031 = vand.u32 %v7030, 4294901760
    %7032 = vmatpush.msra.mxu0 %v7031
    %v7033 = vand.u32 %v6897, 4294901760
    %v7034 = vsub.f32 %v6897, %v7033
    %v7035 = vand.u32 %v7034, 4294901760
    %v7036 = vsub.f32 %v7034, %v7035
    %v7037 = vand.u32 %v7036, 4294901760
    %7038 = vmatpush.msra.mxu0 %v7037
    %v7039 = vand.u32 %v6896, 4294901760
    %v7040 = vsub.f32 %v6896, %v7039
    %v7041 = vand.u32 %v7040, 4294901760
    %v7042 = vsub.f32 %v7040, %v7041
    %v7043 = vand.u32 %v7042, 4294901760
    %7044 = vmatpush.msra.mxu0 %v7043
    %v7045 = vand.u32 %v6895, 4294901760
    %v7046 = vsub.f32 %v6895, %v7045
    %v7047 = vand.u32 %v7046, 4294901760
    %v7048 = vsub.f32 %v7046, %v7047
    %v7049 = vand.u32 %v7048, 4294901760
    %7050 = vmatpush.msra.mxu0 %v7049
    %v7051 = vand.u32 %v6894, 4294901760
    %v7052 = vsub.f32 %v6894, %v7051
    %v7053 = vand.u32 %v7052, 4294901760
    %v7054 = vsub.f32 %v7052, %v7053
    %v7055 = vand.u32 %v7054, 4294901760
    %7056 = vmatpush.msra.mxu0 %v7055
    %v7057 = vand.u32 %v6893, 4294901760
    %v7058 = vsub.f32 %v6893, %v7057
    %v7059 = vand.u32 %v7058, 4294901760
    %v7060 = vsub.f32 %v7058, %v7059
    %v7061 = vand.u32 %v7060, 4294901760
    %7062 = vmatpush.msra.mxu0 %v7061
    %v7063 = vand.u32 %v6892, 4294901760
    %v7064 = vsub.f32 %v6892, %v7063
    %v7065 = vand.u32 %v7064, 4294901760
    %v7066 = vsub.f32 %v7064, %v7065
    %v7067 = vand.u32 %v7066, 4294901760
    %7068 = vmatpush.msra.mxu0 %v7067
    %v7069 = vand.u32 %v6891, 4294901760
    %v7070 = vsub.f32 %v6891, %v7069
    %v7071 = vand.u32 %v7070, 4294901760
    %v7072 = vsub.f32 %v7070, %v7071
    %v7073 = vand.u32 %v7072, 4294901760
    %7074 = vmatpush.msra.mxu0 %v7073
    %v7075 = vand.u32 %v6890, 4294901760
    %v7076 = vsub.f32 %v6890, %v7075
    %v7077 = vand.u32 %v7076, 4294901760
    %v7078 = vsub.f32 %v7076, %v7077
    %v7079 = vand.u32 %v7078, 4294901760
    %7080 = vmatpush.msra.mxu0 %v7079
    %v7081 = vand.u32 %v6889, 4294901760
    %v7082 = vsub.f32 %v6889, %v7081
    %v7083 = vand.u32 %v7082, 4294901760
    %v7084 = vsub.f32 %v7082, %v7083
    %v7085 = vand.u32 %v7084, 4294901760
    %7086 = vmatpush.msra.mxu0 %v7085
    %v7087 = vand.u32 %v6888, 4294901760
    %v7088 = vsub.f32 %v6888, %v7087
    %v7089 = vand.u32 %v7088, 4294901760
    %v7090 = vsub.f32 %v7088, %v7089
    %v7091 = vand.u32 %v7090, 4294901760
    %7092 = vmatpush.msra.mxu0 %v7091
    %v7093 = vand.u32 %v6884, 4294901760
    %7094 = vmatmul.f32.gmra.mxu0 %v7093
    %v7095 = vpop.f32.mrf.mxu0
    %v7096 = vadd.f32 %v6995, %v7095
    %7097 = vdwg.mxu0
    %v7098 = vand.u32 %v6903, 4294901760
    %v7099 = vsub.f32 %v6903, %v7098
    %7100 = vmatpush.msra.mxu0 %v7099
    %v7101 = vand.u32 %v6902, 4294901760
    %v7102 = vsub.f32 %v6902, %v7101
    %7103 = vmatpush.msra.mxu0 %v7102
    %v7104 = vand.u32 %v6901, 4294901760
    %v7105 = vsub.f32 %v6901, %v7104
    %7106 = vmatpush.msra.mxu0 %v7105
    %v7107 = vand.u32 %v6900, 4294901760
    %v7108 = vsub.f32 %v6900, %v7107
    %7109 = vmatpush.msra.mxu0 %v7108
    %v7110 = vand.u32 %v6899, 4294901760
    %v7111 = vsub.f32 %v6899, %v7110
    %7112 = vmatpush.msra.mxu0 %v7111
    %v7113 = vand.u32 %v6898, 4294901760
    %v7114 = vsub.f32 %v6898, %v7113
    %7115 = vmatpush.msra.mxu0 %v7114
    %v7116 = vand.u32 %v6897, 4294901760
    %v7117 = vsub.f32 %v6897, %v7116
    %7118 = vmatpush.msra.mxu0 %v7117
    %v7119 = vand.u32 %v6896, 4294901760
    %v7120 = vsub.f32 %v6896, %v7119
    %7121 = vmatpush.msra.mxu0 %v7120
    %v7122 = vand.u32 %v6895, 4294901760
    %v7123 = vsub.f32 %v6895, %v7122
    %7124 = vmatpush.msra.mxu0 %v7123
    %v7125 = vand.u32 %v6894, 4294901760
    %v7126 = vsub.f32 %v6894, %v7125
    %7127 = vmatpush.msra.mxu0 %v7126
    %v7128 = vand.u32 %v6893, 4294901760
    %v7129 = vsub.f32 %v6893, %v7128
    %7130 = vmatpush.msra.mxu0 %v7129
    %v7131 = vand.u32 %v6892, 4294901760
    %v7132 = vsub.f32 %v6892, %v7131
    %7133 = vmatpush.msra.mxu0 %v7132
    %v7134 = vand.u32 %v6891, 4294901760
    %v7135 = vsub.f32 %v6891, %v7134
    %7136 = vmatpush.msra.mxu0 %v7135
    %v7137 = vand.u32 %v6890, 4294901760
    %v7138 = vsub.f32 %v6890, %v7137
    %7139 = vmatpush.msra.mxu0 %v7138
    %v7140 = vand.u32 %v6889, 4294901760
    %v7141 = vsub.f32 %v6889, %v7140
    %7142 = vmatpush.msra.mxu0 %v7141
    %v7143 = vand.u32 %v6888, 4294901760
    %v7144 = vsub.f32 %v6888, %v7143
    %7145 = vmatpush.msra.mxu0 %v7144
    %v7146 = vand.u32 %v6884, 4294901760
    %v7147 = vsub.f32 %v6884, %v7146
    %7148 = vmatmul.f32.gmra.mxu0 %v7147
    %v7149 = vpop.f32.mrf.mxu0
    %v7150 = vadd.f32 %v7096, %v7149
    %7151 = vdwg.mxu0
    %v7152 = vand.u32 %v6903, 4294901760
    %7153 = vmatpush.msra.mxu0 %v7152
    %v7154 = vand.u32 %v6902, 4294901760
    %7155 = vmatpush.msra.mxu0 %v7154
    %v7156 = vand.u32 %v6901, 4294901760
    %7157 = vmatpush.msra.mxu0 %v7156
    %v7158 = vand.u32 %v6900, 4294901760
    %7159 = vmatpush.msra.mxu0 %v7158
    %v7160 = vand.u32 %v6899, 4294901760
    %7161 = vmatpush.msra.mxu0 %v7160
    %v7162 = vand.u32 %v6898, 4294901760
    %7163 = vmatpush.msra.mxu0 %v7162
    %v7164 = vand.u32 %v6897, 4294901760
    %7165 = vmatpush.msra.mxu0 %v7164
    %v7166 = vand.u32 %v6896, 4294901760
    %7167 = vmatpush.msra.mxu0 %v7166
    %v7168 = vand.u32 %v6895, 4294901760
    %7169 = vmatpush.msra.mxu0 %v7168
    %v7170 = vand.u32 %v6894, 4294901760
    %7171 = vmatpush.msra.mxu0 %v7170
    %v7172 = vand.u32 %v6893, 4294901760
    %7173 = vmatpush.msra.mxu0 %v7172
    %v7174 = vand.u32 %v6892, 4294901760
    %7175 = vmatpush.msra.mxu0 %v7174
    %v7176 = vand.u32 %v6891, 4294901760
    %7177 = vmatpush.msra.mxu0 %v7176
    %v7178 = vand.u32 %v6890, 4294901760
    %7179 = vmatpush.msra.mxu0 %v7178
    %v7180 = vand.u32 %v6889, 4294901760
    %7181 = vmatpush.msra.mxu0 %v7180
    %v7182 = vand.u32 %v6888, 4294901760
    %7183 = vmatpush.msra.mxu0 %v7182
    %v7184 = vand.u32 %v6884, 4294901760
    %v7185 = vsub.f32 %v6884, %v7184
    %v7186 = vand.u32 %v7185, 4294901760
    %7187 = vmatmul.f32.gmra.mxu0 %v7186
    %v7188 = vpop.f32.mrf.mxu0
    %v7189 = vadd.f32 %v7150, %v7188
    %7190 = vdwg.mxu0
    %v7191 = vand.u32 %v6903, 4294901760
    %v7192 = vsub.f32 %v6903, %v7191
    %v7193 = vand.u32 %v7192, 4294901760
    %7194 = vmatpush.msra.mxu0 %v7193
    %v7195 = vand.u32 %v6902, 4294901760
    %v7196 = vsub.f32 %v6902, %v7195
    %v7197 = vand.u32 %v7196, 4294901760
    %7198 = vmatpush.msra.mxu0 %v7197
    %v7199 = vand.u32 %v6901, 4294901760
    %v7200 = vsub.f32 %v6901, %v7199
    %v7201 = vand.u32 %v7200, 4294901760
    %7202 = vmatpush.msra.mxu0 %v7201
    %v7203 = vand.u32 %v6900, 4294901760
    %v7204 = vsub.f32 %v6900, %v7203
    %v7205 = vand.u32 %v7204, 4294901760
    %7206 = vmatpush.msra.mxu0 %v7205
    %v7207 = vand.u32 %v6899, 4294901760
    %v7208 = vsub.f32 %v6899, %v7207
    %v7209 = vand.u32 %v7208, 4294901760
    %7210 = vmatpush.msra.mxu0 %v7209
    %v7211 = vand.u32 %v6898, 4294901760
    %v7212 = vsub.f32 %v6898, %v7211
    %v7213 = vand.u32 %v7212, 4294901760
    %7214 = vmatpush.msra.mxu0 %v7213
    %v7215 = vand.u32 %v6897, 4294901760
    %v7216 = vsub.f32 %v6897, %v7215
    %v7217 = vand.u32 %v7216, 4294901760
    %7218 = vmatpush.msra.mxu0 %v7217
    %v7219 = vand.u32 %v6896, 4294901760
    %v7220 = vsub.f32 %v6896, %v7219
    %v7221 = vand.u32 %v7220, 4294901760
    %7222 = vmatpush.msra.mxu0 %v7221
    %v7223 = vand.u32 %v6895, 4294901760
    %v7224 = vsub.f32 %v6895, %v7223
    %v7225 = vand.u32 %v7224, 4294901760
    %7226 = vmatpush.msra.mxu0 %v7225
    %v7227 = vand.u32 %v6894, 4294901760
    %v7228 = vsub.f32 %v6894, %v7227
    %v7229 = vand.u32 %v7228, 4294901760
    %7230 = vmatpush.msra.mxu0 %v7229
    %v7231 = vand.u32 %v6893, 4294901760
    %v7232 = vsub.f32 %v6893, %v7231
    %v7233 = vand.u32 %v7232, 4294901760
    %7234 = vmatpush.msra.mxu0 %v7233
    %v7235 = vand.u32 %v6892, 4294901760
    %v7236 = vsub.f32 %v6892, %v7235
    %v7237 = vand.u32 %v7236, 4294901760
    %7238 = vmatpush.msra.mxu0 %v7237
    %v7239 = vand.u32 %v6891, 4294901760
    %v7240 = vsub.f32 %v6891, %v7239
    %v7241 = vand.u32 %v7240, 4294901760
    %7242 = vmatpush.msra.mxu0 %v7241
    %v7243 = vand.u32 %v6890, 4294901760
    %v7244 = vsub.f32 %v6890, %v7243
    %v7245 = vand.u32 %v7244, 4294901760
    %7246 = vmatpush.msra.mxu0 %v7245
    %v7247 = vand.u32 %v6889, 4294901760
    %v7248 = vsub.f32 %v6889, %v7247
    %v7249 = vand.u32 %v7248, 4294901760
    %7250 = vmatpush.msra.mxu0 %v7249
    %v7251 = vand.u32 %v6888, 4294901760
    %v7252 = vsub.f32 %v6888, %v7251
    %v7253 = vand.u32 %v7252, 4294901760
    %7254 = vmatpush.msra.mxu0 %v7253
    %v7255 = vand.u32 %v6884, 4294901760
    %7256 = vmatmul.f32.gmra.mxu0 %v7255
    %v7257 = vpop.f32.mrf.mxu0
    %v7258 = vadd.f32 %v7189, %v7257
    %7259 = vdwg.mxu0
    %v7260 = vand.u32 %v6903, 4294901760
    %7261 = vmatpush.msra.mxu0 %v7260
    %v7262 = vand.u32 %v6902, 4294901760
    %7263 = vmatpush.msra.mxu0 %v7262
    %v7264 = vand.u32 %v6901, 4294901760
    %7265 = vmatpush.msra.mxu0 %v7264
    %v7266 = vand.u32 %v6900, 4294901760
    %7267 = vmatpush.msra.mxu0 %v7266
    %v7268 = vand.u32 %v6899, 4294901760
    %7269 = vmatpush.msra.mxu0 %v7268
    %v7270 = vand.u32 %v6898, 4294901760
    %7271 = vmatpush.msra.mxu0 %v7270
    %v7272 = vand.u32 %v6897, 4294901760
    %7273 = vmatpush.msra.mxu0 %v7272
    %v7274 = vand.u32 %v6896, 4294901760
    %7275 = vmatpush.msra.mxu0 %v7274
    %v7276 = vand.u32 %v6895, 4294901760
    %7277 = vmatpush.msra.mxu0 %v7276
    %v7278 = vand.u32 %v6894, 4294901760
    %7279 = vmatpush.msra.mxu0 %v7278
    %v7280 = vand.u32 %v6893, 4294901760
    %7281 = vmatpush.msra.mxu0 %v7280
    %v7282 = vand.u32 %v6892, 4294901760
    %7283 = vmatpush.msra.mxu0 %v7282
    %v7284 = vand.u32 %v6891, 4294901760
    %7285 = vmatpush.msra.mxu0 %v7284
    %v7286 = vand.u32 %v6890, 4294901760
    %7287 = vmatpush.msra.mxu0 %v7286
    %v7288 = vand.u32 %v6889, 4294901760
    %7289 = vmatpush.msra.mxu0 %v7288
    %v7290 = vand.u32 %v6888, 4294901760
    %7291 = vmatpush.msra.mxu0 %v7290
    %v7292 = vand.u32 %v6884, 4294901760
    %7293 = vmatmul.f32.gmra.mxu0 %v7292
    %v7294 = vpop.f32.mrf.mxu0
    %v7295 = vadd.f32 %v7258, %v7294
    %7296 = vdwg.mxu0
    %v7297 = vand.u32 %v6919, 4294901760
    %7298 = vmatpush.msra.mxu0 %v7297
    %v7299 = vand.u32 %v6918, 4294901760
    %7300 = vmatpush.msra.mxu0 %v7299
    %v7301 = vand.u32 %v6917, 4294901760
    %7302 = vmatpush.msra.mxu0 %v7301
    %v7303 = vand.u32 %v6916, 4294901760
    %7304 = vmatpush.msra.mxu0 %v7303
    %v7305 = vand.u32 %v6915, 4294901760
    %7306 = vmatpush.msra.mxu0 %v7305
    %v7307 = vand.u32 %v6914, 4294901760
    %7308 = vmatpush.msra.mxu0 %v7307
    %v7309 = vand.u32 %v6913, 4294901760
    %7310 = vmatpush.msra.mxu0 %v7309
    %v7311 = vand.u32 %v6912, 4294901760
    %7312 = vmatpush.msra.mxu0 %v7311
    %v7313 = vand.u32 %v6911, 4294901760
    %7314 = vmatpush.msra.mxu0 %v7313
    %v7315 = vand.u32 %v6910, 4294901760
    %7316 = vmatpush.msra.mxu0 %v7315
    %v7317 = vand.u32 %v6909, 4294901760
    %7318 = vmatpush.msra.mxu0 %v7317
    %v7319 = vand.u32 %v6908, 4294901760
    %7320 = vmatpush.msra.mxu0 %v7319
    %v7321 = vand.u32 %v6907, 4294901760
    %7322 = vmatpush.msra.mxu0 %v7321
    %v7323 = vand.u32 %v6906, 4294901760
    %7324 = vmatpush.msra.mxu0 %v7323
    %v7325 = vand.u32 %v6905, 4294901760
    %7326 = vmatpush.msra.mxu0 %v7325
    %v7327 = vand.u32 %v6904, 4294901760
    %7328 = vmatpush.msra.mxu0 %v7327
    %v7329 = vand.u32 %v6885, 4294901760
    %v7330 = vsub.f32 %v6885, %v7329
    %v7331 = vand.u32 %v7330, 4294901760
    %v7332 = vsub.f32 %v7330, %v7331
    %v7333 = vand.u32 %v7332, 4294901760
    %7334 = vmatmul.f32.gmra.mxu0 %v7333
    %v7335 = vpop.f32.mrf.mxu0
    %v7336 = vadd.f32 %v7295, %v7335
    %7337 = vdwg.mxu0
    %v7338 = vand.u32 %v6919, 4294901760
    %v7339 = vsub.f32 %v6919, %v7338
    %v7340 = vand.u32 %v7339, 4294901760
    %v7341 = vsub.f32 %v7339, %v7340
    %v7342 = vand.u32 %v7341, 4294901760
    %7343 = vmatpush.msra.mxu0 %v7342
    %v7344 = vand.u32 %v6918, 4294901760
    %v7345 = vsub.f32 %v6918, %v7344
    %v7346 = vand.u32 %v7345, 4294901760
    %v7347 = vsub.f32 %v7345, %v7346
    %v7348 = vand.u32 %v7347, 4294901760
    %7349 = vmatpush.msra.mxu0 %v7348
    %v7350 = vand.u32 %v6917, 4294901760
    %v7351 = vsub.f32 %v6917, %v7350
    %v7352 = vand.u32 %v7351, 4294901760
    %v7353 = vsub.f32 %v7351, %v7352
    %v7354 = vand.u32 %v7353, 4294901760
    %7355 = vmatpush.msra.mxu0 %v7354
    %v7356 = vand.u32 %v6916, 4294901760
    %v7357 = vsub.f32 %v6916, %v7356
    %v7358 = vand.u32 %v7357, 4294901760
    %v7359 = vsub.f32 %v7357, %v7358
    %v7360 = vand.u32 %v7359, 4294901760
    %7361 = vmatpush.msra.mxu0 %v7360
    %v7362 = vand.u32 %v6915, 4294901760
    %v7363 = vsub.f32 %v6915, %v7362
    %v7364 = vand.u32 %v7363, 4294901760
    %v7365 = vsub.f32 %v7363, %v7364
    %v7366 = vand.u32 %v7365, 4294901760
    %7367 = vmatpush.msra.mxu0 %v7366
    %v7368 = vand.u32 %v6914, 4294901760
    %v7369 = vsub.f32 %v6914, %v7368
    %v7370 = vand.u32 %v7369, 4294901760
    %v7371 = vsub.f32 %v7369, %v7370
    %v7372 = vand.u32 %v7371, 4294901760
    %7373 = vmatpush.msra.mxu0 %v7372
    %v7374 = vand.u32 %v6913, 4294901760
    %v7375 = vsub.f32 %v6913, %v7374
    %v7376 = vand.u32 %v7375, 4294901760
    %v7377 = vsub.f32 %v7375, %v7376
    %v7378 = vand.u32 %v7377, 4294901760
    %7379 = vmatpush.msra.mxu0 %v7378
    %v7380 = vand.u32 %v6912, 4294901760
    %v7381 = vsub.f32 %v6912, %v7380
    %v7382 = vand.u32 %v7381, 4294901760
    %v7383 = vsub.f32 %v7381, %v7382
    %v7384 = vand.u32 %v7383, 4294901760
    %7385 = vmatpush.msra.mxu0 %v7384
    %v7386 = vand.u32 %v6911, 4294901760
    %v7387 = vsub.f32 %v6911, %v7386
    %v7388 = vand.u32 %v7387, 4294901760
    %v7389 = vsub.f32 %v7387, %v7388
    %v7390 = vand.u32 %v7389, 4294901760
    %7391 = vmatpush.msra.mxu0 %v7390
    %v7392 = vand.u32 %v6910, 4294901760
    %v7393 = vsub.f32 %v6910, %v7392
    %v7394 = vand.u32 %v7393, 4294901760
    %v7395 = vsub.f32 %v7393, %v7394
    %v7396 = vand.u32 %v7395, 4294901760
    %7397 = vmatpush.msra.mxu0 %v7396
    %v7398 = vand.u32 %v6909, 4294901760
    %v7399 = vsub.f32 %v6909, %v7398
    %v7400 = vand.u32 %v7399, 4294901760
    %v7401 = vsub.f32 %v7399, %v7400
    %v7402 = vand.u32 %v7401, 4294901760
    %7403 = vmatpush.msra.mxu0 %v7402
    %v7404 = vand.u32 %v6908, 4294901760
    %v7405 = vsub.f32 %v6908, %v7404
    %v7406 = vand.u32 %v7405, 4294901760
    %v7407 = vsub.f32 %v7405, %v7406
    %v7408 = vand.u32 %v7407, 4294901760
    %7409 = vmatpush.msra.mxu0 %v7408
    %v7410 = vand.u32 %v6907, 4294901760
    %v7411 = vsub.f32 %v6907, %v7410
    %v7412 = vand.u32 %v7411, 4294901760
    %v7413 = vsub.f32 %v7411, %v7412
    %v7414 = vand.u32 %v7413, 4294901760
    %7415 = vmatpush.msra.mxu0 %v7414
    %v7416 = vand.u32 %v6906, 4294901760
    %v7417 = vsub.f32 %v6906, %v7416
    %v7418 = vand.u32 %v7417, 4294901760
    %v7419 = vsub.f32 %v7417, %v7418
    %v7420 = vand.u32 %v7419, 4294901760
    %7421 = vmatpush.msra.mxu0 %v7420
    %v7422 = vand.u32 %v6905, 4294901760
    %v7423 = vsub.f32 %v6905, %v7422
    %v7424 = vand.u32 %v7423, 4294901760
    %v7425 = vsub.f32 %v7423, %v7424
    %v7426 = vand.u32 %v7425, 4294901760
    %7427 = vmatpush.msra.mxu0 %v7426
    %v7428 = vand.u32 %v6904, 4294901760
    %v7429 = vsub.f32 %v6904, %v7428
    %v7430 = vand.u32 %v7429, 4294901760
    %v7431 = vsub.f32 %v7429, %v7430
    %v7432 = vand.u32 %v7431, 4294901760
    %7433 = vmatpush.msra.mxu0 %v7432
    %v7434 = vand.u32 %v6885, 4294901760
    %7435 = vmatmul.f32.gmra.mxu0 %v7434
    %v7436 = vpop.f32.mrf.mxu0
    %v7437 = vadd.f32 %v7336, %v7436
    %7438 = vdwg.mxu0
    %v7439 = vand.u32 %v6919, 4294901760
    %v7440 = vsub.f32 %v6919, %v7439
    %7441 = vmatpush.msra.mxu0 %v7440
    %v7442 = vand.u32 %v6918, 4294901760
    %v7443 = vsub.f32 %v6918, %v7442
    %7444 = vmatpush.msra.mxu0 %v7443
    %v7445 = vand.u32 %v6917, 4294901760
    %v7446 = vsub.f32 %v6917, %v7445
    %7447 = vmatpush.msra.mxu0 %v7446
    %v7448 = vand.u32 %v6916, 4294901760
    %v7449 = vsub.f32 %v6916, %v7448
    %7450 = vmatpush.msra.mxu0 %v7449
    %v7451 = vand.u32 %v6915, 4294901760
    %v7452 = vsub.f32 %v6915, %v7451
    %7453 = vmatpush.msra.mxu0 %v7452
    %v7454 = vand.u32 %v6914, 4294901760
    %v7455 = vsub.f32 %v6914, %v7454
    %7456 = vmatpush.msra.mxu0 %v7455
    %v7457 = vand.u32 %v6913, 4294901760
    %v7458 = vsub.f32 %v6913, %v7457
    %7459 = vmatpush.msra.mxu0 %v7458
    %v7460 = vand.u32 %v6912, 4294901760
    %v7461 = vsub.f32 %v6912, %v7460
    %7462 = vmatpush.msra.mxu0 %v7461
    %v7463 = vand.u32 %v6911, 4294901760
    %v7464 = vsub.f32 %v6911, %v7463
    %7465 = vmatpush.msra.mxu0 %v7464
    %v7466 = vand.u32 %v6910, 4294901760
    %v7467 = vsub.f32 %v6910, %v7466
    %7468 = vmatpush.msra.mxu0 %v7467
    %v7469 = vand.u32 %v6909, 4294901760
    %v7470 = vsub.f32 %v6909, %v7469
    %7471 = vmatpush.msra.mxu0 %v7470
    %v7472 = vand.u32 %v6908, 4294901760
    %v7473 = vsub.f32 %v6908, %v7472
    %7474 = vmatpush.msra.mxu0 %v7473
    %v7475 = vand.u32 %v6907, 4294901760
    %v7476 = vsub.f32 %v6907, %v7475
    %7477 = vmatpush.msra.mxu0 %v7476
    %v7478 = vand.u32 %v6906, 4294901760
    %v7479 = vsub.f32 %v6906, %v7478
    %7480 = vmatpush.msra.mxu0 %v7479
    %v7481 = vand.u32 %v6905, 4294901760
    %v7482 = vsub.f32 %v6905, %v7481
    %7483 = vmatpush.msra.mxu0 %v7482
    %v7484 = vand.u32 %v6904, 4294901760
    %v7485 = vsub.f32 %v6904, %v7484
    %7486 = vmatpush.msra.mxu0 %v7485
    %v7487 = vand.u32 %v6885, 4294901760
    %v7488 = vsub.f32 %v6885, %v7487
    %7489 = vmatmul.f32.gmra.mxu0 %v7488
    %v7490 = vpop.f32.mrf.mxu0
    %v7491 = vadd.f32 %v7437, %v7490
    %7492 = vdwg.mxu0
    %v7493 = vand.u32 %v6919, 4294901760
    %7494 = vmatpush.msra.mxu0 %v7493
    %v7495 = vand.u32 %v6918, 4294901760
    %7496 = vmatpush.msra.mxu0 %v7495
    %v7497 = vand.u32 %v6917, 4294901760
    %7498 = vmatpush.msra.mxu0 %v7497
    %v7499 = vand.u32 %v6916, 4294901760
    %7500 = vmatpush.msra.mxu0 %v7499
    %v7501 = vand.u32 %v6915, 4294901760
    %7502 = vmatpush.msra.mxu0 %v7501
    %v7503 = vand.u32 %v6914, 4294901760
    %7504 = vmatpush.msra.mxu0 %v7503
    %v7505 = vand.u32 %v6913, 4294901760
    %7506 = vmatpush.msra.mxu0 %v7505
    %v7507 = vand.u32 %v6912, 4294901760
    %7508 = vmatpush.msra.mxu0 %v7507
    %v7509 = vand.u32 %v6911, 4294901760
    %7510 = vmatpush.msra.mxu0 %v7509
    %v7511 = vand.u32 %v6910, 4294901760
    %7512 = vmatpush.msra.mxu0 %v7511
    %v7513 = vand.u32 %v6909, 4294901760
    %7514 = vmatpush.msra.mxu0 %v7513
    %v7515 = vand.u32 %v6908, 4294901760
    %7516 = vmatpush.msra.mxu0 %v7515
    %v7517 = vand.u32 %v6907, 4294901760
    %7518 = vmatpush.msra.mxu0 %v7517
    %v7519 = vand.u32 %v6906, 4294901760
    %7520 = vmatpush.msra.mxu0 %v7519
    %v7521 = vand.u32 %v6905, 4294901760
    %7522 = vmatpush.msra.mxu0 %v7521
    %v7523 = vand.u32 %v6904, 4294901760
    %7524 = vmatpush.msra.mxu0 %v7523
    %v7525 = vand.u32 %v6885, 4294901760
    %v7526 = vsub.f32 %v6885, %v7525
    %v7527 = vand.u32 %v7526, 4294901760
    %7528 = vmatmul.f32.gmra.mxu0 %v7527
    %v7529 = vpop.f32.mrf.mxu0
    %v7530 = vadd.f32 %v7491, %v7529
    %7531 = vdwg.mxu0
    %v7532 = vand.u32 %v6919, 4294901760
    %v7533 = vsub.f32 %v6919, %v7532
    %v7534 = vand.u32 %v7533, 4294901760
    %7535 = vmatpush.msra.mxu0 %v7534
    %v7536 = vand.u32 %v6918, 4294901760
    %v7537 = vsub.f32 %v6918, %v7536
    %v7538 = vand.u32 %v7537, 4294901760
    %7539 = vmatpush.msra.mxu0 %v7538
    %v7540 = vand.u32 %v6917, 4294901760
    %v7541 = vsub.f32 %v6917, %v7540
    %v7542 = vand.u32 %v7541, 4294901760
    %7543 = vmatpush.msra.mxu0 %v7542
    %v7544 = vand.u32 %v6916, 4294901760
    %v7545 = vsub.f32 %v6916, %v7544
    %v7546 = vand.u32 %v7545, 4294901760
    %7547 = vmatpush.msra.mxu0 %v7546
    %v7548 = vand.u32 %v6915, 4294901760
    %v7549 = vsub.f32 %v6915, %v7548
    %v7550 = vand.u32 %v7549, 4294901760
    %7551 = vmatpush.msra.mxu0 %v7550
    %v7552 = vand.u32 %v6914, 4294901760
    %v7553 = vsub.f32 %v6914, %v7552
    %v7554 = vand.u32 %v7553, 4294901760
    %7555 = vmatpush.msra.mxu0 %v7554
    %v7556 = vand.u32 %v6913, 4294901760
    %v7557 = vsub.f32 %v6913, %v7556
    %v7558 = vand.u32 %v7557, 4294901760
    %7559 = vmatpush.msra.mxu0 %v7558
    %v7560 = vand.u32 %v6912, 4294901760
    %v7561 = vsub.f32 %v6912, %v7560
    %v7562 = vand.u32 %v7561, 4294901760
    %7563 = vmatpush.msra.mxu0 %v7562
    %v7564 = vand.u32 %v6911, 4294901760
    %v7565 = vsub.f32 %v6911, %v7564
    %v7566 = vand.u32 %v7565, 4294901760
    %7567 = vmatpush.msra.mxu0 %v7566
    %v7568 = vand.u32 %v6910, 4294901760
    %v7569 = vsub.f32 %v6910, %v7568
    %v7570 = vand.u32 %v7569, 4294901760
    %7571 = vmatpush.msra.mxu0 %v7570
    %v7572 = vand.u32 %v6909, 4294901760
    %v7573 = vsub.f32 %v6909, %v7572
    %v7574 = vand.u32 %v7573, 4294901760
    %7575 = vmatpush.msra.mxu0 %v7574
    %v7576 = vand.u32 %v6908, 4294901760
    %v7577 = vsub.f32 %v6908, %v7576
    %v7578 = vand.u32 %v7577, 4294901760
    %7579 = vmatpush.msra.mxu0 %v7578
    %v7580 = vand.u32 %v6907, 4294901760
    %v7581 = vsub.f32 %v6907, %v7580
    %v7582 = vand.u32 %v7581, 4294901760
    %7583 = vmatpush.msra.mxu0 %v7582
    %v7584 = vand.u32 %v6906, 4294901760
    %v7585 = vsub.f32 %v6906, %v7584
    %v7586 = vand.u32 %v7585, 4294901760
    %7587 = vmatpush.msra.mxu0 %v7586
    %v7588 = vand.u32 %v6905, 4294901760
    %v7589 = vsub.f32 %v6905, %v7588
    %v7590 = vand.u32 %v7589, 4294901760
    %7591 = vmatpush.msra.mxu0 %v7590
    %v7592 = vand.u32 %v6904, 4294901760
    %v7593 = vsub.f32 %v6904, %v7592
    %v7594 = vand.u32 %v7593, 4294901760
    %7595 = vmatpush.msra.mxu0 %v7594
    %v7596 = vand.u32 %v6885, 4294901760
    %7597 = vmatmul.f32.gmra.mxu0 %v7596
    %v7598 = vpop.f32.mrf.mxu0
    %v7599 = vadd.f32 %v7530, %v7598
    %7600 = vdwg.mxu0
    %v7601 = vand.u32 %v6919, 4294901760
    %7602 = vmatpush.msra.mxu0 %v7601
    %v7603 = vand.u32 %v6918, 4294901760
    %7604 = vmatpush.msra.mxu0 %v7603
    %v7605 = vand.u32 %v6917, 4294901760
    %7606 = vmatpush.msra.mxu0 %v7605
    %v7607 = vand.u32 %v6916, 4294901760
    %7608 = vmatpush.msra.mxu0 %v7607
    %v7609 = vand.u32 %v6915, 4294901760
    %7610 = vmatpush.msra.mxu0 %v7609
    %v7611 = vand.u32 %v6914, 4294901760
    %7612 = vmatpush.msra.mxu0 %v7611
    %v7613 = vand.u32 %v6913, 4294901760
    %7614 = vmatpush.msra.mxu0 %v7613
    %v7615 = vand.u32 %v6912, 4294901760
    %7616 = vmatpush.msra.mxu0 %v7615
    %v7617 = vand.u32 %v6911, 4294901760
    %7618 = vmatpush.msra.mxu0 %v7617
    %v7619 = vand.u32 %v6910, 4294901760
    %7620 = vmatpush.msra.mxu0 %v7619
    %v7621 = vand.u32 %v6909, 4294901760
    %7622 = vmatpush.msra.mxu0 %v7621
    %v7623 = vand.u32 %v6908, 4294901760
    %7624 = vmatpush.msra.mxu0 %v7623
    %v7625 = vand.u32 %v6907, 4294901760
    %7626 = vmatpush.msra.mxu0 %v7625
    %v7627 = vand.u32 %v6906, 4294901760
    %7628 = vmatpush.msra.mxu0 %v7627
    %v7629 = vand.u32 %v6905, 4294901760
    %7630 = vmatpush.msra.mxu0 %v7629
    %v7631 = vand.u32 %v6904, 4294901760
    %7632 = vmatpush.msra.mxu0 %v7631
    %v7633 = vand.u32 %v6885, 4294901760
    %7634 = vmatmul.f32.gmra.mxu0 %v7633
    %v7635 = vpop.f32.mrf.mxu0
    %v7636 = vadd.f32 %v7599, %v7635
    %7637 = vdwg.mxu0
    %v7638 = vand.u32 %v6935, 4294901760
    %7639 = vmatpush.msra.mxu0 %v7638
    %v7640 = vand.u32 %v6934, 4294901760
    %7641 = vmatpush.msra.mxu0 %v7640
    %v7642 = vand.u32 %v6933, 4294901760
    %7643 = vmatpush.msra.mxu0 %v7642
    %v7644 = vand.u32 %v6932, 4294901760
    %7645 = vmatpush.msra.mxu0 %v7644
    %v7646 = vand.u32 %v6931, 4294901760
    %7647 = vmatpush.msra.mxu0 %v7646
    %v7648 = vand.u32 %v6930, 4294901760
    %7649 = vmatpush.msra.mxu0 %v7648
    %v7650 = vand.u32 %v6929, 4294901760
    %7651 = vmatpush.msra.mxu0 %v7650
    %v7652 = vand.u32 %v6928, 4294901760
    %7653 = vmatpush.msra.mxu0 %v7652
    %v7654 = vand.u32 %v6927, 4294901760
    %7655 = vmatpush.msra.mxu0 %v7654
    %v7656 = vand.u32 %v6926, 4294901760
    %7657 = vmatpush.msra.mxu0 %v7656
    %v7658 = vand.u32 %v6925, 4294901760
    %7659 = vmatpush.msra.mxu0 %v7658
    %v7660 = vand.u32 %v6924, 4294901760
    %7661 = vmatpush.msra.mxu0 %v7660
    %v7662 = vand.u32 %v6923, 4294901760
    %7663 = vmatpush.msra.mxu0 %v7662
    %v7664 = vand.u32 %v6922, 4294901760
    %7665 = vmatpush.msra.mxu0 %v7664
    %v7666 = vand.u32 %v6921, 4294901760
    %7667 = vmatpush.msra.mxu0 %v7666
    %v7668 = vand.u32 %v6920, 4294901760
    %7669 = vmatpush.msra.mxu0 %v7668
    %v7670 = vand.u32 %v6886, 4294901760
    %v7671 = vsub.f32 %v6886, %v7670
    %v7672 = vand.u32 %v7671, 4294901760
    %v7673 = vsub.f32 %v7671, %v7672
    %v7674 = vand.u32 %v7673, 4294901760
    %7675 = vmatmul.f32.gmra.mxu0 %v7674
    %v7676 = vpop.f32.mrf.mxu0
    %v7677 = vadd.f32 %v7636, %v7676
    %7678 = vdwg.mxu0
    %v7679 = vand.u32 %v6935, 4294901760
    %v7680 = vsub.f32 %v6935, %v7679
    %v7681 = vand.u32 %v7680, 4294901760
    %v7682 = vsub.f32 %v7680, %v7681
    %v7683 = vand.u32 %v7682, 4294901760
    %7684 = vmatpush.msra.mxu0 %v7683
    %v7685 = vand.u32 %v6934, 4294901760
    %v7686 = vsub.f32 %v6934, %v7685
    %v7687 = vand.u32 %v7686, 4294901760
    %v7688 = vsub.f32 %v7686, %v7687
    %v7689 = vand.u32 %v7688, 4294901760
    %7690 = vmatpush.msra.mxu0 %v7689
    %v7691 = vand.u32 %v6933, 4294901760
    %v7692 = vsub.f32 %v6933, %v7691
    %v7693 = vand.u32 %v7692, 4294901760
    %v7694 = vsub.f32 %v7692, %v7693
    %v7695 = vand.u32 %v7694, 4294901760
    %7696 = vmatpush.msra.mxu0 %v7695
    %v7697 = vand.u32 %v6932, 4294901760
    %v7698 = vsub.f32 %v6932, %v7697
    %v7699 = vand.u32 %v7698, 4294901760
    %v7700 = vsub.f32 %v7698, %v7699
    %v7701 = vand.u32 %v7700, 4294901760
    %7702 = vmatpush.msra.mxu0 %v7701
    %v7703 = vand.u32 %v6931, 4294901760
    %v7704 = vsub.f32 %v6931, %v7703
    %v7705 = vand.u32 %v7704, 4294901760
    %v7706 = vsub.f32 %v7704, %v7705
    %v7707 = vand.u32 %v7706, 4294901760
    %7708 = vmatpush.msra.mxu0 %v7707
    %v7709 = vand.u32 %v6930, 4294901760
    %v7710 = vsub.f32 %v6930, %v7709
    %v7711 = vand.u32 %v7710, 4294901760
    %v7712 = vsub.f32 %v7710, %v7711
    %v7713 = vand.u32 %v7712, 4294901760
    %7714 = vmatpush.msra.mxu0 %v7713
    %v7715 = vand.u32 %v6929, 4294901760
    %v7716 = vsub.f32 %v6929, %v7715
    %v7717 = vand.u32 %v7716, 4294901760
    %v7718 = vsub.f32 %v7716, %v7717
    %v7719 = vand.u32 %v7718, 4294901760
    %7720 = vmatpush.msra.mxu0 %v7719
    %v7721 = vand.u32 %v6928, 4294901760
    %v7722 = vsub.f32 %v6928, %v7721
    %v7723 = vand.u32 %v7722, 4294901760
    %v7724 = vsub.f32 %v7722, %v7723
    %v7725 = vand.u32 %v7724, 4294901760
    %7726 = vmatpush.msra.mxu0 %v7725
    %v7727 = vand.u32 %v6927, 4294901760
    %v7728 = vsub.f32 %v6927, %v7727
    %v7729 = vand.u32 %v7728, 4294901760
    %v7730 = vsub.f32 %v7728, %v7729
    %v7731 = vand.u32 %v7730, 4294901760
    %7732 = vmatpush.msra.mxu0 %v7731
    %v7733 = vand.u32 %v6926, 4294901760
    %v7734 = vsub.f32 %v6926, %v7733
    %v7735 = vand.u32 %v7734, 4294901760
    %v7736 = vsub.f32 %v7734, %v7735
    %v7737 = vand.u32 %v7736, 4294901760
    %7738 = vmatpush.msra.mxu0 %v7737
    %v7739 = vand.u32 %v6925, 4294901760
    %v7740 = vsub.f32 %v6925, %v7739
    %v7741 = vand.u32 %v7740, 4294901760
    %v7742 = vsub.f32 %v7740, %v7741
    %v7743 = vand.u32 %v7742, 4294901760
    %7744 = vmatpush.msra.mxu0 %v7743
    %v7745 = vand.u32 %v6924, 4294901760
    %v7746 = vsub.f32 %v6924, %v7745
    %v7747 = vand.u32 %v7746, 4294901760
    %v7748 = vsub.f32 %v7746, %v7747
    %v7749 = vand.u32 %v7748, 4294901760
    %7750 = vmatpush.msra.mxu0 %v7749
    %v7751 = vand.u32 %v6923, 4294901760
    %v7752 = vsub.f32 %v6923, %v7751
    %v7753 = vand.u32 %v7752, 4294901760
    %v7754 = vsub.f32 %v7752, %v7753
    %v7755 = vand.u32 %v7754, 4294901760
    %7756 = vmatpush.msra.mxu0 %v7755
    %v7757 = vand.u32 %v6922, 4294901760
    %v7758 = vsub.f32 %v6922, %v7757
    %v7759 = vand.u32 %v7758, 4294901760
    %v7760 = vsub.f32 %v7758, %v7759
    %v7761 = vand.u32 %v7760, 4294901760
    %7762 = vmatpush.msra.mxu0 %v7761
    %v7763 = vand.u32 %v6921, 4294901760
    %v7764 = vsub.f32 %v6921, %v7763
    %v7765 = vand.u32 %v7764, 4294901760
    %v7766 = vsub.f32 %v7764, %v7765
    %v7767 = vand.u32 %v7766, 4294901760
    %7768 = vmatpush.msra.mxu0 %v7767
    %v7769 = vand.u32 %v6920, 4294901760
    %v7770 = vsub.f32 %v6920, %v7769
    %v7771 = vand.u32 %v7770, 4294901760
    %v7772 = vsub.f32 %v7770, %v7771
    %v7773 = vand.u32 %v7772, 4294901760
    %7774 = vmatpush.msra.mxu0 %v7773
    %v7775 = vand.u32 %v6886, 4294901760
    %7776 = vmatmul.f32.gmra.mxu0 %v7775
    %v7777 = vpop.f32.mrf.mxu0
    %v7778 = vadd.f32 %v7677, %v7777
    %7779 = vdwg.mxu0
    %v7780 = vand.u32 %v6935, 4294901760
    %v7781 = vsub.f32 %v6935, %v7780
    %7782 = vmatpush.msra.mxu0 %v7781
    %v7783 = vand.u32 %v6934, 4294901760
    %v7784 = vsub.f32 %v6934, %v7783
    %7785 = vmatpush.msra.mxu0 %v7784
    %v7786 = vand.u32 %v6933, 4294901760
    %v7787 = vsub.f32 %v6933, %v7786
    %7788 = vmatpush.msra.mxu0 %v7787
    %v7789 = vand.u32 %v6932, 4294901760
    %v7790 = vsub.f32 %v6932, %v7789
    %7791 = vmatpush.msra.mxu0 %v7790
    %v7792 = vand.u32 %v6931, 4294901760
    %v7793 = vsub.f32 %v6931, %v7792
    %7794 = vmatpush.msra.mxu0 %v7793
    %v7795 = vand.u32 %v6930, 4294901760
    %v7796 = vsub.f32 %v6930, %v7795
    %7797 = vmatpush.msra.mxu0 %v7796
    %v7798 = vand.u32 %v6929, 4294901760
    %v7799 = vsub.f32 %v6929, %v7798
    %7800 = vmatpush.msra.mxu0 %v7799
    %v7801 = vand.u32 %v6928, 4294901760
    %v7802 = vsub.f32 %v6928, %v7801
    %7803 = vmatpush.msra.mxu0 %v7802
    %v7804 = vand.u32 %v6927, 4294901760
    %v7805 = vsub.f32 %v6927, %v7804
    %7806 = vmatpush.msra.mxu0 %v7805
    %v7807 = vand.u32 %v6926, 4294901760
    %v7808 = vsub.f32 %v6926, %v7807
    %7809 = vmatpush.msra.mxu0 %v7808
    %v7810 = vand.u32 %v6925, 4294901760
    %v7811 = vsub.f32 %v6925, %v7810
    %7812 = vmatpush.msra.mxu0 %v7811
    %v7813 = vand.u32 %v6924, 4294901760
    %v7814 = vsub.f32 %v6924, %v7813
    %7815 = vmatpush.msra.mxu0 %v7814
    %v7816 = vand.u32 %v6923, 4294901760
    %v7817 = vsub.f32 %v6923, %v7816
    %7818 = vmatpush.msra.mxu0 %v7817
    %v7819 = vand.u32 %v6922, 4294901760
    %v7820 = vsub.f32 %v6922, %v7819
    %7821 = vmatpush.msra.mxu0 %v7820
    %v7822 = vand.u32 %v6921, 4294901760
    %v7823 = vsub.f32 %v6921, %v7822
    %7824 = vmatpush.msra.mxu0 %v7823
    %v7825 = vand.u32 %v6920, 4294901760
    %v7826 = vsub.f32 %v6920, %v7825
    %7827 = vmatpush.msra.mxu0 %v7826
    %v7828 = vand.u32 %v6886, 4294901760
    %v7829 = vsub.f32 %v6886, %v7828
    %7830 = vmatmul.f32.gmra.mxu0 %v7829
    %v7831 = vpop.f32.mrf.mxu0
    %v7832 = vadd.f32 %v7778, %v7831
    %7833 = vdwg.mxu0
    %v7834 = vand.u32 %v6935, 4294901760
    %7835 = vmatpush.msra.mxu0 %v7834
    %v7836 = vand.u32 %v6934, 4294901760
    %7837 = vmatpush.msra.mxu0 %v7836
    %v7838 = vand.u32 %v6933, 4294901760
    %7839 = vmatpush.msra.mxu0 %v7838
    %v7840 = vand.u32 %v6932, 4294901760
    %7841 = vmatpush.msra.mxu0 %v7840
    %v7842 = vand.u32 %v6931, 4294901760
    %7843 = vmatpush.msra.mxu0 %v7842
    %v7844 = vand.u32 %v6930, 4294901760
    %7845 = vmatpush.msra.mxu0 %v7844
    %v7846 = vand.u32 %v6929, 4294901760
    %7847 = vmatpush.msra.mxu0 %v7846
    %v7848 = vand.u32 %v6928, 4294901760
    %7849 = vmatpush.msra.mxu0 %v7848
    %v7850 = vand.u32 %v6927, 4294901760
    %7851 = vmatpush.msra.mxu0 %v7850
    %v7852 = vand.u32 %v6926, 4294901760
    %7853 = vmatpush.msra.mxu0 %v7852
    %v7854 = vand.u32 %v6925, 4294901760
    %7855 = vmatpush.msra.mxu0 %v7854
    %v7856 = vand.u32 %v6924, 4294901760
    %7857 = vmatpush.msra.mxu0 %v7856
    %v7858 = vand.u32 %v6923, 4294901760
    %7859 = vmatpush.msra.mxu0 %v7858
    %v7860 = vand.u32 %v6922, 4294901760
    %7861 = vmatpush.msra.mxu0 %v7860
    %v7862 = vand.u32 %v6921, 4294901760
    %7863 = vmatpush.msra.mxu0 %v7862
    %v7864 = vand.u32 %v6920, 4294901760
    %7865 = vmatpush.msra.mxu0 %v7864
    %v7866 = vand.u32 %v6886, 4294901760
    %v7867 = vsub.f32 %v6886, %v7866
    %v7868 = vand.u32 %v7867, 4294901760
    %7869 = vmatmul.f32.gmra.mxu0 %v7868
    %v7870 = vpop.f32.mrf.mxu0
    %v7871 = vadd.f32 %v7832, %v7870
    %7872 = vdwg.mxu0
    %v7873 = vand.u32 %v6935, 4294901760
    %v7874 = vsub.f32 %v6935, %v7873
    %v7875 = vand.u32 %v7874, 4294901760
    %7876 = vmatpush.msra.mxu0 %v7875
    %v7877 = vand.u32 %v6934, 4294901760
    %v7878 = vsub.f32 %v6934, %v7877
    %v7879 = vand.u32 %v7878, 4294901760
    %7880 = vmatpush.msra.mxu0 %v7879
    %v7881 = vand.u32 %v6933, 4294901760
    %v7882 = vsub.f32 %v6933, %v7881
    %v7883 = vand.u32 %v7882, 4294901760
    %7884 = vmatpush.msra.mxu0 %v7883
    %v7885 = vand.u32 %v6932, 4294901760
    %v7886 = vsub.f32 %v6932, %v7885
    %v7887 = vand.u32 %v7886, 4294901760
    %7888 = vmatpush.msra.mxu0 %v7887
    %v7889 = vand.u32 %v6931, 4294901760
    %v7890 = vsub.f32 %v6931, %v7889
    %v7891 = vand.u32 %v7890, 4294901760
    %7892 = vmatpush.msra.mxu0 %v7891
    %v7893 = vand.u32 %v6930, 4294901760
    %v7894 = vsub.f32 %v6930, %v7893
    %v7895 = vand.u32 %v7894, 4294901760
    %7896 = vmatpush.msra.mxu0 %v7895
    %v7897 = vand.u32 %v6929, 4294901760
    %v7898 = vsub.f32 %v6929, %v7897
    %v7899 = vand.u32 %v7898, 4294901760
    %7900 = vmatpush.msra.mxu0 %v7899
    %v7901 = vand.u32 %v6928, 4294901760
    %v7902 = vsub.f32 %v6928, %v7901
    %v7903 = vand.u32 %v7902, 4294901760
    %7904 = vmatpush.msra.mxu0 %v7903
    %v7905 = vand.u32 %v6927, 4294901760
    %v7906 = vsub.f32 %v6927, %v7905
    %v7907 = vand.u32 %v7906, 4294901760
    %7908 = vmatpush.msra.mxu0 %v7907
    %v7909 = vand.u32 %v6926, 4294901760
    %v7910 = vsub.f32 %v6926, %v7909
    %v7911 = vand.u32 %v7910, 4294901760
    %7912 = vmatpush.msra.mxu0 %v7911
    %v7913 = vand.u32 %v6925, 4294901760
    %v7914 = vsub.f32 %v6925, %v7913
    %v7915 = vand.u32 %v7914, 4294901760
    %7916 = vmatpush.msra.mxu0 %v7915
    %v7917 = vand.u32 %v6924, 4294901760
    %v7918 = vsub.f32 %v6924, %v7917
    %v7919 = vand.u32 %v7918, 4294901760
    %7920 = vmatpush.msra.mxu0 %v7919
    %v7921 = vand.u32 %v6923, 4294901760
    %v7922 = vsub.f32 %v6923, %v7921
    %v7923 = vand.u32 %v7922, 4294901760
    %7924 = vmatpush.msra.mxu0 %v7923
    %v7925 = vand.u32 %v6922, 4294901760
    %v7926 = vsub.f32 %v6922, %v7925
    %v7927 = vand.u32 %v7926, 4294901760
    %7928 = vmatpush.msra.mxu0 %v7927
    %v7929 = vand.u32 %v6921, 4294901760
    %v7930 = vsub.f32 %v6921, %v7929
    %v7931 = vand.u32 %v7930, 4294901760
    %7932 = vmatpush.msra.mxu0 %v7931
    %v7933 = vand.u32 %v6920, 4294901760
    %v7934 = vsub.f32 %v6920, %v7933
    %v7935 = vand.u32 %v7934, 4294901760
    %7936 = vmatpush.msra.mxu0 %v7935
    %v7937 = vand.u32 %v6886, 4294901760
    %7938 = vmatmul.f32.gmra.mxu0 %v7937
    %v7939 = vpop.f32.mrf.mxu0
    %v7940 = vadd.f32 %v7871, %v7939
    %7941 = vdwg.mxu0
    %v7942 = vand.u32 %v6935, 4294901760
    %7943 = vmatpush.msra.mxu0 %v7942
    %v7944 = vand.u32 %v6934, 4294901760
    %7945 = vmatpush.msra.mxu0 %v7944
    %v7946 = vand.u32 %v6933, 4294901760
    %7947 = vmatpush.msra.mxu0 %v7946
    %v7948 = vand.u32 %v6932, 4294901760
    %7949 = vmatpush.msra.mxu0 %v7948
    %v7950 = vand.u32 %v6931, 4294901760
    %7951 = vmatpush.msra.mxu0 %v7950
    %v7952 = vand.u32 %v6930, 4294901760
    %7953 = vmatpush.msra.mxu0 %v7952
    %v7954 = vand.u32 %v6929, 4294901760
    %7955 = vmatpush.msra.mxu0 %v7954
    %v7956 = vand.u32 %v6928, 4294901760
    %7957 = vmatpush.msra.mxu0 %v7956
    %v7958 = vand.u32 %v6927, 4294901760
    %7959 = vmatpush.msra.mxu0 %v7958
    %v7960 = vand.u32 %v6926, 4294901760
    %7961 = vmatpush.msra.mxu0 %v7960
    %v7962 = vand.u32 %v6925, 4294901760
    %7963 = vmatpush.msra.mxu0 %v7962
    %v7964 = vand.u32 %v6924, 4294901760
    %7965 = vmatpush.msra.mxu0 %v7964
    %v7966 = vand.u32 %v6923, 4294901760
    %7967 = vmatpush.msra.mxu0 %v7966
    %v7968 = vand.u32 %v6922, 4294901760
    %7969 = vmatpush.msra.mxu0 %v7968
    %v7970 = vand.u32 %v6921, 4294901760
    %7971 = vmatpush.msra.mxu0 %v7970
    %v7972 = vand.u32 %v6920, 4294901760
    %7973 = vmatpush.msra.mxu0 %v7972
    %v7974 = vand.u32 %v6886, 4294901760
    %7975 = vmatmul.f32.gmra.mxu0 %v7974
    %v7976 = vpop.f32.mrf.mxu0
    %v7977 = vadd.f32 %v7940, %v7976
    %7978 = vdwg.mxu0
    %v7979 = vand.u32 %v6951, 4294901760
    %7980 = vmatpush.msra.mxu0 %v7979
    %v7981 = vand.u32 %v6950, 4294901760
    %7982 = vmatpush.msra.mxu0 %v7981
    %v7983 = vand.u32 %v6949, 4294901760
    %7984 = vmatpush.msra.mxu0 %v7983
    %v7985 = vand.u32 %v6948, 4294901760
    %7986 = vmatpush.msra.mxu0 %v7985
    %v7987 = vand.u32 %v6947, 4294901760
    %7988 = vmatpush.msra.mxu0 %v7987
    %v7989 = vand.u32 %v6946, 4294901760
    %7990 = vmatpush.msra.mxu0 %v7989
    %v7991 = vand.u32 %v6945, 4294901760
    %7992 = vmatpush.msra.mxu0 %v7991
    %v7993 = vand.u32 %v6944, 4294901760
    %7994 = vmatpush.msra.mxu0 %v7993
    %v7995 = vand.u32 %v6943, 4294901760
    %7996 = vmatpush.msra.mxu0 %v7995
    %v7997 = vand.u32 %v6942, 4294901760
    %7998 = vmatpush.msra.mxu0 %v7997
    %v7999 = vand.u32 %v6941, 4294901760
    %8000 = vmatpush.msra.mxu0 %v7999
    %v8001 = vand.u32 %v6940, 4294901760
    %8002 = vmatpush.msra.mxu0 %v8001
    %v8003 = vand.u32 %v6939, 4294901760
    %8004 = vmatpush.msra.mxu0 %v8003
    %v8005 = vand.u32 %v6938, 4294901760
    %8006 = vmatpush.msra.mxu0 %v8005
    %v8007 = vand.u32 %v6937, 4294901760
    %8008 = vmatpush.msra.mxu0 %v8007
    %v8009 = vand.u32 %v6936, 4294901760
    %8010 = vmatpush.msra.mxu0 %v8009
    %v8011 = vand.u32 %v6887, 4294901760
    %v8012 = vsub.f32 %v6887, %v8011
    %v8013 = vand.u32 %v8012, 4294901760
    %v8014 = vsub.f32 %v8012, %v8013
    %v8015 = vand.u32 %v8014, 4294901760
    %8016 = vmatmul.f32.gmra.mxu0 %v8015
    %v8017 = vpop.f32.mrf.mxu0
    %v8018 = vadd.f32 %v7977, %v8017
    %8019 = vdwg.mxu0
    %v8020 = vand.u32 %v6951, 4294901760
    %v8021 = vsub.f32 %v6951, %v8020
    %v8022 = vand.u32 %v8021, 4294901760
    %v8023 = vsub.f32 %v8021, %v8022
    %v8024 = vand.u32 %v8023, 4294901760
    %8025 = vmatpush.msra.mxu0 %v8024
    %v8026 = vand.u32 %v6950, 4294901760
    %v8027 = vsub.f32 %v6950, %v8026
    %v8028 = vand.u32 %v8027, 4294901760
    %v8029 = vsub.f32 %v8027, %v8028
    %v8030 = vand.u32 %v8029, 4294901760
    %8031 = vmatpush.msra.mxu0 %v8030
    %v8032 = vand.u32 %v6949, 4294901760
    %v8033 = vsub.f32 %v6949, %v8032
    %v8034 = vand.u32 %v8033, 4294901760
    %v8035 = vsub.f32 %v8033, %v8034
    %v8036 = vand.u32 %v8035, 4294901760
    %8037 = vmatpush.msra.mxu0 %v8036
    %v8038 = vand.u32 %v6948, 4294901760
    %v8039 = vsub.f32 %v6948, %v8038
    %v8040 = vand.u32 %v8039, 4294901760
    %v8041 = vsub.f32 %v8039, %v8040
    %v8042 = vand.u32 %v8041, 4294901760
    %8043 = vmatpush.msra.mxu0 %v8042
    %v8044 = vand.u32 %v6947, 4294901760
    %v8045 = vsub.f32 %v6947, %v8044
    %v8046 = vand.u32 %v8045, 4294901760
    %v8047 = vsub.f32 %v8045, %v8046
    %v8048 = vand.u32 %v8047, 4294901760
    %8049 = vmatpush.msra.mxu0 %v8048
    %v8050 = vand.u32 %v6946, 4294901760
    %v8051 = vsub.f32 %v6946, %v8050
    %v8052 = vand.u32 %v8051, 4294901760
    %v8053 = vsub.f32 %v8051, %v8052
    %v8054 = vand.u32 %v8053, 4294901760
    %8055 = vmatpush.msra.mxu0 %v8054
    %v8056 = vand.u32 %v6945, 4294901760
    %v8057 = vsub.f32 %v6945, %v8056
    %v8058 = vand.u32 %v8057, 4294901760
    %v8059 = vsub.f32 %v8057, %v8058
    %v8060 = vand.u32 %v8059, 4294901760
    %8061 = vmatpush.msra.mxu0 %v8060
    %v8062 = vand.u32 %v6944, 4294901760
    %v8063 = vsub.f32 %v6944, %v8062
    %v8064 = vand.u32 %v8063, 4294901760
    %v8065 = vsub.f32 %v8063, %v8064
    %v8066 = vand.u32 %v8065, 4294901760
    %8067 = vmatpush.msra.mxu0 %v8066
    %v8068 = vand.u32 %v6943, 4294901760
    %v8069 = vsub.f32 %v6943, %v8068
    %v8070 = vand.u32 %v8069, 4294901760
    %v8071 = vsub.f32 %v8069, %v8070
    %v8072 = vand.u32 %v8071, 4294901760
    %8073 = vmatpush.msra.mxu0 %v8072
    %v8074 = vand.u32 %v6942, 4294901760
    %v8075 = vsub.f32 %v6942, %v8074
    %v8076 = vand.u32 %v8075, 4294901760
    %v8077 = vsub.f32 %v8075, %v8076
    %v8078 = vand.u32 %v8077, 4294901760
    %8079 = vmatpush.msra.mxu0 %v8078
    %v8080 = vand.u32 %v6941, 4294901760
    %v8081 = vsub.f32 %v6941, %v8080
    %v8082 = vand.u32 %v8081, 4294901760
    %v8083 = vsub.f32 %v8081, %v8082
    %v8084 = vand.u32 %v8083, 4294901760
    %8085 = vmatpush.msra.mxu0 %v8084
    %v8086 = vand.u32 %v6940, 4294901760
    %v8087 = vsub.f32 %v6940, %v8086
    %v8088 = vand.u32 %v8087, 4294901760
    %v8089 = vsub.f32 %v8087, %v8088
    %v8090 = vand.u32 %v8089, 4294901760
    %8091 = vmatpush.msra.mxu0 %v8090
    %v8092 = vand.u32 %v6939, 4294901760
    %v8093 = vsub.f32 %v6939, %v8092
    %v8094 = vand.u32 %v8093, 4294901760
    %v8095 = vsub.f32 %v8093, %v8094
    %v8096 = vand.u32 %v8095, 4294901760
    %8097 = vmatpush.msra.mxu0 %v8096
    %v8098 = vand.u32 %v6938, 4294901760
    %v8099 = vsub.f32 %v6938, %v8098
    %v8100 = vand.u32 %v8099, 4294901760
    %v8101 = vsub.f32 %v8099, %v8100
    %v8102 = vand.u32 %v8101, 4294901760
    %8103 = vmatpush.msra.mxu0 %v8102
    %v8104 = vand.u32 %v6937, 4294901760
    %v8105 = vsub.f32 %v6937, %v8104
    %v8106 = vand.u32 %v8105, 4294901760
    %v8107 = vsub.f32 %v8105, %v8106
    %v8108 = vand.u32 %v8107, 4294901760
    %8109 = vmatpush.msra.mxu0 %v8108
    %v8110 = vand.u32 %v6936, 4294901760
    %v8111 = vsub.f32 %v6936, %v8110
    %v8112 = vand.u32 %v8111, 4294901760
    %v8113 = vsub.f32 %v8111, %v8112
    %v8114 = vand.u32 %v8113, 4294901760
    %8115 = vmatpush.msra.mxu0 %v8114
    %v8116 = vand.u32 %v6887, 4294901760
    %8117 = vmatmul.f32.gmra.mxu0 %v8116
    %v8118 = vpop.f32.mrf.mxu0
    %v8119 = vadd.f32 %v8018, %v8118
    %8120 = vdwg.mxu0
    %v8121 = vand.u32 %v6951, 4294901760
    %v8122 = vsub.f32 %v6951, %v8121
    %8123 = vmatpush.msra.mxu0 %v8122
    %v8124 = vand.u32 %v6950, 4294901760
    %v8125 = vsub.f32 %v6950, %v8124
    %8126 = vmatpush.msra.mxu0 %v8125
    %v8127 = vand.u32 %v6949, 4294901760
    %v8128 = vsub.f32 %v6949, %v8127
    %8129 = vmatpush.msra.mxu0 %v8128
    %v8130 = vand.u32 %v6948, 4294901760
    %v8131 = vsub.f32 %v6948, %v8130
    %8132 = vmatpush.msra.mxu0 %v8131
    %v8133 = vand.u32 %v6947, 4294901760
    %v8134 = vsub.f32 %v6947, %v8133
    %8135 = vmatpush.msra.mxu0 %v8134
    %v8136 = vand.u32 %v6946, 4294901760
    %v8137 = vsub.f32 %v6946, %v8136
    %8138 = vmatpush.msra.mxu0 %v8137
    %v8139 = vand.u32 %v6945, 4294901760
    %v8140 = vsub.f32 %v6945, %v8139
    %8141 = vmatpush.msra.mxu0 %v8140
    %v8142 = vand.u32 %v6944, 4294901760
    %v8143 = vsub.f32 %v6944, %v8142
    %8144 = vmatpush.msra.mxu0 %v8143
    %v8145 = vand.u32 %v6943, 4294901760
    %v8146 = vsub.f32 %v6943, %v8145
    %8147 = vmatpush.msra.mxu0 %v8146
    %v8148 = vand.u32 %v6942, 4294901760
    %v8149 = vsub.f32 %v6942, %v8148
    %8150 = vmatpush.msra.mxu0 %v8149
    %v8151 = vand.u32 %v6941, 4294901760
    %v8152 = vsub.f32 %v6941, %v8151
    %8153 = vmatpush.msra.mxu0 %v8152
    %v8154 = vand.u32 %v6940, 4294901760
    %v8155 = vsub.f32 %v6940, %v8154
    %8156 = vmatpush.msra.mxu0 %v8155
    %v8157 = vand.u32 %v6939, 4294901760
    %v8158 = vsub.f32 %v6939, %v8157
    %8159 = vmatpush.msra.mxu0 %v8158
    %v8160 = vand.u32 %v6938, 4294901760
    %v8161 = vsub.f32 %v6938, %v8160
    %8162 = vmatpush.msra.mxu0 %v8161
    %v8163 = vand.u32 %v6937, 4294901760
    %v8164 = vsub.f32 %v6937, %v8163
    %8165 = vmatpush.msra.mxu0 %v8164
    %v8166 = vand.u32 %v6936, 4294901760
    %v8167 = vsub.f32 %v6936, %v8166
    %8168 = vmatpush.msra.mxu0 %v8167
    %v8169 = vand.u32 %v6887, 4294901760
    %v8170 = vsub.f32 %v6887, %v8169
    %8171 = vmatmul.f32.gmra.mxu0 %v8170
    %v8172 = vpop.f32.mrf.mxu0
    %v8173 = vadd.f32 %v8119, %v8172
    %8174 = vdwg.mxu0
    %v8175 = vand.u32 %v6951, 4294901760
    %8176 = vmatpush.msra.mxu0 %v8175
    %v8177 = vand.u32 %v6950, 4294901760
    %8178 = vmatpush.msra.mxu0 %v8177
    %v8179 = vand.u32 %v6949, 4294901760
    %8180 = vmatpush.msra.mxu0 %v8179
    %v8181 = vand.u32 %v6948, 4294901760
    %8182 = vmatpush.msra.mxu0 %v8181
    %v8183 = vand.u32 %v6947, 4294901760
    %8184 = vmatpush.msra.mxu0 %v8183
    %v8185 = vand.u32 %v6946, 4294901760
    %8186 = vmatpush.msra.mxu0 %v8185
    %v8187 = vand.u32 %v6945, 4294901760
    %8188 = vmatpush.msra.mxu0 %v8187
    %v8189 = vand.u32 %v6944, 4294901760
    %8190 = vmatpush.msra.mxu0 %v8189
    %v8191 = vand.u32 %v6943, 4294901760
    %8192 = vmatpush.msra.mxu0 %v8191
    %v8193 = vand.u32 %v6942, 4294901760
    %8194 = vmatpush.msra.mxu0 %v8193
    %v8195 = vand.u32 %v6941, 4294901760
    %8196 = vmatpush.msra.mxu0 %v8195
    %v8197 = vand.u32 %v6940, 4294901760
    %8198 = vmatpush.msra.mxu0 %v8197
    %v8199 = vand.u32 %v6939, 4294901760
    %8200 = vmatpush.msra.mxu0 %v8199
    %v8201 = vand.u32 %v6938, 4294901760
    %8202 = vmatpush.msra.mxu0 %v8201
    %v8203 = vand.u32 %v6937, 4294901760
    %8204 = vmatpush.msra.mxu0 %v8203
    %v8205 = vand.u32 %v6936, 4294901760
    %8206 = vmatpush.msra.mxu0 %v8205
    %v8207 = vand.u32 %v6887, 4294901760
    %v8208 = vsub.f32 %v6887, %v8207
    %v8209 = vand.u32 %v8208, 4294901760
    %8210 = vmatmul.f32.gmra.mxu0 %v8209
    %v8211 = vpop.f32.mrf.mxu0
    %v8212 = vadd.f32 %v8173, %v8211
    %8213 = vdwg.mxu0
    %v8214 = vand.u32 %v6951, 4294901760
    %v8215 = vsub.f32 %v6951, %v8214
    %v8216 = vand.u32 %v8215, 4294901760
    %8217 = vmatpush.msra.mxu0 %v8216
    %v8218 = vand.u32 %v6950, 4294901760
    %v8219 = vsub.f32 %v6950, %v8218
    %v8220 = vand.u32 %v8219, 4294901760
    %8221 = vmatpush.msra.mxu0 %v8220
    %v8222 = vand.u32 %v6949, 4294901760
    %v8223 = vsub.f32 %v6949, %v8222
    %v8224 = vand.u32 %v8223, 4294901760
    %8225 = vmatpush.msra.mxu0 %v8224
    %v8226 = vand.u32 %v6948, 4294901760
    %v8227 = vsub.f32 %v6948, %v8226
    %v8228 = vand.u32 %v8227, 4294901760
    %8229 = vmatpush.msra.mxu0 %v8228
    %v8230 = vand.u32 %v6947, 4294901760
    %v8231 = vsub.f32 %v6947, %v8230
    %v8232 = vand.u32 %v8231, 4294901760
    %8233 = vmatpush.msra.mxu0 %v8232
    %v8234 = vand.u32 %v6946, 4294901760
    %v8235 = vsub.f32 %v6946, %v8234
    %v8236 = vand.u32 %v8235, 4294901760
    %8237 = vmatpush.msra.mxu0 %v8236
    %v8238 = vand.u32 %v6945, 4294901760
    %v8239 = vsub.f32 %v6945, %v8238
    %v8240 = vand.u32 %v8239, 4294901760
    %8241 = vmatpush.msra.mxu0 %v8240
    %v8242 = vand.u32 %v6944, 4294901760
    %v8243 = vsub.f32 %v6944, %v8242
    %v8244 = vand.u32 %v8243, 4294901760
    %8245 = vmatpush.msra.mxu0 %v8244
    %v8246 = vand.u32 %v6943, 4294901760
    %v8247 = vsub.f32 %v6943, %v8246
    %v8248 = vand.u32 %v8247, 4294901760
    %8249 = vmatpush.msra.mxu0 %v8248
    %v8250 = vand.u32 %v6942, 4294901760
    %v8251 = vsub.f32 %v6942, %v8250
    %v8252 = vand.u32 %v8251, 4294901760
    %8253 = vmatpush.msra.mxu0 %v8252
    %v8254 = vand.u32 %v6941, 4294901760
    %v8255 = vsub.f32 %v6941, %v8254
    %v8256 = vand.u32 %v8255, 4294901760
    %8257 = vmatpush.msra.mxu0 %v8256
    %v8258 = vand.u32 %v6940, 4294901760
    %v8259 = vsub.f32 %v6940, %v8258
    %v8260 = vand.u32 %v8259, 4294901760
    %8261 = vmatpush.msra.mxu0 %v8260
    %v8262 = vand.u32 %v6939, 4294901760
    %v8263 = vsub.f32 %v6939, %v8262
    %v8264 = vand.u32 %v8263, 4294901760
    %8265 = vmatpush.msra.mxu0 %v8264
    %v8266 = vand.u32 %v6938, 4294901760
    %v8267 = vsub.f32 %v6938, %v8266
    %v8268 = vand.u32 %v8267, 4294901760
    %8269 = vmatpush.msra.mxu0 %v8268
    %v8270 = vand.u32 %v6937, 4294901760
    %v8271 = vsub.f32 %v6937, %v8270
    %v8272 = vand.u32 %v8271, 4294901760
    %8273 = vmatpush.msra.mxu0 %v8272
    %v8274 = vand.u32 %v6936, 4294901760
    %v8275 = vsub.f32 %v6936, %v8274
    %v8276 = vand.u32 %v8275, 4294901760
    %8277 = vmatpush.msra.mxu0 %v8276
    %v8278 = vand.u32 %v6887, 4294901760
    %8279 = vmatmul.f32.gmra.mxu0 %v8278
    %v8280 = vpop.f32.mrf.mxu0
    %v8281 = vadd.f32 %v8212, %v8280
    %8282 = vdwg.mxu0
    %v8283 = vand.u32 %v6951, 4294901760
    %8284 = vmatpush.msra.mxu0 %v8283
    %v8285 = vand.u32 %v6950, 4294901760
    %8286 = vmatpush.msra.mxu0 %v8285
    %v8287 = vand.u32 %v6949, 4294901760
    %8288 = vmatpush.msra.mxu0 %v8287
    %v8289 = vand.u32 %v6948, 4294901760
    %8290 = vmatpush.msra.mxu0 %v8289
    %v8291 = vand.u32 %v6947, 4294901760
    %8292 = vmatpush.msra.mxu0 %v8291
    %v8293 = vand.u32 %v6946, 4294901760
    %8294 = vmatpush.msra.mxu0 %v8293
    %v8295 = vand.u32 %v6945, 4294901760
    %8296 = vmatpush.msra.mxu0 %v8295
    %v8297 = vand.u32 %v6944, 4294901760
    %8298 = vmatpush.msra.mxu0 %v8297
    %v8299 = vand.u32 %v6943, 4294901760
    %8300 = vmatpush.msra.mxu0 %v8299
    %v8301 = vand.u32 %v6942, 4294901760
    %8302 = vmatpush.msra.mxu0 %v8301
    %v8303 = vand.u32 %v6941, 4294901760
    %8304 = vmatpush.msra.mxu0 %v8303
    %v8305 = vand.u32 %v6940, 4294901760
    %8306 = vmatpush.msra.mxu0 %v8305
    %v8307 = vand.u32 %v6939, 4294901760
    %8308 = vmatpush.msra.mxu0 %v8307
    %v8309 = vand.u32 %v6938, 4294901760
    %8310 = vmatpush.msra.mxu0 %v8309
    %v8311 = vand.u32 %v6937, 4294901760
    %8312 = vmatpush.msra.mxu0 %v8311
    %v8313 = vand.u32 %v6936, 4294901760
    %8314 = vmatpush.msra.mxu0 %v8313
    %v8315 = vand.u32 %v6887, 4294901760
    %8316 = vmatmul.f32.gmra.mxu0 %v8315
    %v8317 = vpop.f32.mrf.mxu0
    %v8318 = vadd.f32 %v8281, %v8317
    %8319 = vdwg.mxu0
    %vm8320 = vcmask 523264
    %8321 = vst.msk [vmem:[#allocation5] sm:$0xff] %vm8320, %v8318
    // Predicated region
    $region34: #{tpu_custom_call.1} parent=1 // pred_check
      _
    $region35: #{tpu_custom_call.1} parent=1 // pred_check_branch
      %8323 = sbr.rel (0) target = $region37
    $region36: #{tpu_custom_call.1} parent=1 // pred_region
      %8325 = vsyncadd [#allocation4], 0
      %s8327 = sshll.u32 [#allocation5], 4
      %s8328 = int_to_ptr.vmem [resolvable:$true] %s8327
      %s8329 = sshll.u32 %s7, 4
      %s8330 = int_to_ptr.hbm [resolvable:$true] %s8329
      %8332 = dma.vmem_to_hbm [thread:$0]  %s8328, 128, %s8330, [#allocation4]
    $region37: #{tpu_custom_call.1} parent=1 // pred_fallthru
      _
    // Predicated region
    $region38: #{tpu_custom_call.1} parent=1 // pred_check
      _
    $region39: #{tpu_custom_call.1} parent=1 // pred_check_branch
      %8334 = sbr.rel (0) target = $region41
    $region40: #{tpu_custom_call.1} parent=1 // pred_region
      %8336 = dma.done [#allocation4], 128
    $region41: #{tpu_custom_call.1} parent=1 // pred_fallthru
      _
    %8337 = vsyncpa [#allocation3], 1
    %8338 = vsyncpa [#allocation4], 1

</llo_original>
